<compile_context>
chip_gen: v7x
topology: tpu7x:2x2x1
jax: 0.10.0
libtpu: 0.0.40
codegen_flags: <defaults>
</compile_context>

<pallas_src>
import math

import jax
import jax.numpy as jnp
from jax.experimental import pallas as pl
from jax.experimental.pallas import tpu as pltpu

PADMAX = 3   # halo for a 3x3 conv with dilation up to 3 ('same' padding)
PADL = 8     # left pad on the W (sublane) axis so interior writes / centre reads are aligned


def transformer_kernel(x_ref, dwd_ref, dwb_ref, lng_ref, lnb_ref,
                       wqkv_ref, bqkv_ref, wo_ref, bo_ref,
                       dcw_ref, dcb_ref, ln2g_ref, ln2b_ref,
                       o_ref, pad_scr, patch_scr, x2_scr, sum_scr):
    """Fused Transformer block; the whole batch is processed in one grid step."""
    B, H, W, C = x_ref.shape
    N = H * W
    M = B * N                       # matmul M dimension (batch folded into rows)
    f32, bf16 = jnp.float32, jnp.bfloat16

    # Halo border stays zero for the whole kernel; only the interior is rewritten.
    pad_scr[...] = jnp.zeros_like(pad_scr)

    def set_interior(img_bhwc):
        pad_scr[:, PADMAX:PADMAX + H, PADL:PADL + W, :] = img_bhwc

    def build_patches(dilation):
        # im2col: (M, 9C) bf16 patch matrix; taps sliced straight off the padded ref.
        for t in range(9):
            ky, kx = t // 3, t % 3
            oy = PADMAX + (ky - 1) * dilation
            ox = PADL + (kx - 1) * dilation
            tap = pad_scr[:, oy:oy + H, ox:ox + W, :]          # ref-slice load (B,H,W,C)
            patch_scr[:, t * C:(t + 1) * C] = tap.reshape(M, C).astype(bf16)

    def conv3x3(w2d, bias):                                     # one K=9C MXU matmul
        return jnp.dot(patch_scr[...], w2d, preferred_element_type=f32) + bias

    def layernorm(x2d, g, b):                                   # over channels, eps=1e-5
        mean = jnp.mean(x2d, axis=-1, keepdims=True)
        var = jnp.mean(jnp.square(x2d - mean), axis=-1, keepdims=True)
        return (x2d - mean) * jax.lax.rsqrt(var + 1e-5) * g + b

    def gelu(x):
        # TODO(synk): tanh-approximate GELU; PyTorch F.gelu uses exact erf (~1e-3 diff).
        c0 = 0.7978845608028654  # sqrt(2/pi)
        return 0.5 * x * (1.0 + jnp.tanh(c0 * (x + 0.044715 * x * x * x)))

    # ---- q/k/v: depthwise 3x3 (as expanded-diagonal im2col matmul) + bias + ReLU
    #      + LayerNorm(C), then the MHA in-projection.  One shared patch build. ----
    set_interior(x_ref[...])
    build_patches(1)

    def qkv(i):
        pre = jnp.maximum(conv3x3(dwd_ref[i], dwb_ref[i]), 0.0)
        nrm = layernorm(pre, lng_ref[i], lnb_ref[i])
        prj = jnp.dot(nrm.astype(bf16), wqkv_ref[i],
                      preferred_element_type=f32) + bqkv_ref[i]
        return prj.reshape(B, N, C)

    qp = qkv(0)                      # 1/sqrt(C) already folded into W_q, b_q
    kp = qkv(1)
    vp = qkv(2)

    # ---- single-head attention (f32 scores/probs, exact softmax normalisation) ----
    s = jnp.einsum('bqd,bkd->bqk', qp.astype(bf16), kp.astype(bf16),
                   preferred_element_type=f32)                   # (B, N, N)
    s = s - jnp.max(s, axis=-1, keepdims=True)
    e = jnp.exp(s)
    probs = e * pl.reciprocal(jnp.sum(e, axis=-1, keepdims=True), approx=False)
    ao = jnp.einsum('bqk,bkd->bqd', probs, vp,
                    preferred_element_type=f32).reshape(M, C)
    att = jnp.dot(ao.astype(bf16), wo_ref[...],
                  preferred_element_type=f32) + bo_ref[...]

    # ---- conv1 + residual + LayerNorm ----
    set_interior(att.reshape(B, H, W, C))
    build_patches(1)
    x2 = conv3x3(dcw_ref[0], dcb_ref[0]) + x_ref[...].reshape(M, C)
    x2_scr[...] = x2                                  # stash: frees vregs for Wide_Focus
    x3 = layernorm(x2, ln2g_ref[...], ln2b_ref[...])

    # ---- Wide_Focus: three dilated 3x3 convs share one padded image ----
    # TODO(synk): F.dropout(p=0.1) in Wide_Focus treated as identity (inference semantics).
    set_interior(x3.reshape(B, H, W, C))
    build_patches(1)
    sum_scr[...] = gelu(conv3x3(dcw_ref[1], dcb_ref[1]))
    build_patches(2)
    sum_scr[...] = sum_scr[...] + gelu(conv3x3(dcw_ref[2], dcb_ref[2]))
    build_patches(3)
    sum_scr[...] = sum_scr[...] + gelu(conv3x3(dcw_ref[3], dcb_ref[3]))

    set_interior(sum_scr[...].reshape(B, H, W, C))
    build_patches(1)
    wf = gelu(conv3x3(dcw_ref[4], dcb_ref[4]))

    o_ref[...] = (x2_scr[...] + wf).astype(o_ref.dtype)          # (M, C)


def transformer_forward(x, kp):
    """x: (B, C, H, W) float32 NCHW (PyTorch layout). Returns (B, C, H, W)."""
    B, C, H, W = x.shape
    N = H * W
    assert H == W, "reference module requires a square spatial grid"
    x_nhwc = jnp.transpose(x, (0, 2, 3, 1))          # NCHW -> NHWC layout glue (tiny)

    out_mc = pl.pallas_call(
        transformer_kernel,
        out_shape=jax.ShapeDtypeStruct((B * N, C), jnp.float32),
        grid_spec=pltpu.PrefetchScalarGridSpec(
            num_scalar_prefetch=0,
            grid=(1,),
            in_specs=[
                pl.BlockSpec((B, H, W, C), lambda i: (0, 0, 0, 0)),   # x (NHWC)
                pl.BlockSpec((3, 9 * C, C), lambda i: (0, 0, 0)),     # depthwise as dense im2col (bf16)
                pl.BlockSpec((3, 1, C), lambda i: (0, 0, 0)),         # depthwise bias
                pl.BlockSpec((3, 1, C), lambda i: (0, 0, 0)),         # LN_q/k/v gamma
                pl.BlockSpec((3, 1, C), lambda i: (0, 0, 0)),         # LN_q/k/v beta
                pl.BlockSpec((3, C, C), lambda i: (0, 0, 0)),         # Wq^T,Wk^T,Wv^T (bf16, q scaled)
                pl.BlockSpec((3, 1, C), lambda i: (0, 0, 0)),         # bq,bk,bv (q scaled)
                pl.BlockSpec((C, C), lambda i: (0, 0)),               # Wo^T (bf16)
                pl.BlockSpec((1, C), lambda i: (0, 0)),               # bo
                pl.BlockSpec((5, 9 * C, C), lambda i: (0, 0, 0)),     # dense conv im2col weights (bf16)
                pl.BlockSpec((5, 1, C), lambda i: (0, 0, 0)),         # dense conv biases
                pl.BlockSpec((1, C), lambda i: (0, 0)),               # LN2 gamma
                pl.BlockSpec((1, C), lambda i: (0, 0)),               # LN2 beta
            ],
            out_specs=pl.BlockSpec((B * N, C), lambda i: (0, 0)),
            scratch_shapes=[
                pltpu.VMEM((B, H + 2 * PADMAX, PADL + W + PADMAX, C), jnp.float32),
                pltpu.VMEM((B * N, 9 * C), jnp.bfloat16),   # shared im2col patch buffer
                pltpu.VMEM((B * N, C), jnp.float32),        # x2 (pre-LN residual) stash
                pltpu.VMEM((B * N, C), jnp.float32),        # Wide_Focus partial sum
            ],
        ),
        compiler_params=pltpu.CompilerParams(
            dimension_semantics=("arbitrary",),
        ),
    )(x_nhwc, kp["dw_dense"], kp["dw_b"], kp["ln_qkv_g"], kp["ln_qkv_b"],
      kp["wqkv_t"], kp["bqkv"], kp["wo_t"], kp["bo"],
      kp["dense_w"], kp["dense_b"], kp["ln2_g"], kp["ln2_b"])

    # (B*N, C) -> (B, C, H, W), matching PyTorch's permute + view.
    return jnp.transpose(out_mc.reshape(B, N, C), (0, 2, 1)).reshape(B, C, H, W)


# ----------------------------------------------------------------------------
# Parameter construction (PyTorch-shaped) and packing into kernel layout.
# ----------------------------------------------------------------------------
def make_torch_params(key, C):
    names_shapes = [
        ("conv_q_w", (C, 1, 3, 3)), ("conv_q_b", (C,)),
        ("conv_k_w", (C, 1, 3, 3)), ("conv_k_b", (C,)),
        ("conv_v_w", (C, 1, 3, 3)), ("conv_v_b", (C,)),
        ("ln_q_g", (C,)), ("ln_q_b", (C,)),
        ("ln_k_g", (C,)), ("ln_k_b", (C,)),
        ("ln_v_g", (C,)), ("ln_v_b", (C,)),
        ("in_proj_w", (3 * C, C)), ("in_proj_b", (3 * C,)),
        ("out_proj_w", (C, C)), ("out_proj_b", (C,)),
        ("conv1_w", (C, C, 3, 3)), ("conv1_b", (C,)),
        ("ln2_g", (C,)), ("ln2_b", (C,)),
        ("wf1_w", (C, C, 3, 3)), ("wf1_b", (C,)),
        ("wf2_w", (C, C, 3, 3)), ("wf2_b", (C,)),
        ("wf3_w", (C, C, 3, 3)), ("wf3_b", (C,)),
        ("wf4_w", (C, C, 3, 3)), ("wf4_b", (C,)),
    ]
    keys = jax.random.split(key, len(names_shapes))
    params = {}
    for (name, shape), k in zip(names_shapes, keys):
        if name.endswith("_g"):  # layernorm gains near 1
            params[name] = 1.0 + 0.05 * jax.random.normal(k, shape, jnp.float32)
        else:
            params[name] = 0.1 * jax.random.normal(k, shape, jnp.float32)
    return params


def pack_params(p, C):
    """Pre-transpose / stack / bf16-cast all matmul weights once in the wrapper."""
    scale = 1.0 / math.sqrt(C)      # num_heads=1 -> head_dim = C
    bf16 = jnp.bfloat16

    # Depthwise q/k/v taps -> expanded block-diagonal im2col weights (9C, C) so the
    # depthwise conv becomes one MXU matmul sharing the dense-conv patch buffer.
    dw = jnp.stack([p["conv_q_w"], p["conv_k_w"], p["conv_v_w"]])[:, :, 0]   # (3,C,3,3)
    dw = jnp.transpose(dw, (0, 2, 3, 1)).reshape(3, 9, 1, C)                 # (3,tap,1,cout)
    eye = jnp.eye(C, dtype=jnp.float32)
    dw_dense = (dw * eye[None, None]).reshape(3, 9 * C, C).astype(bf16)
    dw_b = jnp.stack([p["conv_q_b"], p["conv_k_b"], p["conv_v_b"]]).reshape(3, 1, C)
    ln_qkv_g = jnp.stack([p["ln_q_g"], p["ln_k_g"], p["ln_v_g"]]).reshape(3, 1, C)
    ln_qkv_b = jnp.stack([p["ln_q_b"], p["ln_k_b"], p["ln_v_b"]]).reshape(3, 1, C)

    # MHA in-projection: (3C, C) -> (3, C, C), pre-transposed; 1/sqrt(C) folded into q.
    w_in = jnp.transpose(p["in_proj_w"].reshape(3, C, C), (0, 2, 1))
    wqkv_t = w_in.at[0].multiply(scale).astype(bf16)
    bqkv = p["in_proj_b"].reshape(3, 1, C).at[0].multiply(scale)
    wo_t = p["out_proj_w"].T.astype(bf16)
    bo = p["out_proj_b"].reshape(1, C)

    # Dense 3x3 convs [conv1, wf1, wf2, wf3, wf4]: (Cout,Cin,3,3) -> im2col (9*Cin, Cout).
    dws = jnp.stack([p["conv1_w"], p["wf1_w"], p["wf2_w"], p["wf3_w"], p["wf4_w"]])
    dense_w = jnp.transpose(dws, (0, 3, 4, 2, 1)).reshape(5, 9 * C, C).astype(bf16)
    dense_b = jnp.stack([p["conv1_b"], p["wf1_b"], p["wf2_b"],
                         p["wf3_b"], p["wf4_b"]]).reshape(5, 1, C)

    return dict(dw_dense=dw_dense, dw_b=dw_b, ln_qkv_g=ln_qkv_g, ln_qkv_b=ln_qkv_b,
                wqkv_t=wqkv_t, bqkv=bqkv, wo_t=wo_t, bo=bo,
                dense_w=dense_w, dense_b=dense_b,
                ln2_g=p["ln2_g"].reshape(1, C), ln2_b=p["ln2_b"].reshape(1, C))


if __name__ == "__main__":
    B, C, H, W = 2, 32, 8, 8      # H == W so the sqrt(H*W) reshape in the reference is exact
    key = jax.random.PRNGKey(0)
    kx, kparams = jax.random.split(key)
    x = jax.random.normal(kx, (B, C, H, W), jnp.float32)
    packed = pack_params(make_torch_params(kparams, C), C)

    fwd = jax.jit(transformer_forward)
    out = jax.block_until_ready(fwd(x, packed))
    assert out.shape == (B, C, H, W), out.shape
    assert bool(jnp.all(jnp.isfinite(out)))
    print("KERNEL_OK")
</pallas_src>

<mosaic_0001>
module attributes {stable_mosaic.version = 11 : i64} {
  func.func @transformer_kernel(%arg0: i32, %arg1: memref<2x8x8x32xf32, #tpu.memory_space<vmem>>, %arg2: memref<3x288x32xbf16, #tpu.memory_space<vmem>>, %arg3: memref<3x1x32xf32, #tpu.memory_space<vmem>>, %arg4: memref<3x1x32xf32, #tpu.memory_space<vmem>>, %arg5: memref<3x1x32xf32, #tpu.memory_space<vmem>>, %arg6: memref<3x32x32xbf16, #tpu.memory_space<vmem>>, %arg7: memref<3x1x32xf32, #tpu.memory_space<vmem>>, %arg8: memref<32x32xbf16, #tpu.memory_space<vmem>>, %arg9: memref<1x32xf32, #tpu.memory_space<vmem>>, %arg10: memref<5x288x32xbf16, #tpu.memory_space<vmem>>, %arg11: memref<5x1x32xf32, #tpu.memory_space<vmem>>, %arg12: memref<1x32xf32, #tpu.memory_space<vmem>>, %arg13: memref<1x32xf32, #tpu.memory_space<vmem>>, %arg14: memref<128x32xf32, #tpu.memory_space<vmem>>, %arg15: memref<2x14x19x32xf32, #tpu.memory_space<vmem>>, %arg16: memref<128x288xbf16, #tpu.memory_space<vmem>>, %arg17: memref<128x32xf32, #tpu.memory_space<vmem>>, %arg18: memref<128x32xf32, #tpu.memory_space<vmem>>) attributes {dimension_semantics = [#tpu.dimension_semantics<arbitrary>], iteration_bounds = array<i64: 1>, scalar_prefetch = 0 : i64, scratch_operands = 4 : i64, tpu.core_type = #tpu.core_type<tc>, window_params = [{pipeline_mode = #tpu.pipeline_mode<synchronous>, transform_indices = @transform_0, window_bounds = array<i64: 2, 8, 8, 32>}, {pipeline_mode = #tpu.pipeline_mode<synchronous>, transform_indices = @transform_1, window_bounds = array<i64: 3, 288, 32>}, {pipeline_mode = #tpu.pipeline_mode<synchronous>, transform_indices = @transform_2, window_bounds = array<i64: 3, 1, 32>}, {pipeline_mode = #tpu.pipeline_mode<synchronous>, transform_indices = @transform_3, window_bounds = array<i64: 3, 1, 32>}, {pipeline_mode = #tpu.pipeline_mode<synchronous>, transform_indices = @transform_4, window_bounds = array<i64: 3, 1, 32>}, {pipeline_mode = #tpu.pipeline_mode<synchronous>, transform_indices = @transform_5, window_bounds = array<i64: 3, 32, 32>}, {pipeline_mode = #tpu.pipeline_mode<synchronous>, transform_indices = @transform_6, window_bounds = array<i64: 3, 1, 32>}, {pipeline_mode = #tpu.pipeline_mode<synchronous>, transform_indices = @transform_7, window_bounds = array<i64: 32, 32>}, {pipeline_mode = #tpu.pipeline_mode<synchronous>, transform_indices = @transform_8, window_bounds = array<i64: 1, 32>}, {pipeline_mode = #tpu.pipeline_mode<synchronous>, transform_indices = @transform_9, window_bounds = array<i64: 5, 288, 32>}, {pipeline_mode = #tpu.pipeline_mode<synchronous>, transform_indices = @transform_10, window_bounds = array<i64: 5, 1, 32>}, {pipeline_mode = #tpu.pipeline_mode<synchronous>, transform_indices = @transform_11, window_bounds = array<i64: 1, 32>}, {pipeline_mode = #tpu.pipeline_mode<synchronous>, transform_indices = @transform_12, window_bounds = array<i64: 1, 32>}, {pipeline_mode = #tpu.pipeline_mode<synchronous>, transform_indices = @transform_13, window_bounds = array<i64: 128, 32>}]} {
    %cst = arith.constant 0.000000e+00 : f32
    %0 = vector.broadcast %cst : f32 to vector<2x14x19x32xf32>
    %c0 = arith.constant 0 : index
    %c0_0 = arith.constant 0 : index
    %c0_1 = arith.constant 0 : index
    %c0_2 = arith.constant 0 : index
    %1 = vector.load %arg15[%c0, %c0_0, %c0_1, %c0_2] : memref<2x14x19x32xf32, #tpu.memory_space<vmem>>, vector<2x14x19x32xf32>
    tpu.vector_store %arg15[%c0, %c0_0, %c0_1, %c0_2], %0 {strides = array<i32>} : memref<2x14x19x32xf32, #tpu.memory_space<vmem>>, vector<2x14x19x32xf32>,
    %c0_3 = arith.constant 0 : index
    %c0_4 = arith.constant 0 : index
    %c0_5 = arith.constant 0 : index
    %c0_6 = arith.constant 0 : index
    %2 = vector.load %arg1[%c0_3, %c0_4, %c0_5, %c0_6] : memref<2x8x8x32xf32, #tpu.memory_space<vmem>>, vector<2x8x8x32xf32>
    %c0_7 = arith.constant 0 : index
    %c3 = arith.constant 3 : index
    %c8 = arith.constant 8 : index
    %c0_8 = arith.constant 0 : index
    %3 = vector.load %arg15[%c0_7, %c3, %c8, %c0_8] : memref<2x14x19x32xf32, #tpu.memory_space<vmem>>, vector<2x8x8x32xf32>
    tpu.vector_store %arg15[%c0_7, %c3, %c8, %c0_8], %2 {strides = array<i32>} : memref<2x14x19x32xf32, #tpu.memory_space<vmem>>, vector<2x8x8x32xf32>,
    %c0_9 = arith.constant 0 : index
    %c2 = arith.constant 2 : index
    %c7 = arith.constant 7 : index
    %c0_10 = arith.constant 0 : index
    %4 = vector.load %arg15[%c0_9, %c2, %c7, %c0_10] : memref<2x14x19x32xf32, #tpu.memory_space<vmem>>, vector<2x8x8x32xf32>
    %5 = vector.shape_cast %4 : vector<2x8x8x32xf32> to vector<128x32xf32>
    %6 = arith.truncf %5 : vector<128x32xf32> to vector<128x32xbf16>
    %c0_11 = arith.constant 0 : index
    %c0_12 = arith.constant 0 : index
    %7 = vector.load %arg16[%c0_11, %c0_12] : memref<128x288xbf16, #tpu.memory_space<vmem>>, vector<128x32xbf16>
    tpu.vector_store %arg16[%c0_11, %c0_12], %6 {strides = array<i32>} : memref<128x288xbf16, #tpu.memory_space<vmem>>, vector<128x32xbf16>,
    %c0_13 = arith.constant 0 : index
    %c2_14 = arith.constant 2 : index
    %c8_15 = arith.constant 8 : index
    %c0_16 = arith.constant 0 : index
    %8 = vector.load %arg15[%c0_13, %c2_14, %c8_15, %c0_16] : memref<2x14x19x32xf32, #tpu.memory_space<vmem>>, vector<2x8x8x32xf32>
    %9 = vector.shape_cast %8 : vector<2x8x8x32xf32> to vector<128x32xf32>
    %10 = arith.truncf %9 : vector<128x32xf32> to vector<128x32xbf16>
    %c0_17 = arith.constant 0 : index
    %c32 = arith.constant 32 : index
    %11 = vector.load %arg16[%c0_17, %c32] : memref<128x288xbf16, #tpu.memory_space<vmem>>, vector<128x32xbf16>
    tpu.vector_store %arg16[%c0_17, %c32], %10 {strides = array<i32>} : memref<128x288xbf16, #tpu.memory_space<vmem>>, vector<128x32xbf16>,
    %c0_18 = arith.constant 0 : index
    %c2_19 = arith.constant 2 : index
    %c9 = arith.constant 9 : index
    %c0_20 = arith.constant 0 : index
    %12 = vector.load %arg15[%c0_18, %c2_19, %c9, %c0_20] : memref<2x14x19x32xf32, #tpu.memory_space<vmem>>, vector<2x8x8x32xf32>
    %13 = vector.shape_cast %12 : vector<2x8x8x32xf32> to vector<128x32xf32>
    %14 = arith.truncf %13 : vector<128x32xf32> to vector<128x32xbf16>
    %c0_21 = arith.constant 0 : index
    %c64 = arith.constant 64 : index
    %15 = vector.load %arg16[%c0_21, %c64] : memref<128x288xbf16, #tpu.memory_space<vmem>>, vector<128x32xbf16>
    tpu.vector_store %arg16[%c0_21, %c64], %14 {strides = array<i32>} : memref<128x288xbf16, #tpu.memory_space<vmem>>, vector<128x32xbf16>,
    %c0_22 = arith.constant 0 : index
    %c3_23 = arith.constant 3 : index
    %c7_24 = arith.constant 7 : index
    %c0_25 = arith.constant 0 : index
    %16 = vector.load %arg15[%c0_22, %c3_23, %c7_24, %c0_25] : memref<2x14x19x32xf32, #tpu.memory_space<vmem>>, vector<2x8x8x32xf32>
    %17 = vector.shape_cast %16 : vector<2x8x8x32xf32> to vector<128x32xf32>
    %18 = arith.truncf %17 : vector<128x32xf32> to vector<128x32xbf16>
    %c0_26 = arith.constant 0 : index
    %c96 = arith.constant 96 : index
    %19 = vector.load %arg16[%c0_26, %c96] : memref<128x288xbf16, #tpu.memory_space<vmem>>, vector<128x32xbf16>
    tpu.vector_store %arg16[%c0_26, %c96], %18 {strides = array<i32>} : memref<128x288xbf16, #tpu.memory_space<vmem>>, vector<128x32xbf16>,
    %c0_27 = arith.constant 0 : index
    %c3_28 = arith.constant 3 : index
    %c8_29 = arith.constant 8 : index
    %c0_30 = arith.constant 0 : index
    %20 = vector.load %arg15[%c0_27, %c3_28, %c8_29, %c0_30] : memref<2x14x19x32xf32, #tpu.memory_space<vmem>>, vector<2x8x8x32xf32>
    %21 = vector.shape_cast %20 : vector<2x8x8x32xf32> to vector<128x32xf32>
    %22 = arith.truncf %21 : vector<128x32xf32> to vector<128x32xbf16>
    %c0_31 = arith.constant 0 : index
    %c128 = arith.constant 128 : index
    %23 = vector.load %arg16[%c0_31, %c128] : memref<128x288xbf16, #tpu.memory_space<vmem>>, vector<128x32xbf16>
    tpu.vector_store %arg16[%c0_31, %c128], %22 {strides = array<i32>} : memref<128x288xbf16, #tpu.memory_space<vmem>>, vector<128x32xbf16>,
    %c0_32 = arith.constant 0 : index
    %c3_33 = arith.constant 3 : index
    %c9_34 = arith.constant 9 : index
    %c0_35 = arith.constant 0 : index
    %24 = vector.load %arg15[%c0_32, %c3_33, %c9_34, %c0_35] : memref<2x14x19x32xf32, #tpu.memory_space<vmem>>, vector<2x8x8x32xf32>
    %25 = vector.shape_cast %24 : vector<2x8x8x32xf32> to vector<128x32xf32>
    %26 = arith.truncf %25 : vector<128x32xf32> to vector<128x32xbf16>
    %c0_36 = arith.constant 0 : index
    %c160 = arith.constant 160 : index
    %27 = vector.load %arg16[%c0_36, %c160] : memref<128x288xbf16, #tpu.memory_space<vmem>>, vector<128x32xbf16>
    tpu.vector_store %arg16[%c0_36, %c160], %26 {strides = array<i32>} : memref<128x288xbf16, #tpu.memory_space<vmem>>, vector<128x32xbf16>,
    %c0_37 = arith.constant 0 : index
    %c4 = arith.constant 4 : index
    %c7_38 = arith.constant 7 : index
    %c0_39 = arith.constant 0 : index
    %28 = vector.load %arg15[%c0_37, %c4, %c7_38, %c0_39] : memref<2x14x19x32xf32, #tpu.memory_space<vmem>>, vector<2x8x8x32xf32>
    %29 = vector.shape_cast %28 : vector<2x8x8x32xf32> to vector<128x32xf32>
    %30 = arith.truncf %29 : vector<128x32xf32> to vector<128x32xbf16>
    %c0_40 = arith.constant 0 : index
    %c192 = arith.constant 192 : index
    %31 = vector.load %arg16[%c0_40, %c192] : memref<128x288xbf16, #tpu.memory_space<vmem>>, vector<128x32xbf16>
    tpu.vector_store %arg16[%c0_40, %c192], %30 {strides = array<i32>} : memref<128x288xbf16, #tpu.memory_space<vmem>>, vector<128x32xbf16>,
    %c0_41 = arith.constant 0 : index
    %c4_42 = arith.constant 4 : index
    %c8_43 = arith.constant 8 : index
    %c0_44 = arith.constant 0 : index
    %32 = vector.load %arg15[%c0_41, %c4_42, %c8_43, %c0_44] : memref<2x14x19x32xf32, #tpu.memory_space<vmem>>, vector<2x8x8x32xf32>
    %33 = vector.shape_cast %32 : vector<2x8x8x32xf32> to vector<128x32xf32>
    %34 = arith.truncf %33 : vector<128x32xf32> to vector<128x32xbf16>
    %c0_45 = arith.constant 0 : index
    %c224 = arith.constant 224 : index
    %35 = vector.load %arg16[%c0_45, %c224] : memref<128x288xbf16, #tpu.memory_space<vmem>>, vector<128x32xbf16>
    tpu.vector_store %arg16[%c0_45, %c224], %34 {strides = array<i32>} : memref<128x288xbf16, #tpu.memory_space<vmem>>, vector<128x32xbf16>,
    %c0_46 = arith.constant 0 : index
    %c4_47 = arith.constant 4 : index
    %c9_48 = arith.constant 9 : index
    %c0_49 = arith.constant 0 : index
    %36 = vector.load %arg15[%c0_46, %c4_47, %c9_48, %c0_49] : memref<2x14x19x32xf32, #tpu.memory_space<vmem>>, vector<2x8x8x32xf32>
    %37 = vector.shape_cast %36 : vector<2x8x8x32xf32> to vector<128x32xf32>
    %38 = arith.truncf %37 : vector<128x32xf32> to vector<128x32xbf16>
    %c0_50 = arith.constant 0 : index
    %c256 = arith.constant 256 : index
    %39 = vector.load %arg16[%c0_50, %c256] : memref<128x288xbf16, #tpu.memory_space<vmem>>, vector<128x32xbf16>
    tpu.vector_store %arg16[%c0_50, %c256], %38 {strides = array<i32>} : memref<128x288xbf16, #tpu.memory_space<vmem>>, vector<128x32xbf16>,
    %c0_51 = arith.constant 0 : index
    %c0_52 = arith.constant 0 : index
    %c0_53 = arith.constant 0 : index
    %40 = vector.load %arg2[%c0_51, %c0_52, %c0_53] : memref<3x288x32xbf16, #tpu.memory_space<vmem>>, vector<1x288x32xbf16>
    %41 = vector.shape_cast %40 : vector<1x288x32xbf16> to vector<288x32xbf16>
    %c0_54 = arith.constant 0 : index
    %c0_55 = arith.constant 0 : index
    %c0_56 = arith.constant 0 : index
    %42 = vector.load %arg3[%c0_54, %c0_55, %c0_56] : memref<3x1x32xf32, #tpu.memory_space<vmem>>, vector<1x1x32xf32>
    %43 = vector.shape_cast %42 : vector<1x1x32xf32> to vector<1x32xf32>
    %c0_57 = arith.constant 0 : index
    %c0_58 = arith.constant 0 : index
    %44 = vector.load %arg16[%c0_57, %c0_58] : memref<128x288xbf16, #tpu.memory_space<vmem>>, vector<128x288xbf16>
    %cst_59 = arith.constant dense<0.000000e+00> : vector<128x32xf32>
    %45 = tpu.matmul %44, %41, %cst_59 {dimension_numbers = #tpu.dot_dimension_numbers<[1], [0], [0], [1], [0, 0, 1, 1], [], []>} : vector<128x288xbf16>, vector<288x32xbf16>, vector<128x32xf32> -> vector<128x32xf32>
    %46 = vector.broadcast %43 : vector<1x32xf32> to vector<128x32xf32>
    %47 = arith.addf %45, %46 : vector<128x32xf32>
    %cst_60 = arith.constant 0.000000e+00 : f32
    %48 = vector.broadcast %cst_60 : f32 to vector<128x32xf32>
    %49 = arith.maximumf %47, %48 : vector<128x32xf32>
    %c0_61 = arith.constant 0 : index
    %c0_62 = arith.constant 0 : index
    %c0_63 = arith.constant 0 : index
    %50 = vector.load %arg4[%c0_61, %c0_62, %c0_63] : memref<3x1x32xf32, #tpu.memory_space<vmem>>, vector<1x1x32xf32>
    %51 = vector.shape_cast %50 : vector<1x1x32xf32> to vector<1x32xf32>
    %c0_64 = arith.constant 0 : index
    %c0_65 = arith.constant 0 : index
    %c0_66 = arith.constant 0 : index
    %52 = vector.load %arg5[%c0_64, %c0_65, %c0_66] : memref<3x1x32xf32, #tpu.memory_space<vmem>>, vector<1x1x32xf32>
    %53 = vector.shape_cast %52 : vector<1x1x32xf32> to vector<1x32xf32>
    %cst_67 = arith.constant dense<0.000000e+00> : vector<128xf32>
    %54 = vector.multi_reduction <add>, %49, %cst_67 [1] : vector<128x32xf32> to vector<128xf32>
    %55 = vector.shape_cast %54 : vector<128xf32> to vector<128x1xf32>
    %cst_68 = arith.constant 3.200000e+01 : f32
    %56 = vector.broadcast %cst_68 : f32 to vector<128x1xf32>
    %57 = arith.divf %55, %56 : vector<128x1xf32>
    %58 = vector.broadcast %57 : vector<128x1xf32> to vector<128x32xf32>
    %59 = arith.subf %49, %58 : vector<128x32xf32>
    %60 = arith.mulf %59, %59 : vector<128x32xf32>
    %cst_69 = arith.constant dense<0.000000e+00> : vector<128xf32>
    %61 = vector.multi_reduction <add>, %60, %cst_69 [1] : vector<128x32xf32> to vector<128xf32>
    %62 = vector.shape_cast %61 : vector<128xf32> to vector<128x1xf32>
    %cst_70 = arith.constant 3.200000e+01 : f32
    %63 = vector.broadcast %cst_70 : f32 to vector<128x1xf32>
    %64 = arith.divf %62, %63 : vector<128x1xf32>
    %65 = vector.broadcast %57 : vector<128x1xf32> to vector<128x32xf32>
    %66 = arith.subf %49, %65 : vector<128x32xf32>
    %cst_71 = arith.constant 9.99999974E-6 : f32
    %67 = vector.broadcast %cst_71 : f32 to vector<128x1xf32>
    %68 = arith.addf %64, %67 : vector<128x1xf32>
    %69 = math.rsqrt %68 : vector<128x1xf32>
    %70 = vector.broadcast %69 : vector<128x1xf32> to vector<128x32xf32>
    %71 = arith.mulf %66, %70 : vector<128x32xf32>
    %72 = vector.broadcast %51 : vector<1x32xf32> to vector<128x32xf32>
    %73 = arith.mulf %71, %72 : vector<128x32xf32>
    %74 = vector.broadcast %53 : vector<1x32xf32> to vector<128x32xf32>
    %75 = arith.addf %73, %74 : vector<128x32xf32>
    %76 = arith.truncf %75 : vector<128x32xf32> to vector<128x32xbf16>
    %c0_72 = arith.constant 0 : index
    %c0_73 = arith.constant 0 : index
    %c0_74 = arith.constant 0 : index
    %77 = vector.load %arg6[%c0_72, %c0_73, %c0_74] : memref<3x32x32xbf16, #tpu.memory_space<vmem>>, vector<1x32x32xbf16>
    %78 = vector.shape_cast %77 : vector<1x32x32xbf16> to vector<32x32xbf16>
    %cst_75 = arith.constant dense<0.000000e+00> : vector<128x32xf32>
    %79 = tpu.matmul %76, %78, %cst_75 {dimension_numbers = #tpu.dot_dimension_numbers<[1], [0], [0], [1], [0, 0, 1, 1], [], []>} : vector<128x32xbf16>, vector<32x32xbf16>, vector<128x32xf32> -> vector<128x32xf32>
    %c0_76 = arith.constant 0 : index
    %c0_77 = arith.constant 0 : index
    %c0_78 = arith.constant 0 : index
    %80 = vector.load %arg7[%c0_76, %c0_77, %c0_78] : memref<3x1x32xf32, #tpu.memory_space<vmem>>, vector<1x1x32xf32>
    %81 = vector.shape_cast %80 : vector<1x1x32xf32> to vector<1x32xf32>
    %82 = vector.broadcast %81 : vector<1x32xf32> to vector<128x32xf32>
    %83 = arith.addf %79, %82 : vector<128x32xf32>
    %84 = vector.shape_cast %83 : vector<128x32xf32> to vector<2x64x32xf32>
    %c1 = arith.constant 1 : index
    %c0_79 = arith.constant 0 : index
    %c0_80 = arith.constant 0 : index
    %85 = vector.load %arg2[%c1, %c0_79, %c0_80] : memref<3x288x32xbf16, #tpu.memory_space<vmem>>, vector<1x288x32xbf16>
    %86 = vector.shape_cast %85 : vector<1x288x32xbf16> to vector<288x32xbf16>
    %c1_81 = arith.constant 1 : index
    %c0_82 = arith.constant 0 : index
    %c0_83 = arith.constant 0 : index
    %87 = vector.load %arg3[%c1_81, %c0_82, %c0_83] : memref<3x1x32xf32, #tpu.memory_space<vmem>>, vector<1x1x32xf32>
    %88 = vector.shape_cast %87 : vector<1x1x32xf32> to vector<1x32xf32>
    %c0_84 = arith.constant 0 : index
    %c0_85 = arith.constant 0 : index
    %89 = vector.load %arg16[%c0_84, %c0_85] : memref<128x288xbf16, #tpu.memory_space<vmem>>, vector<128x288xbf16>
    %cst_86 = arith.constant dense<0.000000e+00> : vector<128x32xf32>
    %90 = tpu.matmul %89, %86, %cst_86 {dimension_numbers = #tpu.dot_dimension_numbers<[1], [0], [0], [1], [0, 0, 1, 1], [], []>} : vector<128x288xbf16>, vector<288x32xbf16>, vector<128x32xf32> -> vector<128x32xf32>
    %91 = vector.broadcast %88 : vector<1x32xf32> to vector<128x32xf32>
    %92 = arith.addf %90, %91 : vector<128x32xf32>
    %cst_87 = arith.constant 0.000000e+00 : f32
    %93 = vector.broadcast %cst_87 : f32 to vector<128x32xf32>
    %94 = arith.maximumf %92, %93 : vector<128x32xf32>
    %c1_88 = arith.constant 1 : index
    %c0_89 = arith.constant 0 : index
    %c0_90 = arith.constant 0 : index
    %95 = vector.load %arg4[%c1_88, %c0_89, %c0_90] : memref<3x1x32xf32, #tpu.memory_space<vmem>>, vector<1x1x32xf32>
    %96 = vector.shape_cast %95 : vector<1x1x32xf32> to vector<1x32xf32>
    %c1_91 = arith.constant 1 : index
    %c0_92 = arith.constant 0 : index
    %c0_93 = arith.constant 0 : index
    %97 = vector.load %arg5[%c1_91, %c0_92, %c0_93] : memref<3x1x32xf32, #tpu.memory_space<vmem>>, vector<1x1x32xf32>
    %98 = vector.shape_cast %97 : vector<1x1x32xf32> to vector<1x32xf32>
    %cst_94 = arith.constant dense<0.000000e+00> : vector<128xf32>
    %99 = vector.multi_reduction <add>, %94, %cst_94 [1] : vector<128x32xf32> to vector<128xf32>
    %100 = vector.shape_cast %99 : vector<128xf32> to vector<128x1xf32>
    %cst_95 = arith.constant 3.200000e+01 : f32
    %101 = vector.broadcast %cst_95 : f32 to vector<128x1xf32>
    %102 = arith.divf %100, %101 : vector<128x1xf32>
    %103 = vector.broadcast %102 : vector<128x1xf32> to vector<128x32xf32>
    %104 = arith.subf %94, %103 : vector<128x32xf32>
    %105 = arith.mulf %104, %104 : vector<128x32xf32>
    %cst_96 = arith.constant dense<0.000000e+00> : vector<128xf32>
    %106 = vector.multi_reduction <add>, %105, %cst_96 [1] : vector<128x32xf32> to vector<128xf32>
    %107 = vector.shape_cast %106 : vector<128xf32> to vector<128x1xf32>
    %cst_97 = arith.constant 3.200000e+01 : f32
    %108 = vector.broadcast %cst_97 : f32 to vector<128x1xf32>
    %109 = arith.divf %107, %108 : vector<128x1xf32>
    %110 = vector.broadcast %102 : vector<128x1xf32> to vector<128x32xf32>
    %111 = arith.subf %94, %110 : vector<128x32xf32>
    %cst_98 = arith.constant 9.99999974E-6 : f32
    %112 = vector.broadcast %cst_98 : f32 to vector<128x1xf32>
    %113 = arith.addf %109, %112 : vector<128x1xf32>
    %114 = math.rsqrt %113 : vector<128x1xf32>
    %115 = vector.broadcast %114 : vector<128x1xf32> to vector<128x32xf32>
    %116 = arith.mulf %111, %115 : vector<128x32xf32>
    %117 = vector.broadcast %96 : vector<1x32xf32> to vector<128x32xf32>
    %118 = arith.mulf %116, %117 : vector<128x32xf32>
    %119 = vector.broadcast %98 : vector<1x32xf32> to vector<128x32xf32>
    %120 = arith.addf %118, %119 : vector<128x32xf32>
    %121 = arith.truncf %120 : vector<128x32xf32> to vector<128x32xbf16>
    %c1_99 = arith.constant 1 : index
    %c0_100 = arith.constant 0 : index
    %c0_101 = arith.constant 0 : index
    %122 = vector.load %arg6[%c1_99, %c0_100, %c0_101] : memref<3x32x32xbf16, #tpu.memory_space<vmem>>, vector<1x32x32xbf16>
    %123 = vector.shape_cast %122 : vector<1x32x32xbf16> to vector<32x32xbf16>
    %cst_102 = arith.constant dense<0.000000e+00> : vector<128x32xf32>
    %124 = tpu.matmul %121, %123, %cst_102 {dimension_numbers = #tpu.dot_dimension_numbers<[1], [0], [0], [1], [0, 0, 1, 1], [], []>} : vector<128x32xbf16>, vector<32x32xbf16>, vector<128x32xf32> -> vector<128x32xf32>
    %c1_103 = arith.constant 1 : index
    %c0_104 = arith.constant 0 : index
    %c0_105 = arith.constant 0 : index
    %125 = vector.load %arg7[%c1_103, %c0_104, %c0_105] : memref<3x1x32xf32, #tpu.memory_space<vmem>>, vector<1x1x32xf32>
    %126 = vector.shape_cast %125 : vector<1x1x32xf32> to vector<1x32xf32>
    %127 = vector.broadcast %126 : vector<1x32xf32> to vector<128x32xf32>
    %128 = arith.addf %124, %127 : vector<128x32xf32>
    %129 = vector.shape_cast %128 : vector<128x32xf32> to vector<2x64x32xf32>
    %c2_106 = arith.constant 2 : index
    %c0_107 = arith.constant 0 : index
    %c0_108 = arith.constant 0 : index
    %130 = vector.load %arg2[%c2_106, %c0_107, %c0_108] : memref<3x288x32xbf16, #tpu.memory_space<vmem>>, vector<1x288x32xbf16>
    %131 = vector.shape_cast %130 : vector<1x288x32xbf16> to vector<288x32xbf16>
    %c2_109 = arith.constant 2 : index
    %c0_110 = arith.constant 0 : index
    %c0_111 = arith.constant 0 : index
    %132 = vector.load %arg3[%c2_109, %c0_110, %c0_111] : memref<3x1x32xf32, #tpu.memory_space<vmem>>, vector<1x1x32xf32>
    %133 = vector.shape_cast %132 : vector<1x1x32xf32> to vector<1x32xf32>
    %c0_112 = arith.constant 0 : index
    %c0_113 = arith.constant 0 : index
    %134 = vector.load %arg16[%c0_112, %c0_113] : memref<128x288xbf16, #tpu.memory_space<vmem>>, vector<128x288xbf16>
    %cst_114 = arith.constant dense<0.000000e+00> : vector<128x32xf32>
    %135 = tpu.matmul %134, %131, %cst_114 {dimension_numbers = #tpu.dot_dimension_numbers<[1], [0], [0], [1], [0, 0, 1, 1], [], []>} : vector<128x288xbf16>, vector<288x32xbf16>, vector<128x32xf32> -> vector<128x32xf32>
    %136 = vector.broadcast %133 : vector<1x32xf32> to vector<128x32xf32>
    %137 = arith.addf %135, %136 : vector<128x32xf32>
    %cst_115 = arith.constant 0.000000e+00 : f32
    %138 = vector.broadcast %cst_115 : f32 to vector<128x32xf32>
    %139 = arith.maximumf %137, %138 : vector<128x32xf32>
    %c2_116 = arith.constant 2 : index
    %c0_117 = arith.constant 0 : index
    %c0_118 = arith.constant 0 : index
    %140 = vector.load %arg4[%c2_116, %c0_117, %c0_118] : memref<3x1x32xf32, #tpu.memory_space<vmem>>, vector<1x1x32xf32>
    %141 = vector.shape_cast %140 : vector<1x1x32xf32> to vector<1x32xf32>
    %c2_119 = arith.constant 2 : index
    %c0_120 = arith.constant 0 : index
    %c0_121 = arith.constant 0 : index
    %142 = vector.load %arg5[%c2_119, %c0_120, %c0_121] : memref<3x1x32xf32, #tpu.memory_space<vmem>>, vector<1x1x32xf32>
    %143 = vector.shape_cast %142 : vector<1x1x32xf32> to vector<1x32xf32>
    %cst_122 = arith.constant dense<0.000000e+00> : vector<128xf32>
    %144 = vector.multi_reduction <add>, %139, %cst_122 [1] : vector<128x32xf32> to vector<128xf32>
    %145 = vector.shape_cast %144 : vector<128xf32> to vector<128x1xf32>
    %cst_123 = arith.constant 3.200000e+01 : f32
    %146 = vector.broadcast %cst_123 : f32 to vector<128x1xf32>
    %147 = arith.divf %145, %146 : vector<128x1xf32>
    %148 = vector.broadcast %147 : vector<128x1xf32> to vector<128x32xf32>
    %149 = arith.subf %139, %148 : vector<128x32xf32>
    %150 = arith.mulf %149, %149 : vector<128x32xf32>
    %cst_124 = arith.constant dense<0.000000e+00> : vector<128xf32>
    %151 = vector.multi_reduction <add>, %150, %cst_124 [1] : vector<128x32xf32> to vector<128xf32>
    %152 = vector.shape_cast %151 : vector<128xf32> to vector<128x1xf32>
    %cst_125 = arith.constant 3.200000e+01 : f32
    %153 = vector.broadcast %cst_125 : f32 to vector<128x1xf32>
    %154 = arith.divf %152, %153 : vector<128x1xf32>
    %155 = vector.broadcast %147 : vector<128x1xf32> to vector<128x32xf32>
    %156 = arith.subf %139, %155 : vector<128x32xf32>
    %cst_126 = arith.constant 9.99999974E-6 : f32
    %157 = vector.broadcast %cst_126 : f32 to vector<128x1xf32>
    %158 = arith.addf %154, %157 : vector<128x1xf32>
    %159 = math.rsqrt %158 : vector<128x1xf32>
    %160 = vector.broadcast %159 : vector<128x1xf32> to vector<128x32xf32>
    %161 = arith.mulf %156, %160 : vector<128x32xf32>
    %162 = vector.broadcast %141 : vector<1x32xf32> to vector<128x32xf32>
    %163 = arith.mulf %161, %162 : vector<128x32xf32>
    %164 = vector.broadcast %143 : vector<1x32xf32> to vector<128x32xf32>
    %165 = arith.addf %163, %164 : vector<128x32xf32>
    %166 = arith.truncf %165 : vector<128x32xf32> to vector<128x32xbf16>
    %c2_127 = arith.constant 2 : index
    %c0_128 = arith.constant 0 : index
    %c0_129 = arith.constant 0 : index
    %167 = vector.load %arg6[%c2_127, %c0_128, %c0_129] : memref<3x32x32xbf16, #tpu.memory_space<vmem>>, vector<1x32x32xbf16>
    %168 = vector.shape_cast %167 : vector<1x32x32xbf16> to vector<32x32xbf16>
    %cst_130 = arith.constant dense<0.000000e+00> : vector<128x32xf32>
    %169 = tpu.matmul %166, %168, %cst_130 {dimension_numbers = #tpu.dot_dimension_numbers<[1], [0], [0], [1], [0, 0, 1, 1], [], []>} : vector<128x32xbf16>, vector<32x32xbf16>, vector<128x32xf32> -> vector<128x32xf32>
    %c2_131 = arith.constant 2 : index
    %c0_132 = arith.constant 0 : index
    %c0_133 = arith.constant 0 : index
    %170 = vector.load %arg7[%c2_131, %c0_132, %c0_133] : memref<3x1x32xf32, #tpu.memory_space<vmem>>, vector<1x1x32xf32>
    %171 = vector.shape_cast %170 : vector<1x1x32xf32> to vector<1x32xf32>
    %172 = vector.broadcast %171 : vector<1x32xf32> to vector<128x32xf32>
    %173 = arith.addf %169, %172 : vector<128x32xf32>
    %174 = vector.shape_cast %173 : vector<128x32xf32> to vector<2x64x32xf32>
    %175 = arith.truncf %84 : vector<2x64x32xf32> to vector<2x64x32xbf16>
    %176 = arith.truncf %129 : vector<2x64x32xf32> to vector<2x64x32xbf16>
    "tpu.trace_start"() <{level = 10 : i32, message = "bqd,bkd->bqk"}> : () -> ()
    %cst_134 = arith.constant dense<0.000000e+00> : vector<2x64x64xf32>
    %177 = tpu.matmul %175, %176, %cst_134 {dimension_numbers = #tpu.dot_dimension_numbers<[2], [2], [1], [1], [0, 0, 0, 1, 1, 1], [0], [0]>} : vector<2x64x32xbf16>, vector<2x64x32xbf16>, vector<2x64x64xf32> -> vector<2x64x64xf32>
    "tpu.trace_stop"() : () -> ()
    %cst_135 = arith.constant dense<0xFF800000> : vector<2x64xf32>
    %178 = vector.multi_reduction <maximumf>, %177, %cst_135 [2] : vector<2x64x64xf32> to vector<2x64xf32>
    %179 = vector.shape_cast %178 : vector<2x64xf32> to vector<2x64x1xf32>
    %180 = vector.broadcast %179 : vector<2x64x1xf32> to vector<2x64x64xf32>
    %181 = arith.subf %177, %180 : vector<2x64x64xf32>
    %182 = math.exp %181 : vector<2x64x64xf32>
    %cst_136 = arith.constant dense<0.000000e+00> : vector<2x64xf32>
    %183 = vector.multi_reduction <add>, %182, %cst_136 [2] : vector<2x64x64xf32> to vector<2x64xf32>
    %184 = vector.shape_cast %183 : vector<2x64xf32> to vector<2x64x1xf32>
    %185 = tpu.reciprocal %184 : vector<2x64x1xf32> -> vector<2x64x1xf32>
    %186 = vector.broadcast %185 : vector<2x64x1xf32> to vector<2x64x64xf32>
    %187 = arith.mulf %182, %186 : vector<2x64x64xf32>
    "tpu.trace_start"() <{level = 10 : i32, message = "bqk,bkd->bqd"}> : () -> ()
    %cst_137 = arith.constant dense<0.000000e+00> : vector<2x64x32xf32>
    %188 = tpu.matmul %187, %174, %cst_137 {dimension_numbers = #tpu.dot_dimension_numbers<[2], [1], [1], [2], [0, 0, 0, 1, 1, 2], [0], [0]>} : vector<2x64x64xf32>, vector<2x64x32xf32>, vector<2x64x32xf32> -> vector<2x64x32xf32>
    "tpu.trace_stop"() : () -> ()
    %189 = vector.shape_cast %188 : vector<2x64x32xf32> to vector<128x32xf32>
    %190 = arith.truncf %189 : vector<128x32xf32> to vector<128x32xbf16>
    %c0_138 = arith.constant 0 : index
    %c0_139 = arith.constant 0 : index
    %191 = vector.load %arg8[%c0_138, %c0_139] : memref<32x32xbf16, #tpu.memory_space<vmem>>, vector<32x32xbf16>
    %cst_140 = arith.constant dense<0.000000e+00> : vector<128x32xf32>
    %192 = tpu.matmul %190, %191, %cst_140 {dimension_numbers = #tpu.dot_dimension_numbers<[1], [0], [0], [1], [0, 0, 1, 1], [], []>} : vector<128x32xbf16>, vector<32x32xbf16>, vector<128x32xf32> -> vector<128x32xf32>
    %c0_141 = arith.constant 0 : index
    %c0_142 = arith.constant 0 : index
    %193 = vector.load %arg9[%c0_141, %c0_142] : memref<1x32xf32, #tpu.memory_space<vmem>>, vector<1x32xf32>
    %194 = vector.broadcast %193 : vector<1x32xf32> to vector<128x32xf32>
    %195 = arith.addf %192, %194 : vector<128x32xf32>
    %196 = vector.shape_cast %195 : vector<128x32xf32> to vector<2x8x8x32xf32>
    %c0_143 = arith.constant 0 : index
    %c3_144 = arith.constant 3 : index
    %c8_145 = arith.constant 8 : index
    %c0_146 = arith.constant 0 : index
    %197 = vector.load %arg15[%c0_143, %c3_144, %c8_145, %c0_146] : memref<2x14x19x32xf32, #tpu.memory_space<vmem>>, vector<2x8x8x32xf32>
    tpu.vector_store %arg15[%c0_143, %c3_144, %c8_145, %c0_146], %196 {strides = array<i32>} : memref<2x14x19x32xf32, #tpu.memory_space<vmem>>, vector<2x8x8x32xf32>,
    %c0_147 = arith.constant 0 : index
    %c2_148 = arith.constant 2 : index
    %c7_149 = arith.constant 7 : index
    %c0_150 = arith.constant 0 : index
    %198 = vector.load %arg15[%c0_147, %c2_148, %c7_149, %c0_150] : memref<2x14x19x32xf32, #tpu.memory_space<vmem>>, vector<2x8x8x32xf32>
    %199 = vector.shape_cast %198 : vector<2x8x8x32xf32> to vector<128x32xf32>
    %200 = arith.truncf %199 : vector<128x32xf32> to vector<128x32xbf16>
    %c0_151 = arith.constant 0 : index
    %c0_152 = arith.constant 0 : index
    %201 = vector.load %arg16[%c0_151, %c0_152] : memref<128x288xbf16, #tpu.memory_space<vmem>>, vector<128x32xbf16>
    tpu.vector_store %arg16[%c0_151, %c0_152], %200 {strides = array<i32>} : memref<128x288xbf16, #tpu.memory_space<vmem>>, vector<128x32xbf16>,
    %c0_153 = arith.constant 0 : index
    %c2_154 = arith.constant 2 : index
    %c8_155 = arith.constant 8 : index
    %c0_156 = arith.constant 0 : index
    %202 = vector.load %arg15[%c0_153, %c2_154, %c8_155, %c0_156] : memref<2x14x19x32xf32, #tpu.memory_space<vmem>>, vector<2x8x8x32xf32>
    %203 = vector.shape_cast %202 : vector<2x8x8x32xf32> to vector<128x32xf32>
    %204 = arith.truncf %203 : vector<128x32xf32> to vector<128x32xbf16>
    %c0_157 = arith.constant 0 : index
    %c32_158 = arith.constant 32 : index
    %205 = vector.load %arg16[%c0_157, %c32_158] : memref<128x288xbf16, #tpu.memory_space<vmem>>, vector<128x32xbf16>
    tpu.vector_store %arg16[%c0_157, %c32_158], %204 {strides = array<i32>} : memref<128x288xbf16, #tpu.memory_space<vmem>>, vector<128x32xbf16>,
    %c0_159 = arith.constant 0 : index
    %c2_160 = arith.constant 2 : index
    %c9_161 = arith.constant 9 : index
    %c0_162 = arith.constant 0 : index
    %206 = vector.load %arg15[%c0_159, %c2_160, %c9_161, %c0_162] : memref<2x14x19x32xf32, #tpu.memory_space<vmem>>, vector<2x8x8x32xf32>
    %207 = vector.shape_cast %206 : vector<2x8x8x32xf32> to vector<128x32xf32>
    %208 = arith.truncf %207 : vector<128x32xf32> to vector<128x32xbf16>
    %c0_163 = arith.constant 0 : index
    %c64_164 = arith.constant 64 : index
    %209 = vector.load %arg16[%c0_163, %c64_164] : memref<128x288xbf16, #tpu.memory_space<vmem>>, vector<128x32xbf16>
    tpu.vector_store %arg16[%c0_163, %c64_164], %208 {strides = array<i32>} : memref<128x288xbf16, #tpu.memory_space<vmem>>, vector<128x32xbf16>,
    %c0_165 = arith.constant 0 : index
    %c3_166 = arith.constant 3 : index
    %c7_167 = arith.constant 7 : index
    %c0_168 = arith.constant 0 : index
    %210 = vector.load %arg15[%c0_165, %c3_166, %c7_167, %c0_168] : memref<2x14x19x32xf32, #tpu.memory_space<vmem>>, vector<2x8x8x32xf32>
    %211 = vector.shape_cast %210 : vector<2x8x8x32xf32> to vector<128x32xf32>
    %212 = arith.truncf %211 : vector<128x32xf32> to vector<128x32xbf16>
    %c0_169 = arith.constant 0 : index
    %c96_170 = arith.constant 96 : index
    %213 = vector.load %arg16[%c0_169, %c96_170] : memref<128x288xbf16, #tpu.memory_space<vmem>>, vector<128x32xbf16>
    tpu.vector_store %arg16[%c0_169, %c96_170], %212 {strides = array<i32>} : memref<128x288xbf16, #tpu.memory_space<vmem>>, vector<128x32xbf16>,
    %c0_171 = arith.constant 0 : index
    %c3_172 = arith.constant 3 : index
    %c8_173 = arith.constant 8 : index
    %c0_174 = arith.constant 0 : index
    %214 = vector.load %arg15[%c0_171, %c3_172, %c8_173, %c0_174] : memref<2x14x19x32xf32, #tpu.memory_space<vmem>>, vector<2x8x8x32xf32>
    %215 = vector.shape_cast %214 : vector<2x8x8x32xf32> to vector<128x32xf32>
    %216 = arith.truncf %215 : vector<128x32xf32> to vector<128x32xbf16>
    %c0_175 = arith.constant 0 : index
    %c128_176 = arith.constant 128 : index
    %217 = vector.load %arg16[%c0_175, %c128_176] : memref<128x288xbf16, #tpu.memory_space<vmem>>, vector<128x32xbf16>
    tpu.vector_store %arg16[%c0_175, %c128_176], %216 {strides = array<i32>} : memref<128x288xbf16, #tpu.memory_space<vmem>>, vector<128x32xbf16>,
    %c0_177 = arith.constant 0 : index
    %c3_178 = arith.constant 3 : index
    %c9_179 = arith.constant 9 : index
    %c0_180 = arith.constant 0 : index
    %218 = vector.load %arg15[%c0_177, %c3_178, %c9_179, %c0_180] : memref<2x14x19x32xf32, #tpu.memory_space<vmem>>, vector<2x8x8x32xf32>
    %219 = vector.shape_cast %218 : vector<2x8x8x32xf32> to vector<128x32xf32>
    %220 = arith.truncf %219 : vector<128x32xf32> to vector<128x32xbf16>
    %c0_181 = arith.constant 0 : index
    %c160_182 = arith.constant 160 : index
    %221 = vector.load %arg16[%c0_181, %c160_182] : memref<128x288xbf16, #tpu.memory_space<vmem>>, vector<128x32xbf16>
    tpu.vector_store %arg16[%c0_181, %c160_182], %220 {strides = array<i32>} : memref<128x288xbf16, #tpu.memory_space<vmem>>, vector<128x32xbf16>,
    %c0_183 = arith.constant 0 : index
    %c4_184 = arith.constant 4 : index
    %c7_185 = arith.constant 7 : index
    %c0_186 = arith.constant 0 : index
    %222 = vector.load %arg15[%c0_183, %c4_184, %c7_185, %c0_186] : memref<2x14x19x32xf32, #tpu.memory_space<vmem>>, vector<2x8x8x32xf32>
    %223 = vector.shape_cast %222 : vector<2x8x8x32xf32> to vector<128x32xf32>
    %224 = arith.truncf %223 : vector<128x32xf32> to vector<128x32xbf16>
    %c0_187 = arith.constant 0 : index
    %c192_188 = arith.constant 192 : index
    %225 = vector.load %arg16[%c0_187, %c192_188] : memref<128x288xbf16, #tpu.memory_space<vmem>>, vector<128x32xbf16>
    tpu.vector_store %arg16[%c0_187, %c192_188], %224 {strides = array<i32>} : memref<128x288xbf16, #tpu.memory_space<vmem>>, vector<128x32xbf16>,
    %c0_189 = arith.constant 0 : index
    %c4_190 = arith.constant 4 : index
    %c8_191 = arith.constant 8 : index
    %c0_192 = arith.constant 0 : index
    %226 = vector.load %arg15[%c0_189, %c4_190, %c8_191, %c0_192] : memref<2x14x19x32xf32, #tpu.memory_space<vmem>>, vector<2x8x8x32xf32>
    %227 = vector.shape_cast %226 : vector<2x8x8x32xf32> to vector<128x32xf32>
    %228 = arith.truncf %227 : vector<128x32xf32> to vector<128x32xbf16>
    %c0_193 = arith.constant 0 : index
    %c224_194 = arith.constant 224 : index
    %229 = vector.load %arg16[%c0_193, %c224_194] : memref<128x288xbf16, #tpu.memory_space<vmem>>, vector<128x32xbf16>
    tpu.vector_store %arg16[%c0_193, %c224_194], %228 {strides = array<i32>} : memref<128x288xbf16, #tpu.memory_space<vmem>>, vector<128x32xbf16>,
    %c0_195 = arith.constant 0 : index
    %c4_196 = arith.constant 4 : index
    %c9_197 = arith.constant 9 : index
    %c0_198 = arith.constant 0 : index
    %230 = vector.load %arg15[%c0_195, %c4_196, %c9_197, %c0_198] : memref<2x14x19x32xf32, #tpu.memory_space<vmem>>, vector<2x8x8x32xf32>
    %231 = vector.shape_cast %230 : vector<2x8x8x32xf32> to vector<128x32xf32>
    %232 = arith.truncf %231 : vector<128x32xf32> to vector<128x32xbf16>
    %c0_199 = arith.constant 0 : index
    %c256_200 = arith.constant 256 : index
    %233 = vector.load %arg16[%c0_199, %c256_200] : memref<128x288xbf16, #tpu.memory_space<vmem>>, vector<128x32xbf16>
    tpu.vector_store %arg16[%c0_199, %c256_200], %232 {strides = array<i32>} : memref<128x288xbf16, #tpu.memory_space<vmem>>, vector<128x32xbf16>,
    %c0_201 = arith.constant 0 : index
    %c0_202 = arith.constant 0 : index
    %c0_203 = arith.constant 0 : index
    %234 = vector.load %arg10[%c0_201, %c0_202, %c0_203] : memref<5x288x32xbf16, #tpu.memory_space<vmem>>, vector<1x288x32xbf16>
    %235 = vector.shape_cast %234 : vector<1x288x32xbf16> to vector<288x32xbf16>
    %c0_204 = arith.constant 0 : index
    %c0_205 = arith.constant 0 : index
    %c0_206 = arith.constant 0 : index
    %236 = vector.load %arg11[%c0_204, %c0_205, %c0_206] : memref<5x1x32xf32, #tpu.memory_space<vmem>>, vector<1x1x32xf32>
    %237 = vector.shape_cast %236 : vector<1x1x32xf32> to vector<1x32xf32>
    %c0_207 = arith.constant 0 : index
    %c0_208 = arith.constant 0 : index
    %238 = vector.load %arg16[%c0_207, %c0_208] : memref<128x288xbf16, #tpu.memory_space<vmem>>, vector<128x288xbf16>
    %cst_209 = arith.constant dense<0.000000e+00> : vector<128x32xf32>
    %239 = tpu.matmul %238, %235, %cst_209 {dimension_numbers = #tpu.dot_dimension_numbers<[1], [0], [0], [1], [0, 0, 1, 1], [], []>} : vector<128x288xbf16>, vector<288x32xbf16>, vector<128x32xf32> -> vector<128x32xf32>
    %240 = vector.broadcast %237 : vector<1x32xf32> to vector<128x32xf32>
    %241 = arith.addf %239, %240 : vector<128x32xf32>
    %c0_210 = arith.constant 0 : index
    %c0_211 = arith.constant 0 : index
    %c0_212 = arith.constant 0 : index
    %c0_213 = arith.constant 0 : index
    %242 = vector.load %arg1[%c0_210, %c0_211, %c0_212, %c0_213] : memref<2x8x8x32xf32, #tpu.memory_space<vmem>>, vector<2x8x8x32xf32>
    %243 = vector.shape_cast %242 : vector<2x8x8x32xf32> to vector<128x32xf32>
    %244 = arith.addf %241, %243 : vector<128x32xf32>
    %c0_214 = arith.constant 0 : index
    %c0_215 = arith.constant 0 : index
    %245 = vector.load %arg17[%c0_214, %c0_215] : memref<128x32xf32, #tpu.memory_space<vmem>>, vector<128x32xf32>
    tpu.vector_store %arg17[%c0_214, %c0_215], %244 {strides = array<i32>} : memref<128x32xf32, #tpu.memory_space<vmem>>, vector<128x32xf32>,
    %c0_216 = arith.constant 0 : index
    %c0_217 = arith.constant 0 : index
    %246 = vector.load %arg12[%c0_216, %c0_217] : memref<1x32xf32, #tpu.memory_space<vmem>>, vector<1x32xf32>
    %c0_218 = arith.constant 0 : index
    %c0_219 = arith.constant 0 : index
    %247 = vector.load %arg13[%c0_218, %c0_219] : memref<1x32xf32, #tpu.memory_space<vmem>>, vector<1x32xf32>
    %cst_220 = arith.constant dense<0.000000e+00> : vector<128xf32>
    %248 = vector.multi_reduction <add>, %244, %cst_220 [1] : vector<128x32xf32> to vector<128xf32>
    %249 = vector.shape_cast %248 : vector<128xf32> to vector<128x1xf32>
    %cst_221 = arith.constant 3.200000e+01 : f32
    %250 = vector.broadcast %cst_221 : f32 to vector<128x1xf32>
    %251 = arith.divf %249, %250 : vector<128x1xf32>
    %252 = vector.broadcast %251 : vector<128x1xf32> to vector<128x32xf32>
    %253 = arith.subf %244, %252 : vector<128x32xf32>
    %254 = arith.mulf %253, %253 : vector<128x32xf32>
    %cst_222 = arith.constant dense<0.000000e+00> : vector<128xf32>
    %255 = vector.multi_reduction <add>, %254, %cst_222 [1] : vector<128x32xf32> to vector<128xf32>
    %256 = vector.shape_cast %255 : vector<128xf32> to vector<128x1xf32>
    %cst_223 = arith.constant 3.200000e+01 : f32
    %257 = vector.broadcast %cst_223 : f32 to vector<128x1xf32>
    %258 = arith.divf %256, %257 : vector<128x1xf32>
    %259 = vector.broadcast %251 : vector<128x1xf32> to vector<128x32xf32>
    %260 = arith.subf %244, %259 : vector<128x32xf32>
    %cst_224 = arith.constant 9.99999974E-6 : f32
    %261 = vector.broadcast %cst_224 : f32 to vector<128x1xf32>
    %262 = arith.addf %258, %261 : vector<128x1xf32>
    %263 = math.rsqrt %262 : vector<128x1xf32>
    %264 = vector.broadcast %263 : vector<128x1xf32> to vector<128x32xf32>
    %265 = arith.mulf %260, %264 : vector<128x32xf32>
    %266 = vector.broadcast %246 : vector<1x32xf32> to vector<128x32xf32>
    %267 = arith.mulf %265, %266 : vector<128x32xf32>
    %268 = vector.broadcast %247 : vector<1x32xf32> to vector<128x32xf32>
    %269 = arith.addf %267, %268 : vector<128x32xf32>
    %270 = vector.shape_cast %269 : vector<128x32xf32> to vector<2x8x8x32xf32>
    %c0_225 = arith.constant 0 : index
    %c3_226 = arith.constant 3 : index
    %c8_227 = arith.constant 8 : index
    %c0_228 = arith.constant 0 : index
    %271 = vector.load %arg15[%c0_225, %c3_226, %c8_227, %c0_228] : memref<2x14x19x32xf32, #tpu.memory_space<vmem>>, vector<2x8x8x32xf32>
    tpu.vector_store %arg15[%c0_225, %c3_226, %c8_227, %c0_228], %270 {strides = array<i32>} : memref<2x14x19x32xf32, #tpu.memory_space<vmem>>, vector<2x8x8x32xf32>,
    %c0_229 = arith.constant 0 : index
    %c2_230 = arith.constant 2 : index
    %c7_231 = arith.constant 7 : index
    %c0_232 = arith.constant 0 : index
    %272 = vector.load %arg15[%c0_229, %c2_230, %c7_231, %c0_232] : memref<2x14x19x32xf32, #tpu.memory_space<vmem>>, vector<2x8x8x32xf32>
    %273 = vector.shape_cast %272 : vector<2x8x8x32xf32> to vector<128x32xf32>
    %274 = arith.truncf %273 : vector<128x32xf32> to vector<128x32xbf16>
    %c0_233 = arith.constant 0 : index
    %c0_234 = arith.constant 0 : index
    %275 = vector.load %arg16[%c0_233, %c0_234] : memref<128x288xbf16, #tpu.memory_space<vmem>>, vector<128x32xbf16>
    tpu.vector_store %arg16[%c0_233, %c0_234], %274 {strides = array<i32>} : memref<128x288xbf16, #tpu.memory_space<vmem>>, vector<128x32xbf16>,
    %c0_235 = arith.constant 0 : index
    %c2_236 = arith.constant 2 : index
    %c8_237 = arith.constant 8 : index
    %c0_238 = arith.constant 0 : index
    %276 = vector.load %arg15[%c0_235, %c2_236, %c8_237, %c0_238] : memref<2x14x19x32xf32, #tpu.memory_space<vmem>>, vector<2x8x8x32xf32>
    %277 = vector.shape_cast %276 : vector<2x8x8x32xf32> to vector<128x32xf32>
    %278 = arith.truncf %277 : vector<128x32xf32> to vector<128x32xbf16>
    %c0_239 = arith.constant 0 : index
    %c32_240 = arith.constant 32 : index
    %279 = vector.load %arg16[%c0_239, %c32_240] : memref<128x288xbf16, #tpu.memory_space<vmem>>, vector<128x32xbf16>
    tpu.vector_store %arg16[%c0_239, %c32_240], %278 {strides = array<i32>} : memref<128x288xbf16, #tpu.memory_space<vmem>>, vector<128x32xbf16>,
    %c0_241 = arith.constant 0 : index
    %c2_242 = arith.constant 2 : index
    %c9_243 = arith.constant 9 : index
    %c0_244 = arith.constant 0 : index
    %280 = vector.load %arg15[%c0_241, %c2_242, %c9_243, %c0_244] : memref<2x14x19x32xf32, #tpu.memory_space<vmem>>, vector<2x8x8x32xf32>
    %281 = vector.shape_cast %280 : vector<2x8x8x32xf32> to vector<128x32xf32>
    %282 = arith.truncf %281 : vector<128x32xf32> to vector<128x32xbf16>
    %c0_245 = arith.constant 0 : index
    %c64_246 = arith.constant 64 : index
    %283 = vector.load %arg16[%c0_245, %c64_246] : memref<128x288xbf16, #tpu.memory_space<vmem>>, vector<128x32xbf16>
    tpu.vector_store %arg16[%c0_245, %c64_246], %282 {strides = array<i32>} : memref<128x288xbf16, #tpu.memory_space<vmem>>, vector<128x32xbf16>,
    %c0_247 = arith.constant 0 : index
    %c3_248 = arith.constant 3 : index
    %c7_249 = arith.constant 7 : index
    %c0_250 = arith.constant 0 : index
    %284 = vector.load %arg15[%c0_247, %c3_248, %c7_249, %c0_250] : memref<2x14x19x32xf32, #tpu.memory_space<vmem>>, vector<2x8x8x32xf32>
    %285 = vector.shape_cast %284 : vector<2x8x8x32xf32> to vector<128x32xf32>
    %286 = arith.truncf %285 : vector<128x32xf32> to vector<128x32xbf16>
    %c0_251 = arith.constant 0 : index
    %c96_252 = arith.constant 96 : index
    %287 = vector.load %arg16[%c0_251, %c96_252] : memref<128x288xbf16, #tpu.memory_space<vmem>>, vector<128x32xbf16>
    tpu.vector_store %arg16[%c0_251, %c96_252], %286 {strides = array<i32>} : memref<128x288xbf16, #tpu.memory_space<vmem>>, vector<128x32xbf16>,
    %c0_253 = arith.constant 0 : index
    %c3_254 = arith.constant 3 : index
    %c8_255 = arith.constant 8 : index
    %c0_256 = arith.constant 0 : index
    %288 = vector.load %arg15[%c0_253, %c3_254, %c8_255, %c0_256] : memref<2x14x19x32xf32, #tpu.memory_space<vmem>>, vector<2x8x8x32xf32>
    %289 = vector.shape_cast %288 : vector<2x8x8x32xf32> to vector<128x32xf32>
    %290 = arith.truncf %289 : vector<128x32xf32> to vector<128x32xbf16>
    %c0_257 = arith.constant 0 : index
    %c128_258 = arith.constant 128 : index
    %291 = vector.load %arg16[%c0_257, %c128_258] : memref<128x288xbf16, #tpu.memory_space<vmem>>, vector<128x32xbf16>
    tpu.vector_store %arg16[%c0_257, %c128_258], %290 {strides = array<i32>} : memref<128x288xbf16, #tpu.memory_space<vmem>>, vector<128x32xbf16>,
    %c0_259 = arith.constant 0 : index
    %c3_260 = arith.constant 3 : index
    %c9_261 = arith.constant 9 : index
    %c0_262 = arith.constant 0 : index
    %292 = vector.load %arg15[%c0_259, %c3_260, %c9_261, %c0_262] : memref<2x14x19x32xf32, #tpu.memory_space<vmem>>, vector<2x8x8x32xf32>
    %293 = vector.shape_cast %292 : vector<2x8x8x32xf32> to vector<128x32xf32>
    %294 = arith.truncf %293 : vector<128x32xf32> to vector<128x32xbf16>
    %c0_263 = arith.constant 0 : index
    %c160_264 = arith.constant 160 : index
    %295 = vector.load %arg16[%c0_263, %c160_264] : memref<128x288xbf16, #tpu.memory_space<vmem>>, vector<128x32xbf16>
    tpu.vector_store %arg16[%c0_263, %c160_264], %294 {strides = array<i32>} : memref<128x288xbf16, #tpu.memory_space<vmem>>, vector<128x32xbf16>,
    %c0_265 = arith.constant 0 : index
    %c4_266 = arith.constant 4 : index
    %c7_267 = arith.constant 7 : index
    %c0_268 = arith.constant 0 : index
    %296 = vector.load %arg15[%c0_265, %c4_266, %c7_267, %c0_268] : memref<2x14x19x32xf32, #tpu.memory_space<vmem>>, vector<2x8x8x32xf32>
    %297 = vector.shape_cast %296 : vector<2x8x8x32xf32> to vector<128x32xf32>
    %298 = arith.truncf %297 : vector<128x32xf32> to vector<128x32xbf16>
    %c0_269 = arith.constant 0 : index
    %c192_270 = arith.constant 192 : index
    %299 = vector.load %arg16[%c0_269, %c192_270] : memref<128x288xbf16, #tpu.memory_space<vmem>>, vector<128x32xbf16>
    tpu.vector_store %arg16[%c0_269, %c192_270], %298 {strides = array<i32>} : memref<128x288xbf16, #tpu.memory_space<vmem>>, vector<128x32xbf16>,
    %c0_271 = arith.constant 0 : index
    %c4_272 = arith.constant 4 : index
    %c8_273 = arith.constant 8 : index
    %c0_274 = arith.constant 0 : index
    %300 = vector.load %arg15[%c0_271, %c4_272, %c8_273, %c0_274] : memref<2x14x19x32xf32, #tpu.memory_space<vmem>>, vector<2x8x8x32xf32>
    %301 = vector.shape_cast %300 : vector<2x8x8x32xf32> to vector<128x32xf32>
    %302 = arith.truncf %301 : vector<128x32xf32> to vector<128x32xbf16>
    %c0_275 = arith.constant 0 : index
    %c224_276 = arith.constant 224 : index
    %303 = vector.load %arg16[%c0_275, %c224_276] : memref<128x288xbf16, #tpu.memory_space<vmem>>, vector<128x32xbf16>
    tpu.vector_store %arg16[%c0_275, %c224_276], %302 {strides = array<i32>} : memref<128x288xbf16, #tpu.memory_space<vmem>>, vector<128x32xbf16>,
    %c0_277 = arith.constant 0 : index
    %c4_278 = arith.constant 4 : index
    %c9_279 = arith.constant 9 : index
    %c0_280 = arith.constant 0 : index
    %304 = vector.load %arg15[%c0_277, %c4_278, %c9_279, %c0_280] : memref<2x14x19x32xf32, #tpu.memory_space<vmem>>, vector<2x8x8x32xf32>
    %305 = vector.shape_cast %304 : vector<2x8x8x32xf32> to vector<128x32xf32>
    %306 = arith.truncf %305 : vector<128x32xf32> to vector<128x32xbf16>
    %c0_281 = arith.constant 0 : index
    %c256_282 = arith.constant 256 : index
    %307 = vector.load %arg16[%c0_281, %c256_282] : memref<128x288xbf16, #tpu.memory_space<vmem>>, vector<128x32xbf16>
    tpu.vector_store %arg16[%c0_281, %c256_282], %306 {strides = array<i32>} : memref<128x288xbf16, #tpu.memory_space<vmem>>, vector<128x32xbf16>,
    %c1_283 = arith.constant 1 : index
    %c0_284 = arith.constant 0 : index
    %c0_285 = arith.constant 0 : index
    %308 = vector.load %arg10[%c1_283, %c0_284, %c0_285] : memref<5x288x32xbf16, #tpu.memory_space<vmem>>, vector<1x288x32xbf16>
    %309 = vector.shape_cast %308 : vector<1x288x32xbf16> to vector<288x32xbf16>
    %c1_286 = arith.constant 1 : index
    %c0_287 = arith.constant 0 : index
    %c0_288 = arith.constant 0 : index
    %310 = vector.load %arg11[%c1_286, %c0_287, %c0_288] : memref<5x1x32xf32, #tpu.memory_space<vmem>>, vector<1x1x32xf32>
    %311 = vector.shape_cast %310 : vector<1x1x32xf32> to vector<1x32xf32>
    %c0_289 = arith.constant 0 : index
    %c0_290 = arith.constant 0 : index
    %312 = vector.load %arg16[%c0_289, %c0_290] : memref<128x288xbf16, #tpu.memory_space<vmem>>, vector<128x288xbf16>
    %cst_291 = arith.constant dense<0.000000e+00> : vector<128x32xf32>
    %313 = tpu.matmul %312, %309, %cst_291 {dimension_numbers = #tpu.dot_dimension_numbers<[1], [0], [0], [1], [0, 0, 1, 1], [], []>} : vector<128x288xbf16>, vector<288x32xbf16>, vector<128x32xf32> -> vector<128x32xf32>
    %314 = vector.broadcast %311 : vector<1x32xf32> to vector<128x32xf32>
    %315 = arith.addf %313, %314 : vector<128x32xf32>
    %cst_292 = arith.constant 5.000000e-01 : f32
    %316 = vector.broadcast %cst_292 : f32 to vector<128x32xf32>
    %317 = arith.mulf %316, %315 : vector<128x32xf32>
    %cst_293 = arith.constant 4.471500e-02 : f32
    %318 = vector.broadcast %cst_293 : f32 to vector<128x32xf32>
    %319 = arith.mulf %318, %315 : vector<128x32xf32>
    %320 = arith.mulf %319, %315 : vector<128x32xf32>
    %321 = arith.mulf %320, %315 : vector<128x32xf32>
    %322 = arith.addf %315, %321 : vector<128x32xf32>
    %cst_294 = arith.constant 0.797884583 : f32
    %323 = vector.broadcast %cst_294 : f32 to vector<128x32xf32>
    %324 = arith.mulf %323, %322 : vector<128x32xf32>
    %325 = math.tanh %324 : vector<128x32xf32>
    %cst_295 = arith.constant 1.000000e+00 : f32
    %326 = vector.broadcast %cst_295 : f32 to vector<128x32xf32>
    %327 = arith.addf %326, %325 : vector<128x32xf32>
    %328 = arith.mulf %317, %327 : vector<128x32xf32>
    %c0_296 = arith.constant 0 : index
    %c0_297 = arith.constant 0 : index
    %329 = vector.load %arg18[%c0_296, %c0_297] : memref<128x32xf32, #tpu.memory_space<vmem>>, vector<128x32xf32>
    tpu.vector_store %arg18[%c0_296, %c0_297], %328 {strides = array<i32>} : memref<128x32xf32, #tpu.memory_space<vmem>>, vector<128x32xf32>,
    %c0_298 = arith.constant 0 : index
    %c1_299 = arith.constant 1 : index
    %c6 = arith.constant 6 : index
    %c0_300 = arith.constant 0 : index
    %330 = vector.load %arg15[%c0_298, %c1_299, %c6, %c0_300] : memref<2x14x19x32xf32, #tpu.memory_space<vmem>>, vector<2x8x8x32xf32>
    %331 = vector.shape_cast %330 : vector<2x8x8x32xf32> to vector<128x32xf32>
    %332 = arith.truncf %331 : vector<128x32xf32> to vector<128x32xbf16>
    %c0_301 = arith.constant 0 : index
    %c0_302 = arith.constant 0 : index
    %333 = vector.load %arg16[%c0_301, %c0_302] : memref<128x288xbf16, #tpu.memory_space<vmem>>, vector<128x32xbf16>
    tpu.vector_store %arg16[%c0_301, %c0_302], %332 {strides = array<i32>} : memref<128x288xbf16, #tpu.memory_space<vmem>>, vector<128x32xbf16>,
    %c0_303 = arith.constant 0 : index
    %c1_304 = arith.constant 1 : index
    %c8_305 = arith.constant 8 : index
    %c0_306 = arith.constant 0 : index
    %334 = vector.load %arg15[%c0_303, %c1_304, %c8_305, %c0_306] : memref<2x14x19x32xf32, #tpu.memory_space<vmem>>, vector<2x8x8x32xf32>
    %335 = vector.shape_cast %334 : vector<2x8x8x32xf32> to vector<128x32xf32>
    %336 = arith.truncf %335 : vector<128x32xf32> to vector<128x32xbf16>
    %c0_307 = arith.constant 0 : index
    %c32_308 = arith.constant 32 : index
    %337 = vector.load %arg16[%c0_307, %c32_308] : memref<128x288xbf16, #tpu.memory_space<vmem>>, vector<128x32xbf16>
    tpu.vector_store %arg16[%c0_307, %c32_308], %336 {strides = array<i32>} : memref<128x288xbf16, #tpu.memory_space<vmem>>, vector<128x32xbf16>,
    %c0_309 = arith.constant 0 : index
    %c1_310 = arith.constant 1 : index
    %c10 = arith.constant 10 : index
    %c0_311 = arith.constant 0 : index
    %338 = vector.load %arg15[%c0_309, %c1_310, %c10, %c0_311] : memref<2x14x19x32xf32, #tpu.memory_space<vmem>>, vector<2x8x8x32xf32>
    %339 = vector.shape_cast %338 : vector<2x8x8x32xf32> to vector<128x32xf32>
    %340 = arith.truncf %339 : vector<128x32xf32> to vector<128x32xbf16>
    %c0_312 = arith.constant 0 : index
    %c64_313 = arith.constant 64 : index
    %341 = vector.load %arg16[%c0_312, %c64_313] : memref<128x288xbf16, #tpu.memory_space<vmem>>, vector<128x32xbf16>
    tpu.vector_store %arg16[%c0_312, %c64_313], %340 {strides = array<i32>} : memref<128x288xbf16, #tpu.memory_space<vmem>>, vector<128x32xbf16>,
    %c0_314 = arith.constant 0 : index
    %c3_315 = arith.constant 3 : index
    %c6_316 = arith.constant 6 : index
    %c0_317 = arith.constant 0 : index
    %342 = vector.load %arg15[%c0_314, %c3_315, %c6_316, %c0_317] : memref<2x14x19x32xf32, #tpu.memory_space<vmem>>, vector<2x8x8x32xf32>
    %343 = vector.shape_cast %342 : vector<2x8x8x32xf32> to vector<128x32xf32>
    %344 = arith.truncf %343 : vector<128x32xf32> to vector<128x32xbf16>
    %c0_318 = arith.constant 0 : index
    %c96_319 = arith.constant 96 : index
    %345 = vector.load %arg16[%c0_318, %c96_319] : memref<128x288xbf16, #tpu.memory_space<vmem>>, vector<128x32xbf16>
    tpu.vector_store %arg16[%c0_318, %c96_319], %344 {strides = array<i32>} : memref<128x288xbf16, #tpu.memory_space<vmem>>, vector<128x32xbf16>,
    %c0_320 = arith.constant 0 : index
    %c3_321 = arith.constant 3 : index
    %c8_322 = arith.constant 8 : index
    %c0_323 = arith.constant 0 : index
    %346 = vector.load %arg15[%c0_320, %c3_321, %c8_322, %c0_323] : memref<2x14x19x32xf32, #tpu.memory_space<vmem>>, vector<2x8x8x32xf32>
    %347 = vector.shape_cast %346 : vector<2x8x8x32xf32> to vector<128x32xf32>
    %348 = arith.truncf %347 : vector<128x32xf32> to vector<128x32xbf16>
    %c0_324 = arith.constant 0 : index
    %c128_325 = arith.constant 128 : index
    %349 = vector.load %arg16[%c0_324, %c128_325] : memref<128x288xbf16, #tpu.memory_space<vmem>>, vector<128x32xbf16>
    tpu.vector_store %arg16[%c0_324, %c128_325], %348 {strides = array<i32>} : memref<128x288xbf16, #tpu.memory_space<vmem>>, vector<128x32xbf16>,
    %c0_326 = arith.constant 0 : index
    %c3_327 = arith.constant 3 : index
    %c10_328 = arith.constant 10 : index
    %c0_329 = arith.constant 0 : index
    %350 = vector.load %arg15[%c0_326, %c3_327, %c10_328, %c0_329] : memref<2x14x19x32xf32, #tpu.memory_space<vmem>>, vector<2x8x8x32xf32>
    %351 = vector.shape_cast %350 : vector<2x8x8x32xf32> to vector<128x32xf32>
    %352 = arith.truncf %351 : vector<128x32xf32> to vector<128x32xbf16>
    %c0_330 = arith.constant 0 : index
    %c160_331 = arith.constant 160 : index
    %353 = vector.load %arg16[%c0_330, %c160_331] : memref<128x288xbf16, #tpu.memory_space<vmem>>, vector<128x32xbf16>
    tpu.vector_store %arg16[%c0_330, %c160_331], %352 {strides = array<i32>} : memref<128x288xbf16, #tpu.memory_space<vmem>>, vector<128x32xbf16>,
    %c0_332 = arith.constant 0 : index
    %c5 = arith.constant 5 : index
    %c6_333 = arith.constant 6 : index
    %c0_334 = arith.constant 0 : index
    %354 = vector.load %arg15[%c0_332, %c5, %c6_333, %c0_334] : memref<2x14x19x32xf32, #tpu.memory_space<vmem>>, vector<2x8x8x32xf32>
    %355 = vector.shape_cast %354 : vector<2x8x8x32xf32> to vector<128x32xf32>
    %356 = arith.truncf %355 : vector<128x32xf32> to vector<128x32xbf16>
    %c0_335 = arith.constant 0 : index
    %c192_336 = arith.constant 192 : index
    %357 = vector.load %arg16[%c0_335, %c192_336] : memref<128x288xbf16, #tpu.memory_space<vmem>>, vector<128x32xbf16>
    tpu.vector_store %arg16[%c0_335, %c192_336], %356 {strides = array<i32>} : memref<128x288xbf16, #tpu.memory_space<vmem>>, vector<128x32xbf16>,
    %c0_337 = arith.constant 0 : index
    %c5_338 = arith.constant 5 : index
    %c8_339 = arith.constant 8 : index
    %c0_340 = arith.constant 0 : index
    %358 = vector.load %arg15[%c0_337, %c5_338, %c8_339, %c0_340] : memref<2x14x19x32xf32, #tpu.memory_space<vmem>>, vector<2x8x8x32xf32>
    %359 = vector.shape_cast %358 : vector<2x8x8x32xf32> to vector<128x32xf32>
    %360 = arith.truncf %359 : vector<128x32xf32> to vector<128x32xbf16>
    %c0_341 = arith.constant 0 : index
    %c224_342 = arith.constant 224 : index
    %361 = vector.load %arg16[%c0_341, %c224_342] : memref<128x288xbf16, #tpu.memory_space<vmem>>, vector<128x32xbf16>
    tpu.vector_store %arg16[%c0_341, %c224_342], %360 {strides = array<i32>} : memref<128x288xbf16, #tpu.memory_space<vmem>>, vector<128x32xbf16>,
    %c0_343 = arith.constant 0 : index
    %c5_344 = arith.constant 5 : index
    %c10_345 = arith.constant 10 : index
    %c0_346 = arith.constant 0 : index
    %362 = vector.load %arg15[%c0_343, %c5_344, %c10_345, %c0_346] : memref<2x14x19x32xf32, #tpu.memory_space<vmem>>, vector<2x8x8x32xf32>
    %363 = vector.shape_cast %362 : vector<2x8x8x32xf32> to vector<128x32xf32>
    %364 = arith.truncf %363 : vector<128x32xf32> to vector<128x32xbf16>
    %c0_347 = arith.constant 0 : index
    %c256_348 = arith.constant 256 : index
    %365 = vector.load %arg16[%c0_347, %c256_348] : memref<128x288xbf16, #tpu.memory_space<vmem>>, vector<128x32xbf16>
    tpu.vector_store %arg16[%c0_347, %c256_348], %364 {strides = array<i32>} : memref<128x288xbf16, #tpu.memory_space<vmem>>, vector<128x32xbf16>,
    %c0_349 = arith.constant 0 : index
    %c0_350 = arith.constant 0 : index
    %366 = vector.load %arg18[%c0_349, %c0_350] : memref<128x32xf32, #tpu.memory_space<vmem>>, vector<128x32xf32>
    %c2_351 = arith.constant 2 : index
    %c0_352 = arith.constant 0 : index
    %c0_353 = arith.constant 0 : index
    %367 = vector.load %arg10[%c2_351, %c0_352, %c0_353] : memref<5x288x32xbf16, #tpu.memory_space<vmem>>, vector<1x288x32xbf16>
    %368 = vector.shape_cast %367 : vector<1x288x32xbf16> to vector<288x32xbf16>
    %c2_354 = arith.constant 2 : index
    %c0_355 = arith.constant 0 : index
    %c0_356 = arith.constant 0 : index
    %369 = vector.load %arg11[%c2_354, %c0_355, %c0_356] : memref<5x1x32xf32, #tpu.memory_space<vmem>>, vector<1x1x32xf32>
    %370 = vector.shape_cast %369 : vector<1x1x32xf32> to vector<1x32xf32>
    %c0_357 = arith.constant 0 : index
    %c0_358 = arith.constant 0 : index
    %371 = vector.load %arg16[%c0_357, %c0_358] : memref<128x288xbf16, #tpu.memory_space<vmem>>, vector<128x288xbf16>
    %cst_359 = arith.constant dense<0.000000e+00> : vector<128x32xf32>
    %372 = tpu.matmul %371, %368, %cst_359 {dimension_numbers = #tpu.dot_dimension_numbers<[1], [0], [0], [1], [0, 0, 1, 1], [], []>} : vector<128x288xbf16>, vector<288x32xbf16>, vector<128x32xf32> -> vector<128x32xf32>
    %373 = vector.broadcast %370 : vector<1x32xf32> to vector<128x32xf32>
    %374 = arith.addf %372, %373 : vector<128x32xf32>
    %cst_360 = arith.constant 5.000000e-01 : f32
    %375 = vector.broadcast %cst_360 : f32 to vector<128x32xf32>
    %376 = arith.mulf %375, %374 : vector<128x32xf32>
    %cst_361 = arith.constant 4.471500e-02 : f32
    %377 = vector.broadcast %cst_361 : f32 to vector<128x32xf32>
    %378 = arith.mulf %377, %374 : vector<128x32xf32>
    %379 = arith.mulf %378, %374 : vector<128x32xf32>
    %380 = arith.mulf %379, %374 : vector<128x32xf32>
    %381 = arith.addf %374, %380 : vector<128x32xf32>
    %cst_362 = arith.constant 0.797884583 : f32
    %382 = vector.broadcast %cst_362 : f32 to vector<128x32xf32>
    %383 = arith.mulf %382, %381 : vector<128x32xf32>
    %384 = math.tanh %383 : vector<128x32xf32>
    %cst_363 = arith.constant 1.000000e+00 : f32
    %385 = vector.broadcast %cst_363 : f32 to vector<128x32xf32>
    %386 = arith.addf %385, %384 : vector<128x32xf32>
    %387 = arith.mulf %376, %386 : vector<128x32xf32>
    %388 = arith.addf %366, %387 : vector<128x32xf32>
    %c0_364 = arith.constant 0 : index
    %c0_365 = arith.constant 0 : index
    %389 = vector.load %arg18[%c0_364, %c0_365] : memref<128x32xf32, #tpu.memory_space<vmem>>, vector<128x32xf32>
    tpu.vector_store %arg18[%c0_364, %c0_365], %388 {strides = array<i32>} : memref<128x32xf32, #tpu.memory_space<vmem>>, vector<128x32xf32>,
    %c0_366 = arith.constant 0 : index
    %c0_367 = arith.constant 0 : index
    %c5_368 = arith.constant 5 : index
    %c0_369 = arith.constant 0 : index
    %390 = vector.load %arg15[%c0_366, %c0_367, %c5_368, %c0_369] : memref<2x14x19x32xf32, #tpu.memory_space<vmem>>, vector<2x8x8x32xf32>
    %391 = vector.shape_cast %390 : vector<2x8x8x32xf32> to vector<128x32xf32>
    %392 = arith.truncf %391 : vector<128x32xf32> to vector<128x32xbf16>
    %c0_370 = arith.constant 0 : index
    %c0_371 = arith.constant 0 : index
    %393 = vector.load %arg16[%c0_370, %c0_371] : memref<128x288xbf16, #tpu.memory_space<vmem>>, vector<128x32xbf16>
    tpu.vector_store %arg16[%c0_370, %c0_371], %392 {strides = array<i32>} : memref<128x288xbf16, #tpu.memory_space<vmem>>, vector<128x32xbf16>,
    %c0_372 = arith.constant 0 : index
    %c0_373 = arith.constant 0 : index
    %c8_374 = arith.constant 8 : index
    %c0_375 = arith.constant 0 : index
    %394 = vector.load %arg15[%c0_372, %c0_373, %c8_374, %c0_375] : memref<2x14x19x32xf32, #tpu.memory_space<vmem>>, vector<2x8x8x32xf32>
    %395 = vector.shape_cast %394 : vector<2x8x8x32xf32> to vector<128x32xf32>
    %396 = arith.truncf %395 : vector<128x32xf32> to vector<128x32xbf16>
    %c0_376 = arith.constant 0 : index
    %c32_377 = arith.constant 32 : index
    %397 = vector.load %arg16[%c0_376, %c32_377] : memref<128x288xbf16, #tpu.memory_space<vmem>>, vector<128x32xbf16>
    tpu.vector_store %arg16[%c0_376, %c32_377], %396 {strides = array<i32>} : memref<128x288xbf16, #tpu.memory_space<vmem>>, vector<128x32xbf16>,
    %c0_378 = arith.constant 0 : index
    %c0_379 = arith.constant 0 : index
    %c11 = arith.constant 11 : index
    %c0_380 = arith.constant 0 : index
    %398 = vector.load %arg15[%c0_378, %c0_379, %c11, %c0_380] : memref<2x14x19x32xf32, #tpu.memory_space<vmem>>, vector<2x8x8x32xf32>
    %399 = vector.shape_cast %398 : vector<2x8x8x32xf32> to vector<128x32xf32>
    %400 = arith.truncf %399 : vector<128x32xf32> to vector<128x32xbf16>
    %c0_381 = arith.constant 0 : index
    %c64_382 = arith.constant 64 : index
    %401 = vector.load %arg16[%c0_381, %c64_382] : memref<128x288xbf16, #tpu.memory_space<vmem>>, vector<128x32xbf16>
    tpu.vector_store %arg16[%c0_381, %c64_382], %400 {strides = array<i32>} : memref<128x288xbf16, #tpu.memory_space<vmem>>, vector<128x32xbf16>,
    %c0_383 = arith.constant 0 : index
    %c3_384 = arith.constant 3 : index
    %c5_385 = arith.constant 5 : index
    %c0_386 = arith.constant 0 : index
    %402 = vector.load %arg15[%c0_383, %c3_384, %c5_385, %c0_386] : memref<2x14x19x32xf32, #tpu.memory_space<vmem>>, vector<2x8x8x32xf32>
    %403 = vector.shape_cast %402 : vector<2x8x8x32xf32> to vector<128x32xf32>
    %404 = arith.truncf %403 : vector<128x32xf32> to vector<128x32xbf16>
    %c0_387 = arith.constant 0 : index
    %c96_388 = arith.constant 96 : index
    %405 = vector.load %arg16[%c0_387, %c96_388] : memref<128x288xbf16, #tpu.memory_space<vmem>>, vector<128x32xbf16>
    tpu.vector_store %arg16[%c0_387, %c96_388], %404 {strides = array<i32>} : memref<128x288xbf16, #tpu.memory_space<vmem>>, vector<128x32xbf16>,
    %c0_389 = arith.constant 0 : index
    %c3_390 = arith.constant 3 : index
    %c8_391 = arith.constant 8 : index
    %c0_392 = arith.constant 0 : index
    %406 = vector.load %arg15[%c0_389, %c3_390, %c8_391, %c0_392] : memref<2x14x19x32xf32, #tpu.memory_space<vmem>>, vector<2x8x8x32xf32>
    %407 = vector.shape_cast %406 : vector<2x8x8x32xf32> to vector<128x32xf32>
    %408 = arith.truncf %407 : vector<128x32xf32> to vector<128x32xbf16>
    %c0_393 = arith.constant 0 : index
    %c128_394 = arith.constant 128 : index
    %409 = vector.load %arg16[%c0_393, %c128_394] : memref<128x288xbf16, #tpu.memory_space<vmem>>, vector<128x32xbf16>
    tpu.vector_store %arg16[%c0_393, %c128_394], %408 {strides = array<i32>} : memref<128x288xbf16, #tpu.memory_space<vmem>>, vector<128x32xbf16>,
    %c0_395 = arith.constant 0 : index
    %c3_396 = arith.constant 3 : index
    %c11_397 = arith.constant 11 : index
    %c0_398 = arith.constant 0 : index
    %410 = vector.load %arg15[%c0_395, %c3_396, %c11_397, %c0_398] : memref<2x14x19x32xf32, #tpu.memory_space<vmem>>, vector<2x8x8x32xf32>
    %411 = vector.shape_cast %410 : vector<2x8x8x32xf32> to vector<128x32xf32>
    %412 = arith.truncf %411 : vector<128x32xf32> to vector<128x32xbf16>
    %c0_399 = arith.constant 0 : index
    %c160_400 = arith.constant 160 : index
    %413 = vector.load %arg16[%c0_399, %c160_400] : memref<128x288xbf16, #tpu.memory_space<vmem>>, vector<128x32xbf16>
    tpu.vector_store %arg16[%c0_399, %c160_400], %412 {strides = array<i32>} : memref<128x288xbf16, #tpu.memory_space<vmem>>, vector<128x32xbf16>,
    %c0_401 = arith.constant 0 : index
    %c6_402 = arith.constant 6 : index
    %c5_403 = arith.constant 5 : index
    %c0_404 = arith.constant 0 : index
    %414 = vector.load %arg15[%c0_401, %c6_402, %c5_403, %c0_404] : memref<2x14x19x32xf32, #tpu.memory_space<vmem>>, vector<2x8x8x32xf32>
    %415 = vector.shape_cast %414 : vector<2x8x8x32xf32> to vector<128x32xf32>
    %416 = arith.truncf %415 : vector<128x32xf32> to vector<128x32xbf16>
    %c0_405 = arith.constant 0 : index
    %c192_406 = arith.constant 192 : index
    %417 = vector.load %arg16[%c0_405, %c192_406] : memref<128x288xbf16, #tpu.memory_space<vmem>>, vector<128x32xbf16>
    tpu.vector_store %arg16[%c0_405, %c192_406], %416 {strides = array<i32>} : memref<128x288xbf16, #tpu.memory_space<vmem>>, vector<128x32xbf16>,
    %c0_407 = arith.constant 0 : index
    %c6_408 = arith.constant 6 : index
    %c8_409 = arith.constant 8 : index
    %c0_410 = arith.constant 0 : index
    %418 = vector.load %arg15[%c0_407, %c6_408, %c8_409, %c0_410] : memref<2x14x19x32xf32, #tpu.memory_space<vmem>>, vector<2x8x8x32xf32>
    %419 = vector.shape_cast %418 : vector<2x8x8x32xf32> to vector<128x32xf32>
    %420 = arith.truncf %419 : vector<128x32xf32> to vector<128x32xbf16>
    %c0_411 = arith.constant 0 : index
    %c224_412 = arith.constant 224 : index
    %421 = vector.load %arg16[%c0_411, %c224_412] : memref<128x288xbf16, #tpu.memory_space<vmem>>, vector<128x32xbf16>
    tpu.vector_store %arg16[%c0_411, %c224_412], %420 {strides = array<i32>} : memref<128x288xbf16, #tpu.memory_space<vmem>>, vector<128x32xbf16>,
    %c0_413 = arith.constant 0 : index
    %c6_414 = arith.constant 6 : index
    %c11_415 = arith.constant 11 : index
    %c0_416 = arith.constant 0 : index
    %422 = vector.load %arg15[%c0_413, %c6_414, %c11_415, %c0_416] : memref<2x14x19x32xf32, #tpu.memory_space<vmem>>, vector<2x8x8x32xf32>
    %423 = vector.shape_cast %422 : vector<2x8x8x32xf32> to vector<128x32xf32>
    %424 = arith.truncf %423 : vector<128x32xf32> to vector<128x32xbf16>
    %c0_417 = arith.constant 0 : index
    %c256_418 = arith.constant 256 : index
    %425 = vector.load %arg16[%c0_417, %c256_418] : memref<128x288xbf16, #tpu.memory_space<vmem>>, vector<128x32xbf16>
    tpu.vector_store %arg16[%c0_417, %c256_418], %424 {strides = array<i32>} : memref<128x288xbf16, #tpu.memory_space<vmem>>, vector<128x32xbf16>,
    %c0_419 = arith.constant 0 : index
    %c0_420 = arith.constant 0 : index
    %426 = vector.load %arg18[%c0_419, %c0_420] : memref<128x32xf32, #tpu.memory_space<vmem>>, vector<128x32xf32>
    %c3_421 = arith.constant 3 : index
    %c0_422 = arith.constant 0 : index
    %c0_423 = arith.constant 0 : index
    %427 = vector.load %arg10[%c3_421, %c0_422, %c0_423] : memref<5x288x32xbf16, #tpu.memory_space<vmem>>, vector<1x288x32xbf16>
    %428 = vector.shape_cast %427 : vector<1x288x32xbf16> to vector<288x32xbf16>
    %c3_424 = arith.constant 3 : index
    %c0_425 = arith.constant 0 : index
    %c0_426 = arith.constant 0 : index
    %429 = vector.load %arg11[%c3_424, %c0_425, %c0_426] : memref<5x1x32xf32, #tpu.memory_space<vmem>>, vector<1x1x32xf32>
    %430 = vector.shape_cast %429 : vector<1x1x32xf32> to vector<1x32xf32>
    %c0_427 = arith.constant 0 : index
    %c0_428 = arith.constant 0 : index
    %431 = vector.load %arg16[%c0_427, %c0_428] : memref<128x288xbf16, #tpu.memory_space<vmem>>, vector<128x288xbf16>
    %cst_429 = arith.constant dense<0.000000e+00> : vector<128x32xf32>
    %432 = tpu.matmul %431, %428, %cst_429 {dimension_numbers = #tpu.dot_dimension_numbers<[1], [0], [0], [1], [0, 0, 1, 1], [], []>} : vector<128x288xbf16>, vector<288x32xbf16>, vector<128x32xf32> -> vector<128x32xf32>
    %433 = vector.broadcast %430 : vector<1x32xf32> to vector<128x32xf32>
    %434 = arith.addf %432, %433 : vector<128x32xf32>
    %cst_430 = arith.constant 5.000000e-01 : f32
    %435 = vector.broadcast %cst_430 : f32 to vector<128x32xf32>
    %436 = arith.mulf %435, %434 : vector<128x32xf32>
    %cst_431 = arith.constant 4.471500e-02 : f32
    %437 = vector.broadcast %cst_431 : f32 to vector<128x32xf32>
    %438 = arith.mulf %437, %434 : vector<128x32xf32>
    %439 = arith.mulf %438, %434 : vector<128x32xf32>
    %440 = arith.mulf %439, %434 : vector<128x32xf32>
    %441 = arith.addf %434, %440 : vector<128x32xf32>
    %cst_432 = arith.constant 0.797884583 : f32
    %442 = vector.broadcast %cst_432 : f32 to vector<128x32xf32>
    %443 = arith.mulf %442, %441 : vector<128x32xf32>
    %444 = math.tanh %443 : vector<128x32xf32>
    %cst_433 = arith.constant 1.000000e+00 : f32
    %445 = vector.broadcast %cst_433 : f32 to vector<128x32xf32>
    %446 = arith.addf %445, %444 : vector<128x32xf32>
    %447 = arith.mulf %436, %446 : vector<128x32xf32>
    %448 = arith.addf %426, %447 : vector<128x32xf32>
    %c0_434 = arith.constant 0 : index
    %c0_435 = arith.constant 0 : index
    %449 = vector.load %arg18[%c0_434, %c0_435] : memref<128x32xf32, #tpu.memory_space<vmem>>, vector<128x32xf32>
    tpu.vector_store %arg18[%c0_434, %c0_435], %448 {strides = array<i32>} : memref<128x32xf32, #tpu.memory_space<vmem>>, vector<128x32xf32>,
    %c0_436 = arith.constant 0 : index
    %c0_437 = arith.constant 0 : index
    %450 = vector.load %arg18[%c0_436, %c0_437] : memref<128x32xf32, #tpu.memory_space<vmem>>, vector<128x32xf32>
    %451 = vector.shape_cast %450 : vector<128x32xf32> to vector<2x8x8x32xf32>
    %c0_438 = arith.constant 0 : index
    %c3_439 = arith.constant 3 : index
    %c8_440 = arith.constant 8 : index
    %c0_441 = arith.constant 0 : index
    %452 = vector.load %arg15[%c0_438, %c3_439, %c8_440, %c0_441] : memref<2x14x19x32xf32, #tpu.memory_space<vmem>>, vector<2x8x8x32xf32>
    tpu.vector_store %arg15[%c0_438, %c3_439, %c8_440, %c0_441], %451 {strides = array<i32>} : memref<2x14x19x32xf32, #tpu.memory_space<vmem>>, vector<2x8x8x32xf32>,
    %c0_442 = arith.constant 0 : index
    %c2_443 = arith.constant 2 : index
    %c7_444 = arith.constant 7 : index
    %c0_445 = arith.constant 0 : index
    %453 = vector.load %arg15[%c0_442, %c2_443, %c7_444, %c0_445] : memref<2x14x19x32xf32, #tpu.memory_space<vmem>>, vector<2x8x8x32xf32>
    %454 = vector.shape_cast %453 : vector<2x8x8x32xf32> to vector<128x32xf32>
    %455 = arith.truncf %454 : vector<128x32xf32> to vector<128x32xbf16>
    %c0_446 = arith.constant 0 : index
    %c0_447 = arith.constant 0 : index
    %456 = vector.load %arg16[%c0_446, %c0_447] : memref<128x288xbf16, #tpu.memory_space<vmem>>, vector<128x32xbf16>
    tpu.vector_store %arg16[%c0_446, %c0_447], %455 {strides = array<i32>} : memref<128x288xbf16, #tpu.memory_space<vmem>>, vector<128x32xbf16>,
    %c0_448 = arith.constant 0 : index
    %c2_449 = arith.constant 2 : index
    %c8_450 = arith.constant 8 : index
    %c0_451 = arith.constant 0 : index
    %457 = vector.load %arg15[%c0_448, %c2_449, %c8_450, %c0_451] : memref<2x14x19x32xf32, #tpu.memory_space<vmem>>, vector<2x8x8x32xf32>
    %458 = vector.shape_cast %457 : vector<2x8x8x32xf32> to vector<128x32xf32>
    %459 = arith.truncf %458 : vector<128x32xf32> to vector<128x32xbf16>
    %c0_452 = arith.constant 0 : index
    %c32_453 = arith.constant 32 : index
    %460 = vector.load %arg16[%c0_452, %c32_453] : memref<128x288xbf16, #tpu.memory_space<vmem>>, vector<128x32xbf16>
    tpu.vector_store %arg16[%c0_452, %c32_453], %459 {strides = array<i32>} : memref<128x288xbf16, #tpu.memory_space<vmem>>, vector<128x32xbf16>,
    %c0_454 = arith.constant 0 : index
    %c2_455 = arith.constant 2 : index
    %c9_456 = arith.constant 9 : index
    %c0_457 = arith.constant 0 : index
    %461 = vector.load %arg15[%c0_454, %c2_455, %c9_456, %c0_457] : memref<2x14x19x32xf32, #tpu.memory_space<vmem>>, vector<2x8x8x32xf32>
    %462 = vector.shape_cast %461 : vector<2x8x8x32xf32> to vector<128x32xf32>
    %463 = arith.truncf %462 : vector<128x32xf32> to vector<128x32xbf16>
    %c0_458 = arith.constant 0 : index
    %c64_459 = arith.constant 64 : index
    %464 = vector.load %arg16[%c0_458, %c64_459] : memref<128x288xbf16, #tpu.memory_space<vmem>>, vector<128x32xbf16>
    tpu.vector_store %arg16[%c0_458, %c64_459], %463 {strides = array<i32>} : memref<128x288xbf16, #tpu.memory_space<vmem>>, vector<128x32xbf16>,
    %c0_460 = arith.constant 0 : index
    %c3_461 = arith.constant 3 : index
    %c7_462 = arith.constant 7 : index
    %c0_463 = arith.constant 0 : index
    %465 = vector.load %arg15[%c0_460, %c3_461, %c7_462, %c0_463] : memref<2x14x19x32xf32, #tpu.memory_space<vmem>>, vector<2x8x8x32xf32>
    %466 = vector.shape_cast %465 : vector<2x8x8x32xf32> to vector<128x32xf32>
    %467 = arith.truncf %466 : vector<128x32xf32> to vector<128x32xbf16>
    %c0_464 = arith.constant 0 : index
    %c96_465 = arith.constant 96 : index
    %468 = vector.load %arg16[%c0_464, %c96_465] : memref<128x288xbf16, #tpu.memory_space<vmem>>, vector<128x32xbf16>
    tpu.vector_store %arg16[%c0_464, %c96_465], %467 {strides = array<i32>} : memref<128x288xbf16, #tpu.memory_space<vmem>>, vector<128x32xbf16>,
    %c0_466 = arith.constant 0 : index
    %c3_467 = arith.constant 3 : index
    %c8_468 = arith.constant 8 : index
    %c0_469 = arith.constant 0 : index
    %469 = vector.load %arg15[%c0_466, %c3_467, %c8_468, %c0_469] : memref<2x14x19x32xf32, #tpu.memory_space<vmem>>, vector<2x8x8x32xf32>
    %470 = vector.shape_cast %469 : vector<2x8x8x32xf32> to vector<128x32xf32>
    %471 = arith.truncf %470 : vector<128x32xf32> to vector<128x32xbf16>
    %c0_470 = arith.constant 0 : index
    %c128_471 = arith.constant 128 : index
    %472 = vector.load %arg16[%c0_470, %c128_471] : memref<128x288xbf16, #tpu.memory_space<vmem>>, vector<128x32xbf16>
    tpu.vector_store %arg16[%c0_470, %c128_471], %471 {strides = array<i32>} : memref<128x288xbf16, #tpu.memory_space<vmem>>, vector<128x32xbf16>,
    %c0_472 = arith.constant 0 : index
    %c3_473 = arith.constant 3 : index
    %c9_474 = arith.constant 9 : index
    %c0_475 = arith.constant 0 : index
    %473 = vector.load %arg15[%c0_472, %c3_473, %c9_474, %c0_475] : memref<2x14x19x32xf32, #tpu.memory_space<vmem>>, vector<2x8x8x32xf32>
    %474 = vector.shape_cast %473 : vector<2x8x8x32xf32> to vector<128x32xf32>
    %475 = arith.truncf %474 : vector<128x32xf32> to vector<128x32xbf16>
    %c0_476 = arith.constant 0 : index
    %c160_477 = arith.constant 160 : index
    %476 = vector.load %arg16[%c0_476, %c160_477] : memref<128x288xbf16, #tpu.memory_space<vmem>>, vector<128x32xbf16>
    tpu.vector_store %arg16[%c0_476, %c160_477], %475 {strides = array<i32>} : memref<128x288xbf16, #tpu.memory_space<vmem>>, vector<128x32xbf16>,
    %c0_478 = arith.constant 0 : index
    %c4_479 = arith.constant 4 : index
    %c7_480 = arith.constant 7 : index
    %c0_481 = arith.constant 0 : index
    %477 = vector.load %arg15[%c0_478, %c4_479, %c7_480, %c0_481] : memref<2x14x19x32xf32, #tpu.memory_space<vmem>>, vector<2x8x8x32xf32>
    %478 = vector.shape_cast %477 : vector<2x8x8x32xf32> to vector<128x32xf32>
    %479 = arith.truncf %478 : vector<128x32xf32> to vector<128x32xbf16>
    %c0_482 = arith.constant 0 : index
    %c192_483 = arith.constant 192 : index
    %480 = vector.load %arg16[%c0_482, %c192_483] : memref<128x288xbf16, #tpu.memory_space<vmem>>, vector<128x32xbf16>
    tpu.vector_store %arg16[%c0_482, %c192_483], %479 {strides = array<i32>} : memref<128x288xbf16, #tpu.memory_space<vmem>>, vector<128x32xbf16>,
    %c0_484 = arith.constant 0 : index
    %c4_485 = arith.constant 4 : index
    %c8_486 = arith.constant 8 : index
    %c0_487 = arith.constant 0 : index
    %481 = vector.load %arg15[%c0_484, %c4_485, %c8_486, %c0_487] : memref<2x14x19x32xf32, #tpu.memory_space<vmem>>, vector<2x8x8x32xf32>
    %482 = vector.shape_cast %481 : vector<2x8x8x32xf32> to vector<128x32xf32>
    %483 = arith.truncf %482 : vector<128x32xf32> to vector<128x32xbf16>
    %c0_488 = arith.constant 0 : index
    %c224_489 = arith.constant 224 : index
    %484 = vector.load %arg16[%c0_488, %c224_489] : memref<128x288xbf16, #tpu.memory_space<vmem>>, vector<128x32xbf16>
    tpu.vector_store %arg16[%c0_488, %c224_489], %483 {strides = array<i32>} : memref<128x288xbf16, #tpu.memory_space<vmem>>, vector<128x32xbf16>,
    %c0_490 = arith.constant 0 : index
    %c4_491 = arith.constant 4 : index
    %c9_492 = arith.constant 9 : index
    %c0_493 = arith.constant 0 : index
    %485 = vector.load %arg15[%c0_490, %c4_491, %c9_492, %c0_493] : memref<2x14x19x32xf32, #tpu.memory_space<vmem>>, vector<2x8x8x32xf32>
    %486 = vector.shape_cast %485 : vector<2x8x8x32xf32> to vector<128x32xf32>
    %487 = arith.truncf %486 : vector<128x32xf32> to vector<128x32xbf16>
    %c0_494 = arith.constant 0 : index
    %c256_495 = arith.constant 256 : index
    %488 = vector.load %arg16[%c0_494, %c256_495] : memref<128x288xbf16, #tpu.memory_space<vmem>>, vector<128x32xbf16>
    tpu.vector_store %arg16[%c0_494, %c256_495], %487 {strides = array<i32>} : memref<128x288xbf16, #tpu.memory_space<vmem>>, vector<128x32xbf16>,
    %c4_496 = arith.constant 4 : index
    %c0_497 = arith.constant 0 : index
    %c0_498 = arith.constant 0 : index
    %489 = vector.load %arg10[%c4_496, %c0_497, %c0_498] : memref<5x288x32xbf16, #tpu.memory_space<vmem>>, vector<1x288x32xbf16>
    %490 = vector.shape_cast %489 : vector<1x288x32xbf16> to vector<288x32xbf16>
    %c4_499 = arith.constant 4 : index
    %c0_500 = arith.constant 0 : index
    %c0_501 = arith.constant 0 : index
    %491 = vector.load %arg11[%c4_499, %c0_500, %c0_501] : memref<5x1x32xf32, #tpu.memory_space<vmem>>, vector<1x1x32xf32>
    %492 = vector.shape_cast %491 : vector<1x1x32xf32> to vector<1x32xf32>
    %c0_502 = arith.constant 0 : index
    %c0_503 = arith.constant 0 : index
    %493 = vector.load %arg16[%c0_502, %c0_503] : memref<128x288xbf16, #tpu.memory_space<vmem>>, vector<128x288xbf16>
    %cst_504 = arith.constant dense<0.000000e+00> : vector<128x32xf32>
    %494 = tpu.matmul %493, %490, %cst_504 {dimension_numbers = #tpu.dot_dimension_numbers<[1], [0], [0], [1], [0, 0, 1, 1], [], []>} : vector<128x288xbf16>, vector<288x32xbf16>, vector<128x32xf32> -> vector<128x32xf32>
    %495 = vector.broadcast %492 : vector<1x32xf32> to vector<128x32xf32>
    %496 = arith.addf %494, %495 : vector<128x32xf32>
    %cst_505 = arith.constant 5.000000e-01 : f32
    %497 = vector.broadcast %cst_505 : f32 to vector<128x32xf32>
    %498 = arith.mulf %497, %496 : vector<128x32xf32>
    %cst_506 = arith.constant 4.471500e-02 : f32
    %499 = vector.broadcast %cst_506 : f32 to vector<128x32xf32>
    %500 = arith.mulf %499, %496 : vector<128x32xf32>
    %501 = arith.mulf %500, %496 : vector<128x32xf32>
    %502 = arith.mulf %501, %496 : vector<128x32xf32>
    %503 = arith.addf %496, %502 : vector<128x32xf32>
    %cst_507 = arith.constant 0.797884583 : f32
    %504 = vector.broadcast %cst_507 : f32 to vector<128x32xf32>
    %505 = arith.mulf %504, %503 : vector<128x32xf32>
    %506 = math.tanh %505 : vector<128x32xf32>
    %cst_508 = arith.constant 1.000000e+00 : f32
    %507 = vector.broadcast %cst_508 : f32 to vector<128x32xf32>
    %508 = arith.addf %507, %506 : vector<128x32xf32>
    %509 = arith.mulf %498, %508 : vector<128x32xf32>
    %c0_509 = arith.constant 0 : index
    %c0_510 = arith.constant 0 : index
    %510 = vector.load %arg17[%c0_509, %c0_510] : memref<128x32xf32, #tpu.memory_space<vmem>>, vector<128x32xf32>
    %511 = arith.addf %510, %509 : vector<128x32xf32>
    %c0_511 = arith.constant 0 : index
    %c0_512 = arith.constant 0 : index
    %512 = vector.load %arg14[%c0_511, %c0_512] : memref<128x32xf32, #tpu.memory_space<vmem>>, vector<128x32xf32>
    tpu.vector_store %arg14[%c0_511, %c0_512], %511 {strides = array<i32>} : memref<128x32xf32, #tpu.memory_space<vmem>>, vector<128x32xf32>,
    return
  }
  func.func @transform_0(%arg0: i32) -> (i32, i32, i32, i32) {
    %c0_i32 = arith.constant 0 : i32
    %c0_i32_0 = arith.constant 0 : i32
    %c0_i32_1 = arith.constant 0 : i32
    %c0_i32_2 = arith.constant 0 : i32
    %c0_i32_3 = arith.constant 0 : i32
    return %c0_i32, %c0_i32_0, %c0_i32_1, %c0_i32_2 : i32, i32, i32, i32
  }
  func.func @transform_1(%arg0: i32) -> (i32, i32, i32) {
    %c0_i32 = arith.constant 0 : i32
    %c0_i32_0 = arith.constant 0 : i32
    %c0_i32_1 = arith.constant 0 : i32
    %c0_i32_2 = arith.constant 0 : i32
    return %c0_i32, %c0_i32_0, %c0_i32_1 : i32, i32, i32
  }
  func.func @transform_2(%arg0: i32) -> (i32, i32, i32) {
    %c0_i32 = arith.constant 0 : i32
    %c0_i32_0 = arith.constant 0 : i32
    %c0_i32_1 = arith.constant 0 : i32
    %c0_i32_2 = arith.constant 0 : i32
    return %c0_i32, %c0_i32_0, %c0_i32_1 : i32, i32, i32
  }
  func.func @transform_3(%arg0: i32) -> (i32, i32, i32) {
    %c0_i32 = arith.constant 0 : i32
    %c0_i32_0 = arith.constant 0 : i32
    %c0_i32_1 = arith.constant 0 : i32
    %c0_i32_2 = arith.constant 0 : i32
    return %c0_i32, %c0_i32_0, %c0_i32_1 : i32, i32, i32
  }
  func.func @transform_4(%arg0: i32) -> (i32, i32, i32) {
    %c0_i32 = arith.constant 0 : i32
    %c0_i32_0 = arith.constant 0 : i32
    %c0_i32_1 = arith.constant 0 : i32
    %c0_i32_2 = arith.constant 0 : i32
    return %c0_i32, %c0_i32_0, %c0_i32_1 : i32, i32, i32
  }
  func.func @transform_5(%arg0: i32) -> (i32, i32, i32) {
    %c0_i32 = arith.constant 0 : i32
    %c0_i32_0 = arith.constant 0 : i32
    %c0_i32_1 = arith.constant 0 : i32
    %c0_i32_2 = arith.constant 0 : i32
    return %c0_i32, %c0_i32_0, %c0_i32_1 : i32, i32, i32
  }
  func.func @transform_6(%arg0: i32) -> (i32, i32, i32) {
    %c0_i32 = arith.constant 0 : i32
    %c0_i32_0 = arith.constant 0 : i32
    %c0_i32_1 = arith.constant 0 : i32
    %c0_i32_2 = arith.constant 0 : i32
    return %c0_i32, %c0_i32_0, %c0_i32_1 : i32, i32, i32
  }
  func.func @transform_7(%arg0: i32) -> (i32, i32) {
    %c0_i32 = arith.constant 0 : i32
    %c0_i32_0 = arith.constant 0 : i32
    %c0_i32_1 = arith.constant 0 : i32
    return %c0_i32, %c0_i32_0 : i32, i32
  }
  func.func @transform_8(%arg0: i32) -> (i32, i32) {
    %c0_i32 = arith.constant 0 : i32
    %c0_i32_0 = arith.constant 0 : i32
    %c0_i32_1 = arith.constant 0 : i32
    return %c0_i32, %c0_i32_0 : i32, i32
  }
  func.func @transform_9(%arg0: i32) -> (i32, i32, i32) {
    %c0_i32 = arith.constant 0 : i32
    %c0_i32_0 = arith.constant 0 : i32
    %c0_i32_1 = arith.constant 0 : i32
    %c0_i32_2 = arith.constant 0 : i32
    return %c0_i32, %c0_i32_0, %c0_i32_1 : i32, i32, i32
  }
  func.func @transform_10(%arg0: i32) -> (i32, i32, i32) {
    %c0_i32 = arith.constant 0 : i32
    %c0_i32_0 = arith.constant 0 : i32
    %c0_i32_1 = arith.constant 0 : i32
    %c0_i32_2 = arith.constant 0 : i32
    return %c0_i32, %c0_i32_0, %c0_i32_1 : i32, i32, i32
  }
  func.func @transform_11(%arg0: i32) -> (i32, i32) {
    %c0_i32 = arith.constant 0 : i32
    %c0_i32_0 = arith.constant 0 : i32
    %c0_i32_1 = arith.constant 0 : i32
    return %c0_i32, %c0_i32_0 : i32, i32
  }
  func.func @transform_12(%arg0: i32) -> (i32, i32) {
    %c0_i32 = arith.constant 0 : i32
    %c0_i32_0 = arith.constant 0 : i32
    %c0_i32_1 = arith.constant 0 : i32
    return %c0_i32, %c0_i32_0 : i32, i32
  }
  func.func @transform_13(%arg0: i32) -> (i32, i32) {
    %c0_i32 = arith.constant 0 : i32
    %c0_i32_0 = arith.constant 0 : i32
    %c0_i32_1 = arith.constant 0 : i32
    return %c0_i32, %c0_i32_0 : i32, i32
  }
}

</mosaic_0001>

<llo_original>
// kernel: transformer_forward.1
$region0: #{transformer_forward.1}
  #allocation0 [shape = 'u32[]', space=smem, size = 0x4, offset = 0x4, fixed_abs, tag = 'smem constant byte address 0x4 - core index']
  #allocation1 [shape = 'u32[144,128]{1,0:T(1,128)}', space=vmem, size = 0x12000, scoped, tag = 'internal scratch']
  #allocation2 [shape = 'f32[2,14,19,32]{3,2,1,0:T(8,128)}', space=vmem, size = 0x54000, scoped, tag = 'scratch operand']
  #allocation3 [shape = 'bf16[128,288]{1,0:T(16,128)(2,1)}', space=vmem, size = 0x18000, scoped, tag = 'scratch operand']
  #allocation4 [shape = 'f32[128,32]{1,0:T(8,128)}', space=vmem, size = 0x10000, scoped, tag = 'scratch operand']
  #allocation5 [shape = 'f32[128,32]{1,0:T(8,128)}', space=vmem, size = 0x10000, scoped, tag = 'scratch operand']
  %s0 = inlined_call_operand.vmem [shape: f32[2,8,8,32], index: 0, kind: input, shape index: {}]
  %s1 = inlined_call_operand.vmem [shape: bf16[3,288,32], index: 1, kind: input, shape index: {}]
  %s2 = inlined_call_operand.vmem [shape: f32[3,1,32], index: 2, kind: input, shape index: {}]
  %s3 = inlined_call_operand.vmem [shape: f32[3,1,32], index: 3, kind: input, shape index: {}]
  %s4 = inlined_call_operand.vmem [shape: f32[3,1,32], index: 4, kind: input, shape index: {}]
  %s5 = inlined_call_operand.vmem [shape: bf16[3,32,32], index: 5, kind: input, shape index: {}]
  %s6 = inlined_call_operand.vmem [shape: f32[3,1,32], index: 6, kind: input, shape index: {}]
  %s7 = inlined_call_operand.vmem [shape: bf16[32,32], index: 7, kind: input, shape index: {}]
  %s8 = inlined_call_operand.vmem [shape: f32[1,32], index: 8, kind: input, shape index: {}]
  %s9 = inlined_call_operand.vmem [shape: bf16[5,288,32], index: 9, kind: input, shape index: {}]
  %s10 = inlined_call_operand.vmem [shape: f32[5,1,32], index: 10, kind: input, shape index: {}]
  %s11 = inlined_call_operand.vmem [shape: f32[1,32], index: 11, kind: input, shape index: {}]
  %s12 = inlined_call_operand.vmem [shape: f32[1,32], index: 12, kind: input, shape index: {}]
  %s13 = inlined_call_operand.hbm [shape: f32[128,32], index: 13, kind: output, shape index: {}]
  %s14 = sld [smem:[#allocation0]]
  $region62: #{transformer_forward.1} parent=0
    _
  %s16 = ssub.s32 1, %s14
  %s17 = scalar_select 0, %s16, %s14
  $region1: #{transformer_forward.1} parent=0
    #allocation6 [shape = 'u8[65536]{0}', space=vmem, size = 0x10000, scoped, tag = 'output window, operand 0, single buffered']
    #allocation7 [shape = 's32[1]{0}', space=sflag, size = 0x4, scoped, tag = 'scoped memory for transformer_forward.1']
    %18 = vsyncpa [#allocation7], 0
    // Predicated region
    $region2: #{transformer_forward.1} parent=1 // pred_check
      _
    $region3: #{transformer_forward.1} parent=1 // pred_check_branch
      %20 = sbr.rel (0) target = $region5
    $region4: #{transformer_forward.1} parent=1 // pred_region
      _
    $region5: #{transformer_forward.1} parent=1 // pred_fallthru
      _
    // Predicated region
    $region6: #{transformer_forward.1} parent=1 // pred_check
      _
    $region7: #{transformer_forward.1} parent=1 // pred_check_branch
      %22 = sbr.rel (0) target = $region9
    $region8: #{transformer_forward.1} parent=1 // pred_region
      _
    $region9: #{transformer_forward.1} parent=1 // pred_fallthru
      _
    // Predicated region
    $region10: #{transformer_forward.1} parent=1 // pred_check
      _
    $region11: #{transformer_forward.1} parent=1 // pred_check_branch
      %24 = sbr.rel (0) target = $region13
    $region12: #{transformer_forward.1} parent=1 // pred_region
      _
    $region13: #{transformer_forward.1} parent=1 // pred_fallthru
      _
    // Predicated region
    $region14: #{transformer_forward.1} parent=1 // pred_check
      _
    $region15: #{transformer_forward.1} parent=1 // pred_check_branch
      %26 = sbr.rel (0) target = $region17
    $region16: #{transformer_forward.1} parent=1 // pred_region
      _
    $region17: #{transformer_forward.1} parent=1 // pred_fallthru
      _
    // Predicated region
    $region18: #{transformer_forward.1} parent=1 // pred_check
      _
    $region19: #{transformer_forward.1} parent=1 // pred_check_branch
      %28 = sbr.rel (0) target = $region21
    $region20: #{transformer_forward.1} parent=1 // pred_region
      _
    $region21: #{transformer_forward.1} parent=1 // pred_fallthru
      _
    // Predicated region
    $region22: #{transformer_forward.1} parent=1 // pred_check
      _
    $region23: #{transformer_forward.1} parent=1 // pred_check_branch
      %30 = sbr.rel (0) target = $region25
    $region24: #{transformer_forward.1} parent=1 // pred_region
      _
    $region25: #{transformer_forward.1} parent=1 // pred_fallthru
      _
    // Predicated region
    $region26: #{transformer_forward.1} parent=1 // pred_check
      _
    $region27: #{transformer_forward.1} parent=1 // pred_check_branch
      %32 = sbr.rel (0) target = $region29
    $region28: #{transformer_forward.1} parent=1 // pred_region
      _
    $region29: #{transformer_forward.1} parent=1 // pred_fallthru
      _
    // Predicated region
    $region30: #{transformer_forward.1} parent=1 // pred_check
      _
    $region31: #{transformer_forward.1} parent=1 // pred_check_branch
      %34 = sbr.rel (0) target = $region33
    $region32: #{transformer_forward.1} parent=1 // pred_region
      _
    $region33: #{transformer_forward.1} parent=1 // pred_fallthru
      _
    // Predicated region
    $region34: #{transformer_forward.1} parent=1 // pred_check
      _
    $region35: #{transformer_forward.1} parent=1 // pred_check_branch
      %36 = sbr.rel (0) target = $region37
    $region36: #{transformer_forward.1} parent=1 // pred_region
      _
    $region37: #{transformer_forward.1} parent=1 // pred_fallthru
      _
    // Predicated region
    $region38: #{transformer_forward.1} parent=1 // pred_check
      _
    $region39: #{transformer_forward.1} parent=1 // pred_check_branch
      %38 = sbr.rel (0) target = $region41
    $region40: #{transformer_forward.1} parent=1 // pred_region
      _
    $region41: #{transformer_forward.1} parent=1 // pred_fallthru
      _
    // Predicated region
    $region42: #{transformer_forward.1} parent=1 // pred_check
      _
    $region43: #{transformer_forward.1} parent=1 // pred_check_branch
      %40 = sbr.rel (0) target = $region45
    $region44: #{transformer_forward.1} parent=1 // pred_region
      _
    $region45: #{transformer_forward.1} parent=1 // pred_fallthru
      _
    // Predicated region
    $region46: #{transformer_forward.1} parent=1 // pred_check
      _
    $region47: #{transformer_forward.1} parent=1 // pred_check_branch
      %42 = sbr.rel (0) target = $region49
    $region48: #{transformer_forward.1} parent=1 // pred_region
      _
    $region49: #{transformer_forward.1} parent=1 // pred_fallthru
      _
    // Predicated region
    $region50: #{transformer_forward.1} parent=1 // pred_check
      _
    $region51: #{transformer_forward.1} parent=1 // pred_check_branch
      %44 = sbr.rel (0) target = $region53
    $region52: #{transformer_forward.1} parent=1 // pred_region
      _
    $region53: #{transformer_forward.1} parent=1 // pred_fallthru
      _
    %vm46 = vcmask 261120
    %47 = vst.msk [vmem:[#allocation2] sm:$0xff] %vm46, 0.0
    %48 = vst.msk [vmem:[#allocation2 + $0x8] sm:$0xff] %vm46, 0.0
    %vm49 = vcmask 256000
    %50 = vst.msk [vmem:[#allocation2 + $0x10] sm:$0x7] %vm49, 0.0
    %51 = vst.msk [vmem:[#allocation2 + $0x18] sm:$0xff] %vm46, 0.0
    %52 = vst.msk [vmem:[#allocation2 + $0x20] sm:$0xff] %vm46, 0.0
    %53 = vst.msk [vmem:[#allocation2 + $0x28] sm:$0x7] %vm49, 0.0
    %54 = vst.msk [vmem:[#allocation2 + $0x30] sm:$0xff] %vm46, 0.0
    %55 = vst.msk [vmem:[#allocation2 + $0x38] sm:$0xff] %vm46, 0.0
    %56 = vst.msk [vmem:[#allocation2 + $0x40] sm:$0x7] %vm49, 0.0
    %57 = vst.msk [vmem:[#allocation2 + $0x48] sm:$0xff] %vm46, 0.0
    %58 = vst.msk [vmem:[#allocation2 + $0x50] sm:$0xff] %vm46, 0.0
    %59 = vst.msk [vmem:[#allocation2 + $0x58] sm:$0x7] %vm49, 0.0
    %60 = vst.msk [vmem:[#allocation2 + $0x60] sm:$0xff] %vm46, 0.0
    %61 = vst.msk [vmem:[#allocation2 + $0x68] sm:$0xff] %vm46, 0.0
    %62 = vst.msk [vmem:[#allocation2 + $0x70] sm:$0x7] %vm49, 0.0
    %63 = vst.msk [vmem:[#allocation2 + $0x78] sm:$0xff] %vm46, 0.0
    %64 = vst.msk [vmem:[#allocation2 + $0x80] sm:$0xff] %vm46, 0.0
    %65 = vst.msk [vmem:[#allocation2 + $0x88] sm:$0x7] %vm49, 0.0
    %66 = vst.msk [vmem:[#allocation2 + $0x90] sm:$0xff] %vm46, 0.0
    %67 = vst.msk [vmem:[#allocation2 + $0x98] sm:$0xff] %vm46, 0.0
    %68 = vst.msk [vmem:[#allocation2 + $0xa0] sm:$0x7] %vm49, 0.0
    %69 = vst.msk [vmem:[#allocation2 + $0xa8] sm:$0xff] %vm46, 0.0
    %70 = vst.msk [vmem:[#allocation2 + $0xb0] sm:$0xff] %vm46, 0.0
    %71 = vst.msk [vmem:[#allocation2 + $0xb8] sm:$0x7] %vm49, 0.0
    %72 = vst.msk [vmem:[#allocation2 + $0xc0] sm:$0xff] %vm46, 0.0
    %73 = vst.msk [vmem:[#allocation2 + $0xc8] sm:$0xff] %vm46, 0.0
    %74 = vst.msk [vmem:[#allocation2 + $0xd0] sm:$0x7] %vm49, 0.0
    %75 = vst.msk [vmem:[#allocation2 + $0xd8] sm:$0xff] %vm46, 0.0
    %76 = vst.msk [vmem:[#allocation2 + $0xe0] sm:$0xff] %vm46, 0.0
    %77 = vst.msk [vmem:[#allocation2 + $0xe8] sm:$0x7] %vm49, 0.0
    %78 = vst.msk [vmem:[#allocation2 + $0xf0] sm:$0xff] %vm46, 0.0
    %79 = vst.msk [vmem:[#allocation2 + $0xf8] sm:$0xff] %vm46, 0.0
    %80 = vst.msk [vmem:[#allocation2 + $0x100] sm:$0x7] %vm49, 0.0
    %81 = vst.msk [vmem:[#allocation2 + $0x108] sm:$0xff] %vm46, 0.0
    %82 = vst.msk [vmem:[#allocation2 + $0x110] sm:$0xff] %vm46, 0.0
    %83 = vst.msk [vmem:[#allocation2 + $0x118] sm:$0x7] %vm49, 0.0
    %84 = vst.msk [vmem:[#allocation2 + $0x120] sm:$0xff] %vm46, 0.0
    %85 = vst.msk [vmem:[#allocation2 + $0x128] sm:$0xff] %vm46, 0.0
    %86 = vst.msk [vmem:[#allocation2 + $0x130] sm:$0x7] %vm49, 0.0
    %87 = vst.msk [vmem:[#allocation2 + $0x138] sm:$0xff] %vm46, 0.0
    %88 = vst.msk [vmem:[#allocation2 + $0x140] sm:$0xff] %vm46, 0.0
    %89 = vst.msk [vmem:[#allocation2 + $0x148] sm:$0x7] %vm49, 0.0
    %90 = vst.msk [vmem:[#allocation2 + $0x150] sm:$0xff] %vm46, 0.0
    %91 = vst.msk [vmem:[#allocation2 + $0x158] sm:$0xff] %vm46, 0.0
    %92 = vst.msk [vmem:[#allocation2 + $0x160] sm:$0x7] %vm49, 0.0
    %93 = vst.msk [vmem:[#allocation2 + $0x168] sm:$0xff] %vm46, 0.0
    %94 = vst.msk [vmem:[#allocation2 + $0x170] sm:$0xff] %vm46, 0.0
    %95 = vst.msk [vmem:[#allocation2 + $0x178] sm:$0x7] %vm49, 0.0
    %96 = vst.msk [vmem:[#allocation2 + $0x180] sm:$0xff] %vm46, 0.0
    %97 = vst.msk [vmem:[#allocation2 + $0x188] sm:$0xff] %vm46, 0.0
    %98 = vst.msk [vmem:[#allocation2 + $0x190] sm:$0x7] %vm49, 0.0
    %99 = vst.msk [vmem:[#allocation2 + $0x198] sm:$0xff] %vm46, 0.0
    %100 = vst.msk [vmem:[#allocation2 + $0x1a0] sm:$0xff] %vm46, 0.0
    %101 = vst.msk [vmem:[#allocation2 + $0x1a8] sm:$0x7] %vm49, 0.0
    %102 = vst.msk [vmem:[#allocation2 + $0x1b0] sm:$0xff] %vm46, 0.0
    %103 = vst.msk [vmem:[#allocation2 + $0x1b8] sm:$0xff] %vm46, 0.0
    %104 = vst.msk [vmem:[#allocation2 + $0x1c0] sm:$0x7] %vm49, 0.0
    %105 = vst.msk [vmem:[#allocation2 + $0x1c8] sm:$0xff] %vm46, 0.0
    %106 = vst.msk [vmem:[#allocation2 + $0x1d0] sm:$0xff] %vm46, 0.0
    %107 = vst.msk [vmem:[#allocation2 + $0x1d8] sm:$0x7] %vm49, 0.0
    %108 = vst.msk [vmem:[#allocation2 + $0x1e0] sm:$0xff] %vm46, 0.0
    %109 = vst.msk [vmem:[#allocation2 + $0x1e8] sm:$0xff] %vm46, 0.0
    %110 = vst.msk [vmem:[#allocation2 + $0x1f0] sm:$0x7] %vm49, 0.0
    %111 = vst.msk [vmem:[#allocation2 + $0x1f8] sm:$0xff] %vm46, 0.0
    %112 = vst.msk [vmem:[#allocation2 + $0x200] sm:$0xff] %vm46, 0.0
    %113 = vst.msk [vmem:[#allocation2 + $0x208] sm:$0x7] %vm49, 0.0
    %114 = vst.msk [vmem:[#allocation2 + $0x210] sm:$0xff] %vm46, 0.0
    %115 = vst.msk [vmem:[#allocation2 + $0x218] sm:$0xff] %vm46, 0.0
    %116 = vst.msk [vmem:[#allocation2 + $0x220] sm:$0x7] %vm49, 0.0
    %117 = vst.msk [vmem:[#allocation2 + $0x228] sm:$0xff] %vm46, 0.0
    %118 = vst.msk [vmem:[#allocation2 + $0x230] sm:$0xff] %vm46, 0.0
    %119 = vst.msk [vmem:[#allocation2 + $0x238] sm:$0x7] %vm49, 0.0
    %120 = vst.msk [vmem:[#allocation2 + $0x240] sm:$0xff] %vm46, 0.0
    %121 = vst.msk [vmem:[#allocation2 + $0x248] sm:$0xff] %vm46, 0.0
    %122 = vst.msk [vmem:[#allocation2 + $0x250] sm:$0x7] %vm49, 0.0
    %123 = vst.msk [vmem:[#allocation2 + $0x258] sm:$0xff] %vm46, 0.0
    %124 = vst.msk [vmem:[#allocation2 + $0x260] sm:$0xff] %vm46, 0.0
    %125 = vst.msk [vmem:[#allocation2 + $0x268] sm:$0x7] %vm49, 0.0
    %126 = vst.msk [vmem:[#allocation2 + $0x270] sm:$0xff] %vm46, 0.0
    %127 = vst.msk [vmem:[#allocation2 + $0x278] sm:$0xff] %vm46, 0.0
    %128 = vst.msk [vmem:[#allocation2 + $0x280] sm:$0x7] %vm49, 0.0
    %129 = vst.msk [vmem:[#allocation2 + $0x288] sm:$0xff] %vm46, 0.0
    %130 = vst.msk [vmem:[#allocation2 + $0x290] sm:$0xff] %vm46, 0.0
    %131 = vst.msk [vmem:[#allocation2 + $0x298] sm:$0x7] %vm49, 0.0
    %v132 = vld [vmem:[%s0] sm:$0xff]
    %v133 = vld [vmem:[%s0 + $0x8] sm:$0xff]
    %v134 = vld [vmem:[%s0 + $0x10] sm:$0xff]
    %v135 = vld [vmem:[%s0 + $0x18] sm:$0xff]
    %v136 = vld [vmem:[%s0 + $0x20] sm:$0xff]
    %v137 = vld [vmem:[%s0 + $0x28] sm:$0xff]
    %v138 = vld [vmem:[%s0 + $0x30] sm:$0xff]
    %v139 = vld [vmem:[%s0 + $0x38] sm:$0xff]
    %v140 = vld [vmem:[%s0 + $0x40] sm:$0xff]
    %v141 = vld [vmem:[%s0 + $0x48] sm:$0xff]
    %v142 = vld [vmem:[%s0 + $0x50] sm:$0xff]
    %v143 = vld [vmem:[%s0 + $0x58] sm:$0xff]
    %v144 = vld [vmem:[%s0 + $0x60] sm:$0xff]
    %v145 = vld [vmem:[%s0 + $0x68] sm:$0xff]
    %v146 = vld [vmem:[%s0 + $0x70] sm:$0xff]
    %v147 = vld [vmem:[%s0 + $0x78] sm:$0xff]
    %s148 = scalar_lea.vmem [#allocation2], 72
    %149 = vst.msk [vmem:[%s148 + $0x8] sm:$0xff] %vm46, %v132
    %150 = vst.msk [vmem:[%s148 + $0x20] sm:$0xff] %vm46, %v133
    %151 = vst.msk [vmem:[%s148 + $0x38] sm:$0xff] %vm46, %v134
    %152 = vst.msk [vmem:[%s148 + $0x50] sm:$0xff] %vm46, %v135
    %153 = vst.msk [vmem:[%s148 + $0x68] sm:$0xff] %vm46, %v136
    %154 = vst.msk [vmem:[%s148 + $0x80] sm:$0xff] %vm46, %v137
    %155 = vst.msk [vmem:[%s148 + $0x98] sm:$0xff] %vm46, %v138
    %156 = vst.msk [vmem:[%s148 + $0xb0] sm:$0xff] %vm46, %v139
    %157 = vst.msk [vmem:[%s148 + $0x158] sm:$0xff] %vm46, %v140
    %158 = vst.msk [vmem:[%s148 + $0x170] sm:$0xff] %vm46, %v141
    %159 = vst.msk [vmem:[%s148 + $0x188] sm:$0xff] %vm46, %v142
    %160 = vst.msk [vmem:[%s148 + $0x1a0] sm:$0xff] %vm46, %v143
    %161 = vst.msk [vmem:[%s148 + $0x1b8] sm:$0xff] %vm46, %v144
    %162 = vst.msk [vmem:[%s148 + $0x1d0] sm:$0xff] %vm46, %v145
    %163 = vst.msk [vmem:[%s148 + $0x1e8] sm:$0xff] %vm46, %v146
    %164 = vst.msk [vmem:[%s148 + $0x200] sm:$0xff] %vm46, %v147
    %s165 = scalar_lea.vmem [#allocation2], 48
    %v166 = vld [vmem:[%s165 + $0x7] sm:$0xff]
    %v167 = vld [vmem:[%s165 + $0x1f] sm:$0xff]
    %v168 = vld [vmem:[%s165 + $0x37] sm:$0xff]
    %v169 = vld [vmem:[%s165 + $0x4f] sm:$0xff]
    %v170 = vld [vmem:[%s165 + $0x67] sm:$0xff]
    %v171 = vld [vmem:[%s165 + $0x7f] sm:$0xff]
    %v172 = vld [vmem:[%s165 + $0x97] sm:$0xff]
    %v173 = vld [vmem:[%s165 + $0xaf] sm:$0xff]
    %v174 = vld [vmem:[%s165 + $0x157] sm:$0xff]
    %v175 = vld [vmem:[%s165 + $0x16f] sm:$0xff]
    %v176 = vld [vmem:[%s165 + $0x187] sm:$0xff]
    %v177 = vld [vmem:[%s165 + $0x19f] sm:$0xff]
    %v178 = vld [vmem:[%s165 + $0x1b7] sm:$0xff]
    %v179 = vld [vmem:[%s165 + $0x1cf] sm:$0xff]
    %v180 = vld [vmem:[%s165 + $0x1e7] sm:$0xff]
    %v181 = vld [vmem:[%s165 + $0x1ff] sm:$0xff]
    %v182 = vpack.c.bf16 %v167, %v166
    %v183 = vpack.c.bf16 %v169, %v168
    %v184 = vpack.c.bf16 %v171, %v170
    %v185 = vpack.c.bf16 %v173, %v172
    %v186 = vpack.c.bf16 %v175, %v174
    %v187 = vpack.c.bf16 %v177, %v176
    %v188 = vpack.c.bf16 %v179, %v178
    %v189 = vpack.c.bf16 %v181, %v180
    %190 = vst.msk [vmem:[#allocation3] sm:$0xff] %vm46, %v182
    %191 = vst.msk [vmem:[#allocation3 + $0x18] sm:$0xff] %vm46, %v183
    %192 = vst.msk [vmem:[#allocation3 + $0x30] sm:$0xff] %vm46, %v184
    %193 = vst.msk [vmem:[#allocation3 + $0x48] sm:$0xff] %vm46, %v185
    %194 = vst.msk [vmem:[#allocation3 + $0x60] sm:$0xff] %vm46, %v186
    %195 = vst.msk [vmem:[#allocation3 + $0x78] sm:$0xff] %vm46, %v187
    %196 = vst.msk [vmem:[#allocation3 + $0x90] sm:$0xff] %vm46, %v188
    %197 = vst.msk [vmem:[#allocation3 + $0xa8] sm:$0xff] %vm46, %v189
    %v198 = vld [vmem:[%s165 + $0x8] sm:$0xff]
    %v199 = vld [vmem:[%s165 + $0x20] sm:$0xff]
    %v200 = vld [vmem:[%s165 + $0x38] sm:$0xff]
    %v201 = vld [vmem:[%s165 + $0x50] sm:$0xff]
    %v202 = vld [vmem:[%s165 + $0x68] sm:$0xff]
    %v203 = vld [vmem:[%s165 + $0x80] sm:$0xff]
    %v204 = vld [vmem:[%s165 + $0x98] sm:$0xff]
    %v205 = vld [vmem:[%s165 + $0xb0] sm:$0xff]
    %v206 = vld [vmem:[%s165 + $0x158] sm:$0xff]
    %v207 = vld [vmem:[%s165 + $0x170] sm:$0xff]
    %v208 = vld [vmem:[%s165 + $0x188] sm:$0xff]
    %v209 = vld [vmem:[%s165 + $0x1a0] sm:$0xff]
    %v210 = vld [vmem:[%s165 + $0x1b8] sm:$0xff]
    %v211 = vld [vmem:[%s165 + $0x1d0] sm:$0xff]
    %v212 = vld [vmem:[%s165 + $0x1e8] sm:$0xff]
    %v213 = vld [vmem:[%s165 + $0x200] sm:$0xff]
    %v214 = vpack.c.bf16 %v199, %v198
    %v215 = vpack.c.bf16 %v201, %v200
    %v216 = vpack.c.bf16 %v203, %v202
    %v217 = vpack.c.bf16 %v205, %v204
    %v218 = vpack.c.bf16 %v207, %v206
    %v219 = vpack.c.bf16 %v209, %v208
    %v220 = vpack.c.bf16 %v211, %v210
    %v221 = vpack.c.bf16 %v213, %v212
    %230 = vrot.lane.b32.xlu0 %v214, 32
    %v231 = vpop.permute.xlu0 %230
    %232 = vrot.lane.b32.xlu0 %v215, 32
    %v233 = vpop.permute.xlu0 %232
    %234 = vrot.lane.b32.xlu0 %v216, 32
    %v235 = vpop.permute.xlu0 %234
    %236 = vrot.lane.b32.xlu0 %v217, 32
    %v237 = vpop.permute.xlu0 %236
    %238 = vrot.lane.b32.xlu0 %v218, 32
    %v239 = vpop.permute.xlu0 %238
    %240 = vrot.lane.b32.xlu0 %v219, 32
    %v241 = vpop.permute.xlu0 %240
    %242 = vrot.lane.b32.xlu0 %v220, 32
    %v243 = vpop.permute.xlu0 %242
    %244 = vrot.lane.b32.xlu0 %v221, 32
    %v245 = vpop.permute.xlu0 %244
    %vm254 = vcmask 523520
    %255 = vst.msk [vmem:[#allocation3] sm:$0xff] %vm254, %v231
    %256 = vst.msk [vmem:[#allocation3 + $0x18] sm:$0xff] %vm254, %v233
    %257 = vst.msk [vmem:[#allocation3 + $0x30] sm:$0xff] %vm254, %v235
    %258 = vst.msk [vmem:[#allocation3 + $0x48] sm:$0xff] %vm254, %v237
    %259 = vst.msk [vmem:[#allocation3 + $0x60] sm:$0xff] %vm254, %v239
    %260 = vst.msk [vmem:[#allocation3 + $0x78] sm:$0xff] %vm254, %v241
    %261 = vst.msk [vmem:[#allocation3 + $0x90] sm:$0xff] %vm254, %v243
    %262 = vst.msk [vmem:[#allocation3 + $0xa8] sm:$0xff] %vm254, %v245
    %v263 = vld [vmem:[%s165 + $0x9] sm:$0xff]
    %v264 = vld [vmem:[%s165 + $0x21] sm:$0xff]
    %v265 = vld [vmem:[%s165 + $0x39] sm:$0xff]
    %v266 = vld [vmem:[%s165 + $0x51] sm:$0xff]
    %v267 = vld [vmem:[%s165 + $0x69] sm:$0xff]
    %v268 = vld [vmem:[%s165 + $0x81] sm:$0xff]
    %v269 = vld [vmem:[%s165 + $0x99] sm:$0xff]
    %v270 = vld [vmem:[%s165 + $0xb1] sm:$0xff]
    %v271 = vld [vmem:[%s165 + $0x159] sm:$0xff]
    %v272 = vld [vmem:[%s165 + $0x171] sm:$0xff]
    %v273 = vld [vmem:[%s165 + $0x189] sm:$0xff]
    %v274 = vld [vmem:[%s165 + $0x1a1] sm:$0xff]
    %v275 = vld [vmem:[%s165 + $0x1b9] sm:$0xff]
    %v276 = vld [vmem:[%s165 + $0x1d1] sm:$0xff]
    %v277 = vld [vmem:[%s165 + $0x1e9] sm:$0xff]
    %v278 = vld [vmem:[%s165 + $0x201] sm:$0xff]
    %v279 = vpack.c.bf16 %v264, %v263
    %v280 = vpack.c.bf16 %v266, %v265
    %v281 = vpack.c.bf16 %v268, %v267
    %v282 = vpack.c.bf16 %v270, %v269
    %v283 = vpack.c.bf16 %v272, %v271
    %v284 = vpack.c.bf16 %v274, %v273
    %v285 = vpack.c.bf16 %v276, %v275
    %v286 = vpack.c.bf16 %v278, %v277
    %295 = vrot.lane.b32.xlu0 %v279, 64
    %v296 = vpop.permute.xlu0 %295
    %297 = vrot.lane.b32.xlu0 %v280, 64
    %v298 = vpop.permute.xlu0 %297
    %299 = vrot.lane.b32.xlu0 %v281, 64
    %v300 = vpop.permute.xlu0 %299
    %301 = vrot.lane.b32.xlu0 %v282, 64
    %v302 = vpop.permute.xlu0 %301
    %303 = vrot.lane.b32.xlu0 %v283, 64
    %v304 = vpop.permute.xlu0 %303
    %305 = vrot.lane.b32.xlu0 %v284, 64
    %v306 = vpop.permute.xlu0 %305
    %307 = vrot.lane.b32.xlu0 %v285, 64
    %v308 = vpop.permute.xlu0 %307
    %309 = vrot.lane.b32.xlu0 %v286, 64
    %v310 = vpop.permute.xlu0 %309
    %vm319 = vcmask 785920
    %320 = vst.msk [vmem:[#allocation3] sm:$0xff] %vm319, %v296
    %321 = vst.msk [vmem:[#allocation3 + $0x18] sm:$0xff] %vm319, %v298
    %322 = vst.msk [vmem:[#allocation3 + $0x30] sm:$0xff] %vm319, %v300
    %323 = vst.msk [vmem:[#allocation3 + $0x48] sm:$0xff] %vm319, %v302
    %324 = vst.msk [vmem:[#allocation3 + $0x60] sm:$0xff] %vm319, %v304
    %325 = vst.msk [vmem:[#allocation3 + $0x78] sm:$0xff] %vm319, %v306
    %326 = vst.msk [vmem:[#allocation3 + $0x90] sm:$0xff] %vm319, %v308
    %327 = vst.msk [vmem:[#allocation3 + $0xa8] sm:$0xff] %vm319, %v310
    %v328 = vld [vmem:[%s148 + $0x7] sm:$0xff]
    %v329 = vld [vmem:[%s148 + $0x1f] sm:$0xff]
    %v330 = vld [vmem:[%s148 + $0x37] sm:$0xff]
    %v331 = vld [vmem:[%s148 + $0x4f] sm:$0xff]
    %v332 = vld [vmem:[%s148 + $0x67] sm:$0xff]
    %v333 = vld [vmem:[%s148 + $0x7f] sm:$0xff]
    %v334 = vld [vmem:[%s148 + $0x97] sm:$0xff]
    %v335 = vld [vmem:[%s148 + $0xaf] sm:$0xff]
    %v336 = vld [vmem:[%s148 + $0x157] sm:$0xff]
    %v337 = vld [vmem:[%s148 + $0x16f] sm:$0xff]
    %v338 = vld [vmem:[%s148 + $0x187] sm:$0xff]
    %v339 = vld [vmem:[%s148 + $0x19f] sm:$0xff]
    %v340 = vld [vmem:[%s148 + $0x1b7] sm:$0xff]
    %v341 = vld [vmem:[%s148 + $0x1cf] sm:$0xff]
    %v342 = vld [vmem:[%s148 + $0x1e7] sm:$0xff]
    %v343 = vld [vmem:[%s148 + $0x1ff] sm:$0xff]
    %v344 = vpack.c.bf16 %v329, %v328
    %v345 = vpack.c.bf16 %v331, %v330
    %v346 = vpack.c.bf16 %v333, %v332
    %v347 = vpack.c.bf16 %v335, %v334
    %v348 = vpack.c.bf16 %v337, %v336
    %v349 = vpack.c.bf16 %v339, %v338
    %v350 = vpack.c.bf16 %v341, %v340
    %v351 = vpack.c.bf16 %v343, %v342
    %360 = vrot.lane.b32.xlu0 %v344, 96
    %v361 = vpop.permute.xlu0 %360
    %362 = vrot.lane.b32.xlu0 %v345, 96
    %v363 = vpop.permute.xlu0 %362
    %364 = vrot.lane.b32.xlu0 %v346, 96
    %v365 = vpop.permute.xlu0 %364
    %366 = vrot.lane.b32.xlu0 %v347, 96
    %v367 = vpop.permute.xlu0 %366
    %368 = vrot.lane.b32.xlu0 %v348, 96
    %v369 = vpop.permute.xlu0 %368
    %370 = vrot.lane.b32.xlu0 %v349, 96
    %v371 = vpop.permute.xlu0 %370
    %372 = vrot.lane.b32.xlu0 %v350, 96
    %v373 = vpop.permute.xlu0 %372
    %374 = vrot.lane.b32.xlu0 %v351, 96
    %v375 = vpop.permute.xlu0 %374
    %vm384 = vcmask 1048320
    %385 = vst.msk [vmem:[#allocation3] sm:$0xff] %vm384, %v361
    %386 = vst.msk [vmem:[#allocation3 + $0x18] sm:$0xff] %vm384, %v363
    %387 = vst.msk [vmem:[#allocation3 + $0x30] sm:$0xff] %vm384, %v365
    %388 = vst.msk [vmem:[#allocation3 + $0x48] sm:$0xff] %vm384, %v367
    %389 = vst.msk [vmem:[#allocation3 + $0x60] sm:$0xff] %vm384, %v369
    %390 = vst.msk [vmem:[#allocation3 + $0x78] sm:$0xff] %vm384, %v371
    %391 = vst.msk [vmem:[#allocation3 + $0x90] sm:$0xff] %vm384, %v373
    %392 = vst.msk [vmem:[#allocation3 + $0xa8] sm:$0xff] %vm384, %v375
    %v393 = vld [vmem:[%s148 + $0x8] sm:$0xff]
    %v394 = vld [vmem:[%s148 + $0x20] sm:$0xff]
    %v395 = vld [vmem:[%s148 + $0x38] sm:$0xff]
    %v396 = vld [vmem:[%s148 + $0x50] sm:$0xff]
    %v397 = vld [vmem:[%s148 + $0x68] sm:$0xff]
    %v398 = vld [vmem:[%s148 + $0x80] sm:$0xff]
    %v399 = vld [vmem:[%s148 + $0x98] sm:$0xff]
    %v400 = vld [vmem:[%s148 + $0xb0] sm:$0xff]
    %v401 = vld [vmem:[%s148 + $0x158] sm:$0xff]
    %v402 = vld [vmem:[%s148 + $0x170] sm:$0xff]
    %v403 = vld [vmem:[%s148 + $0x188] sm:$0xff]
    %v404 = vld [vmem:[%s148 + $0x1a0] sm:$0xff]
    %v405 = vld [vmem:[%s148 + $0x1b8] sm:$0xff]
    %v406 = vld [vmem:[%s148 + $0x1d0] sm:$0xff]
    %v407 = vld [vmem:[%s148 + $0x1e8] sm:$0xff]
    %v408 = vld [vmem:[%s148 + $0x200] sm:$0xff]
    %v409 = vpack.c.bf16 %v394, %v393
    %v410 = vpack.c.bf16 %v396, %v395
    %v411 = vpack.c.bf16 %v398, %v397
    %v412 = vpack.c.bf16 %v400, %v399
    %v413 = vpack.c.bf16 %v402, %v401
    %v414 = vpack.c.bf16 %v404, %v403
    %v415 = vpack.c.bf16 %v406, %v405
    %v416 = vpack.c.bf16 %v408, %v407
    %417 = vst.msk [vmem:[#allocation3 + $0x8] sm:$0xff] %vm46, %v409
    %418 = vst.msk [vmem:[#allocation3 + $0x20] sm:$0xff] %vm46, %v410
    %419 = vst.msk [vmem:[#allocation3 + $0x38] sm:$0xff] %vm46, %v411
    %420 = vst.msk [vmem:[#allocation3 + $0x50] sm:$0xff] %vm46, %v412
    %421 = vst.msk [vmem:[#allocation3 + $0x68] sm:$0xff] %vm46, %v413
    %422 = vst.msk [vmem:[#allocation3 + $0x80] sm:$0xff] %vm46, %v414
    %423 = vst.msk [vmem:[#allocation3 + $0x98] sm:$0xff] %vm46, %v415
    %424 = vst.msk [vmem:[#allocation3 + $0xb0] sm:$0xff] %vm46, %v416
    %v425 = vld [vmem:[%s148 + $0x9] sm:$0xff]
    %v426 = vld [vmem:[%s148 + $0x21] sm:$0xff]
    %v427 = vld [vmem:[%s148 + $0x39] sm:$0xff]
    %v428 = vld [vmem:[%s148 + $0x51] sm:$0xff]
    %v429 = vld [vmem:[%s148 + $0x69] sm:$0xff]
    %v430 = vld [vmem:[%s148 + $0x81] sm:$0xff]
    %v431 = vld [vmem:[%s148 + $0x99] sm:$0xff]
    %v432 = vld [vmem:[%s148 + $0xb1] sm:$0xff]
    %v433 = vld [vmem:[%s148 + $0x159] sm:$0xff]
    %v434 = vld [vmem:[%s148 + $0x171] sm:$0xff]
    %v435 = vld [vmem:[%s148 + $0x189] sm:$0xff]
    %v436 = vld [vmem:[%s148 + $0x1a1] sm:$0xff]
    %v437 = vld [vmem:[%s148 + $0x1b9] sm:$0xff]
    %v438 = vld [vmem:[%s148 + $0x1d1] sm:$0xff]
    %v439 = vld [vmem:[%s148 + $0x1e9] sm:$0xff]
    %v440 = vld [vmem:[%s148 + $0x201] sm:$0xff]
    %v441 = vpack.c.bf16 %v426, %v425
    %v442 = vpack.c.bf16 %v428, %v427
    %v443 = vpack.c.bf16 %v430, %v429
    %v444 = vpack.c.bf16 %v432, %v431
    %v445 = vpack.c.bf16 %v434, %v433
    %v446 = vpack.c.bf16 %v436, %v435
    %v447 = vpack.c.bf16 %v438, %v437
    %v448 = vpack.c.bf16 %v440, %v439
    %457 = vrot.lane.b32.xlu0 %v441, 32
    %v458 = vpop.permute.xlu0 %457
    %459 = vrot.lane.b32.xlu0 %v442, 32
    %v460 = vpop.permute.xlu0 %459
    %461 = vrot.lane.b32.xlu0 %v443, 32
    %v462 = vpop.permute.xlu0 %461
    %463 = vrot.lane.b32.xlu0 %v444, 32
    %v464 = vpop.permute.xlu0 %463
    %465 = vrot.lane.b32.xlu0 %v445, 32
    %v466 = vpop.permute.xlu0 %465
    %467 = vrot.lane.b32.xlu0 %v446, 32
    %v468 = vpop.permute.xlu0 %467
    %469 = vrot.lane.b32.xlu0 %v447, 32
    %v470 = vpop.permute.xlu0 %469
    %471 = vrot.lane.b32.xlu0 %v448, 32
    %v472 = vpop.permute.xlu0 %471
    %481 = vst.msk [vmem:[#allocation3 + $0x8] sm:$0xff] %vm254, %v458
    %482 = vst.msk [vmem:[#allocation3 + $0x20] sm:$0xff] %vm254, %v460
    %483 = vst.msk [vmem:[#allocation3 + $0x38] sm:$0xff] %vm254, %v462
    %484 = vst.msk [vmem:[#allocation3 + $0x50] sm:$0xff] %vm254, %v464
    %485 = vst.msk [vmem:[#allocation3 + $0x68] sm:$0xff] %vm254, %v466
    %486 = vst.msk [vmem:[#allocation3 + $0x80] sm:$0xff] %vm254, %v468
    %487 = vst.msk [vmem:[#allocation3 + $0x98] sm:$0xff] %vm254, %v470
    %488 = vst.msk [vmem:[#allocation3 + $0xb0] sm:$0xff] %vm254, %v472
    %s489 = scalar_lea.vmem [#allocation2], 96
    %v490 = vld [vmem:[%s489 + $0x7] sm:$0xff]
    %v491 = vld [vmem:[%s489 + $0x1f] sm:$0xff]
    %v492 = vld [vmem:[%s489 + $0x37] sm:$0xff]
    %v493 = vld [vmem:[%s489 + $0x4f] sm:$0xff]
    %v494 = vld [vmem:[%s489 + $0x67] sm:$0xff]
    %v495 = vld [vmem:[%s489 + $0x7f] sm:$0xff]
    %v496 = vld [vmem:[%s489 + $0x97] sm:$0xff]
    %v497 = vld [vmem:[%s489 + $0xaf] sm:$0xff]
    %v498 = vld [vmem:[%s489 + $0x157] sm:$0xff]
    %v499 = vld [vmem:[%s489 + $0x16f] sm:$0xff]
    %v500 = vld [vmem:[%s489 + $0x187] sm:$0xff]
    %v501 = vld [vmem:[%s489 + $0x19f] sm:$0xff]
    %v502 = vld [vmem:[%s489 + $0x1b7] sm:$0xff]
    %v503 = vld [vmem:[%s489 + $0x1cf] sm:$0xff]
    %v504 = vld [vmem:[%s489 + $0x1e7] sm:$0xff]
    %v505 = vld [vmem:[%s489 + $0x1ff] sm:$0xff]
    %v506 = vpack.c.bf16 %v491, %v490
    %v507 = vpack.c.bf16 %v493, %v492
    %v508 = vpack.c.bf16 %v495, %v494
    %v509 = vpack.c.bf16 %v497, %v496
    %v510 = vpack.c.bf16 %v499, %v498
    %v511 = vpack.c.bf16 %v501, %v500
    %v512 = vpack.c.bf16 %v503, %v502
    %v513 = vpack.c.bf16 %v505, %v504
    %522 = vrot.lane.b32.xlu0 %v506, 64
    %v523 = vpop.permute.xlu0 %522
    %524 = vrot.lane.b32.xlu0 %v507, 64
    %v525 = vpop.permute.xlu0 %524
    %526 = vrot.lane.b32.xlu0 %v508, 64
    %v527 = vpop.permute.xlu0 %526
    %528 = vrot.lane.b32.xlu0 %v509, 64
    %v529 = vpop.permute.xlu0 %528
    %530 = vrot.lane.b32.xlu0 %v510, 64
    %v531 = vpop.permute.xlu0 %530
    %532 = vrot.lane.b32.xlu0 %v511, 64
    %v533 = vpop.permute.xlu0 %532
    %534 = vrot.lane.b32.xlu0 %v512, 64
    %v535 = vpop.permute.xlu0 %534
    %536 = vrot.lane.b32.xlu0 %v513, 64
    %v537 = vpop.permute.xlu0 %536
    %546 = vst.msk [vmem:[#allocation3 + $0x8] sm:$0xff] %vm319, %v523
    %547 = vst.msk [vmem:[#allocation3 + $0x20] sm:$0xff] %vm319, %v525
    %548 = vst.msk [vmem:[#allocation3 + $0x38] sm:$0xff] %vm319, %v527
    %549 = vst.msk [vmem:[#allocation3 + $0x50] sm:$0xff] %vm319, %v529
    %550 = vst.msk [vmem:[#allocation3 + $0x68] sm:$0xff] %vm319, %v531
    %551 = vst.msk [vmem:[#allocation3 + $0x80] sm:$0xff] %vm319, %v533
    %552 = vst.msk [vmem:[#allocation3 + $0x98] sm:$0xff] %vm319, %v535
    %553 = vst.msk [vmem:[#allocation3 + $0xb0] sm:$0xff] %vm319, %v537
    %v554 = vld [vmem:[%s489 + $0x8] sm:$0xff]
    %v555 = vld [vmem:[%s489 + $0x20] sm:$0xff]
    %v556 = vld [vmem:[%s489 + $0x38] sm:$0xff]
    %v557 = vld [vmem:[%s489 + $0x50] sm:$0xff]
    %v558 = vld [vmem:[%s489 + $0x68] sm:$0xff]
    %v559 = vld [vmem:[%s489 + $0x80] sm:$0xff]
    %v560 = vld [vmem:[%s489 + $0x98] sm:$0xff]
    %v561 = vld [vmem:[%s489 + $0xb0] sm:$0xff]
    %v562 = vld [vmem:[%s489 + $0x158] sm:$0xff]
    %v563 = vld [vmem:[%s489 + $0x170] sm:$0xff]
    %v564 = vld [vmem:[%s489 + $0x188] sm:$0xff]
    %v565 = vld [vmem:[%s489 + $0x1a0] sm:$0xff]
    %v566 = vld [vmem:[%s489 + $0x1b8] sm:$0xff]
    %v567 = vld [vmem:[%s489 + $0x1d0] sm:$0xff]
    %v568 = vld [vmem:[%s489 + $0x1e8] sm:$0xff]
    %v569 = vld [vmem:[%s489 + $0x200] sm:$0xff]
    %v570 = vpack.c.bf16 %v555, %v554
    %v571 = vpack.c.bf16 %v557, %v556
    %v572 = vpack.c.bf16 %v559, %v558
    %v573 = vpack.c.bf16 %v561, %v560
    %v574 = vpack.c.bf16 %v563, %v562
    %v575 = vpack.c.bf16 %v565, %v564
    %v576 = vpack.c.bf16 %v567, %v566
    %v577 = vpack.c.bf16 %v569, %v568
    %586 = vrot.lane.b32.xlu0 %v570, 96
    %v587 = vpop.permute.xlu0 %586
    %588 = vrot.lane.b32.xlu0 %v571, 96
    %v589 = vpop.permute.xlu0 %588
    %590 = vrot.lane.b32.xlu0 %v572, 96
    %v591 = vpop.permute.xlu0 %590
    %592 = vrot.lane.b32.xlu0 %v573, 96
    %v593 = vpop.permute.xlu0 %592
    %594 = vrot.lane.b32.xlu0 %v574, 96
    %v595 = vpop.permute.xlu0 %594
    %596 = vrot.lane.b32.xlu0 %v575, 96
    %v597 = vpop.permute.xlu0 %596
    %598 = vrot.lane.b32.xlu0 %v576, 96
    %v599 = vpop.permute.xlu0 %598
    %600 = vrot.lane.b32.xlu0 %v577, 96
    %v601 = vpop.permute.xlu0 %600
    %610 = vst.msk [vmem:[#allocation3 + $0x8] sm:$0xff] %vm384, %v587
    %611 = vst.msk [vmem:[#allocation3 + $0x20] sm:$0xff] %vm384, %v589
    %612 = vst.msk [vmem:[#allocation3 + $0x38] sm:$0xff] %vm384, %v591
    %613 = vst.msk [vmem:[#allocation3 + $0x50] sm:$0xff] %vm384, %v593
    %614 = vst.msk [vmem:[#allocation3 + $0x68] sm:$0xff] %vm384, %v595
    %615 = vst.msk [vmem:[#allocation3 + $0x80] sm:$0xff] %vm384, %v597
    %616 = vst.msk [vmem:[#allocation3 + $0x98] sm:$0xff] %vm384, %v599
    %617 = vst.msk [vmem:[#allocation3 + $0xb0] sm:$0xff] %vm384, %v601
    %v618 = vld [vmem:[%s489 + $0x9] sm:$0xff]
    %v619 = vld [vmem:[%s489 + $0x21] sm:$0xff]
    %v620 = vld [vmem:[%s489 + $0x39] sm:$0xff]
    %v621 = vld [vmem:[%s489 + $0x51] sm:$0xff]
    %v622 = vld [vmem:[%s489 + $0x69] sm:$0xff]
    %v623 = vld [vmem:[%s489 + $0x81] sm:$0xff]
    %v624 = vld [vmem:[%s489 + $0x99] sm:$0xff]
    %v625 = vld [vmem:[%s489 + $0xb1] sm:$0xff]
    %v626 = vld [vmem:[%s489 + $0x159] sm:$0xff]
    %v627 = vld [vmem:[%s489 + $0x171] sm:$0xff]
    %v628 = vld [vmem:[%s489 + $0x189] sm:$0xff]
    %v629 = vld [vmem:[%s489 + $0x1a1] sm:$0xff]
    %v630 = vld [vmem:[%s489 + $0x1b9] sm:$0xff]
    %v631 = vld [vmem:[%s489 + $0x1d1] sm:$0xff]
    %v632 = vld [vmem:[%s489 + $0x1e9] sm:$0xff]
    %v633 = vld [vmem:[%s489 + $0x201] sm:$0xff]
    %v634 = vpack.c.bf16 %v619, %v618
    %v635 = vpack.c.bf16 %v621, %v620
    %v636 = vpack.c.bf16 %v623, %v622
    %v637 = vpack.c.bf16 %v625, %v624
    %v638 = vpack.c.bf16 %v627, %v626
    %v639 = vpack.c.bf16 %v629, %v628
    %v640 = vpack.c.bf16 %v631, %v630
    %v641 = vpack.c.bf16 %v633, %v632
    %642 = vst.msk [vmem:[#allocation3 + $0x10] sm:$0xff] %vm46, %v634
    %643 = vst.msk [vmem:[#allocation3 + $0x28] sm:$0xff] %vm46, %v635
    %644 = vst.msk [vmem:[#allocation3 + $0x40] sm:$0xff] %vm46, %v636
    %645 = vst.msk [vmem:[#allocation3 + $0x58] sm:$0xff] %vm46, %v637
    %646 = vst.msk [vmem:[#allocation3 + $0x70] sm:$0xff] %vm46, %v638
    %647 = vst.msk [vmem:[#allocation3 + $0x88] sm:$0xff] %vm46, %v639
    %648 = vst.msk [vmem:[#allocation3 + $0xa0] sm:$0xff] %vm46, %v640
    %649 = vst.msk [vmem:[#allocation3 + $0xb8] sm:$0xff] %vm46, %v641
    %v650 = vld [vmem:[%s1] sm:$0xf]
    %v651 = vld [vmem:[%s1 + $0x4] sm:$0xf]
    %v652 = vld [vmem:[%s1 + $0x8] sm:$0xf]
    %v653 = vld [vmem:[%s1 + $0xc] sm:$0xf]
    %v654 = vld [vmem:[%s1 + $0x10] sm:$0xf]
    %v655 = vld [vmem:[%s1 + $0x14] sm:$0xf]
    %v656 = vld [vmem:[%s1 + $0x18] sm:$0xf]
    %v657 = vld [vmem:[%s1 + $0x1c] sm:$0xf]
    %v658 = vld [vmem:[%s1 + $0x20] sm:$0xf]
    %v659 = vld [vmem:[%s1 + $0x24] sm:$0xf]
    %v660 = vld [vmem:[%s1 + $0x28] sm:$0xf]
    %v661 = vld [vmem:[%s1 + $0x2c] sm:$0xf]
    %v662 = vld [vmem:[%s1 + $0x30] sm:$0xf]
    %v663 = vld [vmem:[%s1 + $0x34] sm:$0xf]
    %v664 = vld [vmem:[%s1 + $0x38] sm:$0xf]
    %v665 = vld [vmem:[%s1 + $0x3c] sm:$0xf]
    %v666 = vld [vmem:[%s1 + $0x40] sm:$0xf]
    %v667 = vld [vmem:[%s1 + $0x44] sm:$0xf]
    %v668 = vld [vmem:[%s1 + $0x48] sm:$0xf]
    %v669 = vld [vmem:[%s1 + $0x4c] sm:$0xf]
    %v670 = vld [vmem:[%s1 + $0x50] sm:$0xf]
    %v671 = vld [vmem:[%s1 + $0x54] sm:$0xf]
    %v672 = vld [vmem:[%s1 + $0x58] sm:$0xf]
    %v673 = vld [vmem:[%s1 + $0x5c] sm:$0xf]
    %v674 = vld [vmem:[%s1 + $0x60] sm:$0xf]
    %v675 = vld [vmem:[%s1 + $0x64] sm:$0xf]
    %v676 = vld [vmem:[%s1 + $0x68] sm:$0xf]
    %v677 = vld [vmem:[%s1 + $0x6c] sm:$0xf]
    %v678 = vld [vmem:[%s1 + $0x70] sm:$0xf]
    %v679 = vld [vmem:[%s1 + $0x74] sm:$0xf]
    %v680 = vld [vmem:[%s1 + $0x78] sm:$0xf]
    %v681 = vld [vmem:[%s1 + $0x7c] sm:$0xf]
    %v682 = vld [vmem:[%s1 + $0x80] sm:$0xf]
    %v683 = vld [vmem:[%s1 + $0x84] sm:$0xf]
    %v684 = vld [vmem:[%s1 + $0x88] sm:$0xf]
    %v685 = vld [vmem:[%s1 + $0x8c] sm:$0xf]
    %v686 = vld [vmem:[%s2] sm:$0x1]
    %v687 = vld [vmem:[#allocation3] sm:$0xff]
    %v688 = vld [vmem:[#allocation3 + $0x8] sm:$0xff]
    %v689 = vld [vmem:[#allocation3 + $0x10] sm:$0xff]
    %v690 = vld [vmem:[#allocation3 + $0x18] sm:$0xff]
    %v691 = vld [vmem:[#allocation3 + $0x20] sm:$0xff]
    %v692 = vld [vmem:[#allocation3 + $0x28] sm:$0xff]
    %v693 = vld [vmem:[#allocation3 + $0x30] sm:$0xff]
    %v694 = vld [vmem:[#allocation3 + $0x38] sm:$0xff]
    %v695 = vld [vmem:[#allocation3 + $0x40] sm:$0xff]
    %v696 = vld [vmem:[#allocation3 + $0x48] sm:$0xff]
    %v697 = vld [vmem:[#allocation3 + $0x50] sm:$0xff]
    %v698 = vld [vmem:[#allocation3 + $0x58] sm:$0xff]
    %v699 = vld [vmem:[#allocation3 + $0x60] sm:$0xff]
    %v700 = vld [vmem:[#allocation3 + $0x68] sm:$0xff]
    %v701 = vld [vmem:[#allocation3 + $0x70] sm:$0xff]
    %v702 = vld [vmem:[#allocation3 + $0x78] sm:$0xff]
    %v703 = vld [vmem:[#allocation3 + $0x80] sm:$0xff]
    %v704 = vld [vmem:[#allocation3 + $0x88] sm:$0xff]
    %v705 = vld [vmem:[#allocation3 + $0x90] sm:$0xff]
    %v706 = vld [vmem:[#allocation3 + $0x98] sm:$0xff]
    %v707 = vld [vmem:[#allocation3 + $0xa0] sm:$0xff]
    %v708 = vld [vmem:[#allocation3 + $0xa8] sm:$0xff]
    %v709 = vld [vmem:[#allocation3 + $0xb0] sm:$0xff]
    %v710 = vld [vmem:[#allocation3 + $0xb8] sm:$0xff]
    %v712 = vlaneseq
    %v713 = vshrl.u32 %v712, 7
    %v714 = vsub.s32 0, %v713
    %v715 = vrot.slane %v686, %v714
    %v753 = vunpack.c.l.b16 %v650
    %v754 = vunpack.c.l.b16 %v651
    %v755 = vunpack.c.l.b16 %v652
    %v756 = vunpack.c.l.b16 %v653
    %v757 = vunpack.c.l.b16 %v654
    %v758 = vunpack.c.l.b16 %v655
    %v759 = vunpack.c.l.b16 %v656
    %v760 = vunpack.c.l.b16 %v657
    %v761 = vunpack.c.l.b16 %v658
    %v762 = vunpack.c.l.b16 %v659
    %v763 = vunpack.c.l.b16 %v660
    %v764 = vunpack.c.l.b16 %v661
    %v765 = vunpack.c.l.b16 %v662
    %v766 = vunpack.c.l.b16 %v663
    %v767 = vunpack.c.l.b16 %v664
    %v768 = vunpack.c.l.b16 %v665
    %v769 = vunpack.c.l.b16 %v666
    %v770 = vunpack.c.l.b16 %v667
    %v771 = vunpack.c.l.b16 %v668
    %v772 = vunpack.c.l.b16 %v669
    %v773 = vunpack.c.l.b16 %v670
    %v774 = vunpack.c.l.b16 %v671
    %v775 = vunpack.c.l.b16 %v672
    %v776 = vunpack.c.l.b16 %v673
    %v777 = vunpack.c.l.b16 %v674
    %v778 = vunpack.c.l.b16 %v675
    %v779 = vunpack.c.l.b16 %v676
    %v780 = vunpack.c.l.b16 %v677
    %v781 = vunpack.c.l.b16 %v678
    %v782 = vunpack.c.l.b16 %v679
    %v783 = vunpack.c.l.b16 %v680
    %v784 = vunpack.c.l.b16 %v681
    %v785 = vunpack.c.l.b16 %v682
    %v786 = vunpack.c.l.b16 %v683
    %v787 = vunpack.c.l.b16 %v684
    %v788 = vunpack.c.l.b16 %v685
    %v789 = vpack.c.b16 %v754, %v753
    %v790 = vpack.c.b16 %v756, %v755
    %v791 = vpack.c.b16 %v758, %v757
    %v792 = vpack.c.b16 %v760, %v759
    %v793 = vpack.c.b16 %v762, %v761
    %v794 = vpack.c.b16 %v764, %v763
    %v795 = vpack.c.b16 %v766, %v765
    %v796 = vpack.c.b16 %v768, %v767
    %v797 = vpack.c.b16 %v770, %v769
    %v798 = vpack.c.b16 %v772, %v771
    %v799 = vpack.c.b16 %v774, %v773
    %v800 = vpack.c.b16 %v776, %v775
    %v801 = vpack.c.b16 %v778, %v777
    %v802 = vpack.c.b16 %v780, %v779
    %v803 = vpack.c.b16 %v782, %v781
    %v804 = vpack.c.b16 %v784, %v783
    %v805 = vpack.c.b16 %v786, %v785
    %v806 = vpack.c.b16 %v788, %v787
    %v826 = vsel %vm46, %v689, 0
    %v829 = vsel %vm46, %v692, 0
    %v832 = vsel %vm46, %v695, 0
    %v835 = vsel %vm46, %v698, 0
    %v838 = vsel %vm46, %v701, 0
    %v841 = vsel %vm46, %v704, 0
    %v844 = vsel %vm46, %v707, 0
    %v847 = vsel %vm46, %v710, 0
    %849 = vmatprep.subr.bf16.mxu0 0
    %850 = vmatpush1.bf16.msra.mxu0 %v789
    %851 = vmatprep.subr.bf16.mxu0 0
    %852 = vmatpush1.bf16.msra.mxu0 %v790
    %853 = vmatprep.subr.bf16.mxu0 0
    %854 = vmatpush1.bf16.msra.mxu0 %v791
    %855 = vmatprep.subr.bf16.mxu0 0
    %856 = vmatpush1.bf16.msra.mxu0 %v792
    %857 = vmatprep.subr.bf16.mxu0 0
    %858 = vmatpush1.bf16.msra.mxu0 %v793
    %859 = vmatprep.subr.bf16.mxu0 0
    %860 = vmatpush1.bf16.msra.mxu0 %v794
    %861 = vmatprep.subr.bf16.mxu0 0
    %862 = vmatpush1.bf16.msra.mxu0 %v795
    %863 = vmatprep.subr.bf16.mxu0 0
    %864 = vmatpush1.bf16.msra.mxu0 %v796
    %865 = vmatprep.subr.bf16.mxu0 0
    %866 = vmatpush1.bf16.msra.mxu0 %v797
    %867 = vmatprep.subr.bf16.mxu0 0
    %868 = vmatpush1.bf16.msra.mxu0 %v798
    %869 = vmatprep.subr.bf16.mxu0 0
    %870 = vmatpush1.bf16.msra.mxu0 %v799
    %871 = vmatprep.subr.bf16.mxu0 0
    %872 = vmatpush1.bf16.msra.mxu0 %v800
    %873 = vmatprep.subr.bf16.mxu0 0
    %874 = vmatpush1.bf16.msra.mxu0 %v801
    %875 = vmatprep.subr.bf16.mxu0 0
    %876 = vmatpush1.bf16.msra.mxu0 %v802
    %877 = vmatprep.subr.bf16.mxu0 0
    %878 = vmatpush1.bf16.msra.mxu0 %v803
    %879 = vmatprep.subr.bf16.mxu0 0
    %880 = vmatpush1.bf16.msra.mxu0 %v804
    %881 = vmatprep.mubr.bf16.mxu0 %v688
    %882 = vmatmul.mubr.bf16.gmra.mrb[0].mxu0 %v687
    %v883 = vpop.f32.mrb[0].mxu0
    %v884 = vadd.f32 %v715, %v883
    %v885 = vpop.f32.mrb[0].mxu0
    %v886 = vpop.f32.mrb[0].mxu0
    %v887 = vadd.f32 %v715, %v886
    %v888 = vpop.f32.mrb[0].mxu0
    %889 = vmatprep.mubr.bf16.mxu0 %v691
    %890 = vmatmul.mubr.bf16.gmra.mrb[0].mxu0 %v690
    %v891 = vpop.f32.mrb[0].mxu0
    %v892 = vadd.f32 %v715, %v891
    %v893 = vpop.f32.mrb[0].mxu0
    %v894 = vpop.f32.mrb[0].mxu0
    %v895 = vadd.f32 %v715, %v894
    %v896 = vpop.f32.mrb[0].mxu0
    %897 = vmatprep.mubr.bf16.mxu0 %v694
    %898 = vmatmul.mubr.bf16.gmra.mrb[0].mxu0 %v693
    %v899 = vpop.f32.mrb[0].mxu0
    %v900 = vadd.f32 %v715, %v899
    %v901 = vpop.f32.mrb[0].mxu0
    %v902 = vpop.f32.mrb[0].mxu0
    %v903 = vadd.f32 %v715, %v902
    %v904 = vpop.f32.mrb[0].mxu0
    %905 = vmatprep.mubr.bf16.mxu0 %v697
    %906 = vmatmul.mubr.bf16.gmra.mrb[0].mxu0 %v696
    %v907 = vpop.f32.mrb[0].mxu0
    %v908 = vadd.f32 %v715, %v907
    %v909 = vpop.f32.mrb[0].mxu0
    %v910 = vpop.f32.mrb[0].mxu0
    %v911 = vadd.f32 %v715, %v910
    %v912 = vpop.f32.mrb[0].mxu0
    %913 = vmatprep.mubr.bf16.mxu0 %v700
    %914 = vmatmul.mubr.bf16.gmra.mrb[0].mxu0 %v699
    %v915 = vpop.f32.mrb[0].mxu0
    %v916 = vadd.f32 %v715, %v915
    %v917 = vpop.f32.mrb[0].mxu0
    %v918 = vpop.f32.mrb[0].mxu0
    %v919 = vadd.f32 %v715, %v918
    %v920 = vpop.f32.mrb[0].mxu0
    %921 = vmatprep.mubr.bf16.mxu0 %v703
    %922 = vmatmul.mubr.bf16.gmra.mrb[0].mxu0 %v702
    %v923 = vpop.f32.mrb[0].mxu0
    %v924 = vadd.f32 %v715, %v923
    %v925 = vpop.f32.mrb[0].mxu0
    %v926 = vpop.f32.mrb[0].mxu0
    %v927 = vadd.f32 %v715, %v926
    %v928 = vpop.f32.mrb[0].mxu0
    %929 = vmatprep.mubr.bf16.mxu0 %v706
    %930 = vmatmul.mubr.bf16.gmra.mrb[0].mxu0 %v705
    %v931 = vpop.f32.mrb[0].mxu0
    %v932 = vadd.f32 %v715, %v931
    %v933 = vpop.f32.mrb[0].mxu0
    %v934 = vpop.f32.mrb[0].mxu0
    %v935 = vadd.f32 %v715, %v934
    %v936 = vpop.f32.mrb[0].mxu0
    %937 = vmatprep.mubr.bf16.mxu0 %v709
    %938 = vmatmul.mubr.bf16.gmra.mrb[0].mxu0 %v708
    %v939 = vpop.f32.mrb[0].mxu0
    %v940 = vadd.f32 %v715, %v939
    %v941 = vpop.f32.mrb[0].mxu0
    %v942 = vpop.f32.mrb[0].mxu0
    %v943 = vadd.f32 %v715, %v942
    %v944 = vpop.f32.mrb[0].mxu0
    %945 = vdwg.mxu0
    %946 = vmatprep.subr.bf16.mxu0 0
    %947 = vmatpush1.bf16.msra.mxu0 %v805
    %948 = vmatprep.subr.bf16.mxu0 0
    %949 = vmatpush1.bf16.msra.mxu0 %v806
    %950 = vmatprep.subr.bf16.mxu0 0
    %951 = vmatpush1.bf16.msra.mxu0 0
    %952 = vmatprep.subr.bf16.mxu0 0
    %953 = vmatpush1.bf16.msra.mxu0 0
    %954 = vmatprep.subr.bf16.mxu0 0
    %955 = vmatpush1.bf16.msra.mxu0 0
    %956 = vmatprep.subr.bf16.mxu0 0
    %957 = vmatpush1.bf16.msra.mxu0 0
    %958 = vmatprep.subr.bf16.mxu0 0
    %959 = vmatpush1.bf16.msra.mxu0 0
    %960 = vmatprep.subr.bf16.mxu0 0
    %961 = vmatpush1.bf16.msra.mxu0 0
    %962 = vmatprep.subr.bf16.mxu0 0
    %963 = vmatpush1.bf16.msra.mxu0 0
    %964 = vmatprep.subr.bf16.mxu0 0
    %965 = vmatpush1.bf16.msra.mxu0 0
    %966 = vmatprep.subr.bf16.mxu0 0
    %967 = vmatpush1.bf16.msra.mxu0 0
    %968 = vmatprep.subr.bf16.mxu0 0
    %969 = vmatpush1.bf16.msra.mxu0 0
    %970 = vmatprep.subr.bf16.mxu0 0
    %971 = vmatpush1.bf16.msra.mxu0 0
    %972 = vmatprep.subr.bf16.mxu0 0
    %973 = vmatpush1.bf16.msra.mxu0 0
    %974 = vmatprep.subr.bf16.mxu0 0
    %975 = vmatpush1.bf16.msra.mxu0 0
    %976 = vmatprep.subr.bf16.mxu0 0
    %977 = vmatpush1.bf16.msra.mxu0 0
    %978 = vmatprep.mubr.bf16.mxu0 0
    %979 = vmatmul.mubr.bf16.gmra.mrb[0].mxu0 %v826
    %v980 = vpop.f32.mrb[0].mxu0
    %v981 = vadd.f32 %v884, %v980
    %v982 = vpop.f32.mrb[0].mxu0
    %v983 = vpop.f32.mrb[0].mxu0
    %v984 = vadd.f32 %v887, %v983
    %v985 = vpop.f32.mrb[0].mxu0
    %986 = vmatprep.mubr.bf16.mxu0 0
    %987 = vmatmul.mubr.bf16.gmra.mrb[0].mxu0 %v829
    %v988 = vpop.f32.mrb[0].mxu0
    %v989 = vadd.f32 %v892, %v988
    %v990 = vpop.f32.mrb[0].mxu0
    %v991 = vpop.f32.mrb[0].mxu0
    %v992 = vadd.f32 %v895, %v991
    %v993 = vpop.f32.mrb[0].mxu0
    %994 = vmatprep.mubr.bf16.mxu0 0
    %995 = vmatmul.mubr.bf16.gmra.mrb[0].mxu0 %v832
    %v996 = vpop.f32.mrb[0].mxu0
    %v997 = vadd.f32 %v900, %v996
    %v998 = vpop.f32.mrb[0].mxu0
    %v999 = vpop.f32.mrb[0].mxu0
    %v1000 = vadd.f32 %v903, %v999
    %v1001 = vpop.f32.mrb[0].mxu0
    %1002 = vmatprep.mubr.bf16.mxu0 0
    %1003 = vmatmul.mubr.bf16.gmra.mrb[0].mxu0 %v835
    %v1004 = vpop.f32.mrb[0].mxu0
    %v1005 = vadd.f32 %v908, %v1004
    %v1006 = vpop.f32.mrb[0].mxu0
    %v1007 = vpop.f32.mrb[0].mxu0
    %v1008 = vadd.f32 %v911, %v1007
    %v1009 = vpop.f32.mrb[0].mxu0
    %1010 = vmatprep.mubr.bf16.mxu0 0
    %1011 = vmatmul.mubr.bf16.gmra.mrb[0].mxu0 %v838
    %v1012 = vpop.f32.mrb[0].mxu0
    %v1013 = vadd.f32 %v916, %v1012
    %v1014 = vpop.f32.mrb[0].mxu0
    %v1015 = vpop.f32.mrb[0].mxu0
    %v1016 = vadd.f32 %v919, %v1015
    %v1017 = vpop.f32.mrb[0].mxu0
    %1018 = vmatprep.mubr.bf16.mxu0 0
    %1019 = vmatmul.mubr.bf16.gmra.mrb[0].mxu0 %v841
    %v1020 = vpop.f32.mrb[0].mxu0
    %v1021 = vadd.f32 %v924, %v1020
    %v1022 = vpop.f32.mrb[0].mxu0
    %v1023 = vpop.f32.mrb[0].mxu0
    %v1024 = vadd.f32 %v927, %v1023
    %v1025 = vpop.f32.mrb[0].mxu0
    %1026 = vmatprep.mubr.bf16.mxu0 0
    %1027 = vmatmul.mubr.bf16.gmra.mrb[0].mxu0 %v844
    %v1028 = vpop.f32.mrb[0].mxu0
    %v1029 = vadd.f32 %v932, %v1028
    %v1030 = vpop.f32.mrb[0].mxu0
    %v1031 = vpop.f32.mrb[0].mxu0
    %v1032 = vadd.f32 %v935, %v1031
    %v1033 = vpop.f32.mrb[0].mxu0
    %1034 = vmatprep.mubr.bf16.mxu0 0
    %1035 = vmatmul.mubr.bf16.gmra.mrb[0].mxu0 %v847
    %v1036 = vpop.f32.mrb[0].mxu0
    %v1037 = vadd.f32 %v940, %v1036
    %v1038 = vpop.f32.mrb[0].mxu0
    %v1039 = vpop.f32.mrb[0].mxu0
    %v1040 = vadd.f32 %v943, %v1039
    %v1041 = vpop.f32.mrb[0].mxu0
    %1042 = vdwg.mxu0
    %v1043 = vmax.f32 %v981, 0.0
    %v1044 = vmax.f32 %v984, 0.0
    %v1045 = vmax.f32 %v989, 0.0
    %v1046 = vmax.f32 %v992, 0.0
    %v1047 = vmax.f32 %v997, 0.0
    %v1048 = vmax.f32 %v1000, 0.0
    %v1049 = vmax.f32 %v1005, 0.0
    %v1050 = vmax.f32 %v1008, 0.0
    %v1051 = vmax.f32 %v1013, 0.0
    %v1052 = vmax.f32 %v1016, 0.0
    %v1053 = vmax.f32 %v1021, 0.0
    %v1054 = vmax.f32 %v1024, 0.0
    %v1055 = vmax.f32 %v1029, 0.0
    %v1056 = vmax.f32 %v1032, 0.0
    %v1057 = vmax.f32 %v1037, 0.0
    %v1058 = vmax.f32 %v1040, 0.0
    %v1059 = vld [vmem:[%s3] sm:$0x1]
    %v1060 = vld [vmem:[%s4] sm:$0x1]
    %v1061 = vsel %vm46, %v1043, 0.0
    %1062 = vadd.xlane.f32.xlu0 %v1061
    %v1063 = vpop.xlane.xlu0 %1062
    %v1064 = vsel %vm46, %v1044, 0.0
    %1065 = vadd.xlane.f32.xlu0 %v1064
    %v1066 = vpop.xlane.xlu0 %1065
    %v1067 = vsel %vm46, %v1045, 0.0
    %1068 = vadd.xlane.f32.xlu0 %v1067
    %v1069 = vpop.xlane.xlu0 %1068
    %v1070 = vsel %vm46, %v1046, 0.0
    %1071 = vadd.xlane.f32.xlu0 %v1070
    %v1072 = vpop.xlane.xlu0 %1071
    %v1073 = vsel %vm46, %v1047, 0.0
    %1074 = vadd.xlane.f32.xlu0 %v1073
    %v1075 = vpop.xlane.xlu0 %1074
    %v1076 = vsel %vm46, %v1048, 0.0
    %1077 = vadd.xlane.f32.xlu0 %v1076
    %v1078 = vpop.xlane.xlu0 %1077
    %v1079 = vsel %vm46, %v1049, 0.0
    %1080 = vadd.xlane.f32.xlu0 %v1079
    %v1081 = vpop.xlane.xlu0 %1080
    %v1082 = vsel %vm46, %v1050, 0.0
    %1083 = vadd.xlane.f32.xlu0 %v1082
    %v1084 = vpop.xlane.xlu0 %1083
    %v1085 = vsel %vm46, %v1051, 0.0
    %1086 = vadd.xlane.f32.xlu0 %v1085
    %v1087 = vpop.xlane.xlu0 %1086
    %v1088 = vsel %vm46, %v1052, 0.0
    %1089 = vadd.xlane.f32.xlu0 %v1088
    %v1090 = vpop.xlane.xlu0 %1089
    %v1091 = vsel %vm46, %v1053, 0.0
    %1092 = vadd.xlane.f32.xlu0 %v1091
    %v1093 = vpop.xlane.xlu0 %1092
    %v1094 = vsel %vm46, %v1054, 0.0
    %1095 = vadd.xlane.f32.xlu0 %v1094
    %v1096 = vpop.xlane.xlu0 %1095
    %v1097 = vsel %vm46, %v1055, 0.0
    %1098 = vadd.xlane.f32.xlu0 %v1097
    %v1099 = vpop.xlane.xlu0 %1098
    %v1100 = vsel %vm46, %v1056, 0.0
    %1101 = vadd.xlane.f32.xlu0 %v1100
    %v1102 = vpop.xlane.xlu0 %1101
    %v1103 = vsel %vm46, %v1057, 0.0
    %1104 = vadd.xlane.f32.xlu0 %v1103
    %v1105 = vpop.xlane.xlu0 %1104
    %v1106 = vsel %vm46, %v1058, 0.0
    %1107 = vadd.xlane.f32.xlu0 %v1106
    %v1108 = vpop.xlane.xlu0 %1107
    %v1109 = vrcp.pop 32.0
    %v1110 = vmul.f32 %v1063, %v1109
    %v1111 = vmul.f32 %v1066, %v1109
    %v1112 = vmul.f32 %v1069, %v1109
    %v1113 = vmul.f32 %v1072, %v1109
    %v1114 = vmul.f32 %v1075, %v1109
    %v1115 = vmul.f32 %v1078, %v1109
    %v1116 = vmul.f32 %v1081, %v1109
    %v1117 = vmul.f32 %v1084, %v1109
    %v1118 = vmul.f32 %v1087, %v1109
    %v1119 = vmul.f32 %v1090, %v1109
    %v1120 = vmul.f32 %v1093, %v1109
    %v1121 = vmul.f32 %v1096, %v1109
    %v1122 = vmul.f32 %v1099, %v1109
    %v1123 = vmul.f32 %v1102, %v1109
    %v1124 = vmul.f32 %v1105, %v1109
    %v1125 = vmul.f32 %v1108, %v1109
    %v1126 = vsub.f32 %v1043, %v1110
    %v1127 = vsub.f32 %v1044, %v1111
    %v1128 = vsub.f32 %v1045, %v1112
    %v1129 = vsub.f32 %v1046, %v1113
    %v1130 = vsub.f32 %v1047, %v1114
    %v1131 = vsub.f32 %v1048, %v1115
    %v1132 = vsub.f32 %v1049, %v1116
    %v1133 = vsub.f32 %v1050, %v1117
    %v1134 = vsub.f32 %v1051, %v1118
    %v1135 = vsub.f32 %v1052, %v1119
    %v1136 = vsub.f32 %v1053, %v1120
    %v1137 = vsub.f32 %v1054, %v1121
    %v1138 = vsub.f32 %v1055, %v1122
    %v1139 = vsub.f32 %v1056, %v1123
    %v1140 = vsub.f32 %v1057, %v1124
    %v1141 = vsub.f32 %v1058, %v1125
    %v1142 = vmul.f32 %v1126, %v1126
    %v1143 = vmul.f32 %v1127, %v1127
    %v1144 = vmul.f32 %v1128, %v1128
    %v1145 = vmul.f32 %v1129, %v1129
    %v1146 = vmul.f32 %v1130, %v1130
    %v1147 = vmul.f32 %v1131, %v1131
    %v1148 = vmul.f32 %v1132, %v1132
    %v1149 = vmul.f32 %v1133, %v1133
    %v1150 = vmul.f32 %v1134, %v1134
    %v1151 = vmul.f32 %v1135, %v1135
    %v1152 = vmul.f32 %v1136, %v1136
    %v1153 = vmul.f32 %v1137, %v1137
    %v1154 = vmul.f32 %v1138, %v1138
    %v1155 = vmul.f32 %v1139, %v1139
    %v1156 = vmul.f32 %v1140, %v1140
    %v1157 = vmul.f32 %v1141, %v1141
    %v1158 = vsel %vm46, %v1142, 0.0
    %1159 = vadd.xlane.f32.xlu0 %v1158
    %v1160 = vpop.xlane.xlu0 %1159
    %v1161 = vsel %vm46, %v1143, 0.0
    %1162 = vadd.xlane.f32.xlu0 %v1161
    %v1163 = vpop.xlane.xlu0 %1162
    %v1164 = vsel %vm46, %v1144, 0.0
    %1165 = vadd.xlane.f32.xlu0 %v1164
    %v1166 = vpop.xlane.xlu0 %1165
    %v1167 = vsel %vm46, %v1145, 0.0
    %1168 = vadd.xlane.f32.xlu0 %v1167
    %v1169 = vpop.xlane.xlu0 %1168
    %v1170 = vsel %vm46, %v1146, 0.0
    %1171 = vadd.xlane.f32.xlu0 %v1170
    %v1172 = vpop.xlane.xlu0 %1171
    %v1173 = vsel %vm46, %v1147, 0.0
    %1174 = vadd.xlane.f32.xlu0 %v1173
    %v1175 = vpop.xlane.xlu0 %1174
    %v1176 = vsel %vm46, %v1148, 0.0
    %1177 = vadd.xlane.f32.xlu0 %v1176
    %v1178 = vpop.xlane.xlu0 %1177
    %v1179 = vsel %vm46, %v1149, 0.0
    %1180 = vadd.xlane.f32.xlu0 %v1179
    %v1181 = vpop.xlane.xlu0 %1180
    %v1182 = vsel %vm46, %v1150, 0.0
    %1183 = vadd.xlane.f32.xlu0 %v1182
    %v1184 = vpop.xlane.xlu0 %1183
    %v1185 = vsel %vm46, %v1151, 0.0
    %1186 = vadd.xlane.f32.xlu0 %v1185
    %v1187 = vpop.xlane.xlu0 %1186
    %v1188 = vsel %vm46, %v1152, 0.0
    %1189 = vadd.xlane.f32.xlu0 %v1188
    %v1190 = vpop.xlane.xlu0 %1189
    %v1191 = vsel %vm46, %v1153, 0.0
    %1192 = vadd.xlane.f32.xlu0 %v1191
    %v1193 = vpop.xlane.xlu0 %1192
    %v1194 = vsel %vm46, %v1154, 0.0
    %1195 = vadd.xlane.f32.xlu0 %v1194
    %v1196 = vpop.xlane.xlu0 %1195
    %v1197 = vsel %vm46, %v1155, 0.0
    %1198 = vadd.xlane.f32.xlu0 %v1197
    %v1199 = vpop.xlane.xlu0 %1198
    %v1200 = vsel %vm46, %v1156, 0.0
    %1201 = vadd.xlane.f32.xlu0 %v1200
    %v1202 = vpop.xlane.xlu0 %1201
    %v1203 = vsel %vm46, %v1157, 0.0
    %1204 = vadd.xlane.f32.xlu0 %v1203
    %v1205 = vpop.xlane.xlu0 %1204
    %v1206 = vmul.f32 %v1160, %v1109
    %v1207 = vmul.f32 %v1163, %v1109
    %v1208 = vmul.f32 %v1166, %v1109
    %v1209 = vmul.f32 %v1169, %v1109
    %v1210 = vmul.f32 %v1172, %v1109
    %v1211 = vmul.f32 %v1175, %v1109
    %v1212 = vmul.f32 %v1178, %v1109
    %v1213 = vmul.f32 %v1181, %v1109
    %v1214 = vmul.f32 %v1184, %v1109
    %v1215 = vmul.f32 %v1187, %v1109
    %v1216 = vmul.f32 %v1190, %v1109
    %v1217 = vmul.f32 %v1193, %v1109
    %v1218 = vmul.f32 %v1196, %v1109
    %v1219 = vmul.f32 %v1199, %v1109
    %v1220 = vmul.f32 %v1202, %v1109
    %v1221 = vmul.f32 %v1205, %v1109
    %v1222 = vadd.f32 %v1206, 1e-05
    %v1223 = vadd.f32 %v1207, 1e-05
    %v1224 = vadd.f32 %v1208, 1e-05
    %v1225 = vadd.f32 %v1209, 1e-05
    %v1226 = vadd.f32 %v1210, 1e-05
    %v1227 = vadd.f32 %v1211, 1e-05
    %v1228 = vadd.f32 %v1212, 1e-05
    %v1229 = vadd.f32 %v1213, 1e-05
    %v1230 = vadd.f32 %v1214, 1e-05
    %v1231 = vadd.f32 %v1215, 1e-05
    %v1232 = vadd.f32 %v1216, 1e-05
    %v1233 = vadd.f32 %v1217, 1e-05
    %v1234 = vadd.f32 %v1218, 1e-05
    %v1235 = vadd.f32 %v1219, 1e-05
    %v1236 = vadd.f32 %v1220, 1e-05
    %v1237 = vadd.f32 %v1221, 1e-05
    %v1238 = vrsqrt.pop %v1222
    %v1239 = vrsqrt.pop %v1223
    %v1240 = vrsqrt.pop %v1224
    %v1241 = vrsqrt.pop %v1225
    %v1242 = vrsqrt.pop %v1226
    %v1243 = vrsqrt.pop %v1227
    %v1244 = vrsqrt.pop %v1228
    %v1245 = vrsqrt.pop %v1229
    %v1246 = vrsqrt.pop %v1230
    %v1247 = vrsqrt.pop %v1231
    %v1248 = vrsqrt.pop %v1232
    %v1249 = vrsqrt.pop %v1233
    %v1250 = vrsqrt.pop %v1234
    %v1251 = vrsqrt.pop %v1235
    %v1252 = vrsqrt.pop %v1236
    %v1253 = vrsqrt.pop %v1237
    %v1254 = vmul.f32 %v1126, %v1238
    %v1255 = vmul.f32 %v1127, %v1239
    %v1256 = vmul.f32 %v1128, %v1240
    %v1257 = vmul.f32 %v1129, %v1241
    %v1258 = vmul.f32 %v1130, %v1242
    %v1259 = vmul.f32 %v1131, %v1243
    %v1260 = vmul.f32 %v1132, %v1244
    %v1261 = vmul.f32 %v1133, %v1245
    %v1262 = vmul.f32 %v1134, %v1246
    %v1263 = vmul.f32 %v1135, %v1247
    %v1264 = vmul.f32 %v1136, %v1248
    %v1265 = vmul.f32 %v1137, %v1249
    %v1266 = vmul.f32 %v1138, %v1250
    %v1267 = vmul.f32 %v1139, %v1251
    %v1268 = vmul.f32 %v1140, %v1252
    %v1269 = vmul.f32 %v1141, %v1253
    %v1271 = vlaneseq
    %v1272 = vshrl.u32 %v1271, 7
    %v1273 = vsub.s32 0, %v1272
    %v1274 = vrot.slane %v1059, %v1273
    %v1276 = vmul.f32 %v1254, %v1274
    %v1277 = vmul.f32 %v1255, %v1274
    %v1278 = vmul.f32 %v1256, %v1274
    %v1279 = vmul.f32 %v1257, %v1274
    %v1280 = vmul.f32 %v1258, %v1274
    %v1281 = vmul.f32 %v1259, %v1274
    %v1282 = vmul.f32 %v1260, %v1274
    %v1283 = vmul.f32 %v1261, %v1274
    %v1284 = vmul.f32 %v1262, %v1274
    %v1285 = vmul.f32 %v1263, %v1274
    %v1286 = vmul.f32 %v1264, %v1274
    %v1287 = vmul.f32 %v1265, %v1274
    %v1288 = vmul.f32 %v1266, %v1274
    %v1289 = vmul.f32 %v1267, %v1274
    %v1290 = vmul.f32 %v1268, %v1274
    %v1291 = vmul.f32 %v1269, %v1274
    %v1293 = vlaneseq
    %v1294 = vshrl.u32 %v1293, 7
    %v1295 = vsub.s32 0, %v1294
    %v1296 = vrot.slane %v1060, %v1295
    %v1298 = vadd.f32 %v1276, %v1296
    %v1299 = vadd.f32 %v1277, %v1296
    %v1300 = vadd.f32 %v1278, %v1296
    %v1301 = vadd.f32 %v1279, %v1296
    %v1302 = vadd.f32 %v1280, %v1296
    %v1303 = vadd.f32 %v1281, %v1296
    %v1304 = vadd.f32 %v1282, %v1296
    %v1305 = vadd.f32 %v1283, %v1296
    %v1306 = vadd.f32 %v1284, %v1296
    %v1307 = vadd.f32 %v1285, %v1296
    %v1308 = vadd.f32 %v1286, %v1296
    %v1309 = vadd.f32 %v1287, %v1296
    %v1310 = vadd.f32 %v1288, %v1296
    %v1311 = vadd.f32 %v1289, %v1296
    %v1312 = vadd.f32 %v1290, %v1296
    %v1313 = vadd.f32 %v1291, %v1296
    %v1314 = vpack.c.bf16 %v1299, %v1298
    %v1315 = vpack.c.bf16 %v1301, %v1300
    %v1316 = vpack.c.bf16 %v1303, %v1302
    %v1317 = vpack.c.bf16 %v1305, %v1304
    %v1318 = vpack.c.bf16 %v1307, %v1306
    %v1319 = vpack.c.bf16 %v1309, %v1308
    %v1320 = vpack.c.bf16 %v1311, %v1310
    %v1321 = vpack.c.bf16 %v1313, %v1312
    %v1322 = vld [vmem:[%s5] sm:$0xf]
    %v1323 = vld [vmem:[%s5 + $0x4] sm:$0xf]
    %v1324 = vld [vmem:[%s5 + $0x8] sm:$0xf]
    %v1325 = vld [vmem:[%s5 + $0xc] sm:$0xf]
    %v1326 = vld [vmem:[%s6] sm:$0x1]
    %v1328 = vlaneseq
    %v1329 = vshrl.u32 %v1328, 7
    %v1330 = vsub.s32 0, %v1329
    %v1331 = vrot.slane %v1326, %v1330
    %v1337 = vunpack.c.l.b16 %v1322
    %v1338 = vunpack.c.l.b16 %v1323
    %v1339 = vunpack.c.l.b16 %v1324
    %v1340 = vunpack.c.l.b16 %v1325
    %v1341 = vpack.c.b16 %v1338, %v1337
    %v1342 = vpack.c.b16 %v1340, %v1339
    %v1346 = vsel %vm46, %v1314, 0
    %v1349 = vsel %vm46, %v1315, 0
    %v1352 = vsel %vm46, %v1316, 0
    %v1355 = vsel %vm46, %v1317, 0
    %v1358 = vsel %vm46, %v1318, 0
    %v1361 = vsel %vm46, %v1319, 0
    %v1364 = vsel %vm46, %v1320, 0
    %v1367 = vsel %vm46, %v1321, 0
    %1369 = vmatprep.subr.bf16.mxu0 0
    %1370 = vmatpush1.bf16.msra.mxu0 %v1341
    %1371 = vmatprep.subr.bf16.mxu0 0
    %1372 = vmatpush1.bf16.msra.mxu0 %v1342
    %1373 = vmatprep.subr.bf16.mxu0 0
    %1374 = vmatpush1.bf16.msra.mxu0 0
    %1375 = vmatprep.subr.bf16.mxu0 0
    %1376 = vmatpush1.bf16.msra.mxu0 0
    %1377 = vmatprep.subr.bf16.mxu0 0
    %1378 = vmatpush1.bf16.msra.mxu0 0
    %1379 = vmatprep.subr.bf16.mxu0 0
    %1380 = vmatpush1.bf16.msra.mxu0 0
    %1381 = vmatprep.subr.bf16.mxu0 0
    %1382 = vmatpush1.bf16.msra.mxu0 0
    %1383 = vmatprep.subr.bf16.mxu0 0
    %1384 = vmatpush1.bf16.msra.mxu0 0
    %1385 = vmatprep.subr.bf16.mxu0 0
    %1386 = vmatpush1.bf16.msra.mxu0 0
    %1387 = vmatprep.subr.bf16.mxu0 0
    %1388 = vmatpush1.bf16.msra.mxu0 0
    %1389 = vmatprep.subr.bf16.mxu0 0
    %1390 = vmatpush1.bf16.msra.mxu0 0
    %1391 = vmatprep.subr.bf16.mxu0 0
    %1392 = vmatpush1.bf16.msra.mxu0 0
    %1393 = vmatprep.subr.bf16.mxu0 0
    %1394 = vmatpush1.bf16.msra.mxu0 0
    %1395 = vmatprep.subr.bf16.mxu0 0
    %1396 = vmatpush1.bf16.msra.mxu0 0
    %1397 = vmatprep.subr.bf16.mxu0 0
    %1398 = vmatpush1.bf16.msra.mxu0 0
    %1399 = vmatprep.subr.bf16.mxu0 0
    %1400 = vmatpush1.bf16.msra.mxu0 0
    %1401 = vmatprep.mubr.bf16.mxu0 0
    %1402 = vmatmul.mubr.bf16.gmra.mrb[0].mxu0 %v1346
    %v1403 = vpop.f32.mrb[0].mxu0
    %v1404 = vadd.f32 %v1331, %v1403
    %v1405 = vpop.f32.mrb[0].mxu0
    %v1406 = vpop.f32.mrb[0].mxu0
    %v1407 = vadd.f32 %v1331, %v1406
    %v1408 = vpop.f32.mrb[0].mxu0
    %1409 = vmatprep.mubr.bf16.mxu0 0
    %1410 = vmatmul.mubr.bf16.gmra.mrb[0].mxu0 %v1349
    %v1411 = vpop.f32.mrb[0].mxu0
    %v1412 = vadd.f32 %v1331, %v1411
    %v1413 = vpop.f32.mrb[0].mxu0
    %v1414 = vpop.f32.mrb[0].mxu0
    %v1415 = vadd.f32 %v1331, %v1414
    %v1416 = vpop.f32.mrb[0].mxu0
    %1417 = vmatprep.mubr.bf16.mxu0 0
    %1418 = vmatmul.mubr.bf16.gmra.mrb[0].mxu0 %v1352
    %v1419 = vpop.f32.mrb[0].mxu0
    %v1420 = vadd.f32 %v1331, %v1419
    %v1421 = vpop.f32.mrb[0].mxu0
    %v1422 = vpop.f32.mrb[0].mxu0
    %v1423 = vadd.f32 %v1331, %v1422
    %v1424 = vpop.f32.mrb[0].mxu0
    %1425 = vmatprep.mubr.bf16.mxu0 0
    %1426 = vmatmul.mubr.bf16.gmra.mrb[0].mxu0 %v1355
    %v1427 = vpop.f32.mrb[0].mxu0
    %v1428 = vadd.f32 %v1331, %v1427
    %v1429 = vpop.f32.mrb[0].mxu0
    %v1430 = vpop.f32.mrb[0].mxu0
    %v1431 = vadd.f32 %v1331, %v1430
    %v1432 = vpop.f32.mrb[0].mxu0
    %1433 = vmatprep.mubr.bf16.mxu0 0
    %1434 = vmatmul.mubr.bf16.gmra.mrb[0].mxu0 %v1358
    %v1435 = vpop.f32.mrb[0].mxu0
    %v1436 = vadd.f32 %v1331, %v1435
    %v1437 = vpop.f32.mrb[0].mxu0
    %v1438 = vpop.f32.mrb[0].mxu0
    %v1439 = vadd.f32 %v1331, %v1438
    %v1440 = vpop.f32.mrb[0].mxu0
    %1441 = vmatprep.mubr.bf16.mxu0 0
    %1442 = vmatmul.mubr.bf16.gmra.mrb[0].mxu0 %v1361
    %v1443 = vpop.f32.mrb[0].mxu0
    %v1444 = vadd.f32 %v1331, %v1443
    %v1445 = vpop.f32.mrb[0].mxu0
    %v1446 = vpop.f32.mrb[0].mxu0
    %v1447 = vadd.f32 %v1331, %v1446
    %v1448 = vpop.f32.mrb[0].mxu0
    %1449 = vmatprep.mubr.bf16.mxu0 0
    %1450 = vmatmul.mubr.bf16.gmra.mrb[0].mxu0 %v1364
    %v1451 = vpop.f32.mrb[0].mxu0
    %v1452 = vadd.f32 %v1331, %v1451
    %v1453 = vpop.f32.mrb[0].mxu0
    %v1454 = vpop.f32.mrb[0].mxu0
    %v1455 = vadd.f32 %v1331, %v1454
    %v1456 = vpop.f32.mrb[0].mxu0
    %1457 = vmatprep.mubr.bf16.mxu0 0
    %1458 = vmatmul.mubr.bf16.gmra.mrb[0].mxu0 %v1367
    %v1459 = vpop.f32.mrb[0].mxu0
    %v1460 = vadd.f32 %v1331, %v1459
    %v1461 = vpop.f32.mrb[0].mxu0
    %v1462 = vpop.f32.mrb[0].mxu0
    %v1463 = vadd.f32 %v1331, %v1462
    %v1464 = vpop.f32.mrb[0].mxu0
    %1465 = vdwg.mxu0
    %s1466 = scalar_lea.vmem %s1, 144
    %v1467 = vld [vmem:[%s1466] sm:$0xf]
    %v1468 = vld [vmem:[%s1466 + $0x4] sm:$0xf]
    %v1469 = vld [vmem:[%s1466 + $0x8] sm:$0xf]
    %v1470 = vld [vmem:[%s1466 + $0xc] sm:$0xf]
    %v1471 = vld [vmem:[%s1466 + $0x10] sm:$0xf]
    %v1472 = vld [vmem:[%s1466 + $0x14] sm:$0xf]
    %v1473 = vld [vmem:[%s1466 + $0x18] sm:$0xf]
    %v1474 = vld [vmem:[%s1466 + $0x1c] sm:$0xf]
    %v1475 = vld [vmem:[%s1466 + $0x20] sm:$0xf]
    %v1476 = vld [vmem:[%s1466 + $0x24] sm:$0xf]
    %v1477 = vld [vmem:[%s1466 + $0x28] sm:$0xf]
    %v1478 = vld [vmem:[%s1466 + $0x2c] sm:$0xf]
    %v1479 = vld [vmem:[%s1466 + $0x30] sm:$0xf]
    %v1480 = vld [vmem:[%s1466 + $0x34] sm:$0xf]
    %v1481 = vld [vmem:[%s1466 + $0x38] sm:$0xf]
    %v1482 = vld [vmem:[%s1466 + $0x3c] sm:$0xf]
    %v1483 = vld [vmem:[%s1466 + $0x40] sm:$0xf]
    %v1484 = vld [vmem:[%s1466 + $0x44] sm:$0xf]
    %v1485 = vld [vmem:[%s1466 + $0x48] sm:$0xf]
    %v1486 = vld [vmem:[%s1466 + $0x4c] sm:$0xf]
    %v1487 = vld [vmem:[%s1466 + $0x50] sm:$0xf]
    %v1488 = vld [vmem:[%s1466 + $0x54] sm:$0xf]
    %v1489 = vld [vmem:[%s1466 + $0x58] sm:$0xf]
    %v1490 = vld [vmem:[%s1466 + $0x5c] sm:$0xf]
    %v1491 = vld [vmem:[%s1466 + $0x60] sm:$0xf]
    %v1492 = vld [vmem:[%s1466 + $0x64] sm:$0xf]
    %v1493 = vld [vmem:[%s1466 + $0x68] sm:$0xf]
    %v1494 = vld [vmem:[%s1466 + $0x6c] sm:$0xf]
    %v1495 = vld [vmem:[%s1466 + $0x70] sm:$0xf]
    %v1496 = vld [vmem:[%s1466 + $0x74] sm:$0xf]
    %v1497 = vld [vmem:[%s1466 + $0x78] sm:$0xf]
    %v1498 = vld [vmem:[%s1466 + $0x7c] sm:$0xf]
    %v1499 = vld [vmem:[%s1466 + $0x80] sm:$0xf]
    %v1500 = vld [vmem:[%s1466 + $0x84] sm:$0xf]
    %v1501 = vld [vmem:[%s1466 + $0x88] sm:$0xf]
    %v1502 = vld [vmem:[%s1466 + $0x8c] sm:$0xf]
    %s1503 = scalar_lea.vmem %s2, 1
    %v1504 = vld [vmem:[%s1503] sm:$0x1]
    %v1506 = vlaneseq
    %v1507 = vshrl.u32 %v1506, 7
    %v1508 = vsub.s32 0, %v1507
    %v1509 = vrot.slane %v1504, %v1508
    %v1547 = vunpack.c.l.b16 %v1467
    %v1548 = vunpack.c.l.b16 %v1468
    %v1549 = vunpack.c.l.b16 %v1469
    %v1550 = vunpack.c.l.b16 %v1470
    %v1551 = vunpack.c.l.b16 %v1471
    %v1552 = vunpack.c.l.b16 %v1472
    %v1553 = vunpack.c.l.b16 %v1473
    %v1554 = vunpack.c.l.b16 %v1474
    %v1555 = vunpack.c.l.b16 %v1475
    %v1556 = vunpack.c.l.b16 %v1476
    %v1557 = vunpack.c.l.b16 %v1477
    %v1558 = vunpack.c.l.b16 %v1478
    %v1559 = vunpack.c.l.b16 %v1479
    %v1560 = vunpack.c.l.b16 %v1480
    %v1561 = vunpack.c.l.b16 %v1481
    %v1562 = vunpack.c.l.b16 %v1482
    %v1563 = vunpack.c.l.b16 %v1483
    %v1564 = vunpack.c.l.b16 %v1484
    %v1565 = vunpack.c.l.b16 %v1485
    %v1566 = vunpack.c.l.b16 %v1486
    %v1567 = vunpack.c.l.b16 %v1487
    %v1568 = vunpack.c.l.b16 %v1488
    %v1569 = vunpack.c.l.b16 %v1489
    %v1570 = vunpack.c.l.b16 %v1490
    %v1571 = vunpack.c.l.b16 %v1491
    %v1572 = vunpack.c.l.b16 %v1492
    %v1573 = vunpack.c.l.b16 %v1493
    %v1574 = vunpack.c.l.b16 %v1494
    %v1575 = vunpack.c.l.b16 %v1495
    %v1576 = vunpack.c.l.b16 %v1496
    %v1577 = vunpack.c.l.b16 %v1497
    %v1578 = vunpack.c.l.b16 %v1498
    %v1579 = vunpack.c.l.b16 %v1499
    %v1580 = vunpack.c.l.b16 %v1500
    %v1581 = vunpack.c.l.b16 %v1501
    %v1582 = vunpack.c.l.b16 %v1502
    %v1583 = vpack.c.b16 %v1548, %v1547
    %v1584 = vpack.c.b16 %v1550, %v1549
    %v1585 = vpack.c.b16 %v1552, %v1551
    %v1586 = vpack.c.b16 %v1554, %v1553
    %v1587 = vpack.c.b16 %v1556, %v1555
    %v1588 = vpack.c.b16 %v1558, %v1557
    %v1589 = vpack.c.b16 %v1560, %v1559
    %v1590 = vpack.c.b16 %v1562, %v1561
    %v1591 = vpack.c.b16 %v1564, %v1563
    %v1592 = vpack.c.b16 %v1566, %v1565
    %v1593 = vpack.c.b16 %v1568, %v1567
    %v1594 = vpack.c.b16 %v1570, %v1569
    %v1595 = vpack.c.b16 %v1572, %v1571
    %v1596 = vpack.c.b16 %v1574, %v1573
    %v1597 = vpack.c.b16 %v1576, %v1575
    %v1598 = vpack.c.b16 %v1578, %v1577
    %v1599 = vpack.c.b16 %v1580, %v1579
    %v1600 = vpack.c.b16 %v1582, %v1581
    %1619 = vmatprep.subr.bf16.mxu0 0
    %1620 = vmatpush1.bf16.msra.mxu0 %v1583
    %1621 = vmatprep.subr.bf16.mxu0 0
    %1622 = vmatpush1.bf16.msra.mxu0 %v1584
    %1623 = vmatprep.subr.bf16.mxu0 0
    %1624 = vmatpush1.bf16.msra.mxu0 %v1585
    %1625 = vmatprep.subr.bf16.mxu0 0
    %1626 = vmatpush1.bf16.msra.mxu0 %v1586
    %1627 = vmatprep.subr.bf16.mxu0 0
    %1628 = vmatpush1.bf16.msra.mxu0 %v1587
    %1629 = vmatprep.subr.bf16.mxu0 0
    %1630 = vmatpush1.bf16.msra.mxu0 %v1588
    %1631 = vmatprep.subr.bf16.mxu0 0
    %1632 = vmatpush1.bf16.msra.mxu0 %v1589
    %1633 = vmatprep.subr.bf16.mxu0 0
    %1634 = vmatpush1.bf16.msra.mxu0 %v1590
    %1635 = vmatprep.subr.bf16.mxu0 0
    %1636 = vmatpush1.bf16.msra.mxu0 %v1591
    %1637 = vmatprep.subr.bf16.mxu0 0
    %1638 = vmatpush1.bf16.msra.mxu0 %v1592
    %1639 = vmatprep.subr.bf16.mxu0 0
    %1640 = vmatpush1.bf16.msra.mxu0 %v1593
    %1641 = vmatprep.subr.bf16.mxu0 0
    %1642 = vmatpush1.bf16.msra.mxu0 %v1594
    %1643 = vmatprep.subr.bf16.mxu0 0
    %1644 = vmatpush1.bf16.msra.mxu0 %v1595
    %1645 = vmatprep.subr.bf16.mxu0 0
    %1646 = vmatpush1.bf16.msra.mxu0 %v1596
    %1647 = vmatprep.subr.bf16.mxu0 0
    %1648 = vmatpush1.bf16.msra.mxu0 %v1597
    %1649 = vmatprep.subr.bf16.mxu0 0
    %1650 = vmatpush1.bf16.msra.mxu0 %v1598
    %1651 = vmatprep.mubr.bf16.mxu0 %v688
    %1652 = vmatmul.mubr.bf16.gmra.mrb[0].mxu0 %v687
    %v1653 = vpop.f32.mrb[0].mxu0
    %v1654 = vadd.f32 %v1509, %v1653
    %v1655 = vpop.f32.mrb[0].mxu0
    %v1656 = vpop.f32.mrb[0].mxu0
    %v1657 = vadd.f32 %v1509, %v1656
    %v1658 = vpop.f32.mrb[0].mxu0
    %1659 = vmatprep.mubr.bf16.mxu0 %v691
    %1660 = vmatmul.mubr.bf16.gmra.mrb[0].mxu0 %v690
    %v1661 = vpop.f32.mrb[0].mxu0
    %v1662 = vadd.f32 %v1509, %v1661
    %v1663 = vpop.f32.mrb[0].mxu0
    %v1664 = vpop.f32.mrb[0].mxu0
    %v1665 = vadd.f32 %v1509, %v1664
    %v1666 = vpop.f32.mrb[0].mxu0
    %1667 = vmatprep.mubr.bf16.mxu0 %v694
    %1668 = vmatmul.mubr.bf16.gmra.mrb[0].mxu0 %v693
    %v1669 = vpop.f32.mrb[0].mxu0
    %v1670 = vadd.f32 %v1509, %v1669
    %v1671 = vpop.f32.mrb[0].mxu0
    %v1672 = vpop.f32.mrb[0].mxu0
    %v1673 = vadd.f32 %v1509, %v1672
    %v1674 = vpop.f32.mrb[0].mxu0
    %1675 = vmatprep.mubr.bf16.mxu0 %v697
    %1676 = vmatmul.mubr.bf16.gmra.mrb[0].mxu0 %v696
    %v1677 = vpop.f32.mrb[0].mxu0
    %v1678 = vadd.f32 %v1509, %v1677
    %v1679 = vpop.f32.mrb[0].mxu0
    %v1680 = vpop.f32.mrb[0].mxu0
    %v1681 = vadd.f32 %v1509, %v1680
    %v1682 = vpop.f32.mrb[0].mxu0
    %1683 = vmatprep.mubr.bf16.mxu0 %v700
    %1684 = vmatmul.mubr.bf16.gmra.mrb[0].mxu0 %v699
    %v1685 = vpop.f32.mrb[0].mxu0
    %v1686 = vadd.f32 %v1509, %v1685
    %v1687 = vpop.f32.mrb[0].mxu0
    %v1688 = vpop.f32.mrb[0].mxu0
    %v1689 = vadd.f32 %v1509, %v1688
    %v1690 = vpop.f32.mrb[0].mxu0
    %1691 = vmatprep.mubr.bf16.mxu0 %v703
    %1692 = vmatmul.mubr.bf16.gmra.mrb[0].mxu0 %v702
    %v1693 = vpop.f32.mrb[0].mxu0
    %v1694 = vadd.f32 %v1509, %v1693
    %v1695 = vpop.f32.mrb[0].mxu0
    %v1696 = vpop.f32.mrb[0].mxu0
    %v1697 = vadd.f32 %v1509, %v1696
    %v1698 = vpop.f32.mrb[0].mxu0
    %1699 = vmatprep.mubr.bf16.mxu0 %v706
    %1700 = vmatmul.mubr.bf16.gmra.mrb[0].mxu0 %v705
    %v1701 = vpop.f32.mrb[0].mxu0
    %v1702 = vadd.f32 %v1509, %v1701
    %v1703 = vpop.f32.mrb[0].mxu0
    %v1704 = vpop.f32.mrb[0].mxu0
    %v1705 = vadd.f32 %v1509, %v1704
    %v1706 = vpop.f32.mrb[0].mxu0
    %1707 = vmatprep.mubr.bf16.mxu0 %v709
    %1708 = vmatmul.mubr.bf16.gmra.mrb[0].mxu0 %v708
    %v1709 = vpop.f32.mrb[0].mxu0
    %v1710 = vadd.f32 %v1509, %v1709
    %v1711 = vpop.f32.mrb[0].mxu0
    %v1712 = vpop.f32.mrb[0].mxu0
    %v1713 = vadd.f32 %v1509, %v1712
    %v1714 = vpop.f32.mrb[0].mxu0
    %1715 = vdwg.mxu0
    %1716 = vmatprep.subr.bf16.mxu0 0
    %1717 = vmatpush1.bf16.msra.mxu0 %v1599
    %1718 = vmatprep.subr.bf16.mxu0 0
    %1719 = vmatpush1.bf16.msra.mxu0 %v1600
    %1720 = vmatprep.subr.bf16.mxu0 0
    %1721 = vmatpush1.bf16.msra.mxu0 0
    %1722 = vmatprep.subr.bf16.mxu0 0
    %1723 = vmatpush1.bf16.msra.mxu0 0
    %1724 = vmatprep.subr.bf16.mxu0 0
    %1725 = vmatpush1.bf16.msra.mxu0 0
    %1726 = vmatprep.subr.bf16.mxu0 0
    %1727 = vmatpush1.bf16.msra.mxu0 0
    %1728 = vmatprep.subr.bf16.mxu0 0
    %1729 = vmatpush1.bf16.msra.mxu0 0
    %1730 = vmatprep.subr.bf16.mxu0 0
    %1731 = vmatpush1.bf16.msra.mxu0 0
    %1732 = vmatprep.subr.bf16.mxu0 0
    %1733 = vmatpush1.bf16.msra.mxu0 0
    %1734 = vmatprep.subr.bf16.mxu0 0
    %1735 = vmatpush1.bf16.msra.mxu0 0
    %1736 = vmatprep.subr.bf16.mxu0 0
    %1737 = vmatpush1.bf16.msra.mxu0 0
    %1738 = vmatprep.subr.bf16.mxu0 0
    %1739 = vmatpush1.bf16.msra.mxu0 0
    %1740 = vmatprep.subr.bf16.mxu0 0
    %1741 = vmatpush1.bf16.msra.mxu0 0
    %1742 = vmatprep.subr.bf16.mxu0 0
    %1743 = vmatpush1.bf16.msra.mxu0 0
    %1744 = vmatprep.subr.bf16.mxu0 0
    %1745 = vmatpush1.bf16.msra.mxu0 0
    %1746 = vmatprep.subr.bf16.mxu0 0
    %1747 = vmatpush1.bf16.msra.mxu0 0
    %1748 = vmatprep.mubr.bf16.mxu0 0
    %1749 = vmatmul.mubr.bf16.gmra.mrb[0].mxu0 %v826
    %v1750 = vpop.f32.mrb[0].mxu0
    %v1751 = vadd.f32 %v1654, %v1750
    %v1752 = vpop.f32.mrb[0].mxu0
    %v1753 = vpop.f32.mrb[0].mxu0
    %v1754 = vadd.f32 %v1657, %v1753
    %v1755 = vpop.f32.mrb[0].mxu0
    %1756 = vmatprep.mubr.bf16.mxu0 0
    %1757 = vmatmul.mubr.bf16.gmra.mrb[0].mxu0 %v829
    %v1758 = vpop.f32.mrb[0].mxu0
    %v1759 = vadd.f32 %v1662, %v1758
    %v1760 = vpop.f32.mrb[0].mxu0
    %v1761 = vpop.f32.mrb[0].mxu0
    %v1762 = vadd.f32 %v1665, %v1761
    %v1763 = vpop.f32.mrb[0].mxu0
    %1764 = vmatprep.mubr.bf16.mxu0 0
    %1765 = vmatmul.mubr.bf16.gmra.mrb[0].mxu0 %v832
    %v1766 = vpop.f32.mrb[0].mxu0
    %v1767 = vadd.f32 %v1670, %v1766
    %v1768 = vpop.f32.mrb[0].mxu0
    %v1769 = vpop.f32.mrb[0].mxu0
    %v1770 = vadd.f32 %v1673, %v1769
    %v1771 = vpop.f32.mrb[0].mxu0
    %1772 = vmatprep.mubr.bf16.mxu0 0
    %1773 = vmatmul.mubr.bf16.gmra.mrb[0].mxu0 %v835
    %v1774 = vpop.f32.mrb[0].mxu0
    %v1775 = vadd.f32 %v1678, %v1774
    %v1776 = vpop.f32.mrb[0].mxu0
    %v1777 = vpop.f32.mrb[0].mxu0
    %v1778 = vadd.f32 %v1681, %v1777
    %v1779 = vpop.f32.mrb[0].mxu0
    %1780 = vmatprep.mubr.bf16.mxu0 0
    %1781 = vmatmul.mubr.bf16.gmra.mrb[0].mxu0 %v838
    %v1782 = vpop.f32.mrb[0].mxu0
    %v1783 = vadd.f32 %v1686, %v1782
    %v1784 = vpop.f32.mrb[0].mxu0
    %v1785 = vpop.f32.mrb[0].mxu0
    %v1786 = vadd.f32 %v1689, %v1785
    %v1787 = vpop.f32.mrb[0].mxu0
    %1788 = vmatprep.mubr.bf16.mxu0 0
    %1789 = vmatmul.mubr.bf16.gmra.mrb[0].mxu0 %v841
    %v1790 = vpop.f32.mrb[0].mxu0
    %v1791 = vadd.f32 %v1694, %v1790
    %v1792 = vpop.f32.mrb[0].mxu0
    %v1793 = vpop.f32.mrb[0].mxu0
    %v1794 = vadd.f32 %v1697, %v1793
    %v1795 = vpop.f32.mrb[0].mxu0
    %1796 = vmatprep.mubr.bf16.mxu0 0
    %1797 = vmatmul.mubr.bf16.gmra.mrb[0].mxu0 %v844
    %v1798 = vpop.f32.mrb[0].mxu0
    %v1799 = vadd.f32 %v1702, %v1798
    %v1800 = vpop.f32.mrb[0].mxu0
    %v1801 = vpop.f32.mrb[0].mxu0
    %v1802 = vadd.f32 %v1705, %v1801
    %v1803 = vpop.f32.mrb[0].mxu0
    %1804 = vmatprep.mubr.bf16.mxu0 0
    %1805 = vmatmul.mubr.bf16.gmra.mrb[0].mxu0 %v847
    %v1806 = vpop.f32.mrb[0].mxu0
    %v1807 = vadd.f32 %v1710, %v1806
    %v1808 = vpop.f32.mrb[0].mxu0
    %v1809 = vpop.f32.mrb[0].mxu0
    %v1810 = vadd.f32 %v1713, %v1809
    %v1811 = vpop.f32.mrb[0].mxu0
    %1812 = vdwg.mxu0
    %v1813 = vmax.f32 %v1751, 0.0
    %v1814 = vmax.f32 %v1754, 0.0
    %v1815 = vmax.f32 %v1759, 0.0
    %v1816 = vmax.f32 %v1762, 0.0
    %v1817 = vmax.f32 %v1767, 0.0
    %v1818 = vmax.f32 %v1770, 0.0
    %v1819 = vmax.f32 %v1775, 0.0
    %v1820 = vmax.f32 %v1778, 0.0
    %v1821 = vmax.f32 %v1783, 0.0
    %v1822 = vmax.f32 %v1786, 0.0
    %v1823 = vmax.f32 %v1791, 0.0
    %v1824 = vmax.f32 %v1794, 0.0
    %v1825 = vmax.f32 %v1799, 0.0
    %v1826 = vmax.f32 %v1802, 0.0
    %v1827 = vmax.f32 %v1807, 0.0
    %v1828 = vmax.f32 %v1810, 0.0
    %s1829 = scalar_lea.vmem %s3, 1
    %v1830 = vld [vmem:[%s1829] sm:$0x1]
    %s1831 = scalar_lea.vmem %s4, 1
    %v1832 = vld [vmem:[%s1831] sm:$0x1]
    %v1833 = vsel %vm46, %v1813, 0.0
    %1834 = vadd.xlane.f32.xlu0 %v1833
    %v1835 = vpop.xlane.xlu0 %1834
    %v1836 = vsel %vm46, %v1814, 0.0
    %1837 = vadd.xlane.f32.xlu0 %v1836
    %v1838 = vpop.xlane.xlu0 %1837
    %v1839 = vsel %vm46, %v1815, 0.0
    %1840 = vadd.xlane.f32.xlu0 %v1839
    %v1841 = vpop.xlane.xlu0 %1840
    %v1842 = vsel %vm46, %v1816, 0.0
    %1843 = vadd.xlane.f32.xlu0 %v1842
    %v1844 = vpop.xlane.xlu0 %1843
    %v1845 = vsel %vm46, %v1817, 0.0
    %1846 = vadd.xlane.f32.xlu0 %v1845
    %v1847 = vpop.xlane.xlu0 %1846
    %v1848 = vsel %vm46, %v1818, 0.0
    %1849 = vadd.xlane.f32.xlu0 %v1848
    %v1850 = vpop.xlane.xlu0 %1849
    %v1851 = vsel %vm46, %v1819, 0.0
    %1852 = vadd.xlane.f32.xlu0 %v1851
    %v1853 = vpop.xlane.xlu0 %1852
    %v1854 = vsel %vm46, %v1820, 0.0
    %1855 = vadd.xlane.f32.xlu0 %v1854
    %v1856 = vpop.xlane.xlu0 %1855
    %v1857 = vsel %vm46, %v1821, 0.0
    %1858 = vadd.xlane.f32.xlu0 %v1857
    %v1859 = vpop.xlane.xlu0 %1858
    %v1860 = vsel %vm46, %v1822, 0.0
    %1861 = vadd.xlane.f32.xlu0 %v1860
    %v1862 = vpop.xlane.xlu0 %1861
    %v1863 = vsel %vm46, %v1823, 0.0
    %1864 = vadd.xlane.f32.xlu0 %v1863
    %v1865 = vpop.xlane.xlu0 %1864
    %v1866 = vsel %vm46, %v1824, 0.0
    %1867 = vadd.xlane.f32.xlu0 %v1866
    %v1868 = vpop.xlane.xlu0 %1867
    %v1869 = vsel %vm46, %v1825, 0.0
    %1870 = vadd.xlane.f32.xlu0 %v1869
    %v1871 = vpop.xlane.xlu0 %1870
    %v1872 = vsel %vm46, %v1826, 0.0
    %1873 = vadd.xlane.f32.xlu0 %v1872
    %v1874 = vpop.xlane.xlu0 %1873
    %v1875 = vsel %vm46, %v1827, 0.0
    %1876 = vadd.xlane.f32.xlu0 %v1875
    %v1877 = vpop.xlane.xlu0 %1876
    %v1878 = vsel %vm46, %v1828, 0.0
    %1879 = vadd.xlane.f32.xlu0 %v1878
    %v1880 = vpop.xlane.xlu0 %1879
    %v1881 = vmul.f32 %v1835, %v1109
    %v1882 = vmul.f32 %v1838, %v1109
    %v1883 = vmul.f32 %v1841, %v1109
    %v1884 = vmul.f32 %v1844, %v1109
    %v1885 = vmul.f32 %v1847, %v1109
    %v1886 = vmul.f32 %v1850, %v1109
    %v1887 = vmul.f32 %v1853, %v1109
    %v1888 = vmul.f32 %v1856, %v1109
    %v1889 = vmul.f32 %v1859, %v1109
    %v1890 = vmul.f32 %v1862, %v1109
    %v1891 = vmul.f32 %v1865, %v1109
    %v1892 = vmul.f32 %v1868, %v1109
    %v1893 = vmul.f32 %v1871, %v1109
    %v1894 = vmul.f32 %v1874, %v1109
    %v1895 = vmul.f32 %v1877, %v1109
    %v1896 = vmul.f32 %v1880, %v1109
    %v1897 = vsub.f32 %v1813, %v1881
    %v1898 = vsub.f32 %v1814, %v1882
    %v1899 = vsub.f32 %v1815, %v1883
    %v1900 = vsub.f32 %v1816, %v1884
    %v1901 = vsub.f32 %v1817, %v1885
    %v1902 = vsub.f32 %v1818, %v1886
    %v1903 = vsub.f32 %v1819, %v1887
    %v1904 = vsub.f32 %v1820, %v1888
    %v1905 = vsub.f32 %v1821, %v1889
    %v1906 = vsub.f32 %v1822, %v1890
    %v1907 = vsub.f32 %v1823, %v1891
    %v1908 = vsub.f32 %v1824, %v1892
    %v1909 = vsub.f32 %v1825, %v1893
    %v1910 = vsub.f32 %v1826, %v1894
    %v1911 = vsub.f32 %v1827, %v1895
    %v1912 = vsub.f32 %v1828, %v1896
    %v1913 = vmul.f32 %v1897, %v1897
    %v1914 = vmul.f32 %v1898, %v1898
    %v1915 = vmul.f32 %v1899, %v1899
    %v1916 = vmul.f32 %v1900, %v1900
    %v1917 = vmul.f32 %v1901, %v1901
    %v1918 = vmul.f32 %v1902, %v1902
    %v1919 = vmul.f32 %v1903, %v1903
    %v1920 = vmul.f32 %v1904, %v1904
    %v1921 = vmul.f32 %v1905, %v1905
    %v1922 = vmul.f32 %v1906, %v1906
    %v1923 = vmul.f32 %v1907, %v1907
    %v1924 = vmul.f32 %v1908, %v1908
    %v1925 = vmul.f32 %v1909, %v1909
    %v1926 = vmul.f32 %v1910, %v1910
    %v1927 = vmul.f32 %v1911, %v1911
    %v1928 = vmul.f32 %v1912, %v1912
    %v1929 = vsel %vm46, %v1913, 0.0
    %1930 = vadd.xlane.f32.xlu0 %v1929
    %v1931 = vpop.xlane.xlu0 %1930
    %v1932 = vsel %vm46, %v1914, 0.0
    %1933 = vadd.xlane.f32.xlu0 %v1932
    %v1934 = vpop.xlane.xlu0 %1933
    %v1935 = vsel %vm46, %v1915, 0.0
    %1936 = vadd.xlane.f32.xlu0 %v1935
    %v1937 = vpop.xlane.xlu0 %1936
    %v1938 = vsel %vm46, %v1916, 0.0
    %1939 = vadd.xlane.f32.xlu0 %v1938
    %v1940 = vpop.xlane.xlu0 %1939
    %v1941 = vsel %vm46, %v1917, 0.0
    %1942 = vadd.xlane.f32.xlu0 %v1941
    %v1943 = vpop.xlane.xlu0 %1942
    %v1944 = vsel %vm46, %v1918, 0.0
    %1945 = vadd.xlane.f32.xlu0 %v1944
    %v1946 = vpop.xlane.xlu0 %1945
    %v1947 = vsel %vm46, %v1919, 0.0
    %1948 = vadd.xlane.f32.xlu0 %v1947
    %v1949 = vpop.xlane.xlu0 %1948
    %v1950 = vsel %vm46, %v1920, 0.0
    %1951 = vadd.xlane.f32.xlu0 %v1950
    %v1952 = vpop.xlane.xlu0 %1951
    %v1953 = vsel %vm46, %v1921, 0.0
    %1954 = vadd.xlane.f32.xlu0 %v1953
    %v1955 = vpop.xlane.xlu0 %1954
    %v1956 = vsel %vm46, %v1922, 0.0
    %1957 = vadd.xlane.f32.xlu0 %v1956
    %v1958 = vpop.xlane.xlu0 %1957
    %v1959 = vsel %vm46, %v1923, 0.0
    %1960 = vadd.xlane.f32.xlu0 %v1959
    %v1961 = vpop.xlane.xlu0 %1960
    %v1962 = vsel %vm46, %v1924, 0.0
    %1963 = vadd.xlane.f32.xlu0 %v1962
    %v1964 = vpop.xlane.xlu0 %1963
    %v1965 = vsel %vm46, %v1925, 0.0
    %1966 = vadd.xlane.f32.xlu0 %v1965
    %v1967 = vpop.xlane.xlu0 %1966
    %v1968 = vsel %vm46, %v1926, 0.0
    %1969 = vadd.xlane.f32.xlu0 %v1968
    %v1970 = vpop.xlane.xlu0 %1969
    %v1971 = vsel %vm46, %v1927, 0.0
    %1972 = vadd.xlane.f32.xlu0 %v1971
    %v1973 = vpop.xlane.xlu0 %1972
    %v1974 = vsel %vm46, %v1928, 0.0
    %1975 = vadd.xlane.f32.xlu0 %v1974
    %v1976 = vpop.xlane.xlu0 %1975
    %v1977 = vmul.f32 %v1931, %v1109
    %v1978 = vmul.f32 %v1934, %v1109
    %v1979 = vmul.f32 %v1937, %v1109
    %v1980 = vmul.f32 %v1940, %v1109
    %v1981 = vmul.f32 %v1943, %v1109
    %v1982 = vmul.f32 %v1946, %v1109
    %v1983 = vmul.f32 %v1949, %v1109
    %v1984 = vmul.f32 %v1952, %v1109
    %v1985 = vmul.f32 %v1955, %v1109
    %v1986 = vmul.f32 %v1958, %v1109
    %v1987 = vmul.f32 %v1961, %v1109
    %v1988 = vmul.f32 %v1964, %v1109
    %v1989 = vmul.f32 %v1967, %v1109
    %v1990 = vmul.f32 %v1970, %v1109
    %v1991 = vmul.f32 %v1973, %v1109
    %v1992 = vmul.f32 %v1976, %v1109
    %v1993 = vadd.f32 %v1977, 1e-05
    %v1994 = vadd.f32 %v1978, 1e-05
    %v1995 = vadd.f32 %v1979, 1e-05
    %v1996 = vadd.f32 %v1980, 1e-05
    %v1997 = vadd.f32 %v1981, 1e-05
    %v1998 = vadd.f32 %v1982, 1e-05
    %v1999 = vadd.f32 %v1983, 1e-05
    %v2000 = vadd.f32 %v1984, 1e-05
    %v2001 = vadd.f32 %v1985, 1e-05
    %v2002 = vadd.f32 %v1986, 1e-05
    %v2003 = vadd.f32 %v1987, 1e-05
    %v2004 = vadd.f32 %v1988, 1e-05
    %v2005 = vadd.f32 %v1989, 1e-05
    %v2006 = vadd.f32 %v1990, 1e-05
    %v2007 = vadd.f32 %v1991, 1e-05
    %v2008 = vadd.f32 %v1992, 1e-05
    %v2009 = vrsqrt.pop %v1993
    %v2010 = vrsqrt.pop %v1994
    %v2011 = vrsqrt.pop %v1995
    %v2012 = vrsqrt.pop %v1996
    %v2013 = vrsqrt.pop %v1997
    %v2014 = vrsqrt.pop %v1998
    %v2015 = vrsqrt.pop %v1999
    %v2016 = vrsqrt.pop %v2000
    %v2017 = vrsqrt.pop %v2001
    %v2018 = vrsqrt.pop %v2002
    %v2019 = vrsqrt.pop %v2003
    %v2020 = vrsqrt.pop %v2004
    %v2021 = vrsqrt.pop %v2005
    %v2022 = vrsqrt.pop %v2006
    %v2023 = vrsqrt.pop %v2007
    %v2024 = vrsqrt.pop %v2008
    %v2025 = vmul.f32 %v1897, %v2009
    %v2026 = vmul.f32 %v1898, %v2010
    %v2027 = vmul.f32 %v1899, %v2011
    %v2028 = vmul.f32 %v1900, %v2012
    %v2029 = vmul.f32 %v1901, %v2013
    %v2030 = vmul.f32 %v1902, %v2014
    %v2031 = vmul.f32 %v1903, %v2015
    %v2032 = vmul.f32 %v1904, %v2016
    %v2033 = vmul.f32 %v1905, %v2017
    %v2034 = vmul.f32 %v1906, %v2018
    %v2035 = vmul.f32 %v1907, %v2019
    %v2036 = vmul.f32 %v1908, %v2020
    %v2037 = vmul.f32 %v1909, %v2021
    %v2038 = vmul.f32 %v1910, %v2022
    %v2039 = vmul.f32 %v1911, %v2023
    %v2040 = vmul.f32 %v1912, %v2024
    %v2042 = vlaneseq
    %v2043 = vshrl.u32 %v2042, 7
    %v2044 = vsub.s32 0, %v2043
    %v2045 = vrot.slane %v1830, %v2044
    %v2047 = vmul.f32 %v2025, %v2045
    %v2048 = vmul.f32 %v2026, %v2045
    %v2049 = vmul.f32 %v2027, %v2045
    %v2050 = vmul.f32 %v2028, %v2045
    %v2051 = vmul.f32 %v2029, %v2045
    %v2052 = vmul.f32 %v2030, %v2045
    %v2053 = vmul.f32 %v2031, %v2045
    %v2054 = vmul.f32 %v2032, %v2045
    %v2055 = vmul.f32 %v2033, %v2045
    %v2056 = vmul.f32 %v2034, %v2045
    %v2057 = vmul.f32 %v2035, %v2045
    %v2058 = vmul.f32 %v2036, %v2045
    %v2059 = vmul.f32 %v2037, %v2045
    %v2060 = vmul.f32 %v2038, %v2045
    %v2061 = vmul.f32 %v2039, %v2045
    %v2062 = vmul.f32 %v2040, %v2045
    %v2064 = vlaneseq
    %v2065 = vshrl.u32 %v2064, 7
    %v2066 = vsub.s32 0, %v2065
    %v2067 = vrot.slane %v1832, %v2066
    %v2069 = vadd.f32 %v2047, %v2067
    %v2070 = vadd.f32 %v2048, %v2067
    %v2071 = vadd.f32 %v2049, %v2067
    %v2072 = vadd.f32 %v2050, %v2067
    %v2073 = vadd.f32 %v2051, %v2067
    %v2074 = vadd.f32 %v2052, %v2067
    %v2075 = vadd.f32 %v2053, %v2067
    %v2076 = vadd.f32 %v2054, %v2067
    %v2077 = vadd.f32 %v2055, %v2067
    %v2078 = vadd.f32 %v2056, %v2067
    %v2079 = vadd.f32 %v2057, %v2067
    %v2080 = vadd.f32 %v2058, %v2067
    %v2081 = vadd.f32 %v2059, %v2067
    %v2082 = vadd.f32 %v2060, %v2067
    %v2083 = vadd.f32 %v2061, %v2067
    %v2084 = vadd.f32 %v2062, %v2067
    %v2085 = vpack.c.bf16 %v2070, %v2069
    %v2086 = vpack.c.bf16 %v2072, %v2071
    %v2087 = vpack.c.bf16 %v2074, %v2073
    %v2088 = vpack.c.bf16 %v2076, %v2075
    %v2089 = vpack.c.bf16 %v2078, %v2077
    %v2090 = vpack.c.bf16 %v2080, %v2079
    %v2091 = vpack.c.bf16 %v2082, %v2081
    %v2092 = vpack.c.bf16 %v2084, %v2083
    %s2093 = scalar_lea.vmem %s5, 16
    %v2094 = vld [vmem:[%s2093] sm:$0xf]
    %v2095 = vld [vmem:[%s2093 + $0x4] sm:$0xf]
    %v2096 = vld [vmem:[%s2093 + $0x8] sm:$0xf]
    %v2097 = vld [vmem:[%s2093 + $0xc] sm:$0xf]
    %s2098 = scalar_lea.vmem %s6, 1
    %v2099 = vld [vmem:[%s2098] sm:$0x1]
    %v2101 = vlaneseq
    %v2102 = vshrl.u32 %v2101, 7
    %v2103 = vsub.s32 0, %v2102
    %v2104 = vrot.slane %v2099, %v2103
    %v2110 = vunpack.c.l.b16 %v2094
    %v2111 = vunpack.c.l.b16 %v2095
    %v2112 = vunpack.c.l.b16 %v2096
    %v2113 = vunpack.c.l.b16 %v2097
    %v2114 = vpack.c.b16 %v2111, %v2110
    %v2115 = vpack.c.b16 %v2113, %v2112
    %v2119 = vsel %vm46, %v2085, 0
    %v2122 = vsel %vm46, %v2086, 0
    %v2125 = vsel %vm46, %v2087, 0
    %v2128 = vsel %vm46, %v2088, 0
    %v2131 = vsel %vm46, %v2089, 0
    %v2134 = vsel %vm46, %v2090, 0
    %v2137 = vsel %vm46, %v2091, 0
    %v2140 = vsel %vm46, %v2092, 0
    %2142 = vmatprep.subr.bf16.mxu0 0
    %2143 = vmatpush1.bf16.msra.mxu0 %v2114
    %2144 = vmatprep.subr.bf16.mxu0 0
    %2145 = vmatpush1.bf16.msra.mxu0 %v2115
    %2146 = vmatprep.subr.bf16.mxu0 0
    %2147 = vmatpush1.bf16.msra.mxu0 0
    %2148 = vmatprep.subr.bf16.mxu0 0
    %2149 = vmatpush1.bf16.msra.mxu0 0
    %2150 = vmatprep.subr.bf16.mxu0 0
    %2151 = vmatpush1.bf16.msra.mxu0 0
    %2152 = vmatprep.subr.bf16.mxu0 0
    %2153 = vmatpush1.bf16.msra.mxu0 0
    %2154 = vmatprep.subr.bf16.mxu0 0
    %2155 = vmatpush1.bf16.msra.mxu0 0
    %2156 = vmatprep.subr.bf16.mxu0 0
    %2157 = vmatpush1.bf16.msra.mxu0 0
    %2158 = vmatprep.subr.bf16.mxu0 0
    %2159 = vmatpush1.bf16.msra.mxu0 0
    %2160 = vmatprep.subr.bf16.mxu0 0
    %2161 = vmatpush1.bf16.msra.mxu0 0
    %2162 = vmatprep.subr.bf16.mxu0 0
    %2163 = vmatpush1.bf16.msra.mxu0 0
    %2164 = vmatprep.subr.bf16.mxu0 0
    %2165 = vmatpush1.bf16.msra.mxu0 0
    %2166 = vmatprep.subr.bf16.mxu0 0
    %2167 = vmatpush1.bf16.msra.mxu0 0
    %2168 = vmatprep.subr.bf16.mxu0 0
    %2169 = vmatpush1.bf16.msra.mxu0 0
    %2170 = vmatprep.subr.bf16.mxu0 0
    %2171 = vmatpush1.bf16.msra.mxu0 0
    %2172 = vmatprep.subr.bf16.mxu0 0
    %2173 = vmatpush1.bf16.msra.mxu0 0
    %2174 = vmatprep.mubr.bf16.mxu0 0
    %2175 = vmatmul.mubr.bf16.gmra.mrb[0].mxu0 %v2119
    %v2176 = vpop.f32.mrb[0].mxu0
    %v2177 = vadd.f32 %v2104, %v2176
    %v2178 = vpop.f32.mrb[0].mxu0
    %v2179 = vpop.f32.mrb[0].mxu0
    %v2180 = vadd.f32 %v2104, %v2179
    %v2181 = vpop.f32.mrb[0].mxu0
    %2182 = vmatprep.mubr.bf16.mxu0 0
    %2183 = vmatmul.mubr.bf16.gmra.mrb[0].mxu0 %v2122
    %v2184 = vpop.f32.mrb[0].mxu0
    %v2185 = vadd.f32 %v2104, %v2184
    %v2186 = vpop.f32.mrb[0].mxu0
    %v2187 = vpop.f32.mrb[0].mxu0
    %v2188 = vadd.f32 %v2104, %v2187
    %v2189 = vpop.f32.mrb[0].mxu0
    %2190 = vmatprep.mubr.bf16.mxu0 0
    %2191 = vmatmul.mubr.bf16.gmra.mrb[0].mxu0 %v2125
    %v2192 = vpop.f32.mrb[0].mxu0
    %v2193 = vadd.f32 %v2104, %v2192
    %v2194 = vpop.f32.mrb[0].mxu0
    %v2195 = vpop.f32.mrb[0].mxu0
    %v2196 = vadd.f32 %v2104, %v2195
    %v2197 = vpop.f32.mrb[0].mxu0
    %2198 = vmatprep.mubr.bf16.mxu0 0
    %2199 = vmatmul.mubr.bf16.gmra.mrb[0].mxu0 %v2128
    %v2200 = vpop.f32.mrb[0].mxu0
    %v2201 = vadd.f32 %v2104, %v2200
    %v2202 = vpop.f32.mrb[0].mxu0
    %v2203 = vpop.f32.mrb[0].mxu0
    %v2204 = vadd.f32 %v2104, %v2203
    %v2205 = vpop.f32.mrb[0].mxu0
    %2206 = vmatprep.mubr.bf16.mxu0 0
    %2207 = vmatmul.mubr.bf16.gmra.mrb[0].mxu0 %v2131
    %v2208 = vpop.f32.mrb[0].mxu0
    %v2209 = vadd.f32 %v2104, %v2208
    %v2210 = vpop.f32.mrb[0].mxu0
    %v2211 = vpop.f32.mrb[0].mxu0
    %v2212 = vadd.f32 %v2104, %v2211
    %v2213 = vpop.f32.mrb[0].mxu0
    %2214 = vmatprep.mubr.bf16.mxu0 0
    %2215 = vmatmul.mubr.bf16.gmra.mrb[0].mxu0 %v2134
    %v2216 = vpop.f32.mrb[0].mxu0
    %v2217 = vadd.f32 %v2104, %v2216
    %v2218 = vpop.f32.mrb[0].mxu0
    %v2219 = vpop.f32.mrb[0].mxu0
    %v2220 = vadd.f32 %v2104, %v2219
    %v2221 = vpop.f32.mrb[0].mxu0
    %2222 = vmatprep.mubr.bf16.mxu0 0
    %2223 = vmatmul.mubr.bf16.gmra.mrb[0].mxu0 %v2137
    %v2224 = vpop.f32.mrb[0].mxu0
    %v2225 = vadd.f32 %v2104, %v2224
    %v2226 = vpop.f32.mrb[0].mxu0
    %v2227 = vpop.f32.mrb[0].mxu0
    %v2228 = vadd.f32 %v2104, %v2227
    %v2229 = vpop.f32.mrb[0].mxu0
    %2230 = vmatprep.mubr.bf16.mxu0 0
    %2231 = vmatmul.mubr.bf16.gmra.mrb[0].mxu0 %v2140
    %v2232 = vpop.f32.mrb[0].mxu0
    %v2233 = vadd.f32 %v2104, %v2232
    %v2234 = vpop.f32.mrb[0].mxu0
    %v2235 = vpop.f32.mrb[0].mxu0
    %v2236 = vadd.f32 %v2104, %v2235
    %v2237 = vpop.f32.mrb[0].mxu0
    %2238 = vdwg.mxu0
    %s2239 = scalar_lea.vmem %s1, 288
    %v2240 = vld [vmem:[%s2239] sm:$0xf]
    %v2241 = vld [vmem:[%s2239 + $0x4] sm:$0xf]
    %v2242 = vld [vmem:[%s2239 + $0x8] sm:$0xf]
    %v2243 = vld [vmem:[%s2239 + $0xc] sm:$0xf]
    %v2244 = vld [vmem:[%s2239 + $0x10] sm:$0xf]
    %v2245 = vld [vmem:[%s2239 + $0x14] sm:$0xf]
    %v2246 = vld [vmem:[%s2239 + $0x18] sm:$0xf]
    %v2247 = vld [vmem:[%s2239 + $0x1c] sm:$0xf]
    %v2248 = vld [vmem:[%s2239 + $0x20] sm:$0xf]
    %v2249 = vld [vmem:[%s2239 + $0x24] sm:$0xf]
    %v2250 = vld [vmem:[%s2239 + $0x28] sm:$0xf]
    %v2251 = vld [vmem:[%s2239 + $0x2c] sm:$0xf]
    %v2252 = vld [vmem:[%s2239 + $0x30] sm:$0xf]
    %v2253 = vld [vmem:[%s2239 + $0x34] sm:$0xf]
    %v2254 = vld [vmem:[%s2239 + $0x38] sm:$0xf]
    %v2255 = vld [vmem:[%s2239 + $0x3c] sm:$0xf]
    %v2256 = vld [vmem:[%s2239 + $0x40] sm:$0xf]
    %v2257 = vld [vmem:[%s2239 + $0x44] sm:$0xf]
    %v2258 = vld [vmem:[%s2239 + $0x48] sm:$0xf]
    %v2259 = vld [vmem:[%s2239 + $0x4c] sm:$0xf]
    %v2260 = vld [vmem:[%s2239 + $0x50] sm:$0xf]
    %v2261 = vld [vmem:[%s2239 + $0x54] sm:$0xf]
    %v2262 = vld [vmem:[%s2239 + $0x58] sm:$0xf]
    %v2263 = vld [vmem:[%s2239 + $0x5c] sm:$0xf]
    %v2264 = vld [vmem:[%s2239 + $0x60] sm:$0xf]
    %v2265 = vld [vmem:[%s2239 + $0x64] sm:$0xf]
    %v2266 = vld [vmem:[%s2239 + $0x68] sm:$0xf]
    %v2267 = vld [vmem:[%s2239 + $0x6c] sm:$0xf]
    %v2268 = vld [vmem:[%s2239 + $0x70] sm:$0xf]
    %v2269 = vld [vmem:[%s2239 + $0x74] sm:$0xf]
    %v2270 = vld [vmem:[%s2239 + $0x78] sm:$0xf]
    %v2271 = vld [vmem:[%s2239 + $0x7c] sm:$0xf]
    %v2272 = vld [vmem:[%s2239 + $0x80] sm:$0xf]
    %v2273 = vld [vmem:[%s2239 + $0x84] sm:$0xf]
    %v2274 = vld [vmem:[%s2239 + $0x88] sm:$0xf]
    %v2275 = vld [vmem:[%s2239 + $0x8c] sm:$0xf]
    %s2276 = scalar_lea.vmem %s2, 2
    %v2277 = vld [vmem:[%s2276] sm:$0x1]
    %v2279 = vlaneseq
    %v2280 = vshrl.u32 %v2279, 7
    %v2281 = vsub.s32 0, %v2280
    %v2282 = vrot.slane %v2277, %v2281
    %v2320 = vunpack.c.l.b16 %v2240
    %v2321 = vunpack.c.l.b16 %v2241
    %v2322 = vunpack.c.l.b16 %v2242
    %v2323 = vunpack.c.l.b16 %v2243
    %v2324 = vunpack.c.l.b16 %v2244
    %v2325 = vunpack.c.l.b16 %v2245
    %v2326 = vunpack.c.l.b16 %v2246
    %v2327 = vunpack.c.l.b16 %v2247
    %v2328 = vunpack.c.l.b16 %v2248
    %v2329 = vunpack.c.l.b16 %v2249
    %v2330 = vunpack.c.l.b16 %v2250
    %v2331 = vunpack.c.l.b16 %v2251
    %v2332 = vunpack.c.l.b16 %v2252
    %v2333 = vunpack.c.l.b16 %v2253
    %v2334 = vunpack.c.l.b16 %v2254
    %v2335 = vunpack.c.l.b16 %v2255
    %v2336 = vunpack.c.l.b16 %v2256
    %v2337 = vunpack.c.l.b16 %v2257
    %v2338 = vunpack.c.l.b16 %v2258
    %v2339 = vunpack.c.l.b16 %v2259
    %v2340 = vunpack.c.l.b16 %v2260
    %v2341 = vunpack.c.l.b16 %v2261
    %v2342 = vunpack.c.l.b16 %v2262
    %v2343 = vunpack.c.l.b16 %v2263
    %v2344 = vunpack.c.l.b16 %v2264
    %v2345 = vunpack.c.l.b16 %v2265
    %v2346 = vunpack.c.l.b16 %v2266
    %v2347 = vunpack.c.l.b16 %v2267
    %v2348 = vunpack.c.l.b16 %v2268
    %v2349 = vunpack.c.l.b16 %v2269
    %v2350 = vunpack.c.l.b16 %v2270
    %v2351 = vunpack.c.l.b16 %v2271
    %v2352 = vunpack.c.l.b16 %v2272
    %v2353 = vunpack.c.l.b16 %v2273
    %v2354 = vunpack.c.l.b16 %v2274
    %v2355 = vunpack.c.l.b16 %v2275
    %v2356 = vpack.c.b16 %v2321, %v2320
    %v2357 = vpack.c.b16 %v2323, %v2322
    %v2358 = vpack.c.b16 %v2325, %v2324
    %v2359 = vpack.c.b16 %v2327, %v2326
    %v2360 = vpack.c.b16 %v2329, %v2328
    %v2361 = vpack.c.b16 %v2331, %v2330
    %v2362 = vpack.c.b16 %v2333, %v2332
    %v2363 = vpack.c.b16 %v2335, %v2334
    %v2364 = vpack.c.b16 %v2337, %v2336
    %v2365 = vpack.c.b16 %v2339, %v2338
    %v2366 = vpack.c.b16 %v2341, %v2340
    %v2367 = vpack.c.b16 %v2343, %v2342
    %v2368 = vpack.c.b16 %v2345, %v2344
    %v2369 = vpack.c.b16 %v2347, %v2346
    %v2370 = vpack.c.b16 %v2349, %v2348
    %v2371 = vpack.c.b16 %v2351, %v2350
    %v2372 = vpack.c.b16 %v2353, %v2352
    %v2373 = vpack.c.b16 %v2355, %v2354
    %2392 = vmatprep.subr.bf16.mxu0 0
    %2393 = vmatpush1.bf16.msra.mxu0 %v2356
    %2394 = vmatprep.subr.bf16.mxu0 0
    %2395 = vmatpush1.bf16.msra.mxu0 %v2357
    %2396 = vmatprep.subr.bf16.mxu0 0
    %2397 = vmatpush1.bf16.msra.mxu0 %v2358
    %2398 = vmatprep.subr.bf16.mxu0 0
    %2399 = vmatpush1.bf16.msra.mxu0 %v2359
    %2400 = vmatprep.subr.bf16.mxu0 0
    %2401 = vmatpush1.bf16.msra.mxu0 %v2360
    %2402 = vmatprep.subr.bf16.mxu0 0
    %2403 = vmatpush1.bf16.msra.mxu0 %v2361
    %2404 = vmatprep.subr.bf16.mxu0 0
    %2405 = vmatpush1.bf16.msra.mxu0 %v2362
    %2406 = vmatprep.subr.bf16.mxu0 0
    %2407 = vmatpush1.bf16.msra.mxu0 %v2363
    %2408 = vmatprep.subr.bf16.mxu0 0
    %2409 = vmatpush1.bf16.msra.mxu0 %v2364
    %2410 = vmatprep.subr.bf16.mxu0 0
    %2411 = vmatpush1.bf16.msra.mxu0 %v2365
    %2412 = vmatprep.subr.bf16.mxu0 0
    %2413 = vmatpush1.bf16.msra.mxu0 %v2366
    %2414 = vmatprep.subr.bf16.mxu0 0
    %2415 = vmatpush1.bf16.msra.mxu0 %v2367
    %2416 = vmatprep.subr.bf16.mxu0 0
    %2417 = vmatpush1.bf16.msra.mxu0 %v2368
    %2418 = vmatprep.subr.bf16.mxu0 0
    %2419 = vmatpush1.bf16.msra.mxu0 %v2369
    %2420 = vmatprep.subr.bf16.mxu0 0
    %2421 = vmatpush1.bf16.msra.mxu0 %v2370
    %2422 = vmatprep.subr.bf16.mxu0 0
    %2423 = vmatpush1.bf16.msra.mxu0 %v2371
    %2424 = vmatprep.mubr.bf16.mxu0 %v688
    %2425 = vmatmul.mubr.bf16.gmra.mrb[0].mxu0 %v687
    %v2426 = vpop.f32.mrb[0].mxu0
    %v2427 = vadd.f32 %v2282, %v2426
    %v2428 = vpop.f32.mrb[0].mxu0
    %v2429 = vpop.f32.mrb[0].mxu0
    %v2430 = vadd.f32 %v2282, %v2429
    %v2431 = vpop.f32.mrb[0].mxu0
    %2432 = vmatprep.mubr.bf16.mxu0 %v691
    %2433 = vmatmul.mubr.bf16.gmra.mrb[0].mxu0 %v690
    %v2434 = vpop.f32.mrb[0].mxu0
    %v2435 = vadd.f32 %v2282, %v2434
    %v2436 = vpop.f32.mrb[0].mxu0
    %v2437 = vpop.f32.mrb[0].mxu0
    %v2438 = vadd.f32 %v2282, %v2437
    %v2439 = vpop.f32.mrb[0].mxu0
    %2440 = vmatprep.mubr.bf16.mxu0 %v694
    %2441 = vmatmul.mubr.bf16.gmra.mrb[0].mxu0 %v693
    %v2442 = vpop.f32.mrb[0].mxu0
    %v2443 = vadd.f32 %v2282, %v2442
    %v2444 = vpop.f32.mrb[0].mxu0
    %v2445 = vpop.f32.mrb[0].mxu0
    %v2446 = vadd.f32 %v2282, %v2445
    %v2447 = vpop.f32.mrb[0].mxu0
    %2448 = vmatprep.mubr.bf16.mxu0 %v697
    %2449 = vmatmul.mubr.bf16.gmra.mrb[0].mxu0 %v696
    %v2450 = vpop.f32.mrb[0].mxu0
    %v2451 = vadd.f32 %v2282, %v2450
    %v2452 = vpop.f32.mrb[0].mxu0
    %v2453 = vpop.f32.mrb[0].mxu0
    %v2454 = vadd.f32 %v2282, %v2453
    %v2455 = vpop.f32.mrb[0].mxu0
    %2456 = vmatprep.mubr.bf16.mxu0 %v700
    %2457 = vmatmul.mubr.bf16.gmra.mrb[0].mxu0 %v699
    %v2458 = vpop.f32.mrb[0].mxu0
    %v2459 = vadd.f32 %v2282, %v2458
    %v2460 = vpop.f32.mrb[0].mxu0
    %v2461 = vpop.f32.mrb[0].mxu0
    %v2462 = vadd.f32 %v2282, %v2461
    %v2463 = vpop.f32.mrb[0].mxu0
    %2464 = vmatprep.mubr.bf16.mxu0 %v703
    %2465 = vmatmul.mubr.bf16.gmra.mrb[0].mxu0 %v702
    %v2466 = vpop.f32.mrb[0].mxu0
    %v2467 = vadd.f32 %v2282, %v2466
    %v2468 = vpop.f32.mrb[0].mxu0
    %v2469 = vpop.f32.mrb[0].mxu0
    %v2470 = vadd.f32 %v2282, %v2469
    %v2471 = vpop.f32.mrb[0].mxu0
    %2472 = vmatprep.mubr.bf16.mxu0 %v706
    %2473 = vmatmul.mubr.bf16.gmra.mrb[0].mxu0 %v705
    %v2474 = vpop.f32.mrb[0].mxu0
    %v2475 = vadd.f32 %v2282, %v2474
    %v2476 = vpop.f32.mrb[0].mxu0
    %v2477 = vpop.f32.mrb[0].mxu0
    %v2478 = vadd.f32 %v2282, %v2477
    %v2479 = vpop.f32.mrb[0].mxu0
    %2480 = vmatprep.mubr.bf16.mxu0 %v709
    %2481 = vmatmul.mubr.bf16.gmra.mrb[0].mxu0 %v708
    %v2482 = vpop.f32.mrb[0].mxu0
    %v2483 = vadd.f32 %v2282, %v2482
    %v2484 = vpop.f32.mrb[0].mxu0
    %v2485 = vpop.f32.mrb[0].mxu0
    %v2486 = vadd.f32 %v2282, %v2485
    %v2487 = vpop.f32.mrb[0].mxu0
    %2488 = vdwg.mxu0
    %2489 = vmatprep.subr.bf16.mxu0 0
    %2490 = vmatpush1.bf16.msra.mxu0 %v2372
    %2491 = vmatprep.subr.bf16.mxu0 0
    %2492 = vmatpush1.bf16.msra.mxu0 %v2373
    %2493 = vmatprep.subr.bf16.mxu0 0
    %2494 = vmatpush1.bf16.msra.mxu0 0
    %2495 = vmatprep.subr.bf16.mxu0 0
    %2496 = vmatpush1.bf16.msra.mxu0 0
    %2497 = vmatprep.subr.bf16.mxu0 0
    %2498 = vmatpush1.bf16.msra.mxu0 0
    %2499 = vmatprep.subr.bf16.mxu0 0
    %2500 = vmatpush1.bf16.msra.mxu0 0
    %2501 = vmatprep.subr.bf16.mxu0 0
    %2502 = vmatpush1.bf16.msra.mxu0 0
    %2503 = vmatprep.subr.bf16.mxu0 0
    %2504 = vmatpush1.bf16.msra.mxu0 0
    %2505 = vmatprep.subr.bf16.mxu0 0
    %2506 = vmatpush1.bf16.msra.mxu0 0
    %2507 = vmatprep.subr.bf16.mxu0 0
    %2508 = vmatpush1.bf16.msra.mxu0 0
    %2509 = vmatprep.subr.bf16.mxu0 0
    %2510 = vmatpush1.bf16.msra.mxu0 0
    %2511 = vmatprep.subr.bf16.mxu0 0
    %2512 = vmatpush1.bf16.msra.mxu0 0
    %2513 = vmatprep.subr.bf16.mxu0 0
    %2514 = vmatpush1.bf16.msra.mxu0 0
    %2515 = vmatprep.subr.bf16.mxu0 0
    %2516 = vmatpush1.bf16.msra.mxu0 0
    %2517 = vmatprep.subr.bf16.mxu0 0
    %2518 = vmatpush1.bf16.msra.mxu0 0
    %2519 = vmatprep.subr.bf16.mxu0 0
    %2520 = vmatpush1.bf16.msra.mxu0 0
    %2521 = vmatprep.mubr.bf16.mxu0 0
    %2522 = vmatmul.mubr.bf16.gmra.mrb[0].mxu0 %v826
    %v2523 = vpop.f32.mrb[0].mxu0
    %v2524 = vadd.f32 %v2427, %v2523
    %v2525 = vpop.f32.mrb[0].mxu0
    %v2526 = vpop.f32.mrb[0].mxu0
    %v2527 = vadd.f32 %v2430, %v2526
    %v2528 = vpop.f32.mrb[0].mxu0
    %2529 = vmatprep.mubr.bf16.mxu0 0
    %2530 = vmatmul.mubr.bf16.gmra.mrb[0].mxu0 %v829
    %v2531 = vpop.f32.mrb[0].mxu0
    %v2532 = vadd.f32 %v2435, %v2531
    %v2533 = vpop.f32.mrb[0].mxu0
    %v2534 = vpop.f32.mrb[0].mxu0
    %v2535 = vadd.f32 %v2438, %v2534
    %v2536 = vpop.f32.mrb[0].mxu0
    %2537 = vmatprep.mubr.bf16.mxu0 0
    %2538 = vmatmul.mubr.bf16.gmra.mrb[0].mxu0 %v832
    %v2539 = vpop.f32.mrb[0].mxu0
    %v2540 = vadd.f32 %v2443, %v2539
    %v2541 = vpop.f32.mrb[0].mxu0
    %v2542 = vpop.f32.mrb[0].mxu0
    %v2543 = vadd.f32 %v2446, %v2542
    %v2544 = vpop.f32.mrb[0].mxu0
    %2545 = vmatprep.mubr.bf16.mxu0 0
    %2546 = vmatmul.mubr.bf16.gmra.mrb[0].mxu0 %v835
    %v2547 = vpop.f32.mrb[0].mxu0
    %v2548 = vadd.f32 %v2451, %v2547
    %v2549 = vpop.f32.mrb[0].mxu0
    %v2550 = vpop.f32.mrb[0].mxu0
    %v2551 = vadd.f32 %v2454, %v2550
    %v2552 = vpop.f32.mrb[0].mxu0
    %2553 = vmatprep.mubr.bf16.mxu0 0
    %2554 = vmatmul.mubr.bf16.gmra.mrb[0].mxu0 %v838
    %v2555 = vpop.f32.mrb[0].mxu0
    %v2556 = vadd.f32 %v2459, %v2555
    %v2557 = vpop.f32.mrb[0].mxu0
    %v2558 = vpop.f32.mrb[0].mxu0
    %v2559 = vadd.f32 %v2462, %v2558
    %v2560 = vpop.f32.mrb[0].mxu0
    %2561 = vmatprep.mubr.bf16.mxu0 0
    %2562 = vmatmul.mubr.bf16.gmra.mrb[0].mxu0 %v841
    %v2563 = vpop.f32.mrb[0].mxu0
    %v2564 = vadd.f32 %v2467, %v2563
    %v2565 = vpop.f32.mrb[0].mxu0
    %v2566 = vpop.f32.mrb[0].mxu0
    %v2567 = vadd.f32 %v2470, %v2566
    %v2568 = vpop.f32.mrb[0].mxu0
    %2569 = vmatprep.mubr.bf16.mxu0 0
    %2570 = vmatmul.mubr.bf16.gmra.mrb[0].mxu0 %v844
    %v2571 = vpop.f32.mrb[0].mxu0
    %v2572 = vadd.f32 %v2475, %v2571
    %v2573 = vpop.f32.mrb[0].mxu0
    %v2574 = vpop.f32.mrb[0].mxu0
    %v2575 = vadd.f32 %v2478, %v2574
    %v2576 = vpop.f32.mrb[0].mxu0
    %2577 = vmatprep.mubr.bf16.mxu0 0
    %2578 = vmatmul.mubr.bf16.gmra.mrb[0].mxu0 %v847
    %v2579 = vpop.f32.mrb[0].mxu0
    %v2580 = vadd.f32 %v2483, %v2579
    %v2581 = vpop.f32.mrb[0].mxu0
    %v2582 = vpop.f32.mrb[0].mxu0
    %v2583 = vadd.f32 %v2486, %v2582
    %v2584 = vpop.f32.mrb[0].mxu0
    %2585 = vdwg.mxu0
    %v2586 = vmax.f32 %v2524, 0.0
    %v2587 = vmax.f32 %v2527, 0.0
    %v2588 = vmax.f32 %v2532, 0.0
    %v2589 = vmax.f32 %v2535, 0.0
    %v2590 = vmax.f32 %v2540, 0.0
    %v2591 = vmax.f32 %v2543, 0.0
    %v2592 = vmax.f32 %v2548, 0.0
    %v2593 = vmax.f32 %v2551, 0.0
    %v2594 = vmax.f32 %v2556, 0.0
    %v2595 = vmax.f32 %v2559, 0.0
    %v2596 = vmax.f32 %v2564, 0.0
    %v2597 = vmax.f32 %v2567, 0.0
    %v2598 = vmax.f32 %v2572, 0.0
    %v2599 = vmax.f32 %v2575, 0.0
    %v2600 = vmax.f32 %v2580, 0.0
    %v2601 = vmax.f32 %v2583, 0.0
    %s2602 = scalar_lea.vmem %s3, 2
    %v2603 = vld [vmem:[%s2602] sm:$0x1]
    %s2604 = scalar_lea.vmem %s4, 2
    %v2605 = vld [vmem:[%s2604] sm:$0x1]
    %v2606 = vsel %vm46, %v2586, 0.0
    %2607 = vadd.xlane.f32.xlu0 %v2606
    %v2608 = vpop.xlane.xlu0 %2607
    %v2609 = vsel %vm46, %v2587, 0.0
    %2610 = vadd.xlane.f32.xlu0 %v2609
    %v2611 = vpop.xlane.xlu0 %2610
    %v2612 = vsel %vm46, %v2588, 0.0
    %2613 = vadd.xlane.f32.xlu0 %v2612
    %v2614 = vpop.xlane.xlu0 %2613
    %v2615 = vsel %vm46, %v2589, 0.0
    %2616 = vadd.xlane.f32.xlu0 %v2615
    %v2617 = vpop.xlane.xlu0 %2616
    %v2618 = vsel %vm46, %v2590, 0.0
    %2619 = vadd.xlane.f32.xlu0 %v2618
    %v2620 = vpop.xlane.xlu0 %2619
    %v2621 = vsel %vm46, %v2591, 0.0
    %2622 = vadd.xlane.f32.xlu0 %v2621
    %v2623 = vpop.xlane.xlu0 %2622
    %v2624 = vsel %vm46, %v2592, 0.0
    %2625 = vadd.xlane.f32.xlu0 %v2624
    %v2626 = vpop.xlane.xlu0 %2625
    %v2627 = vsel %vm46, %v2593, 0.0
    %2628 = vadd.xlane.f32.xlu0 %v2627
    %v2629 = vpop.xlane.xlu0 %2628
    %v2630 = vsel %vm46, %v2594, 0.0
    %2631 = vadd.xlane.f32.xlu0 %v2630
    %v2632 = vpop.xlane.xlu0 %2631
    %v2633 = vsel %vm46, %v2595, 0.0
    %2634 = vadd.xlane.f32.xlu0 %v2633
    %v2635 = vpop.xlane.xlu0 %2634
    %v2636 = vsel %vm46, %v2596, 0.0
    %2637 = vadd.xlane.f32.xlu0 %v2636
    %v2638 = vpop.xlane.xlu0 %2637
    %v2639 = vsel %vm46, %v2597, 0.0
    %2640 = vadd.xlane.f32.xlu0 %v2639
    %v2641 = vpop.xlane.xlu0 %2640
    %v2642 = vsel %vm46, %v2598, 0.0
    %2643 = vadd.xlane.f32.xlu0 %v2642
    %v2644 = vpop.xlane.xlu0 %2643
    %v2645 = vsel %vm46, %v2599, 0.0
    %2646 = vadd.xlane.f32.xlu0 %v2645
    %v2647 = vpop.xlane.xlu0 %2646
    %v2648 = vsel %vm46, %v2600, 0.0
    %2649 = vadd.xlane.f32.xlu0 %v2648
    %v2650 = vpop.xlane.xlu0 %2649
    %v2651 = vsel %vm46, %v2601, 0.0
    %2652 = vadd.xlane.f32.xlu0 %v2651
    %v2653 = vpop.xlane.xlu0 %2652
    %v2654 = vmul.f32 %v2608, %v1109
    %v2655 = vmul.f32 %v2611, %v1109
    %v2656 = vmul.f32 %v2614, %v1109
    %v2657 = vmul.f32 %v2617, %v1109
    %v2658 = vmul.f32 %v2620, %v1109
    %v2659 = vmul.f32 %v2623, %v1109
    %v2660 = vmul.f32 %v2626, %v1109
    %v2661 = vmul.f32 %v2629, %v1109
    %v2662 = vmul.f32 %v2632, %v1109
    %v2663 = vmul.f32 %v2635, %v1109
    %v2664 = vmul.f32 %v2638, %v1109
    %v2665 = vmul.f32 %v2641, %v1109
    %v2666 = vmul.f32 %v2644, %v1109
    %v2667 = vmul.f32 %v2647, %v1109
    %v2668 = vmul.f32 %v2650, %v1109
    %v2669 = vmul.f32 %v2653, %v1109
    %v2670 = vsub.f32 %v2586, %v2654
    %v2671 = vsub.f32 %v2587, %v2655
    %v2672 = vsub.f32 %v2588, %v2656
    %v2673 = vsub.f32 %v2589, %v2657
    %v2674 = vsub.f32 %v2590, %v2658
    %v2675 = vsub.f32 %v2591, %v2659
    %v2676 = vsub.f32 %v2592, %v2660
    %v2677 = vsub.f32 %v2593, %v2661
    %v2678 = vsub.f32 %v2594, %v2662
    %v2679 = vsub.f32 %v2595, %v2663
    %v2680 = vsub.f32 %v2596, %v2664
    %v2681 = vsub.f32 %v2597, %v2665
    %v2682 = vsub.f32 %v2598, %v2666
    %v2683 = vsub.f32 %v2599, %v2667
    %v2684 = vsub.f32 %v2600, %v2668
    %v2685 = vsub.f32 %v2601, %v2669
    %v2686 = vmul.f32 %v2670, %v2670
    %v2687 = vmul.f32 %v2671, %v2671
    %v2688 = vmul.f32 %v2672, %v2672
    %v2689 = vmul.f32 %v2673, %v2673
    %v2690 = vmul.f32 %v2674, %v2674
    %v2691 = vmul.f32 %v2675, %v2675
    %v2692 = vmul.f32 %v2676, %v2676
    %v2693 = vmul.f32 %v2677, %v2677
    %v2694 = vmul.f32 %v2678, %v2678
    %v2695 = vmul.f32 %v2679, %v2679
    %v2696 = vmul.f32 %v2680, %v2680
    %v2697 = vmul.f32 %v2681, %v2681
    %v2698 = vmul.f32 %v2682, %v2682
    %v2699 = vmul.f32 %v2683, %v2683
    %v2700 = vmul.f32 %v2684, %v2684
    %v2701 = vmul.f32 %v2685, %v2685
    %v2702 = vsel %vm46, %v2686, 0.0
    %2703 = vadd.xlane.f32.xlu0 %v2702
    %v2704 = vpop.xlane.xlu0 %2703
    %v2705 = vsel %vm46, %v2687, 0.0
    %2706 = vadd.xlane.f32.xlu0 %v2705
    %v2707 = vpop.xlane.xlu0 %2706
    %v2708 = vsel %vm46, %v2688, 0.0
    %2709 = vadd.xlane.f32.xlu0 %v2708
    %v2710 = vpop.xlane.xlu0 %2709
    %v2711 = vsel %vm46, %v2689, 0.0
    %2712 = vadd.xlane.f32.xlu0 %v2711
    %v2713 = vpop.xlane.xlu0 %2712
    %v2714 = vsel %vm46, %v2690, 0.0
    %2715 = vadd.xlane.f32.xlu0 %v2714
    %v2716 = vpop.xlane.xlu0 %2715
    %v2717 = vsel %vm46, %v2691, 0.0
    %2718 = vadd.xlane.f32.xlu0 %v2717
    %v2719 = vpop.xlane.xlu0 %2718
    %v2720 = vsel %vm46, %v2692, 0.0
    %2721 = vadd.xlane.f32.xlu0 %v2720
    %v2722 = vpop.xlane.xlu0 %2721
    %v2723 = vsel %vm46, %v2693, 0.0
    %2724 = vadd.xlane.f32.xlu0 %v2723
    %v2725 = vpop.xlane.xlu0 %2724
    %v2726 = vsel %vm46, %v2694, 0.0
    %2727 = vadd.xlane.f32.xlu0 %v2726
    %v2728 = vpop.xlane.xlu0 %2727
    %v2729 = vsel %vm46, %v2695, 0.0
    %2730 = vadd.xlane.f32.xlu0 %v2729
    %v2731 = vpop.xlane.xlu0 %2730
    %v2732 = vsel %vm46, %v2696, 0.0
    %2733 = vadd.xlane.f32.xlu0 %v2732
    %v2734 = vpop.xlane.xlu0 %2733
    %v2735 = vsel %vm46, %v2697, 0.0
    %2736 = vadd.xlane.f32.xlu0 %v2735
    %v2737 = vpop.xlane.xlu0 %2736
    %v2738 = vsel %vm46, %v2698, 0.0
    %2739 = vadd.xlane.f32.xlu0 %v2738
    %v2740 = vpop.xlane.xlu0 %2739
    %v2741 = vsel %vm46, %v2699, 0.0
    %2742 = vadd.xlane.f32.xlu0 %v2741
    %v2743 = vpop.xlane.xlu0 %2742
    %v2744 = vsel %vm46, %v2700, 0.0
    %2745 = vadd.xlane.f32.xlu0 %v2744
    %v2746 = vpop.xlane.xlu0 %2745
    %v2747 = vsel %vm46, %v2701, 0.0
    %2748 = vadd.xlane.f32.xlu0 %v2747
    %v2749 = vpop.xlane.xlu0 %2748
    %v2750 = vmul.f32 %v2704, %v1109
    %v2751 = vmul.f32 %v2707, %v1109
    %v2752 = vmul.f32 %v2710, %v1109
    %v2753 = vmul.f32 %v2713, %v1109
    %v2754 = vmul.f32 %v2716, %v1109
    %v2755 = vmul.f32 %v2719, %v1109
    %v2756 = vmul.f32 %v2722, %v1109
    %v2757 = vmul.f32 %v2725, %v1109
    %v2758 = vmul.f32 %v2728, %v1109
    %v2759 = vmul.f32 %v2731, %v1109
    %v2760 = vmul.f32 %v2734, %v1109
    %v2761 = vmul.f32 %v2737, %v1109
    %v2762 = vmul.f32 %v2740, %v1109
    %v2763 = vmul.f32 %v2743, %v1109
    %v2764 = vmul.f32 %v2746, %v1109
    %v2765 = vmul.f32 %v2749, %v1109
    %v2766 = vadd.f32 %v2750, 1e-05
    %v2767 = vadd.f32 %v2751, 1e-05
    %v2768 = vadd.f32 %v2752, 1e-05
    %v2769 = vadd.f32 %v2753, 1e-05
    %v2770 = vadd.f32 %v2754, 1e-05
    %v2771 = vadd.f32 %v2755, 1e-05
    %v2772 = vadd.f32 %v2756, 1e-05
    %v2773 = vadd.f32 %v2757, 1e-05
    %v2774 = vadd.f32 %v2758, 1e-05
    %v2775 = vadd.f32 %v2759, 1e-05
    %v2776 = vadd.f32 %v2760, 1e-05
    %v2777 = vadd.f32 %v2761, 1e-05
    %v2778 = vadd.f32 %v2762, 1e-05
    %v2779 = vadd.f32 %v2763, 1e-05
    %v2780 = vadd.f32 %v2764, 1e-05
    %v2781 = vadd.f32 %v2765, 1e-05
    %v2782 = vrsqrt.pop %v2766
    %v2783 = vrsqrt.pop %v2767
    %v2784 = vrsqrt.pop %v2768
    %v2785 = vrsqrt.pop %v2769
    %v2786 = vrsqrt.pop %v2770
    %v2787 = vrsqrt.pop %v2771
    %v2788 = vrsqrt.pop %v2772
    %v2789 = vrsqrt.pop %v2773
    %v2790 = vrsqrt.pop %v2774
    %v2791 = vrsqrt.pop %v2775
    %v2792 = vrsqrt.pop %v2776
    %v2793 = vrsqrt.pop %v2777
    %v2794 = vrsqrt.pop %v2778
    %v2795 = vrsqrt.pop %v2779
    %v2796 = vrsqrt.pop %v2780
    %v2797 = vrsqrt.pop %v2781
    %v2798 = vmul.f32 %v2670, %v2782
    %v2799 = vmul.f32 %v2671, %v2783
    %v2800 = vmul.f32 %v2672, %v2784
    %v2801 = vmul.f32 %v2673, %v2785
    %v2802 = vmul.f32 %v2674, %v2786
    %v2803 = vmul.f32 %v2675, %v2787
    %v2804 = vmul.f32 %v2676, %v2788
    %v2805 = vmul.f32 %v2677, %v2789
    %v2806 = vmul.f32 %v2678, %v2790
    %v2807 = vmul.f32 %v2679, %v2791
    %v2808 = vmul.f32 %v2680, %v2792
    %v2809 = vmul.f32 %v2681, %v2793
    %v2810 = vmul.f32 %v2682, %v2794
    %v2811 = vmul.f32 %v2683, %v2795
    %v2812 = vmul.f32 %v2684, %v2796
    %v2813 = vmul.f32 %v2685, %v2797
    %v2815 = vlaneseq
    %v2816 = vshrl.u32 %v2815, 7
    %v2817 = vsub.s32 0, %v2816
    %v2818 = vrot.slane %v2603, %v2817
    %v2820 = vmul.f32 %v2798, %v2818
    %v2821 = vmul.f32 %v2799, %v2818
    %v2822 = vmul.f32 %v2800, %v2818
    %v2823 = vmul.f32 %v2801, %v2818
    %v2824 = vmul.f32 %v2802, %v2818
    %v2825 = vmul.f32 %v2803, %v2818
    %v2826 = vmul.f32 %v2804, %v2818
    %v2827 = vmul.f32 %v2805, %v2818
    %v2828 = vmul.f32 %v2806, %v2818
    %v2829 = vmul.f32 %v2807, %v2818
    %v2830 = vmul.f32 %v2808, %v2818
    %v2831 = vmul.f32 %v2809, %v2818
    %v2832 = vmul.f32 %v2810, %v2818
    %v2833 = vmul.f32 %v2811, %v2818
    %v2834 = vmul.f32 %v2812, %v2818
    %v2835 = vmul.f32 %v2813, %v2818
    %v2837 = vlaneseq
    %v2838 = vshrl.u32 %v2837, 7
    %v2839 = vsub.s32 0, %v2838
    %v2840 = vrot.slane %v2605, %v2839
    %v2842 = vadd.f32 %v2820, %v2840
    %v2843 = vadd.f32 %v2821, %v2840
    %v2844 = vadd.f32 %v2822, %v2840
    %v2845 = vadd.f32 %v2823, %v2840
    %v2846 = vadd.f32 %v2824, %v2840
    %v2847 = vadd.f32 %v2825, %v2840
    %v2848 = vadd.f32 %v2826, %v2840
    %v2849 = vadd.f32 %v2827, %v2840
    %v2850 = vadd.f32 %v2828, %v2840
    %v2851 = vadd.f32 %v2829, %v2840
    %v2852 = vadd.f32 %v2830, %v2840
    %v2853 = vadd.f32 %v2831, %v2840
    %v2854 = vadd.f32 %v2832, %v2840
    %v2855 = vadd.f32 %v2833, %v2840
    %v2856 = vadd.f32 %v2834, %v2840
    %v2857 = vadd.f32 %v2835, %v2840
    %v2858 = vpack.c.bf16 %v2843, %v2842
    %v2859 = vpack.c.bf16 %v2845, %v2844
    %v2860 = vpack.c.bf16 %v2847, %v2846
    %v2861 = vpack.c.bf16 %v2849, %v2848
    %v2862 = vpack.c.bf16 %v2851, %v2850
    %v2863 = vpack.c.bf16 %v2853, %v2852
    %v2864 = vpack.c.bf16 %v2855, %v2854
    %v2865 = vpack.c.bf16 %v2857, %v2856
    %s2866 = scalar_lea.vmem %s5, 32
    %v2867 = vld [vmem:[%s2866] sm:$0xf]
    %v2868 = vld [vmem:[%s2866 + $0x4] sm:$0xf]
    %v2869 = vld [vmem:[%s2866 + $0x8] sm:$0xf]
    %v2870 = vld [vmem:[%s2866 + $0xc] sm:$0xf]
    %s2871 = scalar_lea.vmem %s6, 2
    %v2872 = vld [vmem:[%s2871] sm:$0x1]
    %v2874 = vlaneseq
    %v2875 = vshrl.u32 %v2874, 7
    %v2876 = vsub.s32 0, %v2875
    %v2877 = vrot.slane %v2872, %v2876
    %v2883 = vunpack.c.l.b16 %v2867
    %v2884 = vunpack.c.l.b16 %v2868
    %v2885 = vunpack.c.l.b16 %v2869
    %v2886 = vunpack.c.l.b16 %v2870
    %v2887 = vpack.c.b16 %v2884, %v2883
    %v2888 = vpack.c.b16 %v2886, %v2885
    %v2892 = vsel %vm46, %v2858, 0
    %v2895 = vsel %vm46, %v2859, 0
    %v2898 = vsel %vm46, %v2860, 0
    %v2901 = vsel %vm46, %v2861, 0
    %v2904 = vsel %vm46, %v2862, 0
    %v2907 = vsel %vm46, %v2863, 0
    %v2910 = vsel %vm46, %v2864, 0
    %v2913 = vsel %vm46, %v2865, 0
    %2915 = vmatprep.subr.bf16.mxu0 0
    %2916 = vmatpush1.bf16.msra.mxu0 %v2887
    %2917 = vmatprep.subr.bf16.mxu0 0
    %2918 = vmatpush1.bf16.msra.mxu0 %v2888
    %2919 = vmatprep.subr.bf16.mxu0 0
    %2920 = vmatpush1.bf16.msra.mxu0 0
    %2921 = vmatprep.subr.bf16.mxu0 0
    %2922 = vmatpush1.bf16.msra.mxu0 0
    %2923 = vmatprep.subr.bf16.mxu0 0
    %2924 = vmatpush1.bf16.msra.mxu0 0
    %2925 = vmatprep.subr.bf16.mxu0 0
    %2926 = vmatpush1.bf16.msra.mxu0 0
    %2927 = vmatprep.subr.bf16.mxu0 0
    %2928 = vmatpush1.bf16.msra.mxu0 0
    %2929 = vmatprep.subr.bf16.mxu0 0
    %2930 = vmatpush1.bf16.msra.mxu0 0
    %2931 = vmatprep.subr.bf16.mxu0 0
    %2932 = vmatpush1.bf16.msra.mxu0 0
    %2933 = vmatprep.subr.bf16.mxu0 0
    %2934 = vmatpush1.bf16.msra.mxu0 0
    %2935 = vmatprep.subr.bf16.mxu0 0
    %2936 = vmatpush1.bf16.msra.mxu0 0
    %2937 = vmatprep.subr.bf16.mxu0 0
    %2938 = vmatpush1.bf16.msra.mxu0 0
    %2939 = vmatprep.subr.bf16.mxu0 0
    %2940 = vmatpush1.bf16.msra.mxu0 0
    %2941 = vmatprep.subr.bf16.mxu0 0
    %2942 = vmatpush1.bf16.msra.mxu0 0
    %2943 = vmatprep.subr.bf16.mxu0 0
    %2944 = vmatpush1.bf16.msra.mxu0 0
    %2945 = vmatprep.subr.bf16.mxu0 0
    %2946 = vmatpush1.bf16.msra.mxu0 0
    %2947 = vmatprep.mubr.bf16.mxu0 0
    %2948 = vmatmul.mubr.bf16.gmra.mrb[0].mxu0 %v2892
    %v2949 = vpop.f32.mrb[0].mxu0
    %v2950 = vadd.f32 %v2877, %v2949
    %v2951 = vpop.f32.mrb[0].mxu0
    %v2952 = vpop.f32.mrb[0].mxu0
    %v2953 = vadd.f32 %v2877, %v2952
    %v2954 = vpop.f32.mrb[0].mxu0
    %2955 = vmatprep.mubr.bf16.mxu0 0
    %2956 = vmatmul.mubr.bf16.gmra.mrb[0].mxu0 %v2895
    %v2957 = vpop.f32.mrb[0].mxu0
    %v2958 = vadd.f32 %v2877, %v2957
    %v2959 = vpop.f32.mrb[0].mxu0
    %v2960 = vpop.f32.mrb[0].mxu0
    %v2961 = vadd.f32 %v2877, %v2960
    %v2962 = vpop.f32.mrb[0].mxu0
    %2963 = vmatprep.mubr.bf16.mxu0 0
    %2964 = vmatmul.mubr.bf16.gmra.mrb[0].mxu0 %v2898
    %v2965 = vpop.f32.mrb[0].mxu0
    %v2966 = vadd.f32 %v2877, %v2965
    %v2967 = vpop.f32.mrb[0].mxu0
    %v2968 = vpop.f32.mrb[0].mxu0
    %v2969 = vadd.f32 %v2877, %v2968
    %v2970 = vpop.f32.mrb[0].mxu0
    %2971 = vmatprep.mubr.bf16.mxu0 0
    %2972 = vmatmul.mubr.bf16.gmra.mrb[0].mxu0 %v2901
    %v2973 = vpop.f32.mrb[0].mxu0
    %v2974 = vadd.f32 %v2877, %v2973
    %v2975 = vpop.f32.mrb[0].mxu0
    %v2976 = vpop.f32.mrb[0].mxu0
    %v2977 = vadd.f32 %v2877, %v2976
    %v2978 = vpop.f32.mrb[0].mxu0
    %2979 = vmatprep.mubr.bf16.mxu0 0
    %2980 = vmatmul.mubr.bf16.gmra.mrb[0].mxu0 %v2904
    %v2981 = vpop.f32.mrb[0].mxu0
    %v2982 = vadd.f32 %v2877, %v2981
    %v2983 = vpop.f32.mrb[0].mxu0
    %v2984 = vpop.f32.mrb[0].mxu0
    %v2985 = vadd.f32 %v2877, %v2984
    %v2986 = vpop.f32.mrb[0].mxu0
    %2987 = vmatprep.mubr.bf16.mxu0 0
    %2988 = vmatmul.mubr.bf16.gmra.mrb[0].mxu0 %v2907
    %v2989 = vpop.f32.mrb[0].mxu0
    %v2990 = vadd.f32 %v2877, %v2989
    %v2991 = vpop.f32.mrb[0].mxu0
    %v2992 = vpop.f32.mrb[0].mxu0
    %v2993 = vadd.f32 %v2877, %v2992
    %v2994 = vpop.f32.mrb[0].mxu0
    %2995 = vmatprep.mubr.bf16.mxu0 0
    %2996 = vmatmul.mubr.bf16.gmra.mrb[0].mxu0 %v2910
    %v2997 = vpop.f32.mrb[0].mxu0
    %v2998 = vadd.f32 %v2877, %v2997
    %v2999 = vpop.f32.mrb[0].mxu0
    %v3000 = vpop.f32.mrb[0].mxu0
    %v3001 = vadd.f32 %v2877, %v3000
    %v3002 = vpop.f32.mrb[0].mxu0
    %3003 = vmatprep.mubr.bf16.mxu0 0
    %3004 = vmatmul.mubr.bf16.gmra.mrb[0].mxu0 %v2913
    %v3005 = vpop.f32.mrb[0].mxu0
    %v3006 = vadd.f32 %v2877, %v3005
    %v3007 = vpop.f32.mrb[0].mxu0
    %v3008 = vpop.f32.mrb[0].mxu0
    %v3009 = vadd.f32 %v2877, %v3008
    %v3010 = vpop.f32.mrb[0].mxu0
    %3011 = vdwg.mxu0
    %v3012 = vpack.c.bf16 %v1407, %v1404
    %v3013 = vpack.c.bf16 %v1415, %v1412
    %v3014 = vpack.c.bf16 %v1423, %v1420
    %v3015 = vpack.c.bf16 %v1431, %v1428
    %v3016 = vpack.c.bf16 %v1439, %v1436
    %v3017 = vpack.c.bf16 %v1447, %v1444
    %v3018 = vpack.c.bf16 %v1455, %v1452
    %v3019 = vpack.c.bf16 %v1463, %v1460
    %v3020 = vpack.c.bf16 %v2180, %v2177
    %v3021 = vpack.c.bf16 %v2188, %v2185
    %v3022 = vpack.c.bf16 %v2196, %v2193
    %v3023 = vpack.c.bf16 %v2204, %v2201
    %v3024 = vpack.c.bf16 %v2212, %v2209
    %v3025 = vpack.c.bf16 %v2220, %v2217
    %v3026 = vpack.c.bf16 %v2228, %v2225
    %v3027 = vpack.c.bf16 %v2236, %v2233
    %v3029 = vsel %vm46, %v3012, 0
    %v3032 = vsel %vm46, %v3013, 0
    %v3035 = vsel %vm46, %v3014, 0
    %v3038 = vsel %vm46, %v3015, 0
    %v3041 = vsel %vm46, %v3020, 0
    %v3044 = vsel %vm46, %v3021, 0
    %v3047 = vsel %vm46, %v3022, 0
    %v3050 = vsel %vm46, %v3023, 0
    %3052 = vmatprep.subr.bf16.mxu0 0
    %3053 = vmatpush1.bf16.xpose.msra.mxu0 %v3041
    %3054 = vmatprep.subr.bf16.mxu0 0
    %3055 = vmatpush1.bf16.xpose.msra.mxu0 %v3044
    %3056 = vmatprep.subr.bf16.mxu0 0
    %3057 = vmatpush1.bf16.xpose.msra.mxu0 %v3047
    %3058 = vmatprep.subr.bf16.mxu0 0
    %3059 = vmatpush1.bf16.xpose.msra.mxu0 %v3050
    %3060 = vmatprep.subr.bf16.mxu0 0
    %3061 = vmatpush1.bf16.xpose.msra.mxu0 0
    %3062 = vmatprep.subr.bf16.mxu0 0
    %3063 = vmatpush1.bf16.xpose.msra.mxu0 0
    %3064 = vmatprep.subr.bf16.mxu0 0
    %3065 = vmatpush1.bf16.xpose.msra.mxu0 0
    %3066 = vmatprep.subr.bf16.mxu0 0
    %3067 = vmatpush1.bf16.xpose.msra.mxu0 0
    %3068 = vmatprep.subr.bf16.mxu0 0
    %3069 = vmatpush1.bf16.xpose.msra.mxu0 0
    %3070 = vmatprep.subr.bf16.mxu0 0
    %3071 = vmatpush1.bf16.xpose.msra.mxu0 0
    %3072 = vmatprep.subr.bf16.mxu0 0
    %3073 = vmatpush1.bf16.xpose.msra.mxu0 0
    %3074 = vmatprep.subr.bf16.mxu0 0
    %3075 = vmatpush1.bf16.xpose.msra.mxu0 0
    %3076 = vmatprep.subr.bf16.mxu0 0
    %3077 = vmatpush1.bf16.xpose.msra.mxu0 0
    %3078 = vmatprep.subr.bf16.mxu0 0
    %3079 = vmatpush1.bf16.xpose.msra.mxu0 0
    %3080 = vmatprep.subr.bf16.mxu0 0
    %3081 = vmatpush1.bf16.xpose.msra.mxu0 0
    %3082 = vmatprep.subr.bf16.mxu0 0
    %3083 = vmatpush1.bf16.xpose.msra.mxu0 0
    %3084 = vmatprep.mubr.bf16.mxu0 0
    %3085 = vmatmul.mubr.bf16.gmra.mrb[0].mxu0 %v3029
    %v3086 = vpop.f32.mrb[0].mxu0
    %v3087 = vadd.f32 0.0, %v3086
    %v3088 = vpop.f32.mrb[0].mxu0
    %v3089 = vpop.f32.mrb[0].mxu0
    %v3090 = vadd.f32 0.0, %v3089
    %v3091 = vpop.f32.mrb[0].mxu0
    %3092 = vmatprep.mubr.bf16.mxu0 0
    %3093 = vmatmul.mubr.bf16.gmra.mrb[0].mxu0 %v3032
    %v3094 = vpop.f32.mrb[0].mxu0
    %v3095 = vadd.f32 0.0, %v3094
    %v3096 = vpop.f32.mrb[0].mxu0
    %v3097 = vpop.f32.mrb[0].mxu0
    %v3098 = vadd.f32 0.0, %v3097
    %v3099 = vpop.f32.mrb[0].mxu0
    %3100 = vmatprep.mubr.bf16.mxu0 0
    %3101 = vmatmul.mubr.bf16.gmra.mrb[0].mxu0 %v3035
    %v3102 = vpop.f32.mrb[0].mxu0
    %v3103 = vadd.f32 0.0, %v3102
    %v3104 = vpop.f32.mrb[0].mxu0
    %v3105 = vpop.f32.mrb[0].mxu0
    %v3106 = vadd.f32 0.0, %v3105
    %v3107 = vpop.f32.mrb[0].mxu0
    %3108 = vmatprep.mubr.bf16.mxu0 0
    %3109 = vmatmul.mubr.bf16.gmra.mrb[0].mxu0 %v3038
    %v3110 = vpop.f32.mrb[0].mxu0
    %v3111 = vadd.f32 0.0, %v3110
    %v3112 = vpop.f32.mrb[0].mxu0
    %v3113 = vpop.f32.mrb[0].mxu0
    %v3114 = vadd.f32 0.0, %v3113
    %v3115 = vpop.f32.mrb[0].mxu0
    %3116 = vdwg.mxu0
    %v3118 = vsel %vm46, %v3016, 0
    %v3121 = vsel %vm46, %v3017, 0
    %v3124 = vsel %vm46, %v3018, 0
    %v3127 = vsel %vm46, %v3019, 0
    %v3130 = vsel %vm46, %v3024, 0
    %v3133 = vsel %vm46, %v3025, 0
    %v3136 = vsel %vm46, %v3026, 0
    %v3139 = vsel %vm46, %v3027, 0
    %3141 = vmatprep.subr.bf16.mxu0 0
    %3142 = vmatpush1.bf16.xpose.msra.mxu0 %v3130
    %3143 = vmatprep.subr.bf16.mxu0 0
    %3144 = vmatpush1.bf16.xpose.msra.mxu0 %v3133
    %3145 = vmatprep.subr.bf16.mxu0 0
    %3146 = vmatpush1.bf16.xpose.msra.mxu0 %v3136
    %3147 = vmatprep.subr.bf16.mxu0 0
    %3148 = vmatpush1.bf16.xpose.msra.mxu0 %v3139
    %3149 = vmatprep.subr.bf16.mxu0 0
    %3150 = vmatpush1.bf16.xpose.msra.mxu0 0
    %3151 = vmatprep.subr.bf16.mxu0 0
    %3152 = vmatpush1.bf16.xpose.msra.mxu0 0
    %3153 = vmatprep.subr.bf16.mxu0 0
    %3154 = vmatpush1.bf16.xpose.msra.mxu0 0
    %3155 = vmatprep.subr.bf16.mxu0 0
    %3156 = vmatpush1.bf16.xpose.msra.mxu0 0
    %3157 = vmatprep.subr.bf16.mxu0 0
    %3158 = vmatpush1.bf16.xpose.msra.mxu0 0
    %3159 = vmatprep.subr.bf16.mxu0 0
    %3160 = vmatpush1.bf16.xpose.msra.mxu0 0
    %3161 = vmatprep.subr.bf16.mxu0 0
    %3162 = vmatpush1.bf16.xpose.msra.mxu0 0
    %3163 = vmatprep.subr.bf16.mxu0 0
    %3164 = vmatpush1.bf16.xpose.msra.mxu0 0
    %3165 = vmatprep.subr.bf16.mxu0 0
    %3166 = vmatpush1.bf16.xpose.msra.mxu0 0
    %3167 = vmatprep.subr.bf16.mxu0 0
    %3168 = vmatpush1.bf16.xpose.msra.mxu0 0
    %3169 = vmatprep.subr.bf16.mxu0 0
    %3170 = vmatpush1.bf16.xpose.msra.mxu0 0
    %3171 = vmatprep.subr.bf16.mxu0 0
    %3172 = vmatpush1.bf16.xpose.msra.mxu0 0
    %3173 = vmatprep.mubr.bf16.mxu0 0
    %3174 = vmatmul.mubr.bf16.gmra.mrb[0].mxu0 %v3118
    %v3175 = vpop.f32.mrb[0].mxu0
    %v3176 = vadd.f32 0.0, %v3175
    %v3177 = vpop.f32.mrb[0].mxu0
    %v3178 = vpop.f32.mrb[0].mxu0
    %v3179 = vadd.f32 0.0, %v3178
    %v3180 = vpop.f32.mrb[0].mxu0
    %3181 = vmatprep.mubr.bf16.mxu0 0
    %3182 = vmatmul.mubr.bf16.gmra.mrb[0].mxu0 %v3121
    %v3183 = vpop.f32.mrb[0].mxu0
    %v3184 = vadd.f32 0.0, %v3183
    %v3185 = vpop.f32.mrb[0].mxu0
    %v3186 = vpop.f32.mrb[0].mxu0
    %v3187 = vadd.f32 0.0, %v3186
    %v3188 = vpop.f32.mrb[0].mxu0
    %3189 = vmatprep.mubr.bf16.mxu0 0
    %3190 = vmatmul.mubr.bf16.gmra.mrb[0].mxu0 %v3124
    %v3191 = vpop.f32.mrb[0].mxu0
    %v3192 = vadd.f32 0.0, %v3191
    %v3193 = vpop.f32.mrb[0].mxu0
    %v3194 = vpop.f32.mrb[0].mxu0
    %v3195 = vadd.f32 0.0, %v3194
    %v3196 = vpop.f32.mrb[0].mxu0
    %3197 = vmatprep.mubr.bf16.mxu0 0
    %3198 = vmatmul.mubr.bf16.gmra.mrb[0].mxu0 %v3127
    %v3199 = vpop.f32.mrb[0].mxu0
    %v3200 = vadd.f32 0.0, %v3199
    %v3201 = vpop.f32.mrb[0].mxu0
    %v3202 = vpop.f32.mrb[0].mxu0
    %v3203 = vadd.f32 0.0, %v3202
    %v3204 = vpop.f32.mrb[0].mxu0
    %3205 = vdwg.mxu0
    %vm3206 = vcmask 523264
    %v3207 = vsel %vm3206, %v3087, -inf
    %3208 = vmax.xlane.f32.xlu0 %v3207
    %v3209 = vpop.xlane.xlu0 %3208
    %v3210 = vsel %vm3206, %v3090, -inf
    %3211 = vmax.xlane.f32.xlu0 %v3210
    %v3212 = vpop.xlane.xlu0 %3211
    %v3213 = vsel %vm3206, %v3095, -inf
    %3214 = vmax.xlane.f32.xlu0 %v3213
    %v3215 = vpop.xlane.xlu0 %3214
    %v3216 = vsel %vm3206, %v3098, -inf
    %3217 = vmax.xlane.f32.xlu0 %v3216
    %v3218 = vpop.xlane.xlu0 %3217
    %v3219 = vsel %vm3206, %v3103, -inf
    %3220 = vmax.xlane.f32.xlu0 %v3219
    %v3221 = vpop.xlane.xlu0 %3220
    %v3222 = vsel %vm3206, %v3106, -inf
    %3223 = vmax.xlane.f32.xlu0 %v3222
    %v3224 = vpop.xlane.xlu0 %3223
    %v3225 = vsel %vm3206, %v3111, -inf
    %3226 = vmax.xlane.f32.xlu0 %v3225
    %v3227 = vpop.xlane.xlu0 %3226
    %v3228 = vsel %vm3206, %v3114, -inf
    %3229 = vmax.xlane.f32.xlu0 %v3228
    %v3230 = vpop.xlane.xlu0 %3229
    %v3231 = vsel %vm3206, %v3176, -inf
    %3232 = vmax.xlane.f32.xlu0 %v3231
    %v3233 = vpop.xlane.xlu0 %3232
    %v3234 = vsel %vm3206, %v3179, -inf
    %3235 = vmax.xlane.f32.xlu0 %v3234
    %v3236 = vpop.xlane.xlu0 %3235
    %v3237 = vsel %vm3206, %v3184, -inf
    %3238 = vmax.xlane.f32.xlu0 %v3237
    %v3239 = vpop.xlane.xlu0 %3238
    %v3240 = vsel %vm3206, %v3187, -inf
    %3241 = vmax.xlane.f32.xlu0 %v3240
    %v3242 = vpop.xlane.xlu0 %3241
    %v3243 = vsel %vm3206, %v3192, -inf
    %3244 = vmax.xlane.f32.xlu0 %v3243
    %v3245 = vpop.xlane.xlu0 %3244
    %v3246 = vsel %vm3206, %v3195, -inf
    %3247 = vmax.xlane.f32.xlu0 %v3246
    %v3248 = vpop.xlane.xlu0 %3247
    %v3249 = vsel %vm3206, %v3200, -inf
    %3250 = vmax.xlane.f32.xlu0 %v3249
    %v3251 = vpop.xlane.xlu0 %3250
    %v3252 = vsel %vm3206, %v3203, -inf
    %3253 = vmax.xlane.f32.xlu0 %v3252
    %v3254 = vpop.xlane.xlu0 %3253
    %v3255 = vsub.f32 %v3087, %v3209
    %v3256 = vsub.f32 %v3090, %v3212
    %v3257 = vsub.f32 %v3095, %v3215
    %v3258 = vsub.f32 %v3098, %v3218
    %v3259 = vsub.f32 %v3103, %v3221
    %v3260 = vsub.f32 %v3106, %v3224
    %v3261 = vsub.f32 %v3111, %v3227
    %v3262 = vsub.f32 %v3114, %v3230
    %v3263 = vsub.f32 %v3176, %v3233
    %v3264 = vsub.f32 %v3179, %v3236
    %v3265 = vsub.f32 %v3184, %v3239
    %v3266 = vsub.f32 %v3187, %v3242
    %v3267 = vsub.f32 %v3192, %v3245
    %v3268 = vsub.f32 %v3195, %v3248
    %v3269 = vsub.f32 %v3200, %v3251
    %v3270 = vsub.f32 %v3203, %v3254
    %v3271 = vmul.f32 %v3255, 1.442695
    %v3272 = vpow.pop %v3271
    %v3273 = vmul.f32 %v3256, 1.442695
    %v3274 = vpow.pop %v3273
    %v3275 = vmul.f32 %v3257, 1.442695
    %v3276 = vpow.pop %v3275
    %v3277 = vmul.f32 %v3258, 1.442695
    %v3278 = vpow.pop %v3277
    %v3279 = vmul.f32 %v3259, 1.442695
    %v3280 = vpow.pop %v3279
    %v3281 = vmul.f32 %v3260, 1.442695
    %v3282 = vpow.pop %v3281
    %v3283 = vmul.f32 %v3261, 1.442695
    %v3284 = vpow.pop %v3283
    %v3285 = vmul.f32 %v3262, 1.442695
    %v3286 = vpow.pop %v3285
    %v3287 = vmul.f32 %v3263, 1.442695
    %v3288 = vpow.pop %v3287
    %v3289 = vmul.f32 %v3264, 1.442695
    %v3290 = vpow.pop %v3289
    %v3291 = vmul.f32 %v3265, 1.442695
    %v3292 = vpow.pop %v3291
    %v3293 = vmul.f32 %v3266, 1.442695
    %v3294 = vpow.pop %v3293
    %v3295 = vmul.f32 %v3267, 1.442695
    %v3296 = vpow.pop %v3295
    %v3297 = vmul.f32 %v3268, 1.442695
    %v3298 = vpow.pop %v3297
    %v3299 = vmul.f32 %v3269, 1.442695
    %v3300 = vpow.pop %v3299
    %v3301 = vmul.f32 %v3270, 1.442695
    %v3302 = vpow.pop %v3301
    %v3303 = vsel %vm3206, %v3272, 0.0
    %3304 = vadd.xlane.f32.xlu0 %v3303
    %v3305 = vpop.xlane.xlu0 %3304
    %v3306 = vsel %vm3206, %v3274, 0.0
    %3307 = vadd.xlane.f32.xlu0 %v3306
    %v3308 = vpop.xlane.xlu0 %3307
    %v3309 = vsel %vm3206, %v3276, 0.0
    %3310 = vadd.xlane.f32.xlu0 %v3309
    %v3311 = vpop.xlane.xlu0 %3310
    %v3312 = vsel %vm3206, %v3278, 0.0
    %3313 = vadd.xlane.f32.xlu0 %v3312
    %v3314 = vpop.xlane.xlu0 %3313
    %v3315 = vsel %vm3206, %v3280, 0.0
    %3316 = vadd.xlane.f32.xlu0 %v3315
    %v3317 = vpop.xlane.xlu0 %3316
    %v3318 = vsel %vm3206, %v3282, 0.0
    %3319 = vadd.xlane.f32.xlu0 %v3318
    %v3320 = vpop.xlane.xlu0 %3319
    %v3321 = vsel %vm3206, %v3284, 0.0
    %3322 = vadd.xlane.f32.xlu0 %v3321
    %v3323 = vpop.xlane.xlu0 %3322
    %v3324 = vsel %vm3206, %v3286, 0.0
    %3325 = vadd.xlane.f32.xlu0 %v3324
    %v3326 = vpop.xlane.xlu0 %3325
    %v3327 = vsel %vm3206, %v3288, 0.0
    %3328 = vadd.xlane.f32.xlu0 %v3327
    %v3329 = vpop.xlane.xlu0 %3328
    %v3330 = vsel %vm3206, %v3290, 0.0
    %3331 = vadd.xlane.f32.xlu0 %v3330
    %v3332 = vpop.xlane.xlu0 %3331
    %v3333 = vsel %vm3206, %v3292, 0.0
    %3334 = vadd.xlane.f32.xlu0 %v3333
    %v3335 = vpop.xlane.xlu0 %3334
    %v3336 = vsel %vm3206, %v3294, 0.0
    %3337 = vadd.xlane.f32.xlu0 %v3336
    %v3338 = vpop.xlane.xlu0 %3337
    %v3339 = vsel %vm3206, %v3296, 0.0
    %3340 = vadd.xlane.f32.xlu0 %v3339
    %v3341 = vpop.xlane.xlu0 %3340
    %v3342 = vsel %vm3206, %v3298, 0.0
    %3343 = vadd.xlane.f32.xlu0 %v3342
    %v3344 = vpop.xlane.xlu0 %3343
    %v3345 = vsel %vm3206, %v3300, 0.0
    %3346 = vadd.xlane.f32.xlu0 %v3345
    %v3347 = vpop.xlane.xlu0 %3346
    %v3348 = vsel %vm3206, %v3302, 0.0
    %3349 = vadd.xlane.f32.xlu0 %v3348
    %v3350 = vpop.xlane.xlu0 %3349
    %v3351 = vrcp.pop %v3305
    %v3352 = vrcp.pop %v3308
    %v3353 = vrcp.pop %v3311
    %v3354 = vrcp.pop %v3314
    %v3355 = vrcp.pop %v3317
    %v3356 = vrcp.pop %v3320
    %v3357 = vrcp.pop %v3323
    %v3358 = vrcp.pop %v3326
    %v3359 = vrcp.pop %v3329
    %v3360 = vrcp.pop %v3332
    %v3361 = vrcp.pop %v3335
    %v3362 = vrcp.pop %v3338
    %v3363 = vrcp.pop %v3341
    %v3364 = vrcp.pop %v3344
    %v3365 = vrcp.pop %v3347
    %v3366 = vrcp.pop %v3350
    %v3367 = vmul.f32 %v3272, %v3351
    %v3368 = vmul.f32 %v3274, %v3352
    %v3369 = vmul.f32 %v3276, %v3353
    %v3370 = vmul.f32 %v3278, %v3354
    %v3371 = vmul.f32 %v3280, %v3355
    %v3372 = vmul.f32 %v3282, %v3356
    %v3373 = vmul.f32 %v3284, %v3357
    %v3374 = vmul.f32 %v3286, %v3358
    %v3375 = vmul.f32 %v3288, %v3359
    %v3376 = vmul.f32 %v3290, %v3360
    %v3377 = vmul.f32 %v3292, %v3361
    %v3378 = vmul.f32 %v3294, %v3362
    %v3379 = vmul.f32 %v3296, %v3363
    %v3380 = vmul.f32 %v3298, %v3364
    %v3381 = vmul.f32 %v3300, %v3365
    %v3382 = vmul.f32 %v3302, %v3366
    %v3384 = vsel %vm3206, %v3367, 0
    %v3387 = vsel %vm3206, %v3368, 0
    %v3390 = vsel %vm3206, %v3369, 0
    %v3393 = vsel %vm3206, %v3370, 0
    %v3396 = vsel %vm3206, %v3371, 0
    %v3399 = vsel %vm3206, %v3372, 0
    %v3402 = vsel %vm3206, %v3373, 0
    %v3405 = vsel %vm3206, %v3374, 0
    %3407 = vmatprep.subr.mxu0 0.0
    %3408 = vmatpush1.msra.mxu0 %v2950
    %3409 = vmatprep.subr.mxu0 0.0
    %3410 = vmatpush1.msra.mxu0 %v2953
    %3411 = vmatprep.subr.mxu0 0.0
    %3412 = vmatpush1.msra.mxu0 %v2958
    %3413 = vmatprep.subr.mxu0 0.0
    %3414 = vmatpush1.msra.mxu0 %v2961
    %3415 = vmatprep.subr.mxu0 0.0
    %3416 = vmatpush1.msra.mxu0 %v2966
    %3417 = vmatprep.subr.mxu0 0.0
    %3418 = vmatpush1.msra.mxu0 %v2969
    %3419 = vmatprep.subr.mxu0 0.0
    %3420 = vmatpush1.msra.mxu0 %v2974
    %3421 = vmatprep.subr.mxu0 0.0
    %3422 = vmatpush1.msra.mxu0 %v2977
    %3423 = vmatprep.subr.mxu0 0.0
    %3424 = vmatpush1.msra.mxu0 0.0
    %3425 = vmatprep.subr.mxu0 0.0
    %3426 = vmatpush1.msra.mxu0 0.0
    %3427 = vmatprep.subr.mxu0 0.0
    %3428 = vmatpush1.msra.mxu0 0.0
    %3429 = vmatprep.subr.mxu0 0.0
    %3430 = vmatpush1.msra.mxu0 0.0
    %3431 = vmatprep.subr.mxu0 0.0
    %3432 = vmatpush1.msra.mxu0 0.0
    %3433 = vmatprep.subr.mxu0 0.0
    %3434 = vmatpush1.msra.mxu0 0.0
    %3435 = vmatprep.subr.mxu0 0.0
    %3436 = vmatpush1.msra.mxu0 0.0
    %3437 = vmatprep.subr.mxu0 0.0
    %3438 = vmatpush1.msra.mxu0 0.0
    %3439 = vmatprep.subr.mxu0 0.0
    %3440 = vmatpush1.msra.mxu0 0.0
    %3441 = vmatprep.subr.mxu0 0.0
    %3442 = vmatpush1.msra.mxu0 0.0
    %3443 = vmatprep.subr.mxu0 0.0
    %3444 = vmatpush1.msra.mxu0 0.0
    %3445 = vmatprep.subr.mxu0 0.0
    %3446 = vmatpush1.msra.mxu0 0.0
    %3447 = vmatprep.subr.mxu0 0.0
    %3448 = vmatpush1.msra.mxu0 0.0
    %3449 = vmatprep.subr.mxu0 0.0
    %3450 = vmatpush1.msra.mxu0 0.0
    %3451 = vmatprep.subr.mxu0 0.0
    %3452 = vmatpush1.msra.mxu0 0.0
    %3453 = vmatprep.subr.mxu0 0.0
    %3454 = vmatpush1.msra.mxu0 0.0
    %3455 = vmatprep.subr.mxu0 0.0
    %3456 = vmatpush1.msra.mxu0 0.0
    %3457 = vmatprep.subr.mxu0 0.0
    %3458 = vmatpush1.msra.mxu0 0.0
    %3459 = vmatprep.subr.mxu0 0.0
    %3460 = vmatpush1.msra.mxu0 0.0
    %3461 = vmatprep.subr.mxu0 0.0
    %3462 = vmatpush1.msra.mxu0 0.0
    %3463 = vmatprep.subr.mxu0 0.0
    %3464 = vmatpush1.msra.mxu0 0.0
    %3465 = vmatprep.subr.mxu0 0.0
    %3466 = vmatpush1.msra.mxu0 0.0
    %3467 = vmatprep.subr.mxu0 0.0
    %3468 = vmatpush1.msra.mxu0 0.0
    %3469 = vmatprep.subr.mxu0 0.0
    %3470 = vmatpush1.msra.mxu0 0.0
    %3471 = vmatprep.mubr.f32.mxu0 0.0
    %3472 = vmatmul.mubr.f32.gmra.mrb[0].mxu0 %v3384
    %v3473 = vpop.f32.mrb[0].mxu0
    %v3474 = vadd.f32 0.0, %v3473
    %v3475 = vpop.f32.mrb[0].mxu0
    %3476 = vmatprep.mubr.f32.mxu0 0.0
    %3477 = vmatmul.mubr.f32.gmra.mrb[0].mxu0 %v3387
    %v3478 = vpop.f32.mrb[0].mxu0
    %v3479 = vadd.f32 0.0, %v3478
    %v3480 = vpop.f32.mrb[0].mxu0
    %3481 = vmatprep.mubr.f32.mxu0 0.0
    %3482 = vmatmul.mubr.f32.gmra.mrb[0].mxu0 %v3390
    %v3483 = vpop.f32.mrb[0].mxu0
    %v3484 = vadd.f32 0.0, %v3483
    %v3485 = vpop.f32.mrb[0].mxu0
    %3486 = vmatprep.mubr.f32.mxu0 0.0
    %3487 = vmatmul.mubr.f32.gmra.mrb[0].mxu0 %v3393
    %v3488 = vpop.f32.mrb[0].mxu0
    %v3489 = vadd.f32 0.0, %v3488
    %v3490 = vpop.f32.mrb[0].mxu0
    %3491 = vmatprep.mubr.f32.mxu0 0.0
    %3492 = vmatmul.mubr.f32.gmra.mrb[0].mxu0 %v3396
    %v3493 = vpop.f32.mrb[0].mxu0
    %v3494 = vadd.f32 0.0, %v3493
    %v3495 = vpop.f32.mrb[0].mxu0
    %3496 = vmatprep.mubr.f32.mxu0 0.0
    %3497 = vmatmul.mubr.f32.gmra.mrb[0].mxu0 %v3399
    %v3498 = vpop.f32.mrb[0].mxu0
    %v3499 = vadd.f32 0.0, %v3498
    %v3500 = vpop.f32.mrb[0].mxu0
    %3501 = vmatprep.mubr.f32.mxu0 0.0
    %3502 = vmatmul.mubr.f32.gmra.mrb[0].mxu0 %v3402
    %v3503 = vpop.f32.mrb[0].mxu0
    %v3504 = vadd.f32 0.0, %v3503
    %v3505 = vpop.f32.mrb[0].mxu0
    %3506 = vmatprep.mubr.f32.mxu0 0.0
    %3507 = vmatmul.mubr.f32.gmra.mrb[0].mxu0 %v3405
    %v3508 = vpop.f32.mrb[0].mxu0
    %v3509 = vadd.f32 0.0, %v3508
    %v3510 = vpop.f32.mrb[0].mxu0
    %3511 = vdwg.mxu0
    %v3513 = vsel %vm3206, %v3375, 0
    %v3516 = vsel %vm3206, %v3376, 0
    %v3519 = vsel %vm3206, %v3377, 0
    %v3522 = vsel %vm3206, %v3378, 0
    %v3525 = vsel %vm3206, %v3379, 0
    %v3528 = vsel %vm3206, %v3380, 0
    %v3531 = vsel %vm3206, %v3381, 0
    %v3534 = vsel %vm3206, %v3382, 0
    %3536 = vmatprep.subr.mxu0 0.0
    %3537 = vmatpush1.msra.mxu0 %v2982
    %3538 = vmatprep.subr.mxu0 0.0
    %3539 = vmatpush1.msra.mxu0 %v2985
    %3540 = vmatprep.subr.mxu0 0.0
    %3541 = vmatpush1.msra.mxu0 %v2990
    %3542 = vmatprep.subr.mxu0 0.0
    %3543 = vmatpush1.msra.mxu0 %v2993
    %3544 = vmatprep.subr.mxu0 0.0
    %3545 = vmatpush1.msra.mxu0 %v2998
    %3546 = vmatprep.subr.mxu0 0.0
    %3547 = vmatpush1.msra.mxu0 %v3001
    %3548 = vmatprep.subr.mxu0 0.0
    %3549 = vmatpush1.msra.mxu0 %v3006
    %3550 = vmatprep.subr.mxu0 0.0
    %3551 = vmatpush1.msra.mxu0 %v3009
    %3552 = vmatprep.subr.mxu0 0.0
    %3553 = vmatpush1.msra.mxu0 0.0
    %3554 = vmatprep.subr.mxu0 0.0
    %3555 = vmatpush1.msra.mxu0 0.0
    %3556 = vmatprep.subr.mxu0 0.0
    %3557 = vmatpush1.msra.mxu0 0.0
    %3558 = vmatprep.subr.mxu0 0.0
    %3559 = vmatpush1.msra.mxu0 0.0
    %3560 = vmatprep.subr.mxu0 0.0
    %3561 = vmatpush1.msra.mxu0 0.0
    %3562 = vmatprep.subr.mxu0 0.0
    %3563 = vmatpush1.msra.mxu0 0.0
    %3564 = vmatprep.subr.mxu0 0.0
    %3565 = vmatpush1.msra.mxu0 0.0
    %3566 = vmatprep.subr.mxu0 0.0
    %3567 = vmatpush1.msra.mxu0 0.0
    %3568 = vmatprep.subr.mxu0 0.0
    %3569 = vmatpush1.msra.mxu0 0.0
    %3570 = vmatprep.subr.mxu0 0.0
    %3571 = vmatpush1.msra.mxu0 0.0
    %3572 = vmatprep.subr.mxu0 0.0
    %3573 = vmatpush1.msra.mxu0 0.0
    %3574 = vmatprep.subr.mxu0 0.0
    %3575 = vmatpush1.msra.mxu0 0.0
    %3576 = vmatprep.subr.mxu0 0.0
    %3577 = vmatpush1.msra.mxu0 0.0
    %3578 = vmatprep.subr.mxu0 0.0
    %3579 = vmatpush1.msra.mxu0 0.0
    %3580 = vmatprep.subr.mxu0 0.0
    %3581 = vmatpush1.msra.mxu0 0.0
    %3582 = vmatprep.subr.mxu0 0.0
    %3583 = vmatpush1.msra.mxu0 0.0
    %3584 = vmatprep.subr.mxu0 0.0
    %3585 = vmatpush1.msra.mxu0 0.0
    %3586 = vmatprep.subr.mxu0 0.0
    %3587 = vmatpush1.msra.mxu0 0.0
    %3588 = vmatprep.subr.mxu0 0.0
    %3589 = vmatpush1.msra.mxu0 0.0
    %3590 = vmatprep.subr.mxu0 0.0
    %3591 = vmatpush1.msra.mxu0 0.0
    %3592 = vmatprep.subr.mxu0 0.0
    %3593 = vmatpush1.msra.mxu0 0.0
    %3594 = vmatprep.subr.mxu0 0.0
    %3595 = vmatpush1.msra.mxu0 0.0
    %3596 = vmatprep.subr.mxu0 0.0
    %3597 = vmatpush1.msra.mxu0 0.0
    %3598 = vmatprep.subr.mxu0 0.0
    %3599 = vmatpush1.msra.mxu0 0.0
    %3600 = vmatprep.mubr.f32.mxu0 0.0
    %3601 = vmatmul.mubr.f32.gmra.mrb[0].mxu0 %v3513
    %v3602 = vpop.f32.mrb[0].mxu0
    %v3603 = vadd.f32 0.0, %v3602
    %v3604 = vpop.f32.mrb[0].mxu0
    %3605 = vmatprep.mubr.f32.mxu0 0.0
    %3606 = vmatmul.mubr.f32.gmra.mrb[0].mxu0 %v3516
    %v3607 = vpop.f32.mrb[0].mxu0
    %v3608 = vadd.f32 0.0, %v3607
    %v3609 = vpop.f32.mrb[0].mxu0
    %3610 = vmatprep.mubr.f32.mxu0 0.0
    %3611 = vmatmul.mubr.f32.gmra.mrb[0].mxu0 %v3519
    %v3612 = vpop.f32.mrb[0].mxu0
    %v3613 = vadd.f32 0.0, %v3612
    %v3614 = vpop.f32.mrb[0].mxu0
    %3615 = vmatprep.mubr.f32.mxu0 0.0
    %3616 = vmatmul.mubr.f32.gmra.mrb[0].mxu0 %v3522
    %v3617 = vpop.f32.mrb[0].mxu0
    %v3618 = vadd.f32 0.0, %v3617
    %v3619 = vpop.f32.mrb[0].mxu0
    %3620 = vmatprep.mubr.f32.mxu0 0.0
    %3621 = vmatmul.mubr.f32.gmra.mrb[0].mxu0 %v3525
    %v3622 = vpop.f32.mrb[0].mxu0
    %v3623 = vadd.f32 0.0, %v3622
    %v3624 = vpop.f32.mrb[0].mxu0
    %3625 = vmatprep.mubr.f32.mxu0 0.0
    %3626 = vmatmul.mubr.f32.gmra.mrb[0].mxu0 %v3528
    %v3627 = vpop.f32.mrb[0].mxu0
    %v3628 = vadd.f32 0.0, %v3627
    %v3629 = vpop.f32.mrb[0].mxu0
    %3630 = vmatprep.mubr.f32.mxu0 0.0
    %3631 = vmatmul.mubr.f32.gmra.mrb[0].mxu0 %v3531
    %v3632 = vpop.f32.mrb[0].mxu0
    %v3633 = vadd.f32 0.0, %v3632
    %v3634 = vpop.f32.mrb[0].mxu0
    %3635 = vmatprep.mubr.f32.mxu0 0.0
    %3636 = vmatmul.mubr.f32.gmra.mrb[0].mxu0 %v3534
    %v3637 = vpop.f32.mrb[0].mxu0
    %v3638 = vadd.f32 0.0, %v3637
    %v3639 = vpop.f32.mrb[0].mxu0
    %3640 = vdwg.mxu0
    %v3641 = vpack.c.bf16 %v3479, %v3474
    %v3642 = vpack.c.bf16 %v3489, %v3484
    %v3643 = vpack.c.bf16 %v3499, %v3494
    %v3644 = vpack.c.bf16 %v3509, %v3504
    %v3645 = vpack.c.bf16 %v3608, %v3603
    %v3646 = vpack.c.bf16 %v3618, %v3613
    %v3647 = vpack.c.bf16 %v3628, %v3623
    %v3648 = vpack.c.bf16 %v3638, %v3633
    %v3649 = vld [vmem:[%s7] sm:$0xf]
    %v3650 = vld [vmem:[%s7 + $0x4] sm:$0xf]
    %v3651 = vld [vmem:[%s7 + $0x8] sm:$0xf]
    %v3652 = vld [vmem:[%s7 + $0xc] sm:$0xf]
    %v3653 = vld [vmem:[%s8] sm:$0x1]
    %v3655 = vlaneseq
    %v3656 = vshrl.u32 %v3655, 7
    %v3657 = vsub.s32 0, %v3656
    %v3658 = vrot.slane %v3653, %v3657
    %v3664 = vunpack.c.l.b16 %v3649
    %v3665 = vunpack.c.l.b16 %v3650
    %v3666 = vunpack.c.l.b16 %v3651
    %v3667 = vunpack.c.l.b16 %v3652
    %v3668 = vpack.c.b16 %v3665, %v3664
    %v3669 = vpack.c.b16 %v3667, %v3666
    %v3673 = vsel %vm46, %v3641, 0
    %v3676 = vsel %vm46, %v3642, 0
    %v3679 = vsel %vm46, %v3643, 0
    %v3682 = vsel %vm46, %v3644, 0
    %v3685 = vsel %vm46, %v3645, 0
    %v3688 = vsel %vm46, %v3646, 0
    %v3691 = vsel %vm46, %v3647, 0
    %v3694 = vsel %vm46, %v3648, 0
    %3696 = vmatprep.subr.bf16.mxu0 0
    %3697 = vmatpush1.bf16.msra.mxu0 %v3668
    %3698 = vmatprep.subr.bf16.mxu0 0
    %3699 = vmatpush1.bf16.msra.mxu0 %v3669
    %3700 = vmatprep.subr.bf16.mxu0 0
    %3701 = vmatpush1.bf16.msra.mxu0 0
    %3702 = vmatprep.subr.bf16.mxu0 0
    %3703 = vmatpush1.bf16.msra.mxu0 0
    %3704 = vmatprep.subr.bf16.mxu0 0
    %3705 = vmatpush1.bf16.msra.mxu0 0
    %3706 = vmatprep.subr.bf16.mxu0 0
    %3707 = vmatpush1.bf16.msra.mxu0 0
    %3708 = vmatprep.subr.bf16.mxu0 0
    %3709 = vmatpush1.bf16.msra.mxu0 0
    %3710 = vmatprep.subr.bf16.mxu0 0
    %3711 = vmatpush1.bf16.msra.mxu0 0
    %3712 = vmatprep.subr.bf16.mxu0 0
    %3713 = vmatpush1.bf16.msra.mxu0 0
    %3714 = vmatprep.subr.bf16.mxu0 0
    %3715 = vmatpush1.bf16.msra.mxu0 0
    %3716 = vmatprep.subr.bf16.mxu0 0
    %3717 = vmatpush1.bf16.msra.mxu0 0
    %3718 = vmatprep.subr.bf16.mxu0 0
    %3719 = vmatpush1.bf16.msra.mxu0 0
    %3720 = vmatprep.subr.bf16.mxu0 0
    %3721 = vmatpush1.bf16.msra.mxu0 0
    %3722 = vmatprep.subr.bf16.mxu0 0
    %3723 = vmatpush1.bf16.msra.mxu0 0
    %3724 = vmatprep.subr.bf16.mxu0 0
    %3725 = vmatpush1.bf16.msra.mxu0 0
    %3726 = vmatprep.subr.bf16.mxu0 0
    %3727 = vmatpush1.bf16.msra.mxu0 0
    %3728 = vmatprep.mubr.bf16.mxu0 0
    %3729 = vmatmul.mubr.bf16.gmra.mrb[0].mxu0 %v3673
    %v3730 = vpop.f32.mrb[0].mxu0
    %v3731 = vadd.f32 %v3658, %v3730
    %v3732 = vpop.f32.mrb[0].mxu0
    %v3733 = vpop.f32.mrb[0].mxu0
    %v3734 = vadd.f32 %v3658, %v3733
    %v3735 = vpop.f32.mrb[0].mxu0
    %3736 = vmatprep.mubr.bf16.mxu0 0
    %3737 = vmatmul.mubr.bf16.gmra.mrb[0].mxu0 %v3676
    %v3738 = vpop.f32.mrb[0].mxu0
    %v3739 = vadd.f32 %v3658, %v3738
    %v3740 = vpop.f32.mrb[0].mxu0
    %v3741 = vpop.f32.mrb[0].mxu0
    %v3742 = vadd.f32 %v3658, %v3741
    %v3743 = vpop.f32.mrb[0].mxu0
    %3744 = vmatprep.mubr.bf16.mxu0 0
    %3745 = vmatmul.mubr.bf16.gmra.mrb[0].mxu0 %v3679
    %v3746 = vpop.f32.mrb[0].mxu0
    %v3747 = vadd.f32 %v3658, %v3746
    %v3748 = vpop.f32.mrb[0].mxu0
    %v3749 = vpop.f32.mrb[0].mxu0
    %v3750 = vadd.f32 %v3658, %v3749
    %v3751 = vpop.f32.mrb[0].mxu0
    %3752 = vmatprep.mubr.bf16.mxu0 0
    %3753 = vmatmul.mubr.bf16.gmra.mrb[0].mxu0 %v3682
    %v3754 = vpop.f32.mrb[0].mxu0
    %v3755 = vadd.f32 %v3658, %v3754
    %v3756 = vpop.f32.mrb[0].mxu0
    %v3757 = vpop.f32.mrb[0].mxu0
    %v3758 = vadd.f32 %v3658, %v3757
    %v3759 = vpop.f32.mrb[0].mxu0
    %3760 = vmatprep.mubr.bf16.mxu0 0
    %3761 = vmatmul.mubr.bf16.gmra.mrb[0].mxu0 %v3685
    %v3762 = vpop.f32.mrb[0].mxu0
    %v3763 = vadd.f32 %v3658, %v3762
    %v3764 = vpop.f32.mrb[0].mxu0
    %v3765 = vpop.f32.mrb[0].mxu0
    %v3766 = vadd.f32 %v3658, %v3765
    %v3767 = vpop.f32.mrb[0].mxu0
    %3768 = vmatprep.mubr.bf16.mxu0 0
    %3769 = vmatmul.mubr.bf16.gmra.mrb[0].mxu0 %v3688
    %v3770 = vpop.f32.mrb[0].mxu0
    %v3771 = vadd.f32 %v3658, %v3770
    %v3772 = vpop.f32.mrb[0].mxu0
    %v3773 = vpop.f32.mrb[0].mxu0
    %v3774 = vadd.f32 %v3658, %v3773
    %v3775 = vpop.f32.mrb[0].mxu0
    %3776 = vmatprep.mubr.bf16.mxu0 0
    %3777 = vmatmul.mubr.bf16.gmra.mrb[0].mxu0 %v3691
    %v3778 = vpop.f32.mrb[0].mxu0
    %v3779 = vadd.f32 %v3658, %v3778
    %v3780 = vpop.f32.mrb[0].mxu0
    %v3781 = vpop.f32.mrb[0].mxu0
    %v3782 = vadd.f32 %v3658, %v3781
    %v3783 = vpop.f32.mrb[0].mxu0
    %3784 = vmatprep.mubr.bf16.mxu0 0
    %3785 = vmatmul.mubr.bf16.gmra.mrb[0].mxu0 %v3694
    %v3786 = vpop.f32.mrb[0].mxu0
    %v3787 = vadd.f32 %v3658, %v3786
    %v3788 = vpop.f32.mrb[0].mxu0
    %v3789 = vpop.f32.mrb[0].mxu0
    %v3790 = vadd.f32 %v3658, %v3789
    %v3791 = vpop.f32.mrb[0].mxu0
    %3792 = vdwg.mxu0
    %3793 = vst.msk [vmem:[%s148 + $0x8] sm:$0xff] %vm46, %v3731
    %3794 = vst.msk [vmem:[%s148 + $0x20] sm:$0xff] %vm46, %v3734
    %3795 = vst.msk [vmem:[%s148 + $0x38] sm:$0xff] %vm46, %v3739
    %3796 = vst.msk [vmem:[%s148 + $0x50] sm:$0xff] %vm46, %v3742
    %3797 = vst.msk [vmem:[%s148 + $0x68] sm:$0xff] %vm46, %v3747
    %3798 = vst.msk [vmem:[%s148 + $0x80] sm:$0xff] %vm46, %v3750
    %3799 = vst.msk [vmem:[%s148 + $0x98] sm:$0xff] %vm46, %v3755
    %3800 = vst.msk [vmem:[%s148 + $0xb0] sm:$0xff] %vm46, %v3758
    %3801 = vst.msk [vmem:[%s148 + $0x158] sm:$0xff] %vm46, %v3763
    %3802 = vst.msk [vmem:[%s148 + $0x170] sm:$0xff] %vm46, %v3766
    %3803 = vst.msk [vmem:[%s148 + $0x188] sm:$0xff] %vm46, %v3771
    %3804 = vst.msk [vmem:[%s148 + $0x1a0] sm:$0xff] %vm46, %v3774
    %3805 = vst.msk [vmem:[%s148 + $0x1b8] sm:$0xff] %vm46, %v3779
    %3806 = vst.msk [vmem:[%s148 + $0x1d0] sm:$0xff] %vm46, %v3782
    %3807 = vst.msk [vmem:[%s148 + $0x1e8] sm:$0xff] %vm46, %v3787
    %3808 = vst.msk [vmem:[%s148 + $0x200] sm:$0xff] %vm46, %v3790
    %v3809 = vld [vmem:[%s165 + $0x7] sm:$0xff]
    %v3810 = vld [vmem:[%s165 + $0x1f] sm:$0xff]
    %v3811 = vld [vmem:[%s165 + $0x37] sm:$0xff]
    %v3812 = vld [vmem:[%s165 + $0x4f] sm:$0xff]
    %v3813 = vld [vmem:[%s165 + $0x67] sm:$0xff]
    %v3814 = vld [vmem:[%s165 + $0x7f] sm:$0xff]
    %v3815 = vld [vmem:[%s165 + $0x97] sm:$0xff]
    %v3816 = vld [vmem:[%s165 + $0xaf] sm:$0xff]
    %v3817 = vld [vmem:[%s165 + $0x157] sm:$0xff]
    %v3818 = vld [vmem:[%s165 + $0x16f] sm:$0xff]
    %v3819 = vld [vmem:[%s165 + $0x187] sm:$0xff]
    %v3820 = vld [vmem:[%s165 + $0x19f] sm:$0xff]
    %v3821 = vld [vmem:[%s165 + $0x1b7] sm:$0xff]
    %v3822 = vld [vmem:[%s165 + $0x1cf] sm:$0xff]
    %v3823 = vld [vmem:[%s165 + $0x1e7] sm:$0xff]
    %v3824 = vld [vmem:[%s165 + $0x1ff] sm:$0xff]
    %v3825 = vpack.c.bf16 %v3810, %v3809
    %v3826 = vpack.c.bf16 %v3812, %v3811
    %v3827 = vpack.c.bf16 %v3814, %v3813
    %v3828 = vpack.c.bf16 %v3816, %v3815
    %v3829 = vpack.c.bf16 %v3818, %v3817
    %v3830 = vpack.c.bf16 %v3820, %v3819
    %v3831 = vpack.c.bf16 %v3822, %v3821
    %v3832 = vpack.c.bf16 %v3824, %v3823
    %3833 = vst.msk [vmem:[#allocation3] sm:$0xff] %vm46, %v3825
    %3834 = vst.msk [vmem:[#allocation3 + $0x18] sm:$0xff] %vm46, %v3826
    %3835 = vst.msk [vmem:[#allocation3 + $0x30] sm:$0xff] %vm46, %v3827
    %3836 = vst.msk [vmem:[#allocation3 + $0x48] sm:$0xff] %vm46, %v3828
    %3837 = vst.msk [vmem:[#allocation3 + $0x60] sm:$0xff] %vm46, %v3829
    %3838 = vst.msk [vmem:[#allocation3 + $0x78] sm:$0xff] %vm46, %v3830
    %3839 = vst.msk [vmem:[#allocation3 + $0x90] sm:$0xff] %vm46, %v3831
    %3840 = vst.msk [vmem:[#allocation3 + $0xa8] sm:$0xff] %vm46, %v3832
    %v3841 = vld [vmem:[%s165 + $0x8] sm:$0xff]
    %v3842 = vld [vmem:[%s165 + $0x20] sm:$0xff]
    %v3843 = vld [vmem:[%s165 + $0x38] sm:$0xff]
    %v3844 = vld [vmem:[%s165 + $0x50] sm:$0xff]
    %v3845 = vld [vmem:[%s165 + $0x68] sm:$0xff]
    %v3846 = vld [vmem:[%s165 + $0x80] sm:$0xff]
    %v3847 = vld [vmem:[%s165 + $0x98] sm:$0xff]
    %v3848 = vld [vmem:[%s165 + $0xb0] sm:$0xff]
    %v3849 = vld [vmem:[%s165 + $0x158] sm:$0xff]
    %v3850 = vld [vmem:[%s165 + $0x170] sm:$0xff]
    %v3851 = vld [vmem:[%s165 + $0x188] sm:$0xff]
    %v3852 = vld [vmem:[%s165 + $0x1a0] sm:$0xff]
    %v3853 = vld [vmem:[%s165 + $0x1b8] sm:$0xff]
    %v3854 = vld [vmem:[%s165 + $0x1d0] sm:$0xff]
    %v3855 = vld [vmem:[%s165 + $0x1e8] sm:$0xff]
    %v3856 = vld [vmem:[%s165 + $0x200] sm:$0xff]
    %v3857 = vpack.c.bf16 %v3842, %v3841
    %v3858 = vpack.c.bf16 %v3844, %v3843
    %v3859 = vpack.c.bf16 %v3846, %v3845
    %v3860 = vpack.c.bf16 %v3848, %v3847
    %v3861 = vpack.c.bf16 %v3850, %v3849
    %v3862 = vpack.c.bf16 %v3852, %v3851
    %v3863 = vpack.c.bf16 %v3854, %v3853
    %v3864 = vpack.c.bf16 %v3856, %v3855
    %3873 = vrot.lane.b32.xlu0 %v3857, 32
    %v3874 = vpop.permute.xlu0 %3873
    %3875 = vrot.lane.b32.xlu0 %v3858, 32
    %v3876 = vpop.permute.xlu0 %3875
    %3877 = vrot.lane.b32.xlu0 %v3859, 32
    %v3878 = vpop.permute.xlu0 %3877
    %3879 = vrot.lane.b32.xlu0 %v3860, 32
    %v3880 = vpop.permute.xlu0 %3879
    %3881 = vrot.lane.b32.xlu0 %v3861, 32
    %v3882 = vpop.permute.xlu0 %3881
    %3883 = vrot.lane.b32.xlu0 %v3862, 32
    %v3884 = vpop.permute.xlu0 %3883
    %3885 = vrot.lane.b32.xlu0 %v3863, 32
    %v3886 = vpop.permute.xlu0 %3885
    %3887 = vrot.lane.b32.xlu0 %v3864, 32
    %v3888 = vpop.permute.xlu0 %3887
    %3897 = vst.msk [vmem:[#allocation3] sm:$0xff] %vm254, %v3874
    %3898 = vst.msk [vmem:[#allocation3 + $0x18] sm:$0xff] %vm254, %v3876
    %3899 = vst.msk [vmem:[#allocation3 + $0x30] sm:$0xff] %vm254, %v3878
    %3900 = vst.msk [vmem:[#allocation3 + $0x48] sm:$0xff] %vm254, %v3880
    %3901 = vst.msk [vmem:[#allocation3 + $0x60] sm:$0xff] %vm254, %v3882
    %3902 = vst.msk [vmem:[#allocation3 + $0x78] sm:$0xff] %vm254, %v3884
    %3903 = vst.msk [vmem:[#allocation3 + $0x90] sm:$0xff] %vm254, %v3886
    %3904 = vst.msk [vmem:[#allocation3 + $0xa8] sm:$0xff] %vm254, %v3888
    %v3905 = vld [vmem:[%s165 + $0x9] sm:$0xff]
    %v3906 = vld [vmem:[%s165 + $0x21] sm:$0xff]
    %v3907 = vld [vmem:[%s165 + $0x39] sm:$0xff]
    %v3908 = vld [vmem:[%s165 + $0x51] sm:$0xff]
    %v3909 = vld [vmem:[%s165 + $0x69] sm:$0xff]
    %v3910 = vld [vmem:[%s165 + $0x81] sm:$0xff]
    %v3911 = vld [vmem:[%s165 + $0x99] sm:$0xff]
    %v3912 = vld [vmem:[%s165 + $0xb1] sm:$0xff]
    %v3913 = vld [vmem:[%s165 + $0x159] sm:$0xff]
    %v3914 = vld [vmem:[%s165 + $0x171] sm:$0xff]
    %v3915 = vld [vmem:[%s165 + $0x189] sm:$0xff]
    %v3916 = vld [vmem:[%s165 + $0x1a1] sm:$0xff]
    %v3917 = vld [vmem:[%s165 + $0x1b9] sm:$0xff]
    %v3918 = vld [vmem:[%s165 + $0x1d1] sm:$0xff]
    %v3919 = vld [vmem:[%s165 + $0x1e9] sm:$0xff]
    %v3920 = vld [vmem:[%s165 + $0x201] sm:$0xff]
    %v3921 = vpack.c.bf16 %v3906, %v3905
    %v3922 = vpack.c.bf16 %v3908, %v3907
    %v3923 = vpack.c.bf16 %v3910, %v3909
    %v3924 = vpack.c.bf16 %v3912, %v3911
    %v3925 = vpack.c.bf16 %v3914, %v3913
    %v3926 = vpack.c.bf16 %v3916, %v3915
    %v3927 = vpack.c.bf16 %v3918, %v3917
    %v3928 = vpack.c.bf16 %v3920, %v3919
    %3937 = vrot.lane.b32.xlu0 %v3921, 64
    %v3938 = vpop.permute.xlu0 %3937
    %3939 = vrot.lane.b32.xlu0 %v3922, 64
    %v3940 = vpop.permute.xlu0 %3939
    %3941 = vrot.lane.b32.xlu0 %v3923, 64
    %v3942 = vpop.permute.xlu0 %3941
    %3943 = vrot.lane.b32.xlu0 %v3924, 64
    %v3944 = vpop.permute.xlu0 %3943
    %3945 = vrot.lane.b32.xlu0 %v3925, 64
    %v3946 = vpop.permute.xlu0 %3945
    %3947 = vrot.lane.b32.xlu0 %v3926, 64
    %v3948 = vpop.permute.xlu0 %3947
    %3949 = vrot.lane.b32.xlu0 %v3927, 64
    %v3950 = vpop.permute.xlu0 %3949
    %3951 = vrot.lane.b32.xlu0 %v3928, 64
    %v3952 = vpop.permute.xlu0 %3951
    %3961 = vst.msk [vmem:[#allocation3] sm:$0xff] %vm319, %v3938
    %3962 = vst.msk [vmem:[#allocation3 + $0x18] sm:$0xff] %vm319, %v3940
    %3963 = vst.msk [vmem:[#allocation3 + $0x30] sm:$0xff] %vm319, %v3942
    %3964 = vst.msk [vmem:[#allocation3 + $0x48] sm:$0xff] %vm319, %v3944
    %3965 = vst.msk [vmem:[#allocation3 + $0x60] sm:$0xff] %vm319, %v3946
    %3966 = vst.msk [vmem:[#allocation3 + $0x78] sm:$0xff] %vm319, %v3948
    %3967 = vst.msk [vmem:[#allocation3 + $0x90] sm:$0xff] %vm319, %v3950
    %3968 = vst.msk [vmem:[#allocation3 + $0xa8] sm:$0xff] %vm319, %v3952
    %v3969 = vld [vmem:[%s148 + $0x7] sm:$0xff]
    %v3970 = vld [vmem:[%s148 + $0x1f] sm:$0xff]
    %v3971 = vld [vmem:[%s148 + $0x37] sm:$0xff]
    %v3972 = vld [vmem:[%s148 + $0x4f] sm:$0xff]
    %v3973 = vld [vmem:[%s148 + $0x67] sm:$0xff]
    %v3974 = vld [vmem:[%s148 + $0x7f] sm:$0xff]
    %v3975 = vld [vmem:[%s148 + $0x97] sm:$0xff]
    %v3976 = vld [vmem:[%s148 + $0xaf] sm:$0xff]
    %v3977 = vld [vmem:[%s148 + $0x157] sm:$0xff]
    %v3978 = vld [vmem:[%s148 + $0x16f] sm:$0xff]
    %v3979 = vld [vmem:[%s148 + $0x187] sm:$0xff]
    %v3980 = vld [vmem:[%s148 + $0x19f] sm:$0xff]
    %v3981 = vld [vmem:[%s148 + $0x1b7] sm:$0xff]
    %v3982 = vld [vmem:[%s148 + $0x1cf] sm:$0xff]
    %v3983 = vld [vmem:[%s148 + $0x1e7] sm:$0xff]
    %v3984 = vld [vmem:[%s148 + $0x1ff] sm:$0xff]
    %v3985 = vpack.c.bf16 %v3970, %v3969
    %v3986 = vpack.c.bf16 %v3972, %v3971
    %v3987 = vpack.c.bf16 %v3974, %v3973
    %v3988 = vpack.c.bf16 %v3976, %v3975
    %v3989 = vpack.c.bf16 %v3978, %v3977
    %v3990 = vpack.c.bf16 %v3980, %v3979
    %v3991 = vpack.c.bf16 %v3982, %v3981
    %v3992 = vpack.c.bf16 %v3984, %v3983
    %4001 = vrot.lane.b32.xlu0 %v3985, 96
    %v4002 = vpop.permute.xlu0 %4001
    %4003 = vrot.lane.b32.xlu0 %v3986, 96
    %v4004 = vpop.permute.xlu0 %4003
    %4005 = vrot.lane.b32.xlu0 %v3987, 96
    %v4006 = vpop.permute.xlu0 %4005
    %4007 = vrot.lane.b32.xlu0 %v3988, 96
    %v4008 = vpop.permute.xlu0 %4007
    %4009 = vrot.lane.b32.xlu0 %v3989, 96
    %v4010 = vpop.permute.xlu0 %4009
    %4011 = vrot.lane.b32.xlu0 %v3990, 96
    %v4012 = vpop.permute.xlu0 %4011
    %4013 = vrot.lane.b32.xlu0 %v3991, 96
    %v4014 = vpop.permute.xlu0 %4013
    %4015 = vrot.lane.b32.xlu0 %v3992, 96
    %v4016 = vpop.permute.xlu0 %4015
    %4025 = vst.msk [vmem:[#allocation3] sm:$0xff] %vm384, %v4002
    %4026 = vst.msk [vmem:[#allocation3 + $0x18] sm:$0xff] %vm384, %v4004
    %4027 = vst.msk [vmem:[#allocation3 + $0x30] sm:$0xff] %vm384, %v4006
    %4028 = vst.msk [vmem:[#allocation3 + $0x48] sm:$0xff] %vm384, %v4008
    %4029 = vst.msk [vmem:[#allocation3 + $0x60] sm:$0xff] %vm384, %v4010
    %4030 = vst.msk [vmem:[#allocation3 + $0x78] sm:$0xff] %vm384, %v4012
    %4031 = vst.msk [vmem:[#allocation3 + $0x90] sm:$0xff] %vm384, %v4014
    %4032 = vst.msk [vmem:[#allocation3 + $0xa8] sm:$0xff] %vm384, %v4016
    %v4033 = vld [vmem:[%s148 + $0x8] sm:$0xff]
    %v4034 = vld [vmem:[%s148 + $0x20] sm:$0xff]
    %v4035 = vld [vmem:[%s148 + $0x38] sm:$0xff]
    %v4036 = vld [vmem:[%s148 + $0x50] sm:$0xff]
    %v4037 = vld [vmem:[%s148 + $0x68] sm:$0xff]
    %v4038 = vld [vmem:[%s148 + $0x80] sm:$0xff]
    %v4039 = vld [vmem:[%s148 + $0x98] sm:$0xff]
    %v4040 = vld [vmem:[%s148 + $0xb0] sm:$0xff]
    %v4041 = vld [vmem:[%s148 + $0x158] sm:$0xff]
    %v4042 = vld [vmem:[%s148 + $0x170] sm:$0xff]
    %v4043 = vld [vmem:[%s148 + $0x188] sm:$0xff]
    %v4044 = vld [vmem:[%s148 + $0x1a0] sm:$0xff]
    %v4045 = vld [vmem:[%s148 + $0x1b8] sm:$0xff]
    %v4046 = vld [vmem:[%s148 + $0x1d0] sm:$0xff]
    %v4047 = vld [vmem:[%s148 + $0x1e8] sm:$0xff]
    %v4048 = vld [vmem:[%s148 + $0x200] sm:$0xff]
    %v4049 = vpack.c.bf16 %v4034, %v4033
    %v4050 = vpack.c.bf16 %v4036, %v4035
    %v4051 = vpack.c.bf16 %v4038, %v4037
    %v4052 = vpack.c.bf16 %v4040, %v4039
    %v4053 = vpack.c.bf16 %v4042, %v4041
    %v4054 = vpack.c.bf16 %v4044, %v4043
    %v4055 = vpack.c.bf16 %v4046, %v4045
    %v4056 = vpack.c.bf16 %v4048, %v4047
    %4057 = vst.msk [vmem:[#allocation3 + $0x8] sm:$0xff] %vm46, %v4049
    %4058 = vst.msk [vmem:[#allocation3 + $0x20] sm:$0xff] %vm46, %v4050
    %4059 = vst.msk [vmem:[#allocation3 + $0x38] sm:$0xff] %vm46, %v4051
    %4060 = vst.msk [vmem:[#allocation3 + $0x50] sm:$0xff] %vm46, %v4052
    %4061 = vst.msk [vmem:[#allocation3 + $0x68] sm:$0xff] %vm46, %v4053
    %4062 = vst.msk [vmem:[#allocation3 + $0x80] sm:$0xff] %vm46, %v4054
    %4063 = vst.msk [vmem:[#allocation3 + $0x98] sm:$0xff] %vm46, %v4055
    %4064 = vst.msk [vmem:[#allocation3 + $0xb0] sm:$0xff] %vm46, %v4056
    %v4065 = vld [vmem:[%s148 + $0x9] sm:$0xff]
    %v4066 = vld [vmem:[%s148 + $0x21] sm:$0xff]
    %v4067 = vld [vmem:[%s148 + $0x39] sm:$0xff]
    %v4068 = vld [vmem:[%s148 + $0x51] sm:$0xff]
    %v4069 = vld [vmem:[%s148 + $0x69] sm:$0xff]
    %v4070 = vld [vmem:[%s148 + $0x81] sm:$0xff]
    %v4071 = vld [vmem:[%s148 + $0x99] sm:$0xff]
    %v4072 = vld [vmem:[%s148 + $0xb1] sm:$0xff]
    %v4073 = vld [vmem:[%s148 + $0x159] sm:$0xff]
    %v4074 = vld [vmem:[%s148 + $0x171] sm:$0xff]
    %v4075 = vld [vmem:[%s148 + $0x189] sm:$0xff]
    %v4076 = vld [vmem:[%s148 + $0x1a1] sm:$0xff]
    %v4077 = vld [vmem:[%s148 + $0x1b9] sm:$0xff]
    %v4078 = vld [vmem:[%s148 + $0x1d1] sm:$0xff]
    %v4079 = vld [vmem:[%s148 + $0x1e9] sm:$0xff]
    %v4080 = vld [vmem:[%s148 + $0x201] sm:$0xff]
    %v4081 = vpack.c.bf16 %v4066, %v4065
    %v4082 = vpack.c.bf16 %v4068, %v4067
    %v4083 = vpack.c.bf16 %v4070, %v4069
    %v4084 = vpack.c.bf16 %v4072, %v4071
    %v4085 = vpack.c.bf16 %v4074, %v4073
    %v4086 = vpack.c.bf16 %v4076, %v4075
    %v4087 = vpack.c.bf16 %v4078, %v4077
    %v4088 = vpack.c.bf16 %v4080, %v4079
    %4097 = vrot.lane.b32.xlu0 %v4081, 32
    %v4098 = vpop.permute.xlu0 %4097
    %4099 = vrot.lane.b32.xlu0 %v4082, 32
    %v4100 = vpop.permute.xlu0 %4099
    %4101 = vrot.lane.b32.xlu0 %v4083, 32
    %v4102 = vpop.permute.xlu0 %4101
    %4103 = vrot.lane.b32.xlu0 %v4084, 32
    %v4104 = vpop.permute.xlu0 %4103
    %4105 = vrot.lane.b32.xlu0 %v4085, 32
    %v4106 = vpop.permute.xlu0 %4105
    %4107 = vrot.lane.b32.xlu0 %v4086, 32
    %v4108 = vpop.permute.xlu0 %4107
    %4109 = vrot.lane.b32.xlu0 %v4087, 32
    %v4110 = vpop.permute.xlu0 %4109
    %4111 = vrot.lane.b32.xlu0 %v4088, 32
    %v4112 = vpop.permute.xlu0 %4111
    %4121 = vst.msk [vmem:[#allocation3 + $0x8] sm:$0xff] %vm254, %v4098
    %4122 = vst.msk [vmem:[#allocation3 + $0x20] sm:$0xff] %vm254, %v4100
    %4123 = vst.msk [vmem:[#allocation3 + $0x38] sm:$0xff] %vm254, %v4102
    %4124 = vst.msk [vmem:[#allocation3 + $0x50] sm:$0xff] %vm254, %v4104
    %4125 = vst.msk [vmem:[#allocation3 + $0x68] sm:$0xff] %vm254, %v4106
    %4126 = vst.msk [vmem:[#allocation3 + $0x80] sm:$0xff] %vm254, %v4108
    %4127 = vst.msk [vmem:[#allocation3 + $0x98] sm:$0xff] %vm254, %v4110
    %4128 = vst.msk [vmem:[#allocation3 + $0xb0] sm:$0xff] %vm254, %v4112
    %v4129 = vld [vmem:[%s489 + $0x7] sm:$0xff]
    %v4130 = vld [vmem:[%s489 + $0x1f] sm:$0xff]
    %v4131 = vld [vmem:[%s489 + $0x37] sm:$0xff]
    %v4132 = vld [vmem:[%s489 + $0x4f] sm:$0xff]
    %v4133 = vld [vmem:[%s489 + $0x67] sm:$0xff]
    %v4134 = vld [vmem:[%s489 + $0x7f] sm:$0xff]
    %v4135 = vld [vmem:[%s489 + $0x97] sm:$0xff]
    %v4136 = vld [vmem:[%s489 + $0xaf] sm:$0xff]
    %v4137 = vld [vmem:[%s489 + $0x157] sm:$0xff]
    %v4138 = vld [vmem:[%s489 + $0x16f] sm:$0xff]
    %v4139 = vld [vmem:[%s489 + $0x187] sm:$0xff]
    %v4140 = vld [vmem:[%s489 + $0x19f] sm:$0xff]
    %v4141 = vld [vmem:[%s489 + $0x1b7] sm:$0xff]
    %v4142 = vld [vmem:[%s489 + $0x1cf] sm:$0xff]
    %v4143 = vld [vmem:[%s489 + $0x1e7] sm:$0xff]
    %v4144 = vld [vmem:[%s489 + $0x1ff] sm:$0xff]
    %v4145 = vpack.c.bf16 %v4130, %v4129
    %v4146 = vpack.c.bf16 %v4132, %v4131
    %v4147 = vpack.c.bf16 %v4134, %v4133
    %v4148 = vpack.c.bf16 %v4136, %v4135
    %v4149 = vpack.c.bf16 %v4138, %v4137
    %v4150 = vpack.c.bf16 %v4140, %v4139
    %v4151 = vpack.c.bf16 %v4142, %v4141
    %v4152 = vpack.c.bf16 %v4144, %v4143
    %4161 = vrot.lane.b32.xlu0 %v4145, 64
    %v4162 = vpop.permute.xlu0 %4161
    %4163 = vrot.lane.b32.xlu0 %v4146, 64
    %v4164 = vpop.permute.xlu0 %4163
    %4165 = vrot.lane.b32.xlu0 %v4147, 64
    %v4166 = vpop.permute.xlu0 %4165
    %4167 = vrot.lane.b32.xlu0 %v4148, 64
    %v4168 = vpop.permute.xlu0 %4167
    %4169 = vrot.lane.b32.xlu0 %v4149, 64
    %v4170 = vpop.permute.xlu0 %4169
    %4171 = vrot.lane.b32.xlu0 %v4150, 64
    %v4172 = vpop.permute.xlu0 %4171
    %4173 = vrot.lane.b32.xlu0 %v4151, 64
    %v4174 = vpop.permute.xlu0 %4173
    %4175 = vrot.lane.b32.xlu0 %v4152, 64
    %v4176 = vpop.permute.xlu0 %4175
    %4185 = vst.msk [vmem:[#allocation3 + $0x8] sm:$0xff] %vm319, %v4162
    %4186 = vst.msk [vmem:[#allocation3 + $0x20] sm:$0xff] %vm319, %v4164
    %4187 = vst.msk [vmem:[#allocation3 + $0x38] sm:$0xff] %vm319, %v4166
    %4188 = vst.msk [vmem:[#allocation3 + $0x50] sm:$0xff] %vm319, %v4168
    %4189 = vst.msk [vmem:[#allocation3 + $0x68] sm:$0xff] %vm319, %v4170
    %4190 = vst.msk [vmem:[#allocation3 + $0x80] sm:$0xff] %vm319, %v4172
    %4191 = vst.msk [vmem:[#allocation3 + $0x98] sm:$0xff] %vm319, %v4174
    %4192 = vst.msk [vmem:[#allocation3 + $0xb0] sm:$0xff] %vm319, %v4176
    %v4193 = vld [vmem:[%s489 + $0x8] sm:$0xff]
    %v4194 = vld [vmem:[%s489 + $0x20] sm:$0xff]
    %v4195 = vld [vmem:[%s489 + $0x38] sm:$0xff]
    %v4196 = vld [vmem:[%s489 + $0x50] sm:$0xff]
    %v4197 = vld [vmem:[%s489 + $0x68] sm:$0xff]
    %v4198 = vld [vmem:[%s489 + $0x80] sm:$0xff]
    %v4199 = vld [vmem:[%s489 + $0x98] sm:$0xff]
    %v4200 = vld [vmem:[%s489 + $0xb0] sm:$0xff]
    %v4201 = vld [vmem:[%s489 + $0x158] sm:$0xff]
    %v4202 = vld [vmem:[%s489 + $0x170] sm:$0xff]
    %v4203 = vld [vmem:[%s489 + $0x188] sm:$0xff]
    %v4204 = vld [vmem:[%s489 + $0x1a0] sm:$0xff]
    %v4205 = vld [vmem:[%s489 + $0x1b8] sm:$0xff]
    %v4206 = vld [vmem:[%s489 + $0x1d0] sm:$0xff]
    %v4207 = vld [vmem:[%s489 + $0x1e8] sm:$0xff]
    %v4208 = vld [vmem:[%s489 + $0x200] sm:$0xff]
    %v4209 = vpack.c.bf16 %v4194, %v4193
    %v4210 = vpack.c.bf16 %v4196, %v4195
    %v4211 = vpack.c.bf16 %v4198, %v4197
    %v4212 = vpack.c.bf16 %v4200, %v4199
    %v4213 = vpack.c.bf16 %v4202, %v4201
    %v4214 = vpack.c.bf16 %v4204, %v4203
    %v4215 = vpack.c.bf16 %v4206, %v4205
    %v4216 = vpack.c.bf16 %v4208, %v4207
    %4225 = vrot.lane.b32.xlu0 %v4209, 96
    %v4226 = vpop.permute.xlu0 %4225
    %4227 = vrot.lane.b32.xlu0 %v4210, 96
    %v4228 = vpop.permute.xlu0 %4227
    %4229 = vrot.lane.b32.xlu0 %v4211, 96
    %v4230 = vpop.permute.xlu0 %4229
    %4231 = vrot.lane.b32.xlu0 %v4212, 96
    %v4232 = vpop.permute.xlu0 %4231
    %4233 = vrot.lane.b32.xlu0 %v4213, 96
    %v4234 = vpop.permute.xlu0 %4233
    %4235 = vrot.lane.b32.xlu0 %v4214, 96
    %v4236 = vpop.permute.xlu0 %4235
    %4237 = vrot.lane.b32.xlu0 %v4215, 96
    %v4238 = vpop.permute.xlu0 %4237
    %4239 = vrot.lane.b32.xlu0 %v4216, 96
    %v4240 = vpop.permute.xlu0 %4239
    %4249 = vst.msk [vmem:[#allocation3 + $0x8] sm:$0xff] %vm384, %v4226
    %4250 = vst.msk [vmem:[#allocation3 + $0x20] sm:$0xff] %vm384, %v4228
    %4251 = vst.msk [vmem:[#allocation3 + $0x38] sm:$0xff] %vm384, %v4230
    %4252 = vst.msk [vmem:[#allocation3 + $0x50] sm:$0xff] %vm384, %v4232
    %4253 = vst.msk [vmem:[#allocation3 + $0x68] sm:$0xff] %vm384, %v4234
    %4254 = vst.msk [vmem:[#allocation3 + $0x80] sm:$0xff] %vm384, %v4236
    %4255 = vst.msk [vmem:[#allocation3 + $0x98] sm:$0xff] %vm384, %v4238
    %4256 = vst.msk [vmem:[#allocation3 + $0xb0] sm:$0xff] %vm384, %v4240
    %v4257 = vld [vmem:[%s489 + $0x9] sm:$0xff]
    %v4258 = vld [vmem:[%s489 + $0x21] sm:$0xff]
    %v4259 = vld [vmem:[%s489 + $0x39] sm:$0xff]
    %v4260 = vld [vmem:[%s489 + $0x51] sm:$0xff]
    %v4261 = vld [vmem:[%s489 + $0x69] sm:$0xff]
    %v4262 = vld [vmem:[%s489 + $0x81] sm:$0xff]
    %v4263 = vld [vmem:[%s489 + $0x99] sm:$0xff]
    %v4264 = vld [vmem:[%s489 + $0xb1] sm:$0xff]
    %v4265 = vld [vmem:[%s489 + $0x159] sm:$0xff]
    %v4266 = vld [vmem:[%s489 + $0x171] sm:$0xff]
    %v4267 = vld [vmem:[%s489 + $0x189] sm:$0xff]
    %v4268 = vld [vmem:[%s489 + $0x1a1] sm:$0xff]
    %v4269 = vld [vmem:[%s489 + $0x1b9] sm:$0xff]
    %v4270 = vld [vmem:[%s489 + $0x1d1] sm:$0xff]
    %v4271 = vld [vmem:[%s489 + $0x1e9] sm:$0xff]
    %v4272 = vld [vmem:[%s489 + $0x201] sm:$0xff]
    %v4273 = vpack.c.bf16 %v4258, %v4257
    %v4274 = vpack.c.bf16 %v4260, %v4259
    %v4275 = vpack.c.bf16 %v4262, %v4261
    %v4276 = vpack.c.bf16 %v4264, %v4263
    %v4277 = vpack.c.bf16 %v4266, %v4265
    %v4278 = vpack.c.bf16 %v4268, %v4267
    %v4279 = vpack.c.bf16 %v4270, %v4269
    %v4280 = vpack.c.bf16 %v4272, %v4271
    %4281 = vst.msk [vmem:[#allocation3 + $0x10] sm:$0xff] %vm46, %v4273
    %4282 = vst.msk [vmem:[#allocation3 + $0x28] sm:$0xff] %vm46, %v4274
    %4283 = vst.msk [vmem:[#allocation3 + $0x40] sm:$0xff] %vm46, %v4275
    %4284 = vst.msk [vmem:[#allocation3 + $0x58] sm:$0xff] %vm46, %v4276
    %4285 = vst.msk [vmem:[#allocation3 + $0x70] sm:$0xff] %vm46, %v4277
    %4286 = vst.msk [vmem:[#allocation3 + $0x88] sm:$0xff] %vm46, %v4278
    %4287 = vst.msk [vmem:[#allocation3 + $0xa0] sm:$0xff] %vm46, %v4279
    %4288 = vst.msk [vmem:[#allocation3 + $0xb8] sm:$0xff] %vm46, %v4280
    %v4289 = vld [vmem:[%s9] sm:$0xf]
    %v4290 = vld [vmem:[%s9 + $0x4] sm:$0xf]
    %v4291 = vld [vmem:[%s9 + $0x8] sm:$0xf]
    %v4292 = vld [vmem:[%s9 + $0xc] sm:$0xf]
    %v4293 = vld [vmem:[%s9 + $0x10] sm:$0xf]
    %v4294 = vld [vmem:[%s9 + $0x14] sm:$0xf]
    %v4295 = vld [vmem:[%s9 + $0x18] sm:$0xf]
    %v4296 = vld [vmem:[%s9 + $0x1c] sm:$0xf]
    %v4297 = vld [vmem:[%s9 + $0x20] sm:$0xf]
    %v4298 = vld [vmem:[%s9 + $0x24] sm:$0xf]
    %v4299 = vld [vmem:[%s9 + $0x28] sm:$0xf]
    %v4300 = vld [vmem:[%s9 + $0x2c] sm:$0xf]
    %v4301 = vld [vmem:[%s9 + $0x30] sm:$0xf]
    %v4302 = vld [vmem:[%s9 + $0x34] sm:$0xf]
    %v4303 = vld [vmem:[%s9 + $0x38] sm:$0xf]
    %v4304 = vld [vmem:[%s9 + $0x3c] sm:$0xf]
    %v4305 = vld [vmem:[%s9 + $0x40] sm:$0xf]
    %v4306 = vld [vmem:[%s9 + $0x44] sm:$0xf]
    %v4307 = vld [vmem:[%s9 + $0x48] sm:$0xf]
    %v4308 = vld [vmem:[%s9 + $0x4c] sm:$0xf]
    %v4309 = vld [vmem:[%s9 + $0x50] sm:$0xf]
    %v4310 = vld [vmem:[%s9 + $0x54] sm:$0xf]
    %v4311 = vld [vmem:[%s9 + $0x58] sm:$0xf]
    %v4312 = vld [vmem:[%s9 + $0x5c] sm:$0xf]
    %v4313 = vld [vmem:[%s9 + $0x60] sm:$0xf]
    %v4314 = vld [vmem:[%s9 + $0x64] sm:$0xf]
    %v4315 = vld [vmem:[%s9 + $0x68] sm:$0xf]
    %v4316 = vld [vmem:[%s9 + $0x6c] sm:$0xf]
    %v4317 = vld [vmem:[%s9 + $0x70] sm:$0xf]
    %v4318 = vld [vmem:[%s9 + $0x74] sm:$0xf]
    %v4319 = vld [vmem:[%s9 + $0x78] sm:$0xf]
    %v4320 = vld [vmem:[%s9 + $0x7c] sm:$0xf]
    %v4321 = vld [vmem:[%s9 + $0x80] sm:$0xf]
    %v4322 = vld [vmem:[%s9 + $0x84] sm:$0xf]
    %v4323 = vld [vmem:[%s9 + $0x88] sm:$0xf]
    %v4324 = vld [vmem:[%s9 + $0x8c] sm:$0xf]
    %v4325 = vld [vmem:[%s10] sm:$0x1]
    %v4326 = vld [vmem:[#allocation3] sm:$0xff]
    %v4327 = vld [vmem:[#allocation3 + $0x8] sm:$0xff]
    %v4328 = vld [vmem:[#allocation3 + $0x10] sm:$0xff]
    %v4329 = vld [vmem:[#allocation3 + $0x18] sm:$0xff]
    %v4330 = vld [vmem:[#allocation3 + $0x20] sm:$0xff]
    %v4331 = vld [vmem:[#allocation3 + $0x28] sm:$0xff]
    %v4332 = vld [vmem:[#allocation3 + $0x30] sm:$0xff]
    %v4333 = vld [vmem:[#allocation3 + $0x38] sm:$0xff]
    %v4334 = vld [vmem:[#allocation3 + $0x40] sm:$0xff]
    %v4335 = vld [vmem:[#allocation3 + $0x48] sm:$0xff]
    %v4336 = vld [vmem:[#allocation3 + $0x50] sm:$0xff]
    %v4337 = vld [vmem:[#allocation3 + $0x58] sm:$0xff]
    %v4338 = vld [vmem:[#allocation3 + $0x60] sm:$0xff]
    %v4339 = vld [vmem:[#allocation3 + $0x68] sm:$0xff]
    %v4340 = vld [vmem:[#allocation3 + $0x70] sm:$0xff]
    %v4341 = vld [vmem:[#allocation3 + $0x78] sm:$0xff]
    %v4342 = vld [vmem:[#allocation3 + $0x80] sm:$0xff]
    %v4343 = vld [vmem:[#allocation3 + $0x88] sm:$0xff]
    %v4344 = vld [vmem:[#allocation3 + $0x90] sm:$0xff]
    %v4345 = vld [vmem:[#allocation3 + $0x98] sm:$0xff]
    %v4346 = vld [vmem:[#allocation3 + $0xa0] sm:$0xff]
    %v4347 = vld [vmem:[#allocation3 + $0xa8] sm:$0xff]
    %v4348 = vld [vmem:[#allocation3 + $0xb0] sm:$0xff]
    %v4349 = vld [vmem:[#allocation3 + $0xb8] sm:$0xff]
    %v4351 = vlaneseq
    %v4352 = vshrl.u32 %v4351, 7
    %v4353 = vsub.s32 0, %v4352
    %v4354 = vrot.slane %v4325, %v4353
    %v4392 = vunpack.c.l.b16 %v4289
    %v4393 = vunpack.c.l.b16 %v4290
    %v4394 = vunpack.c.l.b16 %v4291
    %v4395 = vunpack.c.l.b16 %v4292
    %v4396 = vunpack.c.l.b16 %v4293
    %v4397 = vunpack.c.l.b16 %v4294
    %v4398 = vunpack.c.l.b16 %v4295
    %v4399 = vunpack.c.l.b16 %v4296
    %v4400 = vunpack.c.l.b16 %v4297
    %v4401 = vunpack.c.l.b16 %v4298
    %v4402 = vunpack.c.l.b16 %v4299
    %v4403 = vunpack.c.l.b16 %v4300
    %v4404 = vunpack.c.l.b16 %v4301
    %v4405 = vunpack.c.l.b16 %v4302
    %v4406 = vunpack.c.l.b16 %v4303
    %v4407 = vunpack.c.l.b16 %v4304
    %v4408 = vunpack.c.l.b16 %v4305
    %v4409 = vunpack.c.l.b16 %v4306
    %v4410 = vunpack.c.l.b16 %v4307
    %v4411 = vunpack.c.l.b16 %v4308
    %v4412 = vunpack.c.l.b16 %v4309
    %v4413 = vunpack.c.l.b16 %v4310
    %v4414 = vunpack.c.l.b16 %v4311
    %v4415 = vunpack.c.l.b16 %v4312
    %v4416 = vunpack.c.l.b16 %v4313
    %v4417 = vunpack.c.l.b16 %v4314
    %v4418 = vunpack.c.l.b16 %v4315
    %v4419 = vunpack.c.l.b16 %v4316
    %v4420 = vunpack.c.l.b16 %v4317
    %v4421 = vunpack.c.l.b16 %v4318
    %v4422 = vunpack.c.l.b16 %v4319
    %v4423 = vunpack.c.l.b16 %v4320
    %v4424 = vunpack.c.l.b16 %v4321
    %v4425 = vunpack.c.l.b16 %v4322
    %v4426 = vunpack.c.l.b16 %v4323
    %v4427 = vunpack.c.l.b16 %v4324
    %v4428 = vpack.c.b16 %v4393, %v4392
    %v4429 = vpack.c.b16 %v4395, %v4394
    %v4430 = vpack.c.b16 %v4397, %v4396
    %v4431 = vpack.c.b16 %v4399, %v4398
    %v4432 = vpack.c.b16 %v4401, %v4400
    %v4433 = vpack.c.b16 %v4403, %v4402
    %v4434 = vpack.c.b16 %v4405, %v4404
    %v4435 = vpack.c.b16 %v4407, %v4406
    %v4436 = vpack.c.b16 %v4409, %v4408
    %v4437 = vpack.c.b16 %v4411, %v4410
    %v4438 = vpack.c.b16 %v4413, %v4412
    %v4439 = vpack.c.b16 %v4415, %v4414
    %v4440 = vpack.c.b16 %v4417, %v4416
    %v4441 = vpack.c.b16 %v4419, %v4418
    %v4442 = vpack.c.b16 %v4421, %v4420
    %v4443 = vpack.c.b16 %v4423, %v4422
    %v4444 = vpack.c.b16 %v4425, %v4424
    %v4445 = vpack.c.b16 %v4427, %v4426
    %v4465 = vsel %vm46, %v4328, 0
    %v4468 = vsel %vm46, %v4331, 0
    %v4471 = vsel %vm46, %v4334, 0
    %v4474 = vsel %vm46, %v4337, 0
    %v4477 = vsel %vm46, %v4340, 0
    %v4480 = vsel %vm46, %v4343, 0
    %v4483 = vsel %vm46, %v4346, 0
    %v4486 = vsel %vm46, %v4349, 0
    %4488 = vmatprep.subr.bf16.mxu0 0
    %4489 = vmatpush1.bf16.msra.mxu0 %v4428
    %4490 = vmatprep.subr.bf16.mxu0 0
    %4491 = vmatpush1.bf16.msra.mxu0 %v4429
    %4492 = vmatprep.subr.bf16.mxu0 0
    %4493 = vmatpush1.bf16.msra.mxu0 %v4430
    %4494 = vmatprep.subr.bf16.mxu0 0
    %4495 = vmatpush1.bf16.msra.mxu0 %v4431
    %4496 = vmatprep.subr.bf16.mxu0 0
    %4497 = vmatpush1.bf16.msra.mxu0 %v4432
    %4498 = vmatprep.subr.bf16.mxu0 0
    %4499 = vmatpush1.bf16.msra.mxu0 %v4433
    %4500 = vmatprep.subr.bf16.mxu0 0
    %4501 = vmatpush1.bf16.msra.mxu0 %v4434
    %4502 = vmatprep.subr.bf16.mxu0 0
    %4503 = vmatpush1.bf16.msra.mxu0 %v4435
    %4504 = vmatprep.subr.bf16.mxu0 0
    %4505 = vmatpush1.bf16.msra.mxu0 %v4436
    %4506 = vmatprep.subr.bf16.mxu0 0
    %4507 = vmatpush1.bf16.msra.mxu0 %v4437
    %4508 = vmatprep.subr.bf16.mxu0 0
    %4509 = vmatpush1.bf16.msra.mxu0 %v4438
    %4510 = vmatprep.subr.bf16.mxu0 0
    %4511 = vmatpush1.bf16.msra.mxu0 %v4439
    %4512 = vmatprep.subr.bf16.mxu0 0
    %4513 = vmatpush1.bf16.msra.mxu0 %v4440
    %4514 = vmatprep.subr.bf16.mxu0 0
    %4515 = vmatpush1.bf16.msra.mxu0 %v4441
    %4516 = vmatprep.subr.bf16.mxu0 0
    %4517 = vmatpush1.bf16.msra.mxu0 %v4442
    %4518 = vmatprep.subr.bf16.mxu0 0
    %4519 = vmatpush1.bf16.msra.mxu0 %v4443
    %4520 = vmatprep.mubr.bf16.mxu0 %v4327
    %4521 = vmatmul.mubr.bf16.gmra.mrb[0].mxu0 %v4326
    %v4522 = vpop.f32.mrb[0].mxu0
    %v4523 = vadd.f32 %v4354, %v4522
    %v4524 = vpop.f32.mrb[0].mxu0
    %v4525 = vpop.f32.mrb[0].mxu0
    %v4526 = vadd.f32 %v4354, %v4525
    %v4527 = vpop.f32.mrb[0].mxu0
    %4528 = vmatprep.mubr.bf16.mxu0 %v4330
    %4529 = vmatmul.mubr.bf16.gmra.mrb[0].mxu0 %v4329
    %v4530 = vpop.f32.mrb[0].mxu0
    %v4531 = vadd.f32 %v4354, %v4530
    %v4532 = vpop.f32.mrb[0].mxu0
    %v4533 = vpop.f32.mrb[0].mxu0
    %v4534 = vadd.f32 %v4354, %v4533
    %v4535 = vpop.f32.mrb[0].mxu0
    %4536 = vmatprep.mubr.bf16.mxu0 %v4333
    %4537 = vmatmul.mubr.bf16.gmra.mrb[0].mxu0 %v4332
    %v4538 = vpop.f32.mrb[0].mxu0
    %v4539 = vadd.f32 %v4354, %v4538
    %v4540 = vpop.f32.mrb[0].mxu0
    %v4541 = vpop.f32.mrb[0].mxu0
    %v4542 = vadd.f32 %v4354, %v4541
    %v4543 = vpop.f32.mrb[0].mxu0
    %4544 = vmatprep.mubr.bf16.mxu0 %v4336
    %4545 = vmatmul.mubr.bf16.gmra.mrb[0].mxu0 %v4335
    %v4546 = vpop.f32.mrb[0].mxu0
    %v4547 = vadd.f32 %v4354, %v4546
    %v4548 = vpop.f32.mrb[0].mxu0
    %v4549 = vpop.f32.mrb[0].mxu0
    %v4550 = vadd.f32 %v4354, %v4549
    %v4551 = vpop.f32.mrb[0].mxu0
    %4552 = vmatprep.mubr.bf16.mxu0 %v4339
    %4553 = vmatmul.mubr.bf16.gmra.mrb[0].mxu0 %v4338
    %v4554 = vpop.f32.mrb[0].mxu0
    %v4555 = vadd.f32 %v4354, %v4554
    %v4556 = vpop.f32.mrb[0].mxu0
    %v4557 = vpop.f32.mrb[0].mxu0
    %v4558 = vadd.f32 %v4354, %v4557
    %v4559 = vpop.f32.mrb[0].mxu0
    %4560 = vmatprep.mubr.bf16.mxu0 %v4342
    %4561 = vmatmul.mubr.bf16.gmra.mrb[0].mxu0 %v4341
    %v4562 = vpop.f32.mrb[0].mxu0
    %v4563 = vadd.f32 %v4354, %v4562
    %v4564 = vpop.f32.mrb[0].mxu0
    %v4565 = vpop.f32.mrb[0].mxu0
    %v4566 = vadd.f32 %v4354, %v4565
    %v4567 = vpop.f32.mrb[0].mxu0
    %4568 = vmatprep.mubr.bf16.mxu0 %v4345
    %4569 = vmatmul.mubr.bf16.gmra.mrb[0].mxu0 %v4344
    %v4570 = vpop.f32.mrb[0].mxu0
    %v4571 = vadd.f32 %v4354, %v4570
    %v4572 = vpop.f32.mrb[0].mxu0
    %v4573 = vpop.f32.mrb[0].mxu0
    %v4574 = vadd.f32 %v4354, %v4573
    %v4575 = vpop.f32.mrb[0].mxu0
    %4576 = vmatprep.mubr.bf16.mxu0 %v4348
    %4577 = vmatmul.mubr.bf16.gmra.mrb[0].mxu0 %v4347
    %v4578 = vpop.f32.mrb[0].mxu0
    %v4579 = vadd.f32 %v4354, %v4578
    %v4580 = vpop.f32.mrb[0].mxu0
    %v4581 = vpop.f32.mrb[0].mxu0
    %v4582 = vadd.f32 %v4354, %v4581
    %v4583 = vpop.f32.mrb[0].mxu0
    %4584 = vdwg.mxu0
    %4585 = vmatprep.subr.bf16.mxu0 0
    %4586 = vmatpush1.bf16.msra.mxu0 %v4444
    %4587 = vmatprep.subr.bf16.mxu0 0
    %4588 = vmatpush1.bf16.msra.mxu0 %v4445
    %4589 = vmatprep.subr.bf16.mxu0 0
    %4590 = vmatpush1.bf16.msra.mxu0 0
    %4591 = vmatprep.subr.bf16.mxu0 0
    %4592 = vmatpush1.bf16.msra.mxu0 0
    %4593 = vmatprep.subr.bf16.mxu0 0
    %4594 = vmatpush1.bf16.msra.mxu0 0
    %4595 = vmatprep.subr.bf16.mxu0 0
    %4596 = vmatpush1.bf16.msra.mxu0 0
    %4597 = vmatprep.subr.bf16.mxu0 0
    %4598 = vmatpush1.bf16.msra.mxu0 0
    %4599 = vmatprep.subr.bf16.mxu0 0
    %4600 = vmatpush1.bf16.msra.mxu0 0
    %4601 = vmatprep.subr.bf16.mxu0 0
    %4602 = vmatpush1.bf16.msra.mxu0 0
    %4603 = vmatprep.subr.bf16.mxu0 0
    %4604 = vmatpush1.bf16.msra.mxu0 0
    %4605 = vmatprep.subr.bf16.mxu0 0
    %4606 = vmatpush1.bf16.msra.mxu0 0
    %4607 = vmatprep.subr.bf16.mxu0 0
    %4608 = vmatpush1.bf16.msra.mxu0 0
    %4609 = vmatprep.subr.bf16.mxu0 0
    %4610 = vmatpush1.bf16.msra.mxu0 0
    %4611 = vmatprep.subr.bf16.mxu0 0
    %4612 = vmatpush1.bf16.msra.mxu0 0
    %4613 = vmatprep.subr.bf16.mxu0 0
    %4614 = vmatpush1.bf16.msra.mxu0 0
    %4615 = vmatprep.subr.bf16.mxu0 0
    %4616 = vmatpush1.bf16.msra.mxu0 0
    %4617 = vmatprep.mubr.bf16.mxu0 0
    %4618 = vmatmul.mubr.bf16.gmra.mrb[0].mxu0 %v4465
    %v4619 = vpop.f32.mrb[0].mxu0
    %v4620 = vadd.f32 %v4523, %v4619
    %v4621 = vpop.f32.mrb[0].mxu0
    %v4622 = vpop.f32.mrb[0].mxu0
    %v4623 = vadd.f32 %v4526, %v4622
    %v4624 = vpop.f32.mrb[0].mxu0
    %4625 = vmatprep.mubr.bf16.mxu0 0
    %4626 = vmatmul.mubr.bf16.gmra.mrb[0].mxu0 %v4468
    %v4627 = vpop.f32.mrb[0].mxu0
    %v4628 = vadd.f32 %v4531, %v4627
    %v4629 = vpop.f32.mrb[0].mxu0
    %v4630 = vpop.f32.mrb[0].mxu0
    %v4631 = vadd.f32 %v4534, %v4630
    %v4632 = vpop.f32.mrb[0].mxu0
    %4633 = vmatprep.mubr.bf16.mxu0 0
    %4634 = vmatmul.mubr.bf16.gmra.mrb[0].mxu0 %v4471
    %v4635 = vpop.f32.mrb[0].mxu0
    %v4636 = vadd.f32 %v4539, %v4635
    %v4637 = vpop.f32.mrb[0].mxu0
    %v4638 = vpop.f32.mrb[0].mxu0
    %v4639 = vadd.f32 %v4542, %v4638
    %v4640 = vpop.f32.mrb[0].mxu0
    %4641 = vmatprep.mubr.bf16.mxu0 0
    %4642 = vmatmul.mubr.bf16.gmra.mrb[0].mxu0 %v4474
    %v4643 = vpop.f32.mrb[0].mxu0
    %v4644 = vadd.f32 %v4547, %v4643
    %v4645 = vpop.f32.mrb[0].mxu0
    %v4646 = vpop.f32.mrb[0].mxu0
    %v4647 = vadd.f32 %v4550, %v4646
    %v4648 = vpop.f32.mrb[0].mxu0
    %4649 = vmatprep.mubr.bf16.mxu0 0
    %4650 = vmatmul.mubr.bf16.gmra.mrb[0].mxu0 %v4477
    %v4651 = vpop.f32.mrb[0].mxu0
    %v4652 = vadd.f32 %v4555, %v4651
    %v4653 = vpop.f32.mrb[0].mxu0
    %v4654 = vpop.f32.mrb[0].mxu0
    %v4655 = vadd.f32 %v4558, %v4654
    %v4656 = vpop.f32.mrb[0].mxu0
    %4657 = vmatprep.mubr.bf16.mxu0 0
    %4658 = vmatmul.mubr.bf16.gmra.mrb[0].mxu0 %v4480
    %v4659 = vpop.f32.mrb[0].mxu0
    %v4660 = vadd.f32 %v4563, %v4659
    %v4661 = vpop.f32.mrb[0].mxu0
    %v4662 = vpop.f32.mrb[0].mxu0
    %v4663 = vadd.f32 %v4566, %v4662
    %v4664 = vpop.f32.mrb[0].mxu0
    %4665 = vmatprep.mubr.bf16.mxu0 0
    %4666 = vmatmul.mubr.bf16.gmra.mrb[0].mxu0 %v4483
    %v4667 = vpop.f32.mrb[0].mxu0
    %v4668 = vadd.f32 %v4571, %v4667
    %v4669 = vpop.f32.mrb[0].mxu0
    %v4670 = vpop.f32.mrb[0].mxu0
    %v4671 = vadd.f32 %v4574, %v4670
    %v4672 = vpop.f32.mrb[0].mxu0
    %4673 = vmatprep.mubr.bf16.mxu0 0
    %4674 = vmatmul.mubr.bf16.gmra.mrb[0].mxu0 %v4486
    %v4675 = vpop.f32.mrb[0].mxu0
    %v4676 = vadd.f32 %v4579, %v4675
    %v4677 = vpop.f32.mrb[0].mxu0
    %v4678 = vpop.f32.mrb[0].mxu0
    %v4679 = vadd.f32 %v4582, %v4678
    %v4680 = vpop.f32.mrb[0].mxu0
    %4681 = vdwg.mxu0
    %v4682 = vld [vmem:[%s0] sm:$0xff]
    %v4683 = vld [vmem:[%s0 + $0x8] sm:$0xff]
    %v4684 = vld [vmem:[%s0 + $0x10] sm:$0xff]
    %v4685 = vld [vmem:[%s0 + $0x18] sm:$0xff]
    %v4686 = vld [vmem:[%s0 + $0x20] sm:$0xff]
    %v4687 = vld [vmem:[%s0 + $0x28] sm:$0xff]
    %v4688 = vld [vmem:[%s0 + $0x30] sm:$0xff]
    %v4689 = vld [vmem:[%s0 + $0x38] sm:$0xff]
    %v4690 = vld [vmem:[%s0 + $0x40] sm:$0xff]
    %v4691 = vld [vmem:[%s0 + $0x48] sm:$0xff]
    %v4692 = vld [vmem:[%s0 + $0x50] sm:$0xff]
    %v4693 = vld [vmem:[%s0 + $0x58] sm:$0xff]
    %v4694 = vld [vmem:[%s0 + $0x60] sm:$0xff]
    %v4695 = vld [vmem:[%s0 + $0x68] sm:$0xff]
    %v4696 = vld [vmem:[%s0 + $0x70] sm:$0xff]
    %v4697 = vld [vmem:[%s0 + $0x78] sm:$0xff]
    %v4698 = vadd.f32 %v4620, %v4682
    %v4699 = vadd.f32 %v4623, %v4683
    %v4700 = vadd.f32 %v4628, %v4684
    %v4701 = vadd.f32 %v4631, %v4685
    %v4702 = vadd.f32 %v4636, %v4686
    %v4703 = vadd.f32 %v4639, %v4687
    %v4704 = vadd.f32 %v4644, %v4688
    %v4705 = vadd.f32 %v4647, %v4689
    %v4706 = vadd.f32 %v4652, %v4690
    %v4707 = vadd.f32 %v4655, %v4691
    %v4708 = vadd.f32 %v4660, %v4692
    %v4709 = vadd.f32 %v4663, %v4693
    %v4710 = vadd.f32 %v4668, %v4694
    %v4711 = vadd.f32 %v4671, %v4695
    %v4712 = vadd.f32 %v4676, %v4696
    %v4713 = vadd.f32 %v4679, %v4697
    %4714 = vst.msk [vmem:[#allocation4] sm:$0xff] %vm46, %v4698
    %4715 = vst.msk [vmem:[#allocation4 + $0x8] sm:$0xff] %vm46, %v4699
    %4716 = vst.msk [vmem:[#allocation4 + $0x10] sm:$0xff] %vm46, %v4700
    %4717 = vst.msk [vmem:[#allocation4 + $0x18] sm:$0xff] %vm46, %v4701
    %4718 = vst.msk [vmem:[#allocation4 + $0x20] sm:$0xff] %vm46, %v4702
    %4719 = vst.msk [vmem:[#allocation4 + $0x28] sm:$0xff] %vm46, %v4703
    %4720 = vst.msk [vmem:[#allocation4 + $0x30] sm:$0xff] %vm46, %v4704
    %4721 = vst.msk [vmem:[#allocation4 + $0x38] sm:$0xff] %vm46, %v4705
    %4722 = vst.msk [vmem:[#allocation4 + $0x40] sm:$0xff] %vm46, %v4706
    %4723 = vst.msk [vmem:[#allocation4 + $0x48] sm:$0xff] %vm46, %v4707
    %4724 = vst.msk [vmem:[#allocation4 + $0x50] sm:$0xff] %vm46, %v4708
    %4725 = vst.msk [vmem:[#allocation4 + $0x58] sm:$0xff] %vm46, %v4709
    %4726 = vst.msk [vmem:[#allocation4 + $0x60] sm:$0xff] %vm46, %v4710
    %4727 = vst.msk [vmem:[#allocation4 + $0x68] sm:$0xff] %vm46, %v4711
    %4728 = vst.msk [vmem:[#allocation4 + $0x70] sm:$0xff] %vm46, %v4712
    %4729 = vst.msk [vmem:[#allocation4 + $0x78] sm:$0xff] %vm46, %v4713
    %v4730 = vld [vmem:[%s11] sm:$0x1]
    %v4731 = vld [vmem:[%s12] sm:$0x1]
    %v4732 = vsel %vm46, %v4698, 0.0
    %4733 = vadd.xlane.f32.xlu0 %v4732
    %v4734 = vpop.xlane.xlu0 %4733
    %v4735 = vsel %vm46, %v4699, 0.0
    %4736 = vadd.xlane.f32.xlu0 %v4735
    %v4737 = vpop.xlane.xlu0 %4736
    %v4738 = vsel %vm46, %v4700, 0.0
    %4739 = vadd.xlane.f32.xlu0 %v4738
    %v4740 = vpop.xlane.xlu0 %4739
    %v4741 = vsel %vm46, %v4701, 0.0
    %4742 = vadd.xlane.f32.xlu0 %v4741
    %v4743 = vpop.xlane.xlu0 %4742
    %v4744 = vsel %vm46, %v4702, 0.0
    %4745 = vadd.xlane.f32.xlu0 %v4744
    %v4746 = vpop.xlane.xlu0 %4745
    %v4747 = vsel %vm46, %v4703, 0.0
    %4748 = vadd.xlane.f32.xlu0 %v4747
    %v4749 = vpop.xlane.xlu0 %4748
    %v4750 = vsel %vm46, %v4704, 0.0
    %4751 = vadd.xlane.f32.xlu0 %v4750
    %v4752 = vpop.xlane.xlu0 %4751
    %v4753 = vsel %vm46, %v4705, 0.0
    %4754 = vadd.xlane.f32.xlu0 %v4753
    %v4755 = vpop.xlane.xlu0 %4754
    %v4756 = vsel %vm46, %v4706, 0.0
    %4757 = vadd.xlane.f32.xlu0 %v4756
    %v4758 = vpop.xlane.xlu0 %4757
    %v4759 = vsel %vm46, %v4707, 0.0
    %4760 = vadd.xlane.f32.xlu0 %v4759
    %v4761 = vpop.xlane.xlu0 %4760
    %v4762 = vsel %vm46, %v4708, 0.0
    %4763 = vadd.xlane.f32.xlu0 %v4762
    %v4764 = vpop.xlane.xlu0 %4763
    %v4765 = vsel %vm46, %v4709, 0.0
    %4766 = vadd.xlane.f32.xlu0 %v4765
    %v4767 = vpop.xlane.xlu0 %4766
    %v4768 = vsel %vm46, %v4710, 0.0
    %4769 = vadd.xlane.f32.xlu0 %v4768
    %v4770 = vpop.xlane.xlu0 %4769
    %v4771 = vsel %vm46, %v4711, 0.0
    %4772 = vadd.xlane.f32.xlu0 %v4771
    %v4773 = vpop.xlane.xlu0 %4772
    %v4774 = vsel %vm46, %v4712, 0.0
    %4775 = vadd.xlane.f32.xlu0 %v4774
    %v4776 = vpop.xlane.xlu0 %4775
    %v4777 = vsel %vm46, %v4713, 0.0
    %4778 = vadd.xlane.f32.xlu0 %v4777
    %v4779 = vpop.xlane.xlu0 %4778
    %v4780 = vmul.f32 %v4734, %v1109
    %v4781 = vmul.f32 %v4737, %v1109
    %v4782 = vmul.f32 %v4740, %v1109
    %v4783 = vmul.f32 %v4743, %v1109
    %v4784 = vmul.f32 %v4746, %v1109
    %v4785 = vmul.f32 %v4749, %v1109
    %v4786 = vmul.f32 %v4752, %v1109
    %v4787 = vmul.f32 %v4755, %v1109
    %v4788 = vmul.f32 %v4758, %v1109
    %v4789 = vmul.f32 %v4761, %v1109
    %v4790 = vmul.f32 %v4764, %v1109
    %v4791 = vmul.f32 %v4767, %v1109
    %v4792 = vmul.f32 %v4770, %v1109
    %v4793 = vmul.f32 %v4773, %v1109
    %v4794 = vmul.f32 %v4776, %v1109
    %v4795 = vmul.f32 %v4779, %v1109
    %v4796 = vsub.f32 %v4698, %v4780
    %v4797 = vsub.f32 %v4699, %v4781
    %v4798 = vsub.f32 %v4700, %v4782
    %v4799 = vsub.f32 %v4701, %v4783
    %v4800 = vsub.f32 %v4702, %v4784
    %v4801 = vsub.f32 %v4703, %v4785
    %v4802 = vsub.f32 %v4704, %v4786
    %v4803 = vsub.f32 %v4705, %v4787
    %v4804 = vsub.f32 %v4706, %v4788
    %v4805 = vsub.f32 %v4707, %v4789
    %v4806 = vsub.f32 %v4708, %v4790
    %v4807 = vsub.f32 %v4709, %v4791
    %v4808 = vsub.f32 %v4710, %v4792
    %v4809 = vsub.f32 %v4711, %v4793
    %v4810 = vsub.f32 %v4712, %v4794
    %v4811 = vsub.f32 %v4713, %v4795
    %v4812 = vmul.f32 %v4796, %v4796
    %v4813 = vmul.f32 %v4797, %v4797
    %v4814 = vmul.f32 %v4798, %v4798
    %v4815 = vmul.f32 %v4799, %v4799
    %v4816 = vmul.f32 %v4800, %v4800
    %v4817 = vmul.f32 %v4801, %v4801
    %v4818 = vmul.f32 %v4802, %v4802
    %v4819 = vmul.f32 %v4803, %v4803
    %v4820 = vmul.f32 %v4804, %v4804
    %v4821 = vmul.f32 %v4805, %v4805
    %v4822 = vmul.f32 %v4806, %v4806
    %v4823 = vmul.f32 %v4807, %v4807
    %v4824 = vmul.f32 %v4808, %v4808
    %v4825 = vmul.f32 %v4809, %v4809
    %v4826 = vmul.f32 %v4810, %v4810
    %v4827 = vmul.f32 %v4811, %v4811
    %v4828 = vsel %vm46, %v4812, 0.0
    %4829 = vadd.xlane.f32.xlu0 %v4828
    %v4830 = vpop.xlane.xlu0 %4829
    %v4831 = vsel %vm46, %v4813, 0.0
    %4832 = vadd.xlane.f32.xlu0 %v4831
    %v4833 = vpop.xlane.xlu0 %4832
    %v4834 = vsel %vm46, %v4814, 0.0
    %4835 = vadd.xlane.f32.xlu0 %v4834
    %v4836 = vpop.xlane.xlu0 %4835
    %v4837 = vsel %vm46, %v4815, 0.0
    %4838 = vadd.xlane.f32.xlu0 %v4837
    %v4839 = vpop.xlane.xlu0 %4838
    %v4840 = vsel %vm46, %v4816, 0.0
    %4841 = vadd.xlane.f32.xlu0 %v4840
    %v4842 = vpop.xlane.xlu0 %4841
    %v4843 = vsel %vm46, %v4817, 0.0
    %4844 = vadd.xlane.f32.xlu0 %v4843
    %v4845 = vpop.xlane.xlu0 %4844
    %v4846 = vsel %vm46, %v4818, 0.0
    %4847 = vadd.xlane.f32.xlu0 %v4846
    %v4848 = vpop.xlane.xlu0 %4847
    %v4849 = vsel %vm46, %v4819, 0.0
    %4850 = vadd.xlane.f32.xlu0 %v4849
    %v4851 = vpop.xlane.xlu0 %4850
    %v4852 = vsel %vm46, %v4820, 0.0
    %4853 = vadd.xlane.f32.xlu0 %v4852
    %v4854 = vpop.xlane.xlu0 %4853
    %v4855 = vsel %vm46, %v4821, 0.0
    %4856 = vadd.xlane.f32.xlu0 %v4855
    %v4857 = vpop.xlane.xlu0 %4856
    %v4858 = vsel %vm46, %v4822, 0.0
    %4859 = vadd.xlane.f32.xlu0 %v4858
    %v4860 = vpop.xlane.xlu0 %4859
    %v4861 = vsel %vm46, %v4823, 0.0
    %4862 = vadd.xlane.f32.xlu0 %v4861
    %v4863 = vpop.xlane.xlu0 %4862
    %v4864 = vsel %vm46, %v4824, 0.0
    %4865 = vadd.xlane.f32.xlu0 %v4864
    %v4866 = vpop.xlane.xlu0 %4865
    %v4867 = vsel %vm46, %v4825, 0.0
    %4868 = vadd.xlane.f32.xlu0 %v4867
    %v4869 = vpop.xlane.xlu0 %4868
    %v4870 = vsel %vm46, %v4826, 0.0
    %4871 = vadd.xlane.f32.xlu0 %v4870
    %v4872 = vpop.xlane.xlu0 %4871
    %v4873 = vsel %vm46, %v4827, 0.0
    %4874 = vadd.xlane.f32.xlu0 %v4873
    %v4875 = vpop.xlane.xlu0 %4874
    %v4876 = vmul.f32 %v4830, %v1109
    %v4877 = vmul.f32 %v4833, %v1109
    %v4878 = vmul.f32 %v4836, %v1109
    %v4879 = vmul.f32 %v4839, %v1109
    %v4880 = vmul.f32 %v4842, %v1109
    %v4881 = vmul.f32 %v4845, %v1109
    %v4882 = vmul.f32 %v4848, %v1109
    %v4883 = vmul.f32 %v4851, %v1109
    %v4884 = vmul.f32 %v4854, %v1109
    %v4885 = vmul.f32 %v4857, %v1109
    %v4886 = vmul.f32 %v4860, %v1109
    %v4887 = vmul.f32 %v4863, %v1109
    %v4888 = vmul.f32 %v4866, %v1109
    %v4889 = vmul.f32 %v4869, %v1109
    %v4890 = vmul.f32 %v4872, %v1109
    %v4891 = vmul.f32 %v4875, %v1109
    %v4892 = vadd.f32 %v4876, 1e-05
    %v4893 = vadd.f32 %v4877, 1e-05
    %v4894 = vadd.f32 %v4878, 1e-05
    %v4895 = vadd.f32 %v4879, 1e-05
    %v4896 = vadd.f32 %v4880, 1e-05
    %v4897 = vadd.f32 %v4881, 1e-05
    %v4898 = vadd.f32 %v4882, 1e-05
    %v4899 = vadd.f32 %v4883, 1e-05
    %v4900 = vadd.f32 %v4884, 1e-05
    %v4901 = vadd.f32 %v4885, 1e-05
    %v4902 = vadd.f32 %v4886, 1e-05
    %v4903 = vadd.f32 %v4887, 1e-05
    %v4904 = vadd.f32 %v4888, 1e-05
    %v4905 = vadd.f32 %v4889, 1e-05
    %v4906 = vadd.f32 %v4890, 1e-05
    %v4907 = vadd.f32 %v4891, 1e-05
    %v4908 = vrsqrt.pop %v4892
    %v4909 = vrsqrt.pop %v4893
    %v4910 = vrsqrt.pop %v4894
    %v4911 = vrsqrt.pop %v4895
    %v4912 = vrsqrt.pop %v4896
    %v4913 = vrsqrt.pop %v4897
    %v4914 = vrsqrt.pop %v4898
    %v4915 = vrsqrt.pop %v4899
    %v4916 = vrsqrt.pop %v4900
    %v4917 = vrsqrt.pop %v4901
    %v4918 = vrsqrt.pop %v4902
    %v4919 = vrsqrt.pop %v4903
    %v4920 = vrsqrt.pop %v4904
    %v4921 = vrsqrt.pop %v4905
    %v4922 = vrsqrt.pop %v4906
    %v4923 = vrsqrt.pop %v4907
    %v4924 = vmul.f32 %v4796, %v4908
    %v4925 = vmul.f32 %v4797, %v4909
    %v4926 = vmul.f32 %v4798, %v4910
    %v4927 = vmul.f32 %v4799, %v4911
    %v4928 = vmul.f32 %v4800, %v4912
    %v4929 = vmul.f32 %v4801, %v4913
    %v4930 = vmul.f32 %v4802, %v4914
    %v4931 = vmul.f32 %v4803, %v4915
    %v4932 = vmul.f32 %v4804, %v4916
    %v4933 = vmul.f32 %v4805, %v4917
    %v4934 = vmul.f32 %v4806, %v4918
    %v4935 = vmul.f32 %v4807, %v4919
    %v4936 = vmul.f32 %v4808, %v4920
    %v4937 = vmul.f32 %v4809, %v4921
    %v4938 = vmul.f32 %v4810, %v4922
    %v4939 = vmul.f32 %v4811, %v4923
    %v4941 = vlaneseq
    %v4942 = vshrl.u32 %v4941, 7
    %v4943 = vsub.s32 0, %v4942
    %v4944 = vrot.slane %v4730, %v4943
    %v4946 = vmul.f32 %v4924, %v4944
    %v4947 = vmul.f32 %v4925, %v4944
    %v4948 = vmul.f32 %v4926, %v4944
    %v4949 = vmul.f32 %v4927, %v4944
    %v4950 = vmul.f32 %v4928, %v4944
    %v4951 = vmul.f32 %v4929, %v4944
    %v4952 = vmul.f32 %v4930, %v4944
    %v4953 = vmul.f32 %v4931, %v4944
    %v4954 = vmul.f32 %v4932, %v4944
    %v4955 = vmul.f32 %v4933, %v4944
    %v4956 = vmul.f32 %v4934, %v4944
    %v4957 = vmul.f32 %v4935, %v4944
    %v4958 = vmul.f32 %v4936, %v4944
    %v4959 = vmul.f32 %v4937, %v4944
    %v4960 = vmul.f32 %v4938, %v4944
    %v4961 = vmul.f32 %v4939, %v4944
    %v4963 = vlaneseq
    %v4964 = vshrl.u32 %v4963, 7
    %v4965 = vsub.s32 0, %v4964
    %v4966 = vrot.slane %v4731, %v4965
    %v4968 = vadd.f32 %v4946, %v4966
    %v4969 = vadd.f32 %v4947, %v4966
    %v4970 = vadd.f32 %v4948, %v4966
    %v4971 = vadd.f32 %v4949, %v4966
    %v4972 = vadd.f32 %v4950, %v4966
    %v4973 = vadd.f32 %v4951, %v4966
    %v4974 = vadd.f32 %v4952, %v4966
    %v4975 = vadd.f32 %v4953, %v4966
    %v4976 = vadd.f32 %v4954, %v4966
    %v4977 = vadd.f32 %v4955, %v4966
    %v4978 = vadd.f32 %v4956, %v4966
    %v4979 = vadd.f32 %v4957, %v4966
    %v4980 = vadd.f32 %v4958, %v4966
    %v4981 = vadd.f32 %v4959, %v4966
    %v4982 = vadd.f32 %v4960, %v4966
    %v4983 = vadd.f32 %v4961, %v4966
    %4984 = vst.msk [vmem:[%s148 + $0x8] sm:$0xff] %vm46, %v4968
    %4985 = vst.msk [vmem:[%s148 + $0x20] sm:$0xff] %vm46, %v4969
    %4986 = vst.msk [vmem:[%s148 + $0x38] sm:$0xff] %vm46, %v4970
    %4987 = vst.msk [vmem:[%s148 + $0x50] sm:$0xff] %vm46, %v4971
    %4988 = vst.msk [vmem:[%s148 + $0x68] sm:$0xff] %vm46, %v4972
    %4989 = vst.msk [vmem:[%s148 + $0x80] sm:$0xff] %vm46, %v4973
    %4990 = vst.msk [vmem:[%s148 + $0x98] sm:$0xff] %vm46, %v4974
    %4991 = vst.msk [vmem:[%s148 + $0xb0] sm:$0xff] %vm46, %v4975
    %4992 = vst.msk [vmem:[%s148 + $0x158] sm:$0xff] %vm46, %v4976
    %4993 = vst.msk [vmem:[%s148 + $0x170] sm:$0xff] %vm46, %v4977
    %4994 = vst.msk [vmem:[%s148 + $0x188] sm:$0xff] %vm46, %v4978
    %4995 = vst.msk [vmem:[%s148 + $0x1a0] sm:$0xff] %vm46, %v4979
    %4996 = vst.msk [vmem:[%s148 + $0x1b8] sm:$0xff] %vm46, %v4980
    %4997 = vst.msk [vmem:[%s148 + $0x1d0] sm:$0xff] %vm46, %v4981
    %4998 = vst.msk [vmem:[%s148 + $0x1e8] sm:$0xff] %vm46, %v4982
    %4999 = vst.msk [vmem:[%s148 + $0x200] sm:$0xff] %vm46, %v4983
    %v5000 = vld [vmem:[%s165 + $0x7] sm:$0xff]
    %v5001 = vld [vmem:[%s165 + $0x1f] sm:$0xff]
    %v5002 = vld [vmem:[%s165 + $0x37] sm:$0xff]
    %v5003 = vld [vmem:[%s165 + $0x4f] sm:$0xff]
    %v5004 = vld [vmem:[%s165 + $0x67] sm:$0xff]
    %v5005 = vld [vmem:[%s165 + $0x7f] sm:$0xff]
    %v5006 = vld [vmem:[%s165 + $0x97] sm:$0xff]
    %v5007 = vld [vmem:[%s165 + $0xaf] sm:$0xff]
    %v5008 = vld [vmem:[%s165 + $0x157] sm:$0xff]
    %v5009 = vld [vmem:[%s165 + $0x16f] sm:$0xff]
    %v5010 = vld [vmem:[%s165 + $0x187] sm:$0xff]
    %v5011 = vld [vmem:[%s165 + $0x19f] sm:$0xff]
    %v5012 = vld [vmem:[%s165 + $0x1b7] sm:$0xff]
    %v5013 = vld [vmem:[%s165 + $0x1cf] sm:$0xff]
    %v5014 = vld [vmem:[%s165 + $0x1e7] sm:$0xff]
    %v5015 = vld [vmem:[%s165 + $0x1ff] sm:$0xff]
    %v5016 = vpack.c.bf16 %v5001, %v5000
    %v5017 = vpack.c.bf16 %v5003, %v5002
    %v5018 = vpack.c.bf16 %v5005, %v5004
    %v5019 = vpack.c.bf16 %v5007, %v5006
    %v5020 = vpack.c.bf16 %v5009, %v5008
    %v5021 = vpack.c.bf16 %v5011, %v5010
    %v5022 = vpack.c.bf16 %v5013, %v5012
    %v5023 = vpack.c.bf16 %v5015, %v5014
    %5024 = vst.msk [vmem:[#allocation3] sm:$0xff] %vm46, %v5016
    %5025 = vst.msk [vmem:[#allocation3 + $0x18] sm:$0xff] %vm46, %v5017
    %5026 = vst.msk [vmem:[#allocation3 + $0x30] sm:$0xff] %vm46, %v5018
    %5027 = vst.msk [vmem:[#allocation3 + $0x48] sm:$0xff] %vm46, %v5019
    %5028 = vst.msk [vmem:[#allocation3 + $0x60] sm:$0xff] %vm46, %v5020
    %5029 = vst.msk [vmem:[#allocation3 + $0x78] sm:$0xff] %vm46, %v5021
    %5030 = vst.msk [vmem:[#allocation3 + $0x90] sm:$0xff] %vm46, %v5022
    %5031 = vst.msk [vmem:[#allocation3 + $0xa8] sm:$0xff] %vm46, %v5023
    %v5032 = vld [vmem:[%s165 + $0x8] sm:$0xff]
    %v5033 = vld [vmem:[%s165 + $0x20] sm:$0xff]
    %v5034 = vld [vmem:[%s165 + $0x38] sm:$0xff]
    %v5035 = vld [vmem:[%s165 + $0x50] sm:$0xff]
    %v5036 = vld [vmem:[%s165 + $0x68] sm:$0xff]
    %v5037 = vld [vmem:[%s165 + $0x80] sm:$0xff]
    %v5038 = vld [vmem:[%s165 + $0x98] sm:$0xff]
    %v5039 = vld [vmem:[%s165 + $0xb0] sm:$0xff]
    %v5040 = vld [vmem:[%s165 + $0x158] sm:$0xff]
    %v5041 = vld [vmem:[%s165 + $0x170] sm:$0xff]
    %v5042 = vld [vmem:[%s165 + $0x188] sm:$0xff]
    %v5043 = vld [vmem:[%s165 + $0x1a0] sm:$0xff]
    %v5044 = vld [vmem:[%s165 + $0x1b8] sm:$0xff]
    %v5045 = vld [vmem:[%s165 + $0x1d0] sm:$0xff]
    %v5046 = vld [vmem:[%s165 + $0x1e8] sm:$0xff]
    %v5047 = vld [vmem:[%s165 + $0x200] sm:$0xff]
    %v5048 = vpack.c.bf16 %v5033, %v5032
    %v5049 = vpack.c.bf16 %v5035, %v5034
    %v5050 = vpack.c.bf16 %v5037, %v5036
    %v5051 = vpack.c.bf16 %v5039, %v5038
    %v5052 = vpack.c.bf16 %v5041, %v5040
    %v5053 = vpack.c.bf16 %v5043, %v5042
    %v5054 = vpack.c.bf16 %v5045, %v5044
    %v5055 = vpack.c.bf16 %v5047, %v5046
    %5064 = vrot.lane.b32.xlu0 %v5048, 32
    %v5065 = vpop.permute.xlu0 %5064
    %5066 = vrot.lane.b32.xlu0 %v5049, 32
    %v5067 = vpop.permute.xlu0 %5066
    %5068 = vrot.lane.b32.xlu0 %v5050, 32
    %v5069 = vpop.permute.xlu0 %5068
    %5070 = vrot.lane.b32.xlu0 %v5051, 32
    %v5071 = vpop.permute.xlu0 %5070
    %5072 = vrot.lane.b32.xlu0 %v5052, 32
    %v5073 = vpop.permute.xlu0 %5072
    %5074 = vrot.lane.b32.xlu0 %v5053, 32
    %v5075 = vpop.permute.xlu0 %5074
    %5076 = vrot.lane.b32.xlu0 %v5054, 32
    %v5077 = vpop.permute.xlu0 %5076
    %5078 = vrot.lane.b32.xlu0 %v5055, 32
    %v5079 = vpop.permute.xlu0 %5078
    %5088 = vst.msk [vmem:[#allocation3] sm:$0xff] %vm254, %v5065
    %5089 = vst.msk [vmem:[#allocation3 + $0x18] sm:$0xff] %vm254, %v5067
    %5090 = vst.msk [vmem:[#allocation3 + $0x30] sm:$0xff] %vm254, %v5069
    %5091 = vst.msk [vmem:[#allocation3 + $0x48] sm:$0xff] %vm254, %v5071
    %5092 = vst.msk [vmem:[#allocation3 + $0x60] sm:$0xff] %vm254, %v5073
    %5093 = vst.msk [vmem:[#allocation3 + $0x78] sm:$0xff] %vm254, %v5075
    %5094 = vst.msk [vmem:[#allocation3 + $0x90] sm:$0xff] %vm254, %v5077
    %5095 = vst.msk [vmem:[#allocation3 + $0xa8] sm:$0xff] %vm254, %v5079
    %v5096 = vld [vmem:[%s165 + $0x9] sm:$0xff]
    %v5097 = vld [vmem:[%s165 + $0x21] sm:$0xff]
    %v5098 = vld [vmem:[%s165 + $0x39] sm:$0xff]
    %v5099 = vld [vmem:[%s165 + $0x51] sm:$0xff]
    %v5100 = vld [vmem:[%s165 + $0x69] sm:$0xff]
    %v5101 = vld [vmem:[%s165 + $0x81] sm:$0xff]
    %v5102 = vld [vmem:[%s165 + $0x99] sm:$0xff]
    %v5103 = vld [vmem:[%s165 + $0xb1] sm:$0xff]
    %v5104 = vld [vmem:[%s165 + $0x159] sm:$0xff]
    %v5105 = vld [vmem:[%s165 + $0x171] sm:$0xff]
    %v5106 = vld [vmem:[%s165 + $0x189] sm:$0xff]
    %v5107 = vld [vmem:[%s165 + $0x1a1] sm:$0xff]
    %v5108 = vld [vmem:[%s165 + $0x1b9] sm:$0xff]
    %v5109 = vld [vmem:[%s165 + $0x1d1] sm:$0xff]
    %v5110 = vld [vmem:[%s165 + $0x1e9] sm:$0xff]
    %v5111 = vld [vmem:[%s165 + $0x201] sm:$0xff]
    %v5112 = vpack.c.bf16 %v5097, %v5096
    %v5113 = vpack.c.bf16 %v5099, %v5098
    %v5114 = vpack.c.bf16 %v5101, %v5100
    %v5115 = vpack.c.bf16 %v5103, %v5102
    %v5116 = vpack.c.bf16 %v5105, %v5104
    %v5117 = vpack.c.bf16 %v5107, %v5106
    %v5118 = vpack.c.bf16 %v5109, %v5108
    %v5119 = vpack.c.bf16 %v5111, %v5110
    %5128 = vrot.lane.b32.xlu0 %v5112, 64
    %v5129 = vpop.permute.xlu0 %5128
    %5130 = vrot.lane.b32.xlu0 %v5113, 64
    %v5131 = vpop.permute.xlu0 %5130
    %5132 = vrot.lane.b32.xlu0 %v5114, 64
    %v5133 = vpop.permute.xlu0 %5132
    %5134 = vrot.lane.b32.xlu0 %v5115, 64
    %v5135 = vpop.permute.xlu0 %5134
    %5136 = vrot.lane.b32.xlu0 %v5116, 64
    %v5137 = vpop.permute.xlu0 %5136
    %5138 = vrot.lane.b32.xlu0 %v5117, 64
    %v5139 = vpop.permute.xlu0 %5138
    %5140 = vrot.lane.b32.xlu0 %v5118, 64
    %v5141 = vpop.permute.xlu0 %5140
    %5142 = vrot.lane.b32.xlu0 %v5119, 64
    %v5143 = vpop.permute.xlu0 %5142
    %5152 = vst.msk [vmem:[#allocation3] sm:$0xff] %vm319, %v5129
    %5153 = vst.msk [vmem:[#allocation3 + $0x18] sm:$0xff] %vm319, %v5131
    %5154 = vst.msk [vmem:[#allocation3 + $0x30] sm:$0xff] %vm319, %v5133
    %5155 = vst.msk [vmem:[#allocation3 + $0x48] sm:$0xff] %vm319, %v5135
    %5156 = vst.msk [vmem:[#allocation3 + $0x60] sm:$0xff] %vm319, %v5137
    %5157 = vst.msk [vmem:[#allocation3 + $0x78] sm:$0xff] %vm319, %v5139
    %5158 = vst.msk [vmem:[#allocation3 + $0x90] sm:$0xff] %vm319, %v5141
    %5159 = vst.msk [vmem:[#allocation3 + $0xa8] sm:$0xff] %vm319, %v5143
    %v5160 = vld [vmem:[%s148 + $0x7] sm:$0xff]
    %v5161 = vld [vmem:[%s148 + $0x1f] sm:$0xff]
    %v5162 = vld [vmem:[%s148 + $0x37] sm:$0xff]
    %v5163 = vld [vmem:[%s148 + $0x4f] sm:$0xff]
    %v5164 = vld [vmem:[%s148 + $0x67] sm:$0xff]
    %v5165 = vld [vmem:[%s148 + $0x7f] sm:$0xff]
    %v5166 = vld [vmem:[%s148 + $0x97] sm:$0xff]
    %v5167 = vld [vmem:[%s148 + $0xaf] sm:$0xff]
    %v5168 = vld [vmem:[%s148 + $0x157] sm:$0xff]
    %v5169 = vld [vmem:[%s148 + $0x16f] sm:$0xff]
    %v5170 = vld [vmem:[%s148 + $0x187] sm:$0xff]
    %v5171 = vld [vmem:[%s148 + $0x19f] sm:$0xff]
    %v5172 = vld [vmem:[%s148 + $0x1b7] sm:$0xff]
    %v5173 = vld [vmem:[%s148 + $0x1cf] sm:$0xff]
    %v5174 = vld [vmem:[%s148 + $0x1e7] sm:$0xff]
    %v5175 = vld [vmem:[%s148 + $0x1ff] sm:$0xff]
    %v5176 = vpack.c.bf16 %v5161, %v5160
    %v5177 = vpack.c.bf16 %v5163, %v5162
    %v5178 = vpack.c.bf16 %v5165, %v5164
    %v5179 = vpack.c.bf16 %v5167, %v5166
    %v5180 = vpack.c.bf16 %v5169, %v5168
    %v5181 = vpack.c.bf16 %v5171, %v5170
    %v5182 = vpack.c.bf16 %v5173, %v5172
    %v5183 = vpack.c.bf16 %v5175, %v5174
    %5192 = vrot.lane.b32.xlu0 %v5176, 96
    %v5193 = vpop.permute.xlu0 %5192
    %5194 = vrot.lane.b32.xlu0 %v5177, 96
    %v5195 = vpop.permute.xlu0 %5194
    %5196 = vrot.lane.b32.xlu0 %v5178, 96
    %v5197 = vpop.permute.xlu0 %5196
    %5198 = vrot.lane.b32.xlu0 %v5179, 96
    %v5199 = vpop.permute.xlu0 %5198
    %5200 = vrot.lane.b32.xlu0 %v5180, 96
    %v5201 = vpop.permute.xlu0 %5200
    %5202 = vrot.lane.b32.xlu0 %v5181, 96
    %v5203 = vpop.permute.xlu0 %5202
    %5204 = vrot.lane.b32.xlu0 %v5182, 96
    %v5205 = vpop.permute.xlu0 %5204
    %5206 = vrot.lane.b32.xlu0 %v5183, 96
    %v5207 = vpop.permute.xlu0 %5206
    %5216 = vst.msk [vmem:[#allocation3] sm:$0xff] %vm384, %v5193
    %5217 = vst.msk [vmem:[#allocation3 + $0x18] sm:$0xff] %vm384, %v5195
    %5218 = vst.msk [vmem:[#allocation3 + $0x30] sm:$0xff] %vm384, %v5197
    %5219 = vst.msk [vmem:[#allocation3 + $0x48] sm:$0xff] %vm384, %v5199
    %5220 = vst.msk [vmem:[#allocation3 + $0x60] sm:$0xff] %vm384, %v5201
    %5221 = vst.msk [vmem:[#allocation3 + $0x78] sm:$0xff] %vm384, %v5203
    %5222 = vst.msk [vmem:[#allocation3 + $0x90] sm:$0xff] %vm384, %v5205
    %5223 = vst.msk [vmem:[#allocation3 + $0xa8] sm:$0xff] %vm384, %v5207
    %v5224 = vld [vmem:[%s148 + $0x8] sm:$0xff]
    %v5225 = vld [vmem:[%s148 + $0x20] sm:$0xff]
    %v5226 = vld [vmem:[%s148 + $0x38] sm:$0xff]
    %v5227 = vld [vmem:[%s148 + $0x50] sm:$0xff]
    %v5228 = vld [vmem:[%s148 + $0x68] sm:$0xff]
    %v5229 = vld [vmem:[%s148 + $0x80] sm:$0xff]
    %v5230 = vld [vmem:[%s148 + $0x98] sm:$0xff]
    %v5231 = vld [vmem:[%s148 + $0xb0] sm:$0xff]
    %v5232 = vld [vmem:[%s148 + $0x158] sm:$0xff]
    %v5233 = vld [vmem:[%s148 + $0x170] sm:$0xff]
    %v5234 = vld [vmem:[%s148 + $0x188] sm:$0xff]
    %v5235 = vld [vmem:[%s148 + $0x1a0] sm:$0xff]
    %v5236 = vld [vmem:[%s148 + $0x1b8] sm:$0xff]
    %v5237 = vld [vmem:[%s148 + $0x1d0] sm:$0xff]
    %v5238 = vld [vmem:[%s148 + $0x1e8] sm:$0xff]
    %v5239 = vld [vmem:[%s148 + $0x200] sm:$0xff]
    %v5240 = vpack.c.bf16 %v5225, %v5224
    %v5241 = vpack.c.bf16 %v5227, %v5226
    %v5242 = vpack.c.bf16 %v5229, %v5228
    %v5243 = vpack.c.bf16 %v5231, %v5230
    %v5244 = vpack.c.bf16 %v5233, %v5232
    %v5245 = vpack.c.bf16 %v5235, %v5234
    %v5246 = vpack.c.bf16 %v5237, %v5236
    %v5247 = vpack.c.bf16 %v5239, %v5238
    %5248 = vst.msk [vmem:[#allocation3 + $0x8] sm:$0xff] %vm46, %v5240
    %5249 = vst.msk [vmem:[#allocation3 + $0x20] sm:$0xff] %vm46, %v5241
    %5250 = vst.msk [vmem:[#allocation3 + $0x38] sm:$0xff] %vm46, %v5242
    %5251 = vst.msk [vmem:[#allocation3 + $0x50] sm:$0xff] %vm46, %v5243
    %5252 = vst.msk [vmem:[#allocation3 + $0x68] sm:$0xff] %vm46, %v5244
    %5253 = vst.msk [vmem:[#allocation3 + $0x80] sm:$0xff] %vm46, %v5245
    %5254 = vst.msk [vmem:[#allocation3 + $0x98] sm:$0xff] %vm46, %v5246
    %5255 = vst.msk [vmem:[#allocation3 + $0xb0] sm:$0xff] %vm46, %v5247
    %v5256 = vld [vmem:[%s148 + $0x9] sm:$0xff]
    %v5257 = vld [vmem:[%s148 + $0x21] sm:$0xff]
    %v5258 = vld [vmem:[%s148 + $0x39] sm:$0xff]
    %v5259 = vld [vmem:[%s148 + $0x51] sm:$0xff]
    %v5260 = vld [vmem:[%s148 + $0x69] sm:$0xff]
    %v5261 = vld [vmem:[%s148 + $0x81] sm:$0xff]
    %v5262 = vld [vmem:[%s148 + $0x99] sm:$0xff]
    %v5263 = vld [vmem:[%s148 + $0xb1] sm:$0xff]
    %v5264 = vld [vmem:[%s148 + $0x159] sm:$0xff]
    %v5265 = vld [vmem:[%s148 + $0x171] sm:$0xff]
    %v5266 = vld [vmem:[%s148 + $0x189] sm:$0xff]
    %v5267 = vld [vmem:[%s148 + $0x1a1] sm:$0xff]
    %v5268 = vld [vmem:[%s148 + $0x1b9] sm:$0xff]
    %v5269 = vld [vmem:[%s148 + $0x1d1] sm:$0xff]
    %v5270 = vld [vmem:[%s148 + $0x1e9] sm:$0xff]
    %v5271 = vld [vmem:[%s148 + $0x201] sm:$0xff]
    %v5272 = vpack.c.bf16 %v5257, %v5256
    %v5273 = vpack.c.bf16 %v5259, %v5258
    %v5274 = vpack.c.bf16 %v5261, %v5260
    %v5275 = vpack.c.bf16 %v5263, %v5262
    %v5276 = vpack.c.bf16 %v5265, %v5264
    %v5277 = vpack.c.bf16 %v5267, %v5266
    %v5278 = vpack.c.bf16 %v5269, %v5268
    %v5279 = vpack.c.bf16 %v5271, %v5270
    %5288 = vrot.lane.b32.xlu0 %v5272, 32
    %v5289 = vpop.permute.xlu0 %5288
    %5290 = vrot.lane.b32.xlu0 %v5273, 32
    %v5291 = vpop.permute.xlu0 %5290
    %5292 = vrot.lane.b32.xlu0 %v5274, 32
    %v5293 = vpop.permute.xlu0 %5292
    %5294 = vrot.lane.b32.xlu0 %v5275, 32
    %v5295 = vpop.permute.xlu0 %5294
    %5296 = vrot.lane.b32.xlu0 %v5276, 32
    %v5297 = vpop.permute.xlu0 %5296
    %5298 = vrot.lane.b32.xlu0 %v5277, 32
    %v5299 = vpop.permute.xlu0 %5298
    %5300 = vrot.lane.b32.xlu0 %v5278, 32
    %v5301 = vpop.permute.xlu0 %5300
    %5302 = vrot.lane.b32.xlu0 %v5279, 32
    %v5303 = vpop.permute.xlu0 %5302
    %5312 = vst.msk [vmem:[#allocation3 + $0x8] sm:$0xff] %vm254, %v5289
    %5313 = vst.msk [vmem:[#allocation3 + $0x20] sm:$0xff] %vm254, %v5291
    %5314 = vst.msk [vmem:[#allocation3 + $0x38] sm:$0xff] %vm254, %v5293
    %5315 = vst.msk [vmem:[#allocation3 + $0x50] sm:$0xff] %vm254, %v5295
    %5316 = vst.msk [vmem:[#allocation3 + $0x68] sm:$0xff] %vm254, %v5297
    %5317 = vst.msk [vmem:[#allocation3 + $0x80] sm:$0xff] %vm254, %v5299
    %5318 = vst.msk [vmem:[#allocation3 + $0x98] sm:$0xff] %vm254, %v5301
    %5319 = vst.msk [vmem:[#allocation3 + $0xb0] sm:$0xff] %vm254, %v5303
    %v5320 = vld [vmem:[%s489 + $0x7] sm:$0xff]
    %v5321 = vld [vmem:[%s489 + $0x1f] sm:$0xff]
    %v5322 = vld [vmem:[%s489 + $0x37] sm:$0xff]
    %v5323 = vld [vmem:[%s489 + $0x4f] sm:$0xff]
    %v5324 = vld [vmem:[%s489 + $0x67] sm:$0xff]
    %v5325 = vld [vmem:[%s489 + $0x7f] sm:$0xff]
    %v5326 = vld [vmem:[%s489 + $0x97] sm:$0xff]
    %v5327 = vld [vmem:[%s489 + $0xaf] sm:$0xff]
    %v5328 = vld [vmem:[%s489 + $0x157] sm:$0xff]
    %v5329 = vld [vmem:[%s489 + $0x16f] sm:$0xff]
    %v5330 = vld [vmem:[%s489 + $0x187] sm:$0xff]
    %v5331 = vld [vmem:[%s489 + $0x19f] sm:$0xff]
    %v5332 = vld [vmem:[%s489 + $0x1b7] sm:$0xff]
    %v5333 = vld [vmem:[%s489 + $0x1cf] sm:$0xff]
    %v5334 = vld [vmem:[%s489 + $0x1e7] sm:$0xff]
    %v5335 = vld [vmem:[%s489 + $0x1ff] sm:$0xff]
    %v5336 = vpack.c.bf16 %v5321, %v5320
    %v5337 = vpack.c.bf16 %v5323, %v5322
    %v5338 = vpack.c.bf16 %v5325, %v5324
    %v5339 = vpack.c.bf16 %v5327, %v5326
    %v5340 = vpack.c.bf16 %v5329, %v5328
    %v5341 = vpack.c.bf16 %v5331, %v5330
    %v5342 = vpack.c.bf16 %v5333, %v5332
    %v5343 = vpack.c.bf16 %v5335, %v5334
    %5352 = vrot.lane.b32.xlu0 %v5336, 64
    %v5353 = vpop.permute.xlu0 %5352
    %5354 = vrot.lane.b32.xlu0 %v5337, 64
    %v5355 = vpop.permute.xlu0 %5354
    %5356 = vrot.lane.b32.xlu0 %v5338, 64
    %v5357 = vpop.permute.xlu0 %5356
    %5358 = vrot.lane.b32.xlu0 %v5339, 64
    %v5359 = vpop.permute.xlu0 %5358
    %5360 = vrot.lane.b32.xlu0 %v5340, 64
    %v5361 = vpop.permute.xlu0 %5360
    %5362 = vrot.lane.b32.xlu0 %v5341, 64
    %v5363 = vpop.permute.xlu0 %5362
    %5364 = vrot.lane.b32.xlu0 %v5342, 64
    %v5365 = vpop.permute.xlu0 %5364
    %5366 = vrot.lane.b32.xlu0 %v5343, 64
    %v5367 = vpop.permute.xlu0 %5366
    %5376 = vst.msk [vmem:[#allocation3 + $0x8] sm:$0xff] %vm319, %v5353
    %5377 = vst.msk [vmem:[#allocation3 + $0x20] sm:$0xff] %vm319, %v5355
    %5378 = vst.msk [vmem:[#allocation3 + $0x38] sm:$0xff] %vm319, %v5357
    %5379 = vst.msk [vmem:[#allocation3 + $0x50] sm:$0xff] %vm319, %v5359
    %5380 = vst.msk [vmem:[#allocation3 + $0x68] sm:$0xff] %vm319, %v5361
    %5381 = vst.msk [vmem:[#allocation3 + $0x80] sm:$0xff] %vm319, %v5363
    %5382 = vst.msk [vmem:[#allocation3 + $0x98] sm:$0xff] %vm319, %v5365
    %5383 = vst.msk [vmem:[#allocation3 + $0xb0] sm:$0xff] %vm319, %v5367
    %v5384 = vld [vmem:[%s489 + $0x8] sm:$0xff]
    %v5385 = vld [vmem:[%s489 + $0x20] sm:$0xff]
    %v5386 = vld [vmem:[%s489 + $0x38] sm:$0xff]
    %v5387 = vld [vmem:[%s489 + $0x50] sm:$0xff]
    %v5388 = vld [vmem:[%s489 + $0x68] sm:$0xff]
    %v5389 = vld [vmem:[%s489 + $0x80] sm:$0xff]
    %v5390 = vld [vmem:[%s489 + $0x98] sm:$0xff]
    %v5391 = vld [vmem:[%s489 + $0xb0] sm:$0xff]
    %v5392 = vld [vmem:[%s489 + $0x158] sm:$0xff]
    %v5393 = vld [vmem:[%s489 + $0x170] sm:$0xff]
    %v5394 = vld [vmem:[%s489 + $0x188] sm:$0xff]
    %v5395 = vld [vmem:[%s489 + $0x1a0] sm:$0xff]
    %v5396 = vld [vmem:[%s489 + $0x1b8] sm:$0xff]
    %v5397 = vld [vmem:[%s489 + $0x1d0] sm:$0xff]
    %v5398 = vld [vmem:[%s489 + $0x1e8] sm:$0xff]
    %v5399 = vld [vmem:[%s489 + $0x200] sm:$0xff]
    %v5400 = vpack.c.bf16 %v5385, %v5384
    %v5401 = vpack.c.bf16 %v5387, %v5386
    %v5402 = vpack.c.bf16 %v5389, %v5388
    %v5403 = vpack.c.bf16 %v5391, %v5390
    %v5404 = vpack.c.bf16 %v5393, %v5392
    %v5405 = vpack.c.bf16 %v5395, %v5394
    %v5406 = vpack.c.bf16 %v5397, %v5396
    %v5407 = vpack.c.bf16 %v5399, %v5398
    %5416 = vrot.lane.b32.xlu0 %v5400, 96
    %v5417 = vpop.permute.xlu0 %5416
    %5418 = vrot.lane.b32.xlu0 %v5401, 96
    %v5419 = vpop.permute.xlu0 %5418
    %5420 = vrot.lane.b32.xlu0 %v5402, 96
    %v5421 = vpop.permute.xlu0 %5420
    %5422 = vrot.lane.b32.xlu0 %v5403, 96
    %v5423 = vpop.permute.xlu0 %5422
    %5424 = vrot.lane.b32.xlu0 %v5404, 96
    %v5425 = vpop.permute.xlu0 %5424
    %5426 = vrot.lane.b32.xlu0 %v5405, 96
    %v5427 = vpop.permute.xlu0 %5426
    %5428 = vrot.lane.b32.xlu0 %v5406, 96
    %v5429 = vpop.permute.xlu0 %5428
    %5430 = vrot.lane.b32.xlu0 %v5407, 96
    %v5431 = vpop.permute.xlu0 %5430
    %5440 = vst.msk [vmem:[#allocation3 + $0x8] sm:$0xff] %vm384, %v5417
    %5441 = vst.msk [vmem:[#allocation3 + $0x20] sm:$0xff] %vm384, %v5419
    %5442 = vst.msk [vmem:[#allocation3 + $0x38] sm:$0xff] %vm384, %v5421
    %5443 = vst.msk [vmem:[#allocation3 + $0x50] sm:$0xff] %vm384, %v5423
    %5444 = vst.msk [vmem:[#allocation3 + $0x68] sm:$0xff] %vm384, %v5425
    %5445 = vst.msk [vmem:[#allocation3 + $0x80] sm:$0xff] %vm384, %v5427
    %5446 = vst.msk [vmem:[#allocation3 + $0x98] sm:$0xff] %vm384, %v5429
    %5447 = vst.msk [vmem:[#allocation3 + $0xb0] sm:$0xff] %vm384, %v5431
    %v5448 = vld [vmem:[%s489 + $0x9] sm:$0xff]
    %v5449 = vld [vmem:[%s489 + $0x21] sm:$0xff]
    %v5450 = vld [vmem:[%s489 + $0x39] sm:$0xff]
    %v5451 = vld [vmem:[%s489 + $0x51] sm:$0xff]
    %v5452 = vld [vmem:[%s489 + $0x69] sm:$0xff]
    %v5453 = vld [vmem:[%s489 + $0x81] sm:$0xff]
    %v5454 = vld [vmem:[%s489 + $0x99] sm:$0xff]
    %v5455 = vld [vmem:[%s489 + $0xb1] sm:$0xff]
    %v5456 = vld [vmem:[%s489 + $0x159] sm:$0xff]
    %v5457 = vld [vmem:[%s489 + $0x171] sm:$0xff]
    %v5458 = vld [vmem:[%s489 + $0x189] sm:$0xff]
    %v5459 = vld [vmem:[%s489 + $0x1a1] sm:$0xff]
    %v5460 = vld [vmem:[%s489 + $0x1b9] sm:$0xff]
    %v5461 = vld [vmem:[%s489 + $0x1d1] sm:$0xff]
    %v5462 = vld [vmem:[%s489 + $0x1e9] sm:$0xff]
    %v5463 = vld [vmem:[%s489 + $0x201] sm:$0xff]
    %v5464 = vpack.c.bf16 %v5449, %v5448
    %v5465 = vpack.c.bf16 %v5451, %v5450
    %v5466 = vpack.c.bf16 %v5453, %v5452
    %v5467 = vpack.c.bf16 %v5455, %v5454
    %v5468 = vpack.c.bf16 %v5457, %v5456
    %v5469 = vpack.c.bf16 %v5459, %v5458
    %v5470 = vpack.c.bf16 %v5461, %v5460
    %v5471 = vpack.c.bf16 %v5463, %v5462
    %5472 = vst.msk [vmem:[#allocation3 + $0x10] sm:$0xff] %vm46, %v5464
    %5473 = vst.msk [vmem:[#allocation3 + $0x28] sm:$0xff] %vm46, %v5465
    %5474 = vst.msk [vmem:[#allocation3 + $0x40] sm:$0xff] %vm46, %v5466
    %5475 = vst.msk [vmem:[#allocation3 + $0x58] sm:$0xff] %vm46, %v5467
    %5476 = vst.msk [vmem:[#allocation3 + $0x70] sm:$0xff] %vm46, %v5468
    %5477 = vst.msk [vmem:[#allocation3 + $0x88] sm:$0xff] %vm46, %v5469
    %5478 = vst.msk [vmem:[#allocation3 + $0xa0] sm:$0xff] %vm46, %v5470
    %5479 = vst.msk [vmem:[#allocation3 + $0xb8] sm:$0xff] %vm46, %v5471
    %s5480 = scalar_lea.vmem %s9, 144
    %v5481 = vld [vmem:[%s5480] sm:$0xf]
    %v5482 = vld [vmem:[%s5480 + $0x4] sm:$0xf]
    %v5483 = vld [vmem:[%s5480 + $0x8] sm:$0xf]
    %v5484 = vld [vmem:[%s5480 + $0xc] sm:$0xf]
    %v5485 = vld [vmem:[%s5480 + $0x10] sm:$0xf]
    %v5486 = vld [vmem:[%s5480 + $0x14] sm:$0xf]
    %v5487 = vld [vmem:[%s5480 + $0x18] sm:$0xf]
    %v5488 = vld [vmem:[%s5480 + $0x1c] sm:$0xf]
    %v5489 = vld [vmem:[%s5480 + $0x20] sm:$0xf]
    %v5490 = vld [vmem:[%s5480 + $0x24] sm:$0xf]
    %v5491 = vld [vmem:[%s5480 + $0x28] sm:$0xf]
    %v5492 = vld [vmem:[%s5480 + $0x2c] sm:$0xf]
    %v5493 = vld [vmem:[%s5480 + $0x30] sm:$0xf]
    %v5494 = vld [vmem:[%s5480 + $0x34] sm:$0xf]
    %v5495 = vld [vmem:[%s5480 + $0x38] sm:$0xf]
    %v5496 = vld [vmem:[%s5480 + $0x3c] sm:$0xf]
    %v5497 = vld [vmem:[%s5480 + $0x40] sm:$0xf]
    %v5498 = vld [vmem:[%s5480 + $0x44] sm:$0xf]
    %v5499 = vld [vmem:[%s5480 + $0x48] sm:$0xf]
    %v5500 = vld [vmem:[%s5480 + $0x4c] sm:$0xf]
    %v5501 = vld [vmem:[%s5480 + $0x50] sm:$0xf]
    %v5502 = vld [vmem:[%s5480 + $0x54] sm:$0xf]
    %v5503 = vld [vmem:[%s5480 + $0x58] sm:$0xf]
    %v5504 = vld [vmem:[%s5480 + $0x5c] sm:$0xf]
    %v5505 = vld [vmem:[%s5480 + $0x60] sm:$0xf]
    %v5506 = vld [vmem:[%s5480 + $0x64] sm:$0xf]
    %v5507 = vld [vmem:[%s5480 + $0x68] sm:$0xf]
    %v5508 = vld [vmem:[%s5480 + $0x6c] sm:$0xf]
    %v5509 = vld [vmem:[%s5480 + $0x70] sm:$0xf]
    %v5510 = vld [vmem:[%s5480 + $0x74] sm:$0xf]
    %v5511 = vld [vmem:[%s5480 + $0x78] sm:$0xf]
    %v5512 = vld [vmem:[%s5480 + $0x7c] sm:$0xf]
    %v5513 = vld [vmem:[%s5480 + $0x80] sm:$0xf]
    %v5514 = vld [vmem:[%s5480 + $0x84] sm:$0xf]
    %v5515 = vld [vmem:[%s5480 + $0x88] sm:$0xf]
    %v5516 = vld [vmem:[%s5480 + $0x8c] sm:$0xf]
    %s5517 = scalar_lea.vmem %s10, 1
    %v5518 = vld [vmem:[%s5517] sm:$0x1]
    %v5519 = vld [vmem:[#allocation3] sm:$0xff]
    %v5520 = vld [vmem:[#allocation3 + $0x8] sm:$0xff]
    %v5521 = vld [vmem:[#allocation3 + $0x10] sm:$0xff]
    %v5522 = vld [vmem:[#allocation3 + $0x18] sm:$0xff]
    %v5523 = vld [vmem:[#allocation3 + $0x20] sm:$0xff]
    %v5524 = vld [vmem:[#allocation3 + $0x28] sm:$0xff]
    %v5525 = vld [vmem:[#allocation3 + $0x30] sm:$0xff]
    %v5526 = vld [vmem:[#allocation3 + $0x38] sm:$0xff]
    %v5527 = vld [vmem:[#allocation3 + $0x40] sm:$0xff]
    %v5528 = vld [vmem:[#allocation3 + $0x48] sm:$0xff]
    %v5529 = vld [vmem:[#allocation3 + $0x50] sm:$0xff]
    %v5530 = vld [vmem:[#allocation3 + $0x58] sm:$0xff]
    %v5531 = vld [vmem:[#allocation3 + $0x60] sm:$0xff]
    %v5532 = vld [vmem:[#allocation3 + $0x68] sm:$0xff]
    %v5533 = vld [vmem:[#allocation3 + $0x70] sm:$0xff]
    %v5534 = vld [vmem:[#allocation3 + $0x78] sm:$0xff]
    %v5535 = vld [vmem:[#allocation3 + $0x80] sm:$0xff]
    %v5536 = vld [vmem:[#allocation3 + $0x88] sm:$0xff]
    %v5537 = vld [vmem:[#allocation3 + $0x90] sm:$0xff]
    %v5538 = vld [vmem:[#allocation3 + $0x98] sm:$0xff]
    %v5539 = vld [vmem:[#allocation3 + $0xa0] sm:$0xff]
    %v5540 = vld [vmem:[#allocation3 + $0xa8] sm:$0xff]
    %v5541 = vld [vmem:[#allocation3 + $0xb0] sm:$0xff]
    %v5542 = vld [vmem:[#allocation3 + $0xb8] sm:$0xff]
    %v5544 = vlaneseq
    %v5545 = vshrl.u32 %v5544, 7
    %v5546 = vsub.s32 0, %v5545
    %v5547 = vrot.slane %v5518, %v5546
    %v5585 = vunpack.c.l.b16 %v5481
    %v5586 = vunpack.c.l.b16 %v5482
    %v5587 = vunpack.c.l.b16 %v5483
    %v5588 = vunpack.c.l.b16 %v5484
    %v5589 = vunpack.c.l.b16 %v5485
    %v5590 = vunpack.c.l.b16 %v5486
    %v5591 = vunpack.c.l.b16 %v5487
    %v5592 = vunpack.c.l.b16 %v5488
    %v5593 = vunpack.c.l.b16 %v5489
    %v5594 = vunpack.c.l.b16 %v5490
    %v5595 = vunpack.c.l.b16 %v5491
    %v5596 = vunpack.c.l.b16 %v5492
    %v5597 = vunpack.c.l.b16 %v5493
    %v5598 = vunpack.c.l.b16 %v5494
    %v5599 = vunpack.c.l.b16 %v5495
    %v5600 = vunpack.c.l.b16 %v5496
    %v5601 = vunpack.c.l.b16 %v5497
    %v5602 = vunpack.c.l.b16 %v5498
    %v5603 = vunpack.c.l.b16 %v5499
    %v5604 = vunpack.c.l.b16 %v5500
    %v5605 = vunpack.c.l.b16 %v5501
    %v5606 = vunpack.c.l.b16 %v5502
    %v5607 = vunpack.c.l.b16 %v5503
    %v5608 = vunpack.c.l.b16 %v5504
    %v5609 = vunpack.c.l.b16 %v5505
    %v5610 = vunpack.c.l.b16 %v5506
    %v5611 = vunpack.c.l.b16 %v5507
    %v5612 = vunpack.c.l.b16 %v5508
    %v5613 = vunpack.c.l.b16 %v5509
    %v5614 = vunpack.c.l.b16 %v5510
    %v5615 = vunpack.c.l.b16 %v5511
    %v5616 = vunpack.c.l.b16 %v5512
    %v5617 = vunpack.c.l.b16 %v5513
    %v5618 = vunpack.c.l.b16 %v5514
    %v5619 = vunpack.c.l.b16 %v5515
    %v5620 = vunpack.c.l.b16 %v5516
    %v5621 = vpack.c.b16 %v5586, %v5585
    %v5622 = vpack.c.b16 %v5588, %v5587
    %v5623 = vpack.c.b16 %v5590, %v5589
    %v5624 = vpack.c.b16 %v5592, %v5591
    %v5625 = vpack.c.b16 %v5594, %v5593
    %v5626 = vpack.c.b16 %v5596, %v5595
    %v5627 = vpack.c.b16 %v5598, %v5597
    %v5628 = vpack.c.b16 %v5600, %v5599
    %v5629 = vpack.c.b16 %v5602, %v5601
    %v5630 = vpack.c.b16 %v5604, %v5603
    %v5631 = vpack.c.b16 %v5606, %v5605
    %v5632 = vpack.c.b16 %v5608, %v5607
    %v5633 = vpack.c.b16 %v5610, %v5609
    %v5634 = vpack.c.b16 %v5612, %v5611
    %v5635 = vpack.c.b16 %v5614, %v5613
    %v5636 = vpack.c.b16 %v5616, %v5615
    %v5637 = vpack.c.b16 %v5618, %v5617
    %v5638 = vpack.c.b16 %v5620, %v5619
    %v5658 = vsel %vm46, %v5521, 0
    %v5661 = vsel %vm46, %v5524, 0
    %v5664 = vsel %vm46, %v5527, 0
    %v5667 = vsel %vm46, %v5530, 0
    %v5670 = vsel %vm46, %v5533, 0
    %v5673 = vsel %vm46, %v5536, 0
    %v5676 = vsel %vm46, %v5539, 0
    %v5679 = vsel %vm46, %v5542, 0
    %5681 = vmatprep.subr.bf16.mxu0 0
    %5682 = vmatpush1.bf16.msra.mxu0 %v5621
    %5683 = vmatprep.subr.bf16.mxu0 0
    %5684 = vmatpush1.bf16.msra.mxu0 %v5622
    %5685 = vmatprep.subr.bf16.mxu0 0
    %5686 = vmatpush1.bf16.msra.mxu0 %v5623
    %5687 = vmatprep.subr.bf16.mxu0 0
    %5688 = vmatpush1.bf16.msra.mxu0 %v5624
    %5689 = vmatprep.subr.bf16.mxu0 0
    %5690 = vmatpush1.bf16.msra.mxu0 %v5625
    %5691 = vmatprep.subr.bf16.mxu0 0
    %5692 = vmatpush1.bf16.msra.mxu0 %v5626
    %5693 = vmatprep.subr.bf16.mxu0 0
    %5694 = vmatpush1.bf16.msra.mxu0 %v5627
    %5695 = vmatprep.subr.bf16.mxu0 0
    %5696 = vmatpush1.bf16.msra.mxu0 %v5628
    %5697 = vmatprep.subr.bf16.mxu0 0
    %5698 = vmatpush1.bf16.msra.mxu0 %v5629
    %5699 = vmatprep.subr.bf16.mxu0 0
    %5700 = vmatpush1.bf16.msra.mxu0 %v5630
    %5701 = vmatprep.subr.bf16.mxu0 0
    %5702 = vmatpush1.bf16.msra.mxu0 %v5631
    %5703 = vmatprep.subr.bf16.mxu0 0
    %5704 = vmatpush1.bf16.msra.mxu0 %v5632
    %5705 = vmatprep.subr.bf16.mxu0 0
    %5706 = vmatpush1.bf16.msra.mxu0 %v5633
    %5707 = vmatprep.subr.bf16.mxu0 0
    %5708 = vmatpush1.bf16.msra.mxu0 %v5634
    %5709 = vmatprep.subr.bf16.mxu0 0
    %5710 = vmatpush1.bf16.msra.mxu0 %v5635
    %5711 = vmatprep.subr.bf16.mxu0 0
    %5712 = vmatpush1.bf16.msra.mxu0 %v5636
    %5713 = vmatprep.mubr.bf16.mxu0 %v5520
    %5714 = vmatmul.mubr.bf16.gmra.mrb[0].mxu0 %v5519
    %v5715 = vpop.f32.mrb[0].mxu0
    %v5716 = vadd.f32 %v5547, %v5715
    %v5717 = vpop.f32.mrb[0].mxu0
    %v5718 = vpop.f32.mrb[0].mxu0
    %v5719 = vadd.f32 %v5547, %v5718
    %v5720 = vpop.f32.mrb[0].mxu0
    %5721 = vmatprep.mubr.bf16.mxu0 %v5523
    %5722 = vmatmul.mubr.bf16.gmra.mrb[0].mxu0 %v5522
    %v5723 = vpop.f32.mrb[0].mxu0
    %v5724 = vadd.f32 %v5547, %v5723
    %v5725 = vpop.f32.mrb[0].mxu0
    %v5726 = vpop.f32.mrb[0].mxu0
    %v5727 = vadd.f32 %v5547, %v5726
    %v5728 = vpop.f32.mrb[0].mxu0
    %5729 = vmatprep.mubr.bf16.mxu0 %v5526
    %5730 = vmatmul.mubr.bf16.gmra.mrb[0].mxu0 %v5525
    %v5731 = vpop.f32.mrb[0].mxu0
    %v5732 = vadd.f32 %v5547, %v5731
    %v5733 = vpop.f32.mrb[0].mxu0
    %v5734 = vpop.f32.mrb[0].mxu0
    %v5735 = vadd.f32 %v5547, %v5734
    %v5736 = vpop.f32.mrb[0].mxu0
    %5737 = vmatprep.mubr.bf16.mxu0 %v5529
    %5738 = vmatmul.mubr.bf16.gmra.mrb[0].mxu0 %v5528
    %v5739 = vpop.f32.mrb[0].mxu0
    %v5740 = vadd.f32 %v5547, %v5739
    %v5741 = vpop.f32.mrb[0].mxu0
    %v5742 = vpop.f32.mrb[0].mxu0
    %v5743 = vadd.f32 %v5547, %v5742
    %v5744 = vpop.f32.mrb[0].mxu0
    %5745 = vmatprep.mubr.bf16.mxu0 %v5532
    %5746 = vmatmul.mubr.bf16.gmra.mrb[0].mxu0 %v5531
    %v5747 = vpop.f32.mrb[0].mxu0
    %v5748 = vadd.f32 %v5547, %v5747
    %v5749 = vpop.f32.mrb[0].mxu0
    %v5750 = vpop.f32.mrb[0].mxu0
    %v5751 = vadd.f32 %v5547, %v5750
    %v5752 = vpop.f32.mrb[0].mxu0
    %5753 = vmatprep.mubr.bf16.mxu0 %v5535
    %5754 = vmatmul.mubr.bf16.gmra.mrb[0].mxu0 %v5534
    %v5755 = vpop.f32.mrb[0].mxu0
    %v5756 = vadd.f32 %v5547, %v5755
    %v5757 = vpop.f32.mrb[0].mxu0
    %v5758 = vpop.f32.mrb[0].mxu0
    %v5759 = vadd.f32 %v5547, %v5758
    %v5760 = vpop.f32.mrb[0].mxu0
    %5761 = vmatprep.mubr.bf16.mxu0 %v5538
    %5762 = vmatmul.mubr.bf16.gmra.mrb[0].mxu0 %v5537
    %v5763 = vpop.f32.mrb[0].mxu0
    %v5764 = vadd.f32 %v5547, %v5763
    %v5765 = vpop.f32.mrb[0].mxu0
    %v5766 = vpop.f32.mrb[0].mxu0
    %v5767 = vadd.f32 %v5547, %v5766
    %v5768 = vpop.f32.mrb[0].mxu0
    %5769 = vmatprep.mubr.bf16.mxu0 %v5541
    %5770 = vmatmul.mubr.bf16.gmra.mrb[0].mxu0 %v5540
    %v5771 = vpop.f32.mrb[0].mxu0
    %v5772 = vadd.f32 %v5547, %v5771
    %v5773 = vpop.f32.mrb[0].mxu0
    %v5774 = vpop.f32.mrb[0].mxu0
    %v5775 = vadd.f32 %v5547, %v5774
    %v5776 = vpop.f32.mrb[0].mxu0
    %5777 = vdwg.mxu0
    %5778 = vmatprep.subr.bf16.mxu0 0
    %5779 = vmatpush1.bf16.msra.mxu0 %v5637
    %5780 = vmatprep.subr.bf16.mxu0 0
    %5781 = vmatpush1.bf16.msra.mxu0 %v5638
    %5782 = vmatprep.subr.bf16.mxu0 0
    %5783 = vmatpush1.bf16.msra.mxu0 0
    %5784 = vmatprep.subr.bf16.mxu0 0
    %5785 = vmatpush1.bf16.msra.mxu0 0
    %5786 = vmatprep.subr.bf16.mxu0 0
    %5787 = vmatpush1.bf16.msra.mxu0 0
    %5788 = vmatprep.subr.bf16.mxu0 0
    %5789 = vmatpush1.bf16.msra.mxu0 0
    %5790 = vmatprep.subr.bf16.mxu0 0
    %5791 = vmatpush1.bf16.msra.mxu0 0
    %5792 = vmatprep.subr.bf16.mxu0 0
    %5793 = vmatpush1.bf16.msra.mxu0 0
    %5794 = vmatprep.subr.bf16.mxu0 0
    %5795 = vmatpush1.bf16.msra.mxu0 0
    %5796 = vmatprep.subr.bf16.mxu0 0
    %5797 = vmatpush1.bf16.msra.mxu0 0
    %5798 = vmatprep.subr.bf16.mxu0 0
    %5799 = vmatpush1.bf16.msra.mxu0 0
    %5800 = vmatprep.subr.bf16.mxu0 0
    %5801 = vmatpush1.bf16.msra.mxu0 0
    %5802 = vmatprep.subr.bf16.mxu0 0
    %5803 = vmatpush1.bf16.msra.mxu0 0
    %5804 = vmatprep.subr.bf16.mxu0 0
    %5805 = vmatpush1.bf16.msra.mxu0 0
    %5806 = vmatprep.subr.bf16.mxu0 0
    %5807 = vmatpush1.bf16.msra.mxu0 0
    %5808 = vmatprep.subr.bf16.mxu0 0
    %5809 = vmatpush1.bf16.msra.mxu0 0
    %5810 = vmatprep.mubr.bf16.mxu0 0
    %5811 = vmatmul.mubr.bf16.gmra.mrb[0].mxu0 %v5658
    %v5812 = vpop.f32.mrb[0].mxu0
    %v5813 = vadd.f32 %v5716, %v5812
    %v5814 = vpop.f32.mrb[0].mxu0
    %v5815 = vpop.f32.mrb[0].mxu0
    %v5816 = vadd.f32 %v5719, %v5815
    %v5817 = vpop.f32.mrb[0].mxu0
    %5818 = vmatprep.mubr.bf16.mxu0 0
    %5819 = vmatmul.mubr.bf16.gmra.mrb[0].mxu0 %v5661
    %v5820 = vpop.f32.mrb[0].mxu0
    %v5821 = vadd.f32 %v5724, %v5820
    %v5822 = vpop.f32.mrb[0].mxu0
    %v5823 = vpop.f32.mrb[0].mxu0
    %v5824 = vadd.f32 %v5727, %v5823
    %v5825 = vpop.f32.mrb[0].mxu0
    %5826 = vmatprep.mubr.bf16.mxu0 0
    %5827 = vmatmul.mubr.bf16.gmra.mrb[0].mxu0 %v5664
    %v5828 = vpop.f32.mrb[0].mxu0
    %v5829 = vadd.f32 %v5732, %v5828
    %v5830 = vpop.f32.mrb[0].mxu0
    %v5831 = vpop.f32.mrb[0].mxu0
    %v5832 = vadd.f32 %v5735, %v5831
    %v5833 = vpop.f32.mrb[0].mxu0
    %5834 = vmatprep.mubr.bf16.mxu0 0
    %5835 = vmatmul.mubr.bf16.gmra.mrb[0].mxu0 %v5667
    %v5836 = vpop.f32.mrb[0].mxu0
    %v5837 = vadd.f32 %v5740, %v5836
    %v5838 = vpop.f32.mrb[0].mxu0
    %v5839 = vpop.f32.mrb[0].mxu0
    %v5840 = vadd.f32 %v5743, %v5839
    %v5841 = vpop.f32.mrb[0].mxu0
    %5842 = vmatprep.mubr.bf16.mxu0 0
    %5843 = vmatmul.mubr.bf16.gmra.mrb[0].mxu0 %v5670
    %v5844 = vpop.f32.mrb[0].mxu0
    %v5845 = vadd.f32 %v5748, %v5844
    %v5846 = vpop.f32.mrb[0].mxu0
    %v5847 = vpop.f32.mrb[0].mxu0
    %v5848 = vadd.f32 %v5751, %v5847
    %v5849 = vpop.f32.mrb[0].mxu0
    %5850 = vmatprep.mubr.bf16.mxu0 0
    %5851 = vmatmul.mubr.bf16.gmra.mrb[0].mxu0 %v5673
    %v5852 = vpop.f32.mrb[0].mxu0
    %v5853 = vadd.f32 %v5756, %v5852
    %v5854 = vpop.f32.mrb[0].mxu0
    %v5855 = vpop.f32.mrb[0].mxu0
    %v5856 = vadd.f32 %v5759, %v5855
    %v5857 = vpop.f32.mrb[0].mxu0
    %5858 = vmatprep.mubr.bf16.mxu0 0
    %5859 = vmatmul.mubr.bf16.gmra.mrb[0].mxu0 %v5676
    %v5860 = vpop.f32.mrb[0].mxu0
    %v5861 = vadd.f32 %v5764, %v5860
    %v5862 = vpop.f32.mrb[0].mxu0
    %v5863 = vpop.f32.mrb[0].mxu0
    %v5864 = vadd.f32 %v5767, %v5863
    %v5865 = vpop.f32.mrb[0].mxu0
    %5866 = vmatprep.mubr.bf16.mxu0 0
    %5867 = vmatmul.mubr.bf16.gmra.mrb[0].mxu0 %v5679
    %v5868 = vpop.f32.mrb[0].mxu0
    %v5869 = vadd.f32 %v5772, %v5868
    %v5870 = vpop.f32.mrb[0].mxu0
    %v5871 = vpop.f32.mrb[0].mxu0
    %v5872 = vadd.f32 %v5775, %v5871
    %v5873 = vpop.f32.mrb[0].mxu0
    %5874 = vdwg.mxu0
    %v5875 = vmul.f32 %v5813, 0.5
    %v5876 = vmul.f32 %v5816, 0.5
    %v5877 = vmul.f32 %v5821, 0.5
    %v5878 = vmul.f32 %v5824, 0.5
    %v5879 = vmul.f32 %v5829, 0.5
    %v5880 = vmul.f32 %v5832, 0.5
    %v5881 = vmul.f32 %v5837, 0.5
    %v5882 = vmul.f32 %v5840, 0.5
    %v5883 = vmul.f32 %v5845, 0.5
    %v5884 = vmul.f32 %v5848, 0.5
    %v5885 = vmul.f32 %v5853, 0.5
    %v5886 = vmul.f32 %v5856, 0.5
    %v5887 = vmul.f32 %v5861, 0.5
    %v5888 = vmul.f32 %v5864, 0.5
    %v5889 = vmul.f32 %v5869, 0.5
    %v5890 = vmul.f32 %v5872, 0.5
    %v5891 = vmul.f32 %v5813, 0.044715
    %v5892 = vmul.f32 %v5816, 0.044715
    %v5893 = vmul.f32 %v5821, 0.044715
    %v5894 = vmul.f32 %v5824, 0.044715
    %v5895 = vmul.f32 %v5829, 0.044715
    %v5896 = vmul.f32 %v5832, 0.044715
    %v5897 = vmul.f32 %v5837, 0.044715
    %v5898 = vmul.f32 %v5840, 0.044715
    %v5899 = vmul.f32 %v5845, 0.044715
    %v5900 = vmul.f32 %v5848, 0.044715
    %v5901 = vmul.f32 %v5853, 0.044715
    %v5902 = vmul.f32 %v5856, 0.044715
    %v5903 = vmul.f32 %v5861, 0.044715
    %v5904 = vmul.f32 %v5864, 0.044715
    %v5905 = vmul.f32 %v5869, 0.044715
    %v5906 = vmul.f32 %v5872, 0.044715
    %v5907 = vmul.f32 %v5891, %v5813
    %v5908 = vmul.f32 %v5892, %v5816
    %v5909 = vmul.f32 %v5893, %v5821
    %v5910 = vmul.f32 %v5894, %v5824
    %v5911 = vmul.f32 %v5895, %v5829
    %v5912 = vmul.f32 %v5896, %v5832
    %v5913 = vmul.f32 %v5897, %v5837
    %v5914 = vmul.f32 %v5898, %v5840
    %v5915 = vmul.f32 %v5899, %v5845
    %v5916 = vmul.f32 %v5900, %v5848
    %v5917 = vmul.f32 %v5901, %v5853
    %v5918 = vmul.f32 %v5902, %v5856
    %v5919 = vmul.f32 %v5903, %v5861
    %v5920 = vmul.f32 %v5904, %v5864
    %v5921 = vmul.f32 %v5905, %v5869
    %v5922 = vmul.f32 %v5906, %v5872
    %v5923 = vmul.f32 %v5907, %v5813
    %v5924 = vmul.f32 %v5908, %v5816
    %v5925 = vmul.f32 %v5909, %v5821
    %v5926 = vmul.f32 %v5910, %v5824
    %v5927 = vmul.f32 %v5911, %v5829
    %v5928 = vmul.f32 %v5912, %v5832
    %v5929 = vmul.f32 %v5913, %v5837
    %v5930 = vmul.f32 %v5914, %v5840
    %v5931 = vmul.f32 %v5915, %v5845
    %v5932 = vmul.f32 %v5916, %v5848
    %v5933 = vmul.f32 %v5917, %v5853
    %v5934 = vmul.f32 %v5918, %v5856
    %v5935 = vmul.f32 %v5919, %v5861
    %v5936 = vmul.f32 %v5920, %v5864
    %v5937 = vmul.f32 %v5921, %v5869
    %v5938 = vmul.f32 %v5922, %v5872
    %v5939 = vadd.f32 %v5813, %v5923
    %v5940 = vadd.f32 %v5816, %v5924
    %v5941 = vadd.f32 %v5821, %v5925
    %v5942 = vadd.f32 %v5824, %v5926
    %v5943 = vadd.f32 %v5829, %v5927
    %v5944 = vadd.f32 %v5832, %v5928
    %v5945 = vadd.f32 %v5837, %v5929
    %v5946 = vadd.f32 %v5840, %v5930
    %v5947 = vadd.f32 %v5845, %v5931
    %v5948 = vadd.f32 %v5848, %v5932
    %v5949 = vadd.f32 %v5853, %v5933
    %v5950 = vadd.f32 %v5856, %v5934
    %v5951 = vadd.f32 %v5861, %v5935
    %v5952 = vadd.f32 %v5864, %v5936
    %v5953 = vadd.f32 %v5869, %v5937
    %v5954 = vadd.f32 %v5872, %v5938
    %v5955 = vmul.f32 %v5939, 0.7978846
    %v5956 = vmul.f32 %v5940, 0.7978846
    %v5957 = vmul.f32 %v5941, 0.7978846
    %v5958 = vmul.f32 %v5942, 0.7978846
    %v5959 = vmul.f32 %v5943, 0.7978846
    %v5960 = vmul.f32 %v5944, 0.7978846
    %v5961 = vmul.f32 %v5945, 0.7978846
    %v5962 = vmul.f32 %v5946, 0.7978846
    %v5963 = vmul.f32 %v5947, 0.7978846
    %v5964 = vmul.f32 %v5948, 0.7978846
    %v5965 = vmul.f32 %v5949, 0.7978846
    %v5966 = vmul.f32 %v5950, 0.7978846
    %v5967 = vmul.f32 %v5951, 0.7978846
    %v5968 = vmul.f32 %v5952, 0.7978846
    %v5969 = vmul.f32 %v5953, 0.7978846
    %v5970 = vmul.f32 %v5954, 0.7978846
    %v5971 = vtanh.pop %v5955
    %v5972 = vtanh.pop %v5956
    %v5973 = vtanh.pop %v5957
    %v5974 = vtanh.pop %v5958
    %v5975 = vtanh.pop %v5959
    %v5976 = vtanh.pop %v5960
    %v5977 = vtanh.pop %v5961
    %v5978 = vtanh.pop %v5962
    %v5979 = vtanh.pop %v5963
    %v5980 = vtanh.pop %v5964
    %v5981 = vtanh.pop %v5965
    %v5982 = vtanh.pop %v5966
    %v5983 = vtanh.pop %v5967
    %v5984 = vtanh.pop %v5968
    %v5985 = vtanh.pop %v5969
    %v5986 = vtanh.pop %v5970
    %v5987 = vadd.f32 %v5971, 1.0
    %v5988 = vadd.f32 %v5972, 1.0
    %v5989 = vadd.f32 %v5973, 1.0
    %v5990 = vadd.f32 %v5974, 1.0
    %v5991 = vadd.f32 %v5975, 1.0
    %v5992 = vadd.f32 %v5976, 1.0
    %v5993 = vadd.f32 %v5977, 1.0
    %v5994 = vadd.f32 %v5978, 1.0
    %v5995 = vadd.f32 %v5979, 1.0
    %v5996 = vadd.f32 %v5980, 1.0
    %v5997 = vadd.f32 %v5981, 1.0
    %v5998 = vadd.f32 %v5982, 1.0
    %v5999 = vadd.f32 %v5983, 1.0
    %v6000 = vadd.f32 %v5984, 1.0
    %v6001 = vadd.f32 %v5985, 1.0
    %v6002 = vadd.f32 %v5986, 1.0
    %v6003 = vmul.f32 %v5875, %v5987
    %v6004 = vmul.f32 %v5876, %v5988
    %v6005 = vmul.f32 %v5877, %v5989
    %v6006 = vmul.f32 %v5878, %v5990
    %v6007 = vmul.f32 %v5879, %v5991
    %v6008 = vmul.f32 %v5880, %v5992
    %v6009 = vmul.f32 %v5881, %v5993
    %v6010 = vmul.f32 %v5882, %v5994
    %v6011 = vmul.f32 %v5883, %v5995
    %v6012 = vmul.f32 %v5884, %v5996
    %v6013 = vmul.f32 %v5885, %v5997
    %v6014 = vmul.f32 %v5886, %v5998
    %v6015 = vmul.f32 %v5887, %v5999
    %v6016 = vmul.f32 %v5888, %v6000
    %v6017 = vmul.f32 %v5889, %v6001
    %v6018 = vmul.f32 %v5890, %v6002
    %6019 = vst.msk [vmem:[#allocation5] sm:$0xff] %vm46, %v6003
    %6020 = vst.msk [vmem:[#allocation5 + $0x8] sm:$0xff] %vm46, %v6004
    %6021 = vst.msk [vmem:[#allocation5 + $0x10] sm:$0xff] %vm46, %v6005
    %6022 = vst.msk [vmem:[#allocation5 + $0x18] sm:$0xff] %vm46, %v6006
    %6023 = vst.msk [vmem:[#allocation5 + $0x20] sm:$0xff] %vm46, %v6007
    %6024 = vst.msk [vmem:[#allocation5 + $0x28] sm:$0xff] %vm46, %v6008
    %6025 = vst.msk [vmem:[#allocation5 + $0x30] sm:$0xff] %vm46, %v6009
    %6026 = vst.msk [vmem:[#allocation5 + $0x38] sm:$0xff] %vm46, %v6010
    %6027 = vst.msk [vmem:[#allocation5 + $0x40] sm:$0xff] %vm46, %v6011
    %6028 = vst.msk [vmem:[#allocation5 + $0x48] sm:$0xff] %vm46, %v6012
    %6029 = vst.msk [vmem:[#allocation5 + $0x50] sm:$0xff] %vm46, %v6013
    %6030 = vst.msk [vmem:[#allocation5 + $0x58] sm:$0xff] %vm46, %v6014
    %6031 = vst.msk [vmem:[#allocation5 + $0x60] sm:$0xff] %vm46, %v6015
    %6032 = vst.msk [vmem:[#allocation5 + $0x68] sm:$0xff] %vm46, %v6016
    %6033 = vst.msk [vmem:[#allocation5 + $0x70] sm:$0xff] %vm46, %v6017
    %6034 = vst.msk [vmem:[#allocation5 + $0x78] sm:$0xff] %vm46, %v6018
    %s6035 = scalar_lea.vmem [#allocation2], 24
    %v6036 = vld [vmem:[%s6035 + $0x6] sm:$0xff]
    %v6037 = vld [vmem:[%s6035 + $0x1e] sm:$0xff]
    %v6038 = vld [vmem:[%s6035 + $0x36] sm:$0xff]
    %v6039 = vld [vmem:[%s6035 + $0x4e] sm:$0xff]
    %v6040 = vld [vmem:[%s6035 + $0x66] sm:$0xff]
    %v6041 = vld [vmem:[%s6035 + $0x7e] sm:$0xff]
    %v6042 = vld [vmem:[%s6035 + $0x96] sm:$0xff]
    %v6043 = vld [vmem:[%s6035 + $0xae] sm:$0xff]
    %v6044 = vld [vmem:[%s6035 + $0x156] sm:$0xff]
    %v6045 = vld [vmem:[%s6035 + $0x16e] sm:$0xff]
    %v6046 = vld [vmem:[%s6035 + $0x186] sm:$0xff]
    %v6047 = vld [vmem:[%s6035 + $0x19e] sm:$0xff]
    %v6048 = vld [vmem:[%s6035 + $0x1b6] sm:$0xff]
    %v6049 = vld [vmem:[%s6035 + $0x1ce] sm:$0xff]
    %v6050 = vld [vmem:[%s6035 + $0x1e6] sm:$0xff]
    %v6051 = vld [vmem:[%s6035 + $0x1fe] sm:$0xff]
    %v6052 = vpack.c.bf16 %v6037, %v6036
    %v6053 = vpack.c.bf16 %v6039, %v6038
    %v6054 = vpack.c.bf16 %v6041, %v6040
    %v6055 = vpack.c.bf16 %v6043, %v6042
    %v6056 = vpack.c.bf16 %v6045, %v6044
    %v6057 = vpack.c.bf16 %v6047, %v6046
    %v6058 = vpack.c.bf16 %v6049, %v6048
    %v6059 = vpack.c.bf16 %v6051, %v6050
    %6060 = vst.msk [vmem:[#allocation3] sm:$0xff] %vm46, %v6052
    %6061 = vst.msk [vmem:[#allocation3 + $0x18] sm:$0xff] %vm46, %v6053
    %6062 = vst.msk [vmem:[#allocation3 + $0x30] sm:$0xff] %vm46, %v6054
    %6063 = vst.msk [vmem:[#allocation3 + $0x48] sm:$0xff] %vm46, %v6055
    %6064 = vst.msk [vmem:[#allocation3 + $0x60] sm:$0xff] %vm46, %v6056
    %6065 = vst.msk [vmem:[#allocation3 + $0x78] sm:$0xff] %vm46, %v6057
    %6066 = vst.msk [vmem:[#allocation3 + $0x90] sm:$0xff] %vm46, %v6058
    %6067 = vst.msk [vmem:[#allocation3 + $0xa8] sm:$0xff] %vm46, %v6059
    %v6068 = vld [vmem:[%s6035 + $0x8] sm:$0xff]
    %v6069 = vld [vmem:[%s6035 + $0x20] sm:$0xff]
    %v6070 = vld [vmem:[%s6035 + $0x38] sm:$0xff]
    %v6071 = vld [vmem:[%s6035 + $0x50] sm:$0xff]
    %v6072 = vld [vmem:[%s6035 + $0x68] sm:$0xff]
    %v6073 = vld [vmem:[%s6035 + $0x80] sm:$0xff]
    %v6074 = vld [vmem:[%s6035 + $0x98] sm:$0xff]
    %v6075 = vld [vmem:[%s6035 + $0xb0] sm:$0xff]
    %v6076 = vld [vmem:[%s6035 + $0x158] sm:$0xff]
    %v6077 = vld [vmem:[%s6035 + $0x170] sm:$0xff]
    %v6078 = vld [vmem:[%s6035 + $0x188] sm:$0xff]
    %v6079 = vld [vmem:[%s6035 + $0x1a0] sm:$0xff]
    %v6080 = vld [vmem:[%s6035 + $0x1b8] sm:$0xff]
    %v6081 = vld [vmem:[%s6035 + $0x1d0] sm:$0xff]
    %v6082 = vld [vmem:[%s6035 + $0x1e8] sm:$0xff]
    %v6083 = vld [vmem:[%s6035 + $0x200] sm:$0xff]
    %v6084 = vpack.c.bf16 %v6069, %v6068
    %v6085 = vpack.c.bf16 %v6071, %v6070
    %v6086 = vpack.c.bf16 %v6073, %v6072
    %v6087 = vpack.c.bf16 %v6075, %v6074
    %v6088 = vpack.c.bf16 %v6077, %v6076
    %v6089 = vpack.c.bf16 %v6079, %v6078
    %v6090 = vpack.c.bf16 %v6081, %v6080
    %v6091 = vpack.c.bf16 %v6083, %v6082
    %6100 = vrot.lane.b32.xlu0 %v6084, 32
    %v6101 = vpop.permute.xlu0 %6100
    %6102 = vrot.lane.b32.xlu0 %v6085, 32
    %v6103 = vpop.permute.xlu0 %6102
    %6104 = vrot.lane.b32.xlu0 %v6086, 32
    %v6105 = vpop.permute.xlu0 %6104
    %6106 = vrot.lane.b32.xlu0 %v6087, 32
    %v6107 = vpop.permute.xlu0 %6106
    %6108 = vrot.lane.b32.xlu0 %v6088, 32
    %v6109 = vpop.permute.xlu0 %6108
    %6110 = vrot.lane.b32.xlu0 %v6089, 32
    %v6111 = vpop.permute.xlu0 %6110
    %6112 = vrot.lane.b32.xlu0 %v6090, 32
    %v6113 = vpop.permute.xlu0 %6112
    %6114 = vrot.lane.b32.xlu0 %v6091, 32
    %v6115 = vpop.permute.xlu0 %6114
    %6124 = vst.msk [vmem:[#allocation3] sm:$0xff] %vm254, %v6101
    %6125 = vst.msk [vmem:[#allocation3 + $0x18] sm:$0xff] %vm254, %v6103
    %6126 = vst.msk [vmem:[#allocation3 + $0x30] sm:$0xff] %vm254, %v6105
    %6127 = vst.msk [vmem:[#allocation3 + $0x48] sm:$0xff] %vm254, %v6107
    %6128 = vst.msk [vmem:[#allocation3 + $0x60] sm:$0xff] %vm254, %v6109
    %6129 = vst.msk [vmem:[#allocation3 + $0x78] sm:$0xff] %vm254, %v6111
    %6130 = vst.msk [vmem:[#allocation3 + $0x90] sm:$0xff] %vm254, %v6113
    %6131 = vst.msk [vmem:[#allocation3 + $0xa8] sm:$0xff] %vm254, %v6115
    %v6132 = vld [vmem:[%s6035 + $0xa] sm:$0xff]
    %v6133 = vld [vmem:[%s6035 + $0x22] sm:$0xff]
    %v6134 = vld [vmem:[%s6035 + $0x3a] sm:$0xff]
    %v6135 = vld [vmem:[%s6035 + $0x52] sm:$0xff]
    %v6136 = vld [vmem:[%s6035 + $0x6a] sm:$0xff]
    %v6137 = vld [vmem:[%s6035 + $0x82] sm:$0xff]
    %v6138 = vld [vmem:[%s6035 + $0x9a] sm:$0xff]
    %v6139 = vld [vmem:[%s6035 + $0xb2] sm:$0xff]
    %v6140 = vld [vmem:[%s6035 + $0x15a] sm:$0xff]
    %v6141 = vld [vmem:[%s6035 + $0x172] sm:$0xff]
    %v6142 = vld [vmem:[%s6035 + $0x18a] sm:$0xff]
    %v6143 = vld [vmem:[%s6035 + $0x1a2] sm:$0xff]
    %v6144 = vld [vmem:[%s6035 + $0x1ba] sm:$0xff]
    %v6145 = vld [vmem:[%s6035 + $0x1d2] sm:$0xff]
    %v6146 = vld [vmem:[%s6035 + $0x1ea] sm:$0xff]
    %v6147 = vld [vmem:[%s6035 + $0x202] sm:$0xff]
    %v6148 = vpack.c.bf16 %v6133, %v6132
    %v6149 = vpack.c.bf16 %v6135, %v6134
    %v6150 = vpack.c.bf16 %v6137, %v6136
    %v6151 = vpack.c.bf16 %v6139, %v6138
    %v6152 = vpack.c.bf16 %v6141, %v6140
    %v6153 = vpack.c.bf16 %v6143, %v6142
    %v6154 = vpack.c.bf16 %v6145, %v6144
    %v6155 = vpack.c.bf16 %v6147, %v6146
    %6164 = vrot.lane.b32.xlu0 %v6148, 64
    %v6165 = vpop.permute.xlu0 %6164
    %6166 = vrot.lane.b32.xlu0 %v6149, 64
    %v6167 = vpop.permute.xlu0 %6166
    %6168 = vrot.lane.b32.xlu0 %v6150, 64
    %v6169 = vpop.permute.xlu0 %6168
    %6170 = vrot.lane.b32.xlu0 %v6151, 64
    %v6171 = vpop.permute.xlu0 %6170
    %6172 = vrot.lane.b32.xlu0 %v6152, 64
    %v6173 = vpop.permute.xlu0 %6172
    %6174 = vrot.lane.b32.xlu0 %v6153, 64
    %v6175 = vpop.permute.xlu0 %6174
    %6176 = vrot.lane.b32.xlu0 %v6154, 64
    %v6177 = vpop.permute.xlu0 %6176
    %6178 = vrot.lane.b32.xlu0 %v6155, 64
    %v6179 = vpop.permute.xlu0 %6178
    %6188 = vst.msk [vmem:[#allocation3] sm:$0xff] %vm319, %v6165
    %6189 = vst.msk [vmem:[#allocation3 + $0x18] sm:$0xff] %vm319, %v6167
    %6190 = vst.msk [vmem:[#allocation3 + $0x30] sm:$0xff] %vm319, %v6169
    %6191 = vst.msk [vmem:[#allocation3 + $0x48] sm:$0xff] %vm319, %v6171
    %6192 = vst.msk [vmem:[#allocation3 + $0x60] sm:$0xff] %vm319, %v6173
    %6193 = vst.msk [vmem:[#allocation3 + $0x78] sm:$0xff] %vm319, %v6175
    %6194 = vst.msk [vmem:[#allocation3 + $0x90] sm:$0xff] %vm319, %v6177
    %6195 = vst.msk [vmem:[#allocation3 + $0xa8] sm:$0xff] %vm319, %v6179
    %v6196 = vld [vmem:[%s148 + $0x6] sm:$0xff]
    %v6197 = vld [vmem:[%s148 + $0x1e] sm:$0xff]
    %v6198 = vld [vmem:[%s148 + $0x36] sm:$0xff]
    %v6199 = vld [vmem:[%s148 + $0x4e] sm:$0xff]
    %v6200 = vld [vmem:[%s148 + $0x66] sm:$0xff]
    %v6201 = vld [vmem:[%s148 + $0x7e] sm:$0xff]
    %v6202 = vld [vmem:[%s148 + $0x96] sm:$0xff]
    %v6203 = vld [vmem:[%s148 + $0xae] sm:$0xff]
    %v6204 = vld [vmem:[%s148 + $0x156] sm:$0xff]
    %v6205 = vld [vmem:[%s148 + $0x16e] sm:$0xff]
    %v6206 = vld [vmem:[%s148 + $0x186] sm:$0xff]
    %v6207 = vld [vmem:[%s148 + $0x19e] sm:$0xff]
    %v6208 = vld [vmem:[%s148 + $0x1b6] sm:$0xff]
    %v6209 = vld [vmem:[%s148 + $0x1ce] sm:$0xff]
    %v6210 = vld [vmem:[%s148 + $0x1e6] sm:$0xff]
    %v6211 = vld [vmem:[%s148 + $0x1fe] sm:$0xff]
    %v6212 = vpack.c.bf16 %v6197, %v6196
    %v6213 = vpack.c.bf16 %v6199, %v6198
    %v6214 = vpack.c.bf16 %v6201, %v6200
    %v6215 = vpack.c.bf16 %v6203, %v6202
    %v6216 = vpack.c.bf16 %v6205, %v6204
    %v6217 = vpack.c.bf16 %v6207, %v6206
    %v6218 = vpack.c.bf16 %v6209, %v6208
    %v6219 = vpack.c.bf16 %v6211, %v6210
    %6228 = vrot.lane.b32.xlu0 %v6212, 96
    %v6229 = vpop.permute.xlu0 %6228
    %6230 = vrot.lane.b32.xlu0 %v6213, 96
    %v6231 = vpop.permute.xlu0 %6230
    %6232 = vrot.lane.b32.xlu0 %v6214, 96
    %v6233 = vpop.permute.xlu0 %6232
    %6234 = vrot.lane.b32.xlu0 %v6215, 96
    %v6235 = vpop.permute.xlu0 %6234
    %6236 = vrot.lane.b32.xlu0 %v6216, 96
    %v6237 = vpop.permute.xlu0 %6236
    %6238 = vrot.lane.b32.xlu0 %v6217, 96
    %v6239 = vpop.permute.xlu0 %6238
    %6240 = vrot.lane.b32.xlu0 %v6218, 96
    %v6241 = vpop.permute.xlu0 %6240
    %6242 = vrot.lane.b32.xlu0 %v6219, 96
    %v6243 = vpop.permute.xlu0 %6242
    %6252 = vst.msk [vmem:[#allocation3] sm:$0xff] %vm384, %v6229
    %6253 = vst.msk [vmem:[#allocation3 + $0x18] sm:$0xff] %vm384, %v6231
    %6254 = vst.msk [vmem:[#allocation3 + $0x30] sm:$0xff] %vm384, %v6233
    %6255 = vst.msk [vmem:[#allocation3 + $0x48] sm:$0xff] %vm384, %v6235
    %6256 = vst.msk [vmem:[#allocation3 + $0x60] sm:$0xff] %vm384, %v6237
    %6257 = vst.msk [vmem:[#allocation3 + $0x78] sm:$0xff] %vm384, %v6239
    %6258 = vst.msk [vmem:[#allocation3 + $0x90] sm:$0xff] %vm384, %v6241
    %6259 = vst.msk [vmem:[#allocation3 + $0xa8] sm:$0xff] %vm384, %v6243
    %v6260 = vld [vmem:[%s148 + $0x8] sm:$0xff]
    %v6261 = vld [vmem:[%s148 + $0x20] sm:$0xff]
    %v6262 = vld [vmem:[%s148 + $0x38] sm:$0xff]
    %v6263 = vld [vmem:[%s148 + $0x50] sm:$0xff]
    %v6264 = vld [vmem:[%s148 + $0x68] sm:$0xff]
    %v6265 = vld [vmem:[%s148 + $0x80] sm:$0xff]
    %v6266 = vld [vmem:[%s148 + $0x98] sm:$0xff]
    %v6267 = vld [vmem:[%s148 + $0xb0] sm:$0xff]
    %v6268 = vld [vmem:[%s148 + $0x158] sm:$0xff]
    %v6269 = vld [vmem:[%s148 + $0x170] sm:$0xff]
    %v6270 = vld [vmem:[%s148 + $0x188] sm:$0xff]
    %v6271 = vld [vmem:[%s148 + $0x1a0] sm:$0xff]
    %v6272 = vld [vmem:[%s148 + $0x1b8] sm:$0xff]
    %v6273 = vld [vmem:[%s148 + $0x1d0] sm:$0xff]
    %v6274 = vld [vmem:[%s148 + $0x1e8] sm:$0xff]
    %v6275 = vld [vmem:[%s148 + $0x200] sm:$0xff]
    %v6276 = vpack.c.bf16 %v6261, %v6260
    %v6277 = vpack.c.bf16 %v6263, %v6262
    %v6278 = vpack.c.bf16 %v6265, %v6264
    %v6279 = vpack.c.bf16 %v6267, %v6266
    %v6280 = vpack.c.bf16 %v6269, %v6268
    %v6281 = vpack.c.bf16 %v6271, %v6270
    %v6282 = vpack.c.bf16 %v6273, %v6272
    %v6283 = vpack.c.bf16 %v6275, %v6274
    %6284 = vst.msk [vmem:[#allocation3 + $0x8] sm:$0xff] %vm46, %v6276
    %6285 = vst.msk [vmem:[#allocation3 + $0x20] sm:$0xff] %vm46, %v6277
    %6286 = vst.msk [vmem:[#allocation3 + $0x38] sm:$0xff] %vm46, %v6278
    %6287 = vst.msk [vmem:[#allocation3 + $0x50] sm:$0xff] %vm46, %v6279
    %6288 = vst.msk [vmem:[#allocation3 + $0x68] sm:$0xff] %vm46, %v6280
    %6289 = vst.msk [vmem:[#allocation3 + $0x80] sm:$0xff] %vm46, %v6281
    %6290 = vst.msk [vmem:[#allocation3 + $0x98] sm:$0xff] %vm46, %v6282
    %6291 = vst.msk [vmem:[#allocation3 + $0xb0] sm:$0xff] %vm46, %v6283
    %v6292 = vld [vmem:[%s148 + $0xa] sm:$0xff]
    %v6293 = vld [vmem:[%s148 + $0x22] sm:$0xff]
    %v6294 = vld [vmem:[%s148 + $0x3a] sm:$0xff]
    %v6295 = vld [vmem:[%s148 + $0x52] sm:$0xff]
    %v6296 = vld [vmem:[%s148 + $0x6a] sm:$0xff]
    %v6297 = vld [vmem:[%s148 + $0x82] sm:$0xff]
    %v6298 = vld [vmem:[%s148 + $0x9a] sm:$0xff]
    %v6299 = vld [vmem:[%s148 + $0xb2] sm:$0xff]
    %v6300 = vld [vmem:[%s148 + $0x15a] sm:$0xff]
    %v6301 = vld [vmem:[%s148 + $0x172] sm:$0xff]
    %v6302 = vld [vmem:[%s148 + $0x18a] sm:$0xff]
    %v6303 = vld [vmem:[%s148 + $0x1a2] sm:$0xff]
    %v6304 = vld [vmem:[%s148 + $0x1ba] sm:$0xff]
    %v6305 = vld [vmem:[%s148 + $0x1d2] sm:$0xff]
    %v6306 = vld [vmem:[%s148 + $0x1ea] sm:$0xff]
    %v6307 = vld [vmem:[%s148 + $0x202] sm:$0xff]
    %v6308 = vpack.c.bf16 %v6293, %v6292
    %v6309 = vpack.c.bf16 %v6295, %v6294
    %v6310 = vpack.c.bf16 %v6297, %v6296
    %v6311 = vpack.c.bf16 %v6299, %v6298
    %v6312 = vpack.c.bf16 %v6301, %v6300
    %v6313 = vpack.c.bf16 %v6303, %v6302
    %v6314 = vpack.c.bf16 %v6305, %v6304
    %v6315 = vpack.c.bf16 %v6307, %v6306
    %6324 = vrot.lane.b32.xlu0 %v6308, 32
    %v6325 = vpop.permute.xlu0 %6324
    %6326 = vrot.lane.b32.xlu0 %v6309, 32
    %v6327 = vpop.permute.xlu0 %6326
    %6328 = vrot.lane.b32.xlu0 %v6310, 32
    %v6329 = vpop.permute.xlu0 %6328
    %6330 = vrot.lane.b32.xlu0 %v6311, 32
    %v6331 = vpop.permute.xlu0 %6330
    %6332 = vrot.lane.b32.xlu0 %v6312, 32
    %v6333 = vpop.permute.xlu0 %6332
    %6334 = vrot.lane.b32.xlu0 %v6313, 32
    %v6335 = vpop.permute.xlu0 %6334
    %6336 = vrot.lane.b32.xlu0 %v6314, 32
    %v6337 = vpop.permute.xlu0 %6336
    %6338 = vrot.lane.b32.xlu0 %v6315, 32
    %v6339 = vpop.permute.xlu0 %6338
    %6348 = vst.msk [vmem:[#allocation3 + $0x8] sm:$0xff] %vm254, %v6325
    %6349 = vst.msk [vmem:[#allocation3 + $0x20] sm:$0xff] %vm254, %v6327
    %6350 = vst.msk [vmem:[#allocation3 + $0x38] sm:$0xff] %vm254, %v6329
    %6351 = vst.msk [vmem:[#allocation3 + $0x50] sm:$0xff] %vm254, %v6331
    %6352 = vst.msk [vmem:[#allocation3 + $0x68] sm:$0xff] %vm254, %v6333
    %6353 = vst.msk [vmem:[#allocation3 + $0x80] sm:$0xff] %vm254, %v6335
    %6354 = vst.msk [vmem:[#allocation3 + $0x98] sm:$0xff] %vm254, %v6337
    %6355 = vst.msk [vmem:[#allocation3 + $0xb0] sm:$0xff] %vm254, %v6339
    %s6356 = scalar_lea.vmem [#allocation2], 120
    %v6357 = vld [vmem:[%s6356 + $0x6] sm:$0xff]
    %v6358 = vld [vmem:[%s6356 + $0x1e] sm:$0xff]
    %v6359 = vld [vmem:[%s6356 + $0x36] sm:$0xff]
    %v6360 = vld [vmem:[%s6356 + $0x4e] sm:$0xff]
    %v6361 = vld [vmem:[%s6356 + $0x66] sm:$0xff]
    %v6362 = vld [vmem:[%s6356 + $0x7e] sm:$0xff]
    %v6363 = vld [vmem:[%s6356 + $0x96] sm:$0xff]
    %v6364 = vld [vmem:[%s6356 + $0xae] sm:$0xff]
    %v6365 = vld [vmem:[%s6356 + $0x156] sm:$0xff]
    %v6366 = vld [vmem:[%s6356 + $0x16e] sm:$0xff]
    %v6367 = vld [vmem:[%s6356 + $0x186] sm:$0xff]
    %v6368 = vld [vmem:[%s6356 + $0x19e] sm:$0xff]
    %v6369 = vld [vmem:[%s6356 + $0x1b6] sm:$0xff]
    %v6370 = vld [vmem:[%s6356 + $0x1ce] sm:$0xff]
    %v6371 = vld [vmem:[%s6356 + $0x1e6] sm:$0xff]
    %v6372 = vld [vmem:[%s6356 + $0x1fe] sm:$0xff]
    %v6373 = vpack.c.bf16 %v6358, %v6357
    %v6374 = vpack.c.bf16 %v6360, %v6359
    %v6375 = vpack.c.bf16 %v6362, %v6361
    %v6376 = vpack.c.bf16 %v6364, %v6363
    %v6377 = vpack.c.bf16 %v6366, %v6365
    %v6378 = vpack.c.bf16 %v6368, %v6367
    %v6379 = vpack.c.bf16 %v6370, %v6369
    %v6380 = vpack.c.bf16 %v6372, %v6371
    %6389 = vrot.lane.b32.xlu0 %v6373, 64
    %v6390 = vpop.permute.xlu0 %6389
    %6391 = vrot.lane.b32.xlu0 %v6374, 64
    %v6392 = vpop.permute.xlu0 %6391
    %6393 = vrot.lane.b32.xlu0 %v6375, 64
    %v6394 = vpop.permute.xlu0 %6393
    %6395 = vrot.lane.b32.xlu0 %v6376, 64
    %v6396 = vpop.permute.xlu0 %6395
    %6397 = vrot.lane.b32.xlu0 %v6377, 64
    %v6398 = vpop.permute.xlu0 %6397
    %6399 = vrot.lane.b32.xlu0 %v6378, 64
    %v6400 = vpop.permute.xlu0 %6399
    %6401 = vrot.lane.b32.xlu0 %v6379, 64
    %v6402 = vpop.permute.xlu0 %6401
    %6403 = vrot.lane.b32.xlu0 %v6380, 64
    %v6404 = vpop.permute.xlu0 %6403
    %6413 = vst.msk [vmem:[#allocation3 + $0x8] sm:$0xff] %vm319, %v6390
    %6414 = vst.msk [vmem:[#allocation3 + $0x20] sm:$0xff] %vm319, %v6392
    %6415 = vst.msk [vmem:[#allocation3 + $0x38] sm:$0xff] %vm319, %v6394
    %6416 = vst.msk [vmem:[#allocation3 + $0x50] sm:$0xff] %vm319, %v6396
    %6417 = vst.msk [vmem:[#allocation3 + $0x68] sm:$0xff] %vm319, %v6398
    %6418 = vst.msk [vmem:[#allocation3 + $0x80] sm:$0xff] %vm319, %v6400
    %6419 = vst.msk [vmem:[#allocation3 + $0x98] sm:$0xff] %vm319, %v6402
    %6420 = vst.msk [vmem:[#allocation3 + $0xb0] sm:$0xff] %vm319, %v6404
    %v6421 = vld [vmem:[%s6356 + $0x8] sm:$0xff]
    %v6422 = vld [vmem:[%s6356 + $0x20] sm:$0xff]
    %v6423 = vld [vmem:[%s6356 + $0x38] sm:$0xff]
    %v6424 = vld [vmem:[%s6356 + $0x50] sm:$0xff]
    %v6425 = vld [vmem:[%s6356 + $0x68] sm:$0xff]
    %v6426 = vld [vmem:[%s6356 + $0x80] sm:$0xff]
    %v6427 = vld [vmem:[%s6356 + $0x98] sm:$0xff]
    %v6428 = vld [vmem:[%s6356 + $0xb0] sm:$0xff]
    %v6429 = vld [vmem:[%s6356 + $0x158] sm:$0xff]
    %v6430 = vld [vmem:[%s6356 + $0x170] sm:$0xff]
    %v6431 = vld [vmem:[%s6356 + $0x188] sm:$0xff]
    %v6432 = vld [vmem:[%s6356 + $0x1a0] sm:$0xff]
    %v6433 = vld [vmem:[%s6356 + $0x1b8] sm:$0xff]
    %v6434 = vld [vmem:[%s6356 + $0x1d0] sm:$0xff]
    %v6435 = vld [vmem:[%s6356 + $0x1e8] sm:$0xff]
    %v6436 = vld [vmem:[%s6356 + $0x200] sm:$0xff]
    %v6437 = vpack.c.bf16 %v6422, %v6421
    %v6438 = vpack.c.bf16 %v6424, %v6423
    %v6439 = vpack.c.bf16 %v6426, %v6425
    %v6440 = vpack.c.bf16 %v6428, %v6427
    %v6441 = vpack.c.bf16 %v6430, %v6429
    %v6442 = vpack.c.bf16 %v6432, %v6431
    %v6443 = vpack.c.bf16 %v6434, %v6433
    %v6444 = vpack.c.bf16 %v6436, %v6435
    %6453 = vrot.lane.b32.xlu0 %v6437, 96
    %v6454 = vpop.permute.xlu0 %6453
    %6455 = vrot.lane.b32.xlu0 %v6438, 96
    %v6456 = vpop.permute.xlu0 %6455
    %6457 = vrot.lane.b32.xlu0 %v6439, 96
    %v6458 = vpop.permute.xlu0 %6457
    %6459 = vrot.lane.b32.xlu0 %v6440, 96
    %v6460 = vpop.permute.xlu0 %6459
    %6461 = vrot.lane.b32.xlu0 %v6441, 96
    %v6462 = vpop.permute.xlu0 %6461
    %6463 = vrot.lane.b32.xlu0 %v6442, 96
    %v6464 = vpop.permute.xlu0 %6463
    %6465 = vrot.lane.b32.xlu0 %v6443, 96
    %v6466 = vpop.permute.xlu0 %6465
    %6467 = vrot.lane.b32.xlu0 %v6444, 96
    %v6468 = vpop.permute.xlu0 %6467
    %6477 = vst.msk [vmem:[#allocation3 + $0x8] sm:$0xff] %vm384, %v6454
    %6478 = vst.msk [vmem:[#allocation3 + $0x20] sm:$0xff] %vm384, %v6456
    %6479 = vst.msk [vmem:[#allocation3 + $0x38] sm:$0xff] %vm384, %v6458
    %6480 = vst.msk [vmem:[#allocation3 + $0x50] sm:$0xff] %vm384, %v6460
    %6481 = vst.msk [vmem:[#allocation3 + $0x68] sm:$0xff] %vm384, %v6462
    %6482 = vst.msk [vmem:[#allocation3 + $0x80] sm:$0xff] %vm384, %v6464
    %6483 = vst.msk [vmem:[#allocation3 + $0x98] sm:$0xff] %vm384, %v6466
    %6484 = vst.msk [vmem:[#allocation3 + $0xb0] sm:$0xff] %vm384, %v6468
    %v6485 = vld [vmem:[%s6356 + $0xa] sm:$0xff]
    %v6486 = vld [vmem:[%s6356 + $0x22] sm:$0xff]
    %v6487 = vld [vmem:[%s6356 + $0x3a] sm:$0xff]
    %v6488 = vld [vmem:[%s6356 + $0x52] sm:$0xff]
    %v6489 = vld [vmem:[%s6356 + $0x6a] sm:$0xff]
    %v6490 = vld [vmem:[%s6356 + $0x82] sm:$0xff]
    %v6491 = vld [vmem:[%s6356 + $0x9a] sm:$0xff]
    %v6492 = vld [vmem:[%s6356 + $0xb2] sm:$0xff]
    %v6493 = vld [vmem:[%s6356 + $0x15a] sm:$0xff]
    %v6494 = vld [vmem:[%s6356 + $0x172] sm:$0xff]
    %v6495 = vld [vmem:[%s6356 + $0x18a] sm:$0xff]
    %v6496 = vld [vmem:[%s6356 + $0x1a2] sm:$0xff]
    %v6497 = vld [vmem:[%s6356 + $0x1ba] sm:$0xff]
    %v6498 = vld [vmem:[%s6356 + $0x1d2] sm:$0xff]
    %v6499 = vld [vmem:[%s6356 + $0x1ea] sm:$0xff]
    %v6500 = vld [vmem:[%s6356 + $0x202] sm:$0xff]
    %v6501 = vpack.c.bf16 %v6486, %v6485
    %v6502 = vpack.c.bf16 %v6488, %v6487
    %v6503 = vpack.c.bf16 %v6490, %v6489
    %v6504 = vpack.c.bf16 %v6492, %v6491
    %v6505 = vpack.c.bf16 %v6494, %v6493
    %v6506 = vpack.c.bf16 %v6496, %v6495
    %v6507 = vpack.c.bf16 %v6498, %v6497
    %v6508 = vpack.c.bf16 %v6500, %v6499
    %6509 = vst.msk [vmem:[#allocation3 + $0x10] sm:$0xff] %vm46, %v6501
    %6510 = vst.msk [vmem:[#allocation3 + $0x28] sm:$0xff] %vm46, %v6502
    %6511 = vst.msk [vmem:[#allocation3 + $0x40] sm:$0xff] %vm46, %v6503
    %6512 = vst.msk [vmem:[#allocation3 + $0x58] sm:$0xff] %vm46, %v6504
    %6513 = vst.msk [vmem:[#allocation3 + $0x70] sm:$0xff] %vm46, %v6505
    %6514 = vst.msk [vmem:[#allocation3 + $0x88] sm:$0xff] %vm46, %v6506
    %6515 = vst.msk [vmem:[#allocation3 + $0xa0] sm:$0xff] %vm46, %v6507
    %6516 = vst.msk [vmem:[#allocation3 + $0xb8] sm:$0xff] %vm46, %v6508
    %v6517 = vld [vmem:[#allocation5] sm:$0xff]
    %v6518 = vld [vmem:[#allocation5 + $0x8] sm:$0xff]
    %v6519 = vld [vmem:[#allocation5 + $0x10] sm:$0xff]
    %v6520 = vld [vmem:[#allocation5 + $0x18] sm:$0xff]
    %v6521 = vld [vmem:[#allocation5 + $0x20] sm:$0xff]
    %v6522 = vld [vmem:[#allocation5 + $0x28] sm:$0xff]
    %v6523 = vld [vmem:[#allocation5 + $0x30] sm:$0xff]
    %v6524 = vld [vmem:[#allocation5 + $0x38] sm:$0xff]
    %v6525 = vld [vmem:[#allocation5 + $0x40] sm:$0xff]
    %v6526 = vld [vmem:[#allocation5 + $0x48] sm:$0xff]
    %v6527 = vld [vmem:[#allocation5 + $0x50] sm:$0xff]
    %v6528 = vld [vmem:[#allocation5 + $0x58] sm:$0xff]
    %v6529 = vld [vmem:[#allocation5 + $0x60] sm:$0xff]
    %v6530 = vld [vmem:[#allocation5 + $0x68] sm:$0xff]
    %v6531 = vld [vmem:[#allocation5 + $0x70] sm:$0xff]
    %v6532 = vld [vmem:[#allocation5 + $0x78] sm:$0xff]
    %s6533 = scalar_lea.vmem %s9, 288
    %v6534 = vld [vmem:[%s6533] sm:$0xf]
    %v6535 = vld [vmem:[%s6533 + $0x4] sm:$0xf]
    %v6536 = vld [vmem:[%s6533 + $0x8] sm:$0xf]
    %v6537 = vld [vmem:[%s6533 + $0xc] sm:$0xf]
    %v6538 = vld [vmem:[%s6533 + $0x10] sm:$0xf]
    %v6539 = vld [vmem:[%s6533 + $0x14] sm:$0xf]
    %v6540 = vld [vmem:[%s6533 + $0x18] sm:$0xf]
    %v6541 = vld [vmem:[%s6533 + $0x1c] sm:$0xf]
    %v6542 = vld [vmem:[%s6533 + $0x20] sm:$0xf]
    %v6543 = vld [vmem:[%s6533 + $0x24] sm:$0xf]
    %v6544 = vld [vmem:[%s6533 + $0x28] sm:$0xf]
    %v6545 = vld [vmem:[%s6533 + $0x2c] sm:$0xf]
    %v6546 = vld [vmem:[%s6533 + $0x30] sm:$0xf]
    %v6547 = vld [vmem:[%s6533 + $0x34] sm:$0xf]
    %v6548 = vld [vmem:[%s6533 + $0x38] sm:$0xf]
    %v6549 = vld [vmem:[%s6533 + $0x3c] sm:$0xf]
    %v6550 = vld [vmem:[%s6533 + $0x40] sm:$0xf]
    %v6551 = vld [vmem:[%s6533 + $0x44] sm:$0xf]
    %v6552 = vld [vmem:[%s6533 + $0x48] sm:$0xf]
    %v6553 = vld [vmem:[%s6533 + $0x4c] sm:$0xf]
    %v6554 = vld [vmem:[%s6533 + $0x50] sm:$0xf]
    %v6555 = vld [vmem:[%s6533 + $0x54] sm:$0xf]
    %v6556 = vld [vmem:[%s6533 + $0x58] sm:$0xf]
    %v6557 = vld [vmem:[%s6533 + $0x5c] sm:$0xf]
    %v6558 = vld [vmem:[%s6533 + $0x60] sm:$0xf]
    %v6559 = vld [vmem:[%s6533 + $0x64] sm:$0xf]
    %v6560 = vld [vmem:[%s6533 + $0x68] sm:$0xf]
    %v6561 = vld [vmem:[%s6533 + $0x6c] sm:$0xf]
    %v6562 = vld [vmem:[%s6533 + $0x70] sm:$0xf]
    %v6563 = vld [vmem:[%s6533 + $0x74] sm:$0xf]
    %v6564 = vld [vmem:[%s6533 + $0x78] sm:$0xf]
    %v6565 = vld [vmem:[%s6533 + $0x7c] sm:$0xf]
    %v6566 = vld [vmem:[%s6533 + $0x80] sm:$0xf]
    %v6567 = vld [vmem:[%s6533 + $0x84] sm:$0xf]
    %v6568 = vld [vmem:[%s6533 + $0x88] sm:$0xf]
    %v6569 = vld [vmem:[%s6533 + $0x8c] sm:$0xf]
    %s6570 = scalar_lea.vmem %s10, 2
    %v6571 = vld [vmem:[%s6570] sm:$0x1]
    %v6572 = vld [vmem:[#allocation3] sm:$0xff]
    %v6573 = vld [vmem:[#allocation3 + $0x8] sm:$0xff]
    %v6574 = vld [vmem:[#allocation3 + $0x10] sm:$0xff]
    %v6575 = vld [vmem:[#allocation3 + $0x18] sm:$0xff]
    %v6576 = vld [vmem:[#allocation3 + $0x20] sm:$0xff]
    %v6577 = vld [vmem:[#allocation3 + $0x28] sm:$0xff]
    %v6578 = vld [vmem:[#allocation3 + $0x30] sm:$0xff]
    %v6579 = vld [vmem:[#allocation3 + $0x38] sm:$0xff]
    %v6580 = vld [vmem:[#allocation3 + $0x40] sm:$0xff]
    %v6581 = vld [vmem:[#allocation3 + $0x48] sm:$0xff]
    %v6582 = vld [vmem:[#allocation3 + $0x50] sm:$0xff]
    %v6583 = vld [vmem:[#allocation3 + $0x58] sm:$0xff]
    %v6584 = vld [vmem:[#allocation3 + $0x60] sm:$0xff]
    %v6585 = vld [vmem:[#allocation3 + $0x68] sm:$0xff]
    %v6586 = vld [vmem:[#allocation3 + $0x70] sm:$0xff]
    %v6587 = vld [vmem:[#allocation3 + $0x78] sm:$0xff]
    %v6588 = vld [vmem:[#allocation3 + $0x80] sm:$0xff]
    %v6589 = vld [vmem:[#allocation3 + $0x88] sm:$0xff]
    %v6590 = vld [vmem:[#allocation3 + $0x90] sm:$0xff]
    %v6591 = vld [vmem:[#allocation3 + $0x98] sm:$0xff]
    %v6592 = vld [vmem:[#allocation3 + $0xa0] sm:$0xff]
    %v6593 = vld [vmem:[#allocation3 + $0xa8] sm:$0xff]
    %v6594 = vld [vmem:[#allocation3 + $0xb0] sm:$0xff]
    %v6595 = vld [vmem:[#allocation3 + $0xb8] sm:$0xff]
    %v6597 = vlaneseq
    %v6598 = vshrl.u32 %v6597, 7
    %v6599 = vsub.s32 0, %v6598
    %v6600 = vrot.slane %v6571, %v6599
    %v6638 = vunpack.c.l.b16 %v6534
    %v6639 = vunpack.c.l.b16 %v6535
    %v6640 = vunpack.c.l.b16 %v6536
    %v6641 = vunpack.c.l.b16 %v6537
    %v6642 = vunpack.c.l.b16 %v6538
    %v6643 = vunpack.c.l.b16 %v6539
    %v6644 = vunpack.c.l.b16 %v6540
    %v6645 = vunpack.c.l.b16 %v6541
    %v6646 = vunpack.c.l.b16 %v6542
    %v6647 = vunpack.c.l.b16 %v6543
    %v6648 = vunpack.c.l.b16 %v6544
    %v6649 = vunpack.c.l.b16 %v6545
    %v6650 = vunpack.c.l.b16 %v6546
    %v6651 = vunpack.c.l.b16 %v6547
    %v6652 = vunpack.c.l.b16 %v6548
    %v6653 = vunpack.c.l.b16 %v6549
    %v6654 = vunpack.c.l.b16 %v6550
    %v6655 = vunpack.c.l.b16 %v6551
    %v6656 = vunpack.c.l.b16 %v6552
    %v6657 = vunpack.c.l.b16 %v6553
    %v6658 = vunpack.c.l.b16 %v6554
    %v6659 = vunpack.c.l.b16 %v6555
    %v6660 = vunpack.c.l.b16 %v6556
    %v6661 = vunpack.c.l.b16 %v6557
    %v6662 = vunpack.c.l.b16 %v6558
    %v6663 = vunpack.c.l.b16 %v6559
    %v6664 = vunpack.c.l.b16 %v6560
    %v6665 = vunpack.c.l.b16 %v6561
    %v6666 = vunpack.c.l.b16 %v6562
    %v6667 = vunpack.c.l.b16 %v6563
    %v6668 = vunpack.c.l.b16 %v6564
    %v6669 = vunpack.c.l.b16 %v6565
    %v6670 = vunpack.c.l.b16 %v6566
    %v6671 = vunpack.c.l.b16 %v6567
    %v6672 = vunpack.c.l.b16 %v6568
    %v6673 = vunpack.c.l.b16 %v6569
    %v6674 = vpack.c.b16 %v6639, %v6638
    %v6675 = vpack.c.b16 %v6641, %v6640
    %v6676 = vpack.c.b16 %v6643, %v6642
    %v6677 = vpack.c.b16 %v6645, %v6644
    %v6678 = vpack.c.b16 %v6647, %v6646
    %v6679 = vpack.c.b16 %v6649, %v6648
    %v6680 = vpack.c.b16 %v6651, %v6650
    %v6681 = vpack.c.b16 %v6653, %v6652
    %v6682 = vpack.c.b16 %v6655, %v6654
    %v6683 = vpack.c.b16 %v6657, %v6656
    %v6684 = vpack.c.b16 %v6659, %v6658
    %v6685 = vpack.c.b16 %v6661, %v6660
    %v6686 = vpack.c.b16 %v6663, %v6662
    %v6687 = vpack.c.b16 %v6665, %v6664
    %v6688 = vpack.c.b16 %v6667, %v6666
    %v6689 = vpack.c.b16 %v6669, %v6668
    %v6690 = vpack.c.b16 %v6671, %v6670
    %v6691 = vpack.c.b16 %v6673, %v6672
    %v6711 = vsel %vm46, %v6574, 0
    %v6714 = vsel %vm46, %v6577, 0
    %v6717 = vsel %vm46, %v6580, 0
    %v6720 = vsel %vm46, %v6583, 0
    %v6723 = vsel %vm46, %v6586, 0
    %v6726 = vsel %vm46, %v6589, 0
    %v6729 = vsel %vm46, %v6592, 0
    %v6732 = vsel %vm46, %v6595, 0
    %6734 = vmatprep.subr.bf16.mxu0 0
    %6735 = vmatpush1.bf16.msra.mxu0 %v6674
    %6736 = vmatprep.subr.bf16.mxu0 0
    %6737 = vmatpush1.bf16.msra.mxu0 %v6675
    %6738 = vmatprep.subr.bf16.mxu0 0
    %6739 = vmatpush1.bf16.msra.mxu0 %v6676
    %6740 = vmatprep.subr.bf16.mxu0 0
    %6741 = vmatpush1.bf16.msra.mxu0 %v6677
    %6742 = vmatprep.subr.bf16.mxu0 0
    %6743 = vmatpush1.bf16.msra.mxu0 %v6678
    %6744 = vmatprep.subr.bf16.mxu0 0
    %6745 = vmatpush1.bf16.msra.mxu0 %v6679
    %6746 = vmatprep.subr.bf16.mxu0 0
    %6747 = vmatpush1.bf16.msra.mxu0 %v6680
    %6748 = vmatprep.subr.bf16.mxu0 0
    %6749 = vmatpush1.bf16.msra.mxu0 %v6681
    %6750 = vmatprep.subr.bf16.mxu0 0
    %6751 = vmatpush1.bf16.msra.mxu0 %v6682
    %6752 = vmatprep.subr.bf16.mxu0 0
    %6753 = vmatpush1.bf16.msra.mxu0 %v6683
    %6754 = vmatprep.subr.bf16.mxu0 0
    %6755 = vmatpush1.bf16.msra.mxu0 %v6684
    %6756 = vmatprep.subr.bf16.mxu0 0
    %6757 = vmatpush1.bf16.msra.mxu0 %v6685
    %6758 = vmatprep.subr.bf16.mxu0 0
    %6759 = vmatpush1.bf16.msra.mxu0 %v6686
    %6760 = vmatprep.subr.bf16.mxu0 0
    %6761 = vmatpush1.bf16.msra.mxu0 %v6687
    %6762 = vmatprep.subr.bf16.mxu0 0
    %6763 = vmatpush1.bf16.msra.mxu0 %v6688
    %6764 = vmatprep.subr.bf16.mxu0 0
    %6765 = vmatpush1.bf16.msra.mxu0 %v6689
    %6766 = vmatprep.mubr.bf16.mxu0 %v6573
    %6767 = vmatmul.mubr.bf16.gmra.mrb[0].mxu0 %v6572
    %v6768 = vpop.f32.mrb[0].mxu0
    %v6769 = vadd.f32 %v6600, %v6768
    %v6770 = vpop.f32.mrb[0].mxu0
    %v6771 = vpop.f32.mrb[0].mxu0
    %v6772 = vadd.f32 %v6600, %v6771
    %v6773 = vpop.f32.mrb[0].mxu0
    %6774 = vmatprep.mubr.bf16.mxu0 %v6576
    %6775 = vmatmul.mubr.bf16.gmra.mrb[0].mxu0 %v6575
    %v6776 = vpop.f32.mrb[0].mxu0
    %v6777 = vadd.f32 %v6600, %v6776
    %v6778 = vpop.f32.mrb[0].mxu0
    %v6779 = vpop.f32.mrb[0].mxu0
    %v6780 = vadd.f32 %v6600, %v6779
    %v6781 = vpop.f32.mrb[0].mxu0
    %6782 = vmatprep.mubr.bf16.mxu0 %v6579
    %6783 = vmatmul.mubr.bf16.gmra.mrb[0].mxu0 %v6578
    %v6784 = vpop.f32.mrb[0].mxu0
    %v6785 = vadd.f32 %v6600, %v6784
    %v6786 = vpop.f32.mrb[0].mxu0
    %v6787 = vpop.f32.mrb[0].mxu0
    %v6788 = vadd.f32 %v6600, %v6787
    %v6789 = vpop.f32.mrb[0].mxu0
    %6790 = vmatprep.mubr.bf16.mxu0 %v6582
    %6791 = vmatmul.mubr.bf16.gmra.mrb[0].mxu0 %v6581
    %v6792 = vpop.f32.mrb[0].mxu0
    %v6793 = vadd.f32 %v6600, %v6792
    %v6794 = vpop.f32.mrb[0].mxu0
    %v6795 = vpop.f32.mrb[0].mxu0
    %v6796 = vadd.f32 %v6600, %v6795
    %v6797 = vpop.f32.mrb[0].mxu0
    %6798 = vmatprep.mubr.bf16.mxu0 %v6585
    %6799 = vmatmul.mubr.bf16.gmra.mrb[0].mxu0 %v6584
    %v6800 = vpop.f32.mrb[0].mxu0
    %v6801 = vadd.f32 %v6600, %v6800
    %v6802 = vpop.f32.mrb[0].mxu0
    %v6803 = vpop.f32.mrb[0].mxu0
    %v6804 = vadd.f32 %v6600, %v6803
    %v6805 = vpop.f32.mrb[0].mxu0
    %6806 = vmatprep.mubr.bf16.mxu0 %v6588
    %6807 = vmatmul.mubr.bf16.gmra.mrb[0].mxu0 %v6587
    %v6808 = vpop.f32.mrb[0].mxu0
    %v6809 = vadd.f32 %v6600, %v6808
    %v6810 = vpop.f32.mrb[0].mxu0
    %v6811 = vpop.f32.mrb[0].mxu0
    %v6812 = vadd.f32 %v6600, %v6811
    %v6813 = vpop.f32.mrb[0].mxu0
    %6814 = vmatprep.mubr.bf16.mxu0 %v6591
    %6815 = vmatmul.mubr.bf16.gmra.mrb[0].mxu0 %v6590
    %v6816 = vpop.f32.mrb[0].mxu0
    %v6817 = vadd.f32 %v6600, %v6816
    %v6818 = vpop.f32.mrb[0].mxu0
    %v6819 = vpop.f32.mrb[0].mxu0
    %v6820 = vadd.f32 %v6600, %v6819
    %v6821 = vpop.f32.mrb[0].mxu0
    %6822 = vmatprep.mubr.bf16.mxu0 %v6594
    %6823 = vmatmul.mubr.bf16.gmra.mrb[0].mxu0 %v6593
    %v6824 = vpop.f32.mrb[0].mxu0
    %v6825 = vadd.f32 %v6600, %v6824
    %v6826 = vpop.f32.mrb[0].mxu0
    %v6827 = vpop.f32.mrb[0].mxu0
    %v6828 = vadd.f32 %v6600, %v6827
    %v6829 = vpop.f32.mrb[0].mxu0
    %6830 = vdwg.mxu0
    %6831 = vmatprep.subr.bf16.mxu0 0
    %6832 = vmatpush1.bf16.msra.mxu0 %v6690
    %6833 = vmatprep.subr.bf16.mxu0 0
    %6834 = vmatpush1.bf16.msra.mxu0 %v6691
    %6835 = vmatprep.subr.bf16.mxu0 0
    %6836 = vmatpush1.bf16.msra.mxu0 0
    %6837 = vmatprep.subr.bf16.mxu0 0
    %6838 = vmatpush1.bf16.msra.mxu0 0
    %6839 = vmatprep.subr.bf16.mxu0 0
    %6840 = vmatpush1.bf16.msra.mxu0 0
    %6841 = vmatprep.subr.bf16.mxu0 0
    %6842 = vmatpush1.bf16.msra.mxu0 0
    %6843 = vmatprep.subr.bf16.mxu0 0
    %6844 = vmatpush1.bf16.msra.mxu0 0
    %6845 = vmatprep.subr.bf16.mxu0 0
    %6846 = vmatpush1.bf16.msra.mxu0 0
    %6847 = vmatprep.subr.bf16.mxu0 0
    %6848 = vmatpush1.bf16.msra.mxu0 0
    %6849 = vmatprep.subr.bf16.mxu0 0
    %6850 = vmatpush1.bf16.msra.mxu0 0
    %6851 = vmatprep.subr.bf16.mxu0 0
    %6852 = vmatpush1.bf16.msra.mxu0 0
    %6853 = vmatprep.subr.bf16.mxu0 0
    %6854 = vmatpush1.bf16.msra.mxu0 0
    %6855 = vmatprep.subr.bf16.mxu0 0
    %6856 = vmatpush1.bf16.msra.mxu0 0
    %6857 = vmatprep.subr.bf16.mxu0 0
    %6858 = vmatpush1.bf16.msra.mxu0 0
    %6859 = vmatprep.subr.bf16.mxu0 0
    %6860 = vmatpush1.bf16.msra.mxu0 0
    %6861 = vmatprep.subr.bf16.mxu0 0
    %6862 = vmatpush1.bf16.msra.mxu0 0
    %6863 = vmatprep.mubr.bf16.mxu0 0
    %6864 = vmatmul.mubr.bf16.gmra.mrb[0].mxu0 %v6711
    %v6865 = vpop.f32.mrb[0].mxu0
    %v6866 = vadd.f32 %v6769, %v6865
    %v6867 = vpop.f32.mrb[0].mxu0
    %v6868 = vpop.f32.mrb[0].mxu0
    %v6869 = vadd.f32 %v6772, %v6868
    %v6870 = vpop.f32.mrb[0].mxu0
    %6871 = vmatprep.mubr.bf16.mxu0 0
    %6872 = vmatmul.mubr.bf16.gmra.mrb[0].mxu0 %v6714
    %v6873 = vpop.f32.mrb[0].mxu0
    %v6874 = vadd.f32 %v6777, %v6873
    %v6875 = vpop.f32.mrb[0].mxu0
    %v6876 = vpop.f32.mrb[0].mxu0
    %v6877 = vadd.f32 %v6780, %v6876
    %v6878 = vpop.f32.mrb[0].mxu0
    %6879 = vmatprep.mubr.bf16.mxu0 0
    %6880 = vmatmul.mubr.bf16.gmra.mrb[0].mxu0 %v6717
    %v6881 = vpop.f32.mrb[0].mxu0
    %v6882 = vadd.f32 %v6785, %v6881
    %v6883 = vpop.f32.mrb[0].mxu0
    %v6884 = vpop.f32.mrb[0].mxu0
    %v6885 = vadd.f32 %v6788, %v6884
    %v6886 = vpop.f32.mrb[0].mxu0
    %6887 = vmatprep.mubr.bf16.mxu0 0
    %6888 = vmatmul.mubr.bf16.gmra.mrb[0].mxu0 %v6720
    %v6889 = vpop.f32.mrb[0].mxu0
    %v6890 = vadd.f32 %v6793, %v6889
    %v6891 = vpop.f32.mrb[0].mxu0
    %v6892 = vpop.f32.mrb[0].mxu0
    %v6893 = vadd.f32 %v6796, %v6892
    %v6894 = vpop.f32.mrb[0].mxu0
    %6895 = vmatprep.mubr.bf16.mxu0 0
    %6896 = vmatmul.mubr.bf16.gmra.mrb[0].mxu0 %v6723
    %v6897 = vpop.f32.mrb[0].mxu0
    %v6898 = vadd.f32 %v6801, %v6897
    %v6899 = vpop.f32.mrb[0].mxu0
    %v6900 = vpop.f32.mrb[0].mxu0
    %v6901 = vadd.f32 %v6804, %v6900
    %v6902 = vpop.f32.mrb[0].mxu0
    %6903 = vmatprep.mubr.bf16.mxu0 0
    %6904 = vmatmul.mubr.bf16.gmra.mrb[0].mxu0 %v6726
    %v6905 = vpop.f32.mrb[0].mxu0
    %v6906 = vadd.f32 %v6809, %v6905
    %v6907 = vpop.f32.mrb[0].mxu0
    %v6908 = vpop.f32.mrb[0].mxu0
    %v6909 = vadd.f32 %v6812, %v6908
    %v6910 = vpop.f32.mrb[0].mxu0
    %6911 = vmatprep.mubr.bf16.mxu0 0
    %6912 = vmatmul.mubr.bf16.gmra.mrb[0].mxu0 %v6729
    %v6913 = vpop.f32.mrb[0].mxu0
    %v6914 = vadd.f32 %v6817, %v6913
    %v6915 = vpop.f32.mrb[0].mxu0
    %v6916 = vpop.f32.mrb[0].mxu0
    %v6917 = vadd.f32 %v6820, %v6916
    %v6918 = vpop.f32.mrb[0].mxu0
    %6919 = vmatprep.mubr.bf16.mxu0 0
    %6920 = vmatmul.mubr.bf16.gmra.mrb[0].mxu0 %v6732
    %v6921 = vpop.f32.mrb[0].mxu0
    %v6922 = vadd.f32 %v6825, %v6921
    %v6923 = vpop.f32.mrb[0].mxu0
    %v6924 = vpop.f32.mrb[0].mxu0
    %v6925 = vadd.f32 %v6828, %v6924
    %v6926 = vpop.f32.mrb[0].mxu0
    %6927 = vdwg.mxu0
    %v6928 = vmul.f32 %v6866, 0.5
    %v6929 = vmul.f32 %v6869, 0.5
    %v6930 = vmul.f32 %v6874, 0.5
    %v6931 = vmul.f32 %v6877, 0.5
    %v6932 = vmul.f32 %v6882, 0.5
    %v6933 = vmul.f32 %v6885, 0.5
    %v6934 = vmul.f32 %v6890, 0.5
    %v6935 = vmul.f32 %v6893, 0.5
    %v6936 = vmul.f32 %v6898, 0.5
    %v6937 = vmul.f32 %v6901, 0.5
    %v6938 = vmul.f32 %v6906, 0.5
    %v6939 = vmul.f32 %v6909, 0.5
    %v6940 = vmul.f32 %v6914, 0.5
    %v6941 = vmul.f32 %v6917, 0.5
    %v6942 = vmul.f32 %v6922, 0.5
    %v6943 = vmul.f32 %v6925, 0.5
    %v6944 = vmul.f32 %v6866, 0.044715
    %v6945 = vmul.f32 %v6869, 0.044715
    %v6946 = vmul.f32 %v6874, 0.044715
    %v6947 = vmul.f32 %v6877, 0.044715
    %v6948 = vmul.f32 %v6882, 0.044715
    %v6949 = vmul.f32 %v6885, 0.044715
    %v6950 = vmul.f32 %v6890, 0.044715
    %v6951 = vmul.f32 %v6893, 0.044715
    %v6952 = vmul.f32 %v6898, 0.044715
    %v6953 = vmul.f32 %v6901, 0.044715
    %v6954 = vmul.f32 %v6906, 0.044715
    %v6955 = vmul.f32 %v6909, 0.044715
    %v6956 = vmul.f32 %v6914, 0.044715
    %v6957 = vmul.f32 %v6917, 0.044715
    %v6958 = vmul.f32 %v6922, 0.044715
    %v6959 = vmul.f32 %v6925, 0.044715
    %v6960 = vmul.f32 %v6944, %v6866
    %v6961 = vmul.f32 %v6945, %v6869
    %v6962 = vmul.f32 %v6946, %v6874
    %v6963 = vmul.f32 %v6947, %v6877
    %v6964 = vmul.f32 %v6948, %v6882
    %v6965 = vmul.f32 %v6949, %v6885
    %v6966 = vmul.f32 %v6950, %v6890
    %v6967 = vmul.f32 %v6951, %v6893
    %v6968 = vmul.f32 %v6952, %v6898
    %v6969 = vmul.f32 %v6953, %v6901
    %v6970 = vmul.f32 %v6954, %v6906
    %v6971 = vmul.f32 %v6955, %v6909
    %v6972 = vmul.f32 %v6956, %v6914
    %v6973 = vmul.f32 %v6957, %v6917
    %v6974 = vmul.f32 %v6958, %v6922
    %v6975 = vmul.f32 %v6959, %v6925
    %v6976 = vmul.f32 %v6960, %v6866
    %v6977 = vmul.f32 %v6961, %v6869
    %v6978 = vmul.f32 %v6962, %v6874
    %v6979 = vmul.f32 %v6963, %v6877
    %v6980 = vmul.f32 %v6964, %v6882
    %v6981 = vmul.f32 %v6965, %v6885
    %v6982 = vmul.f32 %v6966, %v6890
    %v6983 = vmul.f32 %v6967, %v6893
    %v6984 = vmul.f32 %v6968, %v6898
    %v6985 = vmul.f32 %v6969, %v6901
    %v6986 = vmul.f32 %v6970, %v6906
    %v6987 = vmul.f32 %v6971, %v6909
    %v6988 = vmul.f32 %v6972, %v6914
    %v6989 = vmul.f32 %v6973, %v6917
    %v6990 = vmul.f32 %v6974, %v6922
    %v6991 = vmul.f32 %v6975, %v6925
    %v6992 = vadd.f32 %v6866, %v6976
    %v6993 = vadd.f32 %v6869, %v6977
    %v6994 = vadd.f32 %v6874, %v6978
    %v6995 = vadd.f32 %v6877, %v6979
    %v6996 = vadd.f32 %v6882, %v6980
    %v6997 = vadd.f32 %v6885, %v6981
    %v6998 = vadd.f32 %v6890, %v6982
    %v6999 = vadd.f32 %v6893, %v6983
    %v7000 = vadd.f32 %v6898, %v6984
    %v7001 = vadd.f32 %v6901, %v6985
    %v7002 = vadd.f32 %v6906, %v6986
    %v7003 = vadd.f32 %v6909, %v6987
    %v7004 = vadd.f32 %v6914, %v6988
    %v7005 = vadd.f32 %v6917, %v6989
    %v7006 = vadd.f32 %v6922, %v6990
    %v7007 = vadd.f32 %v6925, %v6991
    %v7008 = vmul.f32 %v6992, 0.7978846
    %v7009 = vmul.f32 %v6993, 0.7978846
    %v7010 = vmul.f32 %v6994, 0.7978846
    %v7011 = vmul.f32 %v6995, 0.7978846
    %v7012 = vmul.f32 %v6996, 0.7978846
    %v7013 = vmul.f32 %v6997, 0.7978846
    %v7014 = vmul.f32 %v6998, 0.7978846
    %v7015 = vmul.f32 %v6999, 0.7978846
    %v7016 = vmul.f32 %v7000, 0.7978846
    %v7017 = vmul.f32 %v7001, 0.7978846
    %v7018 = vmul.f32 %v7002, 0.7978846
    %v7019 = vmul.f32 %v7003, 0.7978846
    %v7020 = vmul.f32 %v7004, 0.7978846
    %v7021 = vmul.f32 %v7005, 0.7978846
    %v7022 = vmul.f32 %v7006, 0.7978846
    %v7023 = vmul.f32 %v7007, 0.7978846
    %v7024 = vtanh.pop %v7008
    %v7025 = vtanh.pop %v7009
    %v7026 = vtanh.pop %v7010
    %v7027 = vtanh.pop %v7011
    %v7028 = vtanh.pop %v7012
    %v7029 = vtanh.pop %v7013
    %v7030 = vtanh.pop %v7014
    %v7031 = vtanh.pop %v7015
    %v7032 = vtanh.pop %v7016
    %v7033 = vtanh.pop %v7017
    %v7034 = vtanh.pop %v7018
    %v7035 = vtanh.pop %v7019
    %v7036 = vtanh.pop %v7020
    %v7037 = vtanh.pop %v7021
    %v7038 = vtanh.pop %v7022
    %v7039 = vtanh.pop %v7023
    %v7040 = vadd.f32 %v7024, 1.0
    %v7041 = vadd.f32 %v7025, 1.0
    %v7042 = vadd.f32 %v7026, 1.0
    %v7043 = vadd.f32 %v7027, 1.0
    %v7044 = vadd.f32 %v7028, 1.0
    %v7045 = vadd.f32 %v7029, 1.0
    %v7046 = vadd.f32 %v7030, 1.0
    %v7047 = vadd.f32 %v7031, 1.0
    %v7048 = vadd.f32 %v7032, 1.0
    %v7049 = vadd.f32 %v7033, 1.0
    %v7050 = vadd.f32 %v7034, 1.0
    %v7051 = vadd.f32 %v7035, 1.0
    %v7052 = vadd.f32 %v7036, 1.0
    %v7053 = vadd.f32 %v7037, 1.0
    %v7054 = vadd.f32 %v7038, 1.0
    %v7055 = vadd.f32 %v7039, 1.0
    %v7056 = vmul.f32 %v6928, %v7040
    %v7057 = vmul.f32 %v6929, %v7041
    %v7058 = vmul.f32 %v6930, %v7042
    %v7059 = vmul.f32 %v6931, %v7043
    %v7060 = vmul.f32 %v6932, %v7044
    %v7061 = vmul.f32 %v6933, %v7045
    %v7062 = vmul.f32 %v6934, %v7046
    %v7063 = vmul.f32 %v6935, %v7047
    %v7064 = vmul.f32 %v6936, %v7048
    %v7065 = vmul.f32 %v6937, %v7049
    %v7066 = vmul.f32 %v6938, %v7050
    %v7067 = vmul.f32 %v6939, %v7051
    %v7068 = vmul.f32 %v6940, %v7052
    %v7069 = vmul.f32 %v6941, %v7053
    %v7070 = vmul.f32 %v6942, %v7054
    %v7071 = vmul.f32 %v6943, %v7055
    %v7072 = vadd.f32 %v6517, %v7056
    %v7073 = vadd.f32 %v6518, %v7057
    %v7074 = vadd.f32 %v6519, %v7058
    %v7075 = vadd.f32 %v6520, %v7059
    %v7076 = vadd.f32 %v6521, %v7060
    %v7077 = vadd.f32 %v6522, %v7061
    %v7078 = vadd.f32 %v6523, %v7062
    %v7079 = vadd.f32 %v6524, %v7063
    %v7080 = vadd.f32 %v6525, %v7064
    %v7081 = vadd.f32 %v6526, %v7065
    %v7082 = vadd.f32 %v6527, %v7066
    %v7083 = vadd.f32 %v6528, %v7067
    %v7084 = vadd.f32 %v6529, %v7068
    %v7085 = vadd.f32 %v6530, %v7069
    %v7086 = vadd.f32 %v6531, %v7070
    %v7087 = vadd.f32 %v6532, %v7071
    %7088 = vst.msk [vmem:[#allocation5] sm:$0xff] %vm46, %v7072
    %7089 = vst.msk [vmem:[#allocation5 + $0x8] sm:$0xff] %vm46, %v7073
    %7090 = vst.msk [vmem:[#allocation5 + $0x10] sm:$0xff] %vm46, %v7074
    %7091 = vst.msk [vmem:[#allocation5 + $0x18] sm:$0xff] %vm46, %v7075
    %7092 = vst.msk [vmem:[#allocation5 + $0x20] sm:$0xff] %vm46, %v7076
    %7093 = vst.msk [vmem:[#allocation5 + $0x28] sm:$0xff] %vm46, %v7077
    %7094 = vst.msk [vmem:[#allocation5 + $0x30] sm:$0xff] %vm46, %v7078
    %7095 = vst.msk [vmem:[#allocation5 + $0x38] sm:$0xff] %vm46, %v7079
    %7096 = vst.msk [vmem:[#allocation5 + $0x40] sm:$0xff] %vm46, %v7080
    %7097 = vst.msk [vmem:[#allocation5 + $0x48] sm:$0xff] %vm46, %v7081
    %7098 = vst.msk [vmem:[#allocation5 + $0x50] sm:$0xff] %vm46, %v7082
    %7099 = vst.msk [vmem:[#allocation5 + $0x58] sm:$0xff] %vm46, %v7083
    %7100 = vst.msk [vmem:[#allocation5 + $0x60] sm:$0xff] %vm46, %v7084
    %7101 = vst.msk [vmem:[#allocation5 + $0x68] sm:$0xff] %vm46, %v7085
    %7102 = vst.msk [vmem:[#allocation5 + $0x70] sm:$0xff] %vm46, %v7086
    %7103 = vst.msk [vmem:[#allocation5 + $0x78] sm:$0xff] %vm46, %v7087
    %v7104 = vld [vmem:[#allocation2 + $0x5] sm:$0xff]
    %v7105 = vld [vmem:[#allocation2 + $0x1d] sm:$0xff]
    %v7106 = vld [vmem:[#allocation2 + $0x35] sm:$0xff]
    %v7107 = vld [vmem:[#allocation2 + $0x4d] sm:$0xff]
    %v7108 = vld [vmem:[#allocation2 + $0x65] sm:$0xff]
    %v7109 = vld [vmem:[#allocation2 + $0x7d] sm:$0xff]
    %v7110 = vld [vmem:[#allocation2 + $0x95] sm:$0xff]
    %v7111 = vld [vmem:[#allocation2 + $0xad] sm:$0xff]
    %v7112 = vld [vmem:[#allocation2 + $0x155] sm:$0xff]
    %v7113 = vld [vmem:[#allocation2 + $0x16d] sm:$0xff]
    %v7114 = vld [vmem:[#allocation2 + $0x185] sm:$0xff]
    %v7115 = vld [vmem:[#allocation2 + $0x19d] sm:$0xff]
    %v7116 = vld [vmem:[#allocation2 + $0x1b5] sm:$0xff]
    %v7117 = vld [vmem:[#allocation2 + $0x1cd] sm:$0xff]
    %v7118 = vld [vmem:[#allocation2 + $0x1e5] sm:$0xff]
    %v7119 = vld [vmem:[#allocation2 + $0x1fd] sm:$0xff]
    %v7120 = vpack.c.bf16 %v7105, %v7104
    %v7121 = vpack.c.bf16 %v7107, %v7106
    %v7122 = vpack.c.bf16 %v7109, %v7108
    %v7123 = vpack.c.bf16 %v7111, %v7110
    %v7124 = vpack.c.bf16 %v7113, %v7112
    %v7125 = vpack.c.bf16 %v7115, %v7114
    %v7126 = vpack.c.bf16 %v7117, %v7116
    %v7127 = vpack.c.bf16 %v7119, %v7118
    %7128 = vst.msk [vmem:[#allocation3] sm:$0xff] %vm46, %v7120
    %7129 = vst.msk [vmem:[#allocation3 + $0x18] sm:$0xff] %vm46, %v7121
    %7130 = vst.msk [vmem:[#allocation3 + $0x30] sm:$0xff] %vm46, %v7122
    %7131 = vst.msk [vmem:[#allocation3 + $0x48] sm:$0xff] %vm46, %v7123
    %7132 = vst.msk [vmem:[#allocation3 + $0x60] sm:$0xff] %vm46, %v7124
    %7133 = vst.msk [vmem:[#allocation3 + $0x78] sm:$0xff] %vm46, %v7125
    %7134 = vst.msk [vmem:[#allocation3 + $0x90] sm:$0xff] %vm46, %v7126
    %7135 = vst.msk [vmem:[#allocation3 + $0xa8] sm:$0xff] %vm46, %v7127
    %v7136 = vld [vmem:[#allocation2 + $0x8] sm:$0xff]
    %v7137 = vld [vmem:[#allocation2 + $0x20] sm:$0xff]
    %v7138 = vld [vmem:[#allocation2 + $0x38] sm:$0xff]
    %v7139 = vld [vmem:[#allocation2 + $0x50] sm:$0xff]
    %v7140 = vld [vmem:[#allocation2 + $0x68] sm:$0xff]
    %v7141 = vld [vmem:[#allocation2 + $0x80] sm:$0xff]
    %v7142 = vld [vmem:[#allocation2 + $0x98] sm:$0xff]
    %v7143 = vld [vmem:[#allocation2 + $0xb0] sm:$0xff]
    %v7144 = vld [vmem:[#allocation2 + $0x158] sm:$0xff]
    %v7145 = vld [vmem:[#allocation2 + $0x170] sm:$0xff]
    %v7146 = vld [vmem:[#allocation2 + $0x188] sm:$0xff]
    %v7147 = vld [vmem:[#allocation2 + $0x1a0] sm:$0xff]
    %v7148 = vld [vmem:[#allocation2 + $0x1b8] sm:$0xff]
    %v7149 = vld [vmem:[#allocation2 + $0x1d0] sm:$0xff]
    %v7150 = vld [vmem:[#allocation2 + $0x1e8] sm:$0xff]
    %v7151 = vld [vmem:[#allocation2 + $0x200] sm:$0xff]
    %v7152 = vpack.c.bf16 %v7137, %v7136
    %v7153 = vpack.c.bf16 %v7139, %v7138
    %v7154 = vpack.c.bf16 %v7141, %v7140
    %v7155 = vpack.c.bf16 %v7143, %v7142
    %v7156 = vpack.c.bf16 %v7145, %v7144
    %v7157 = vpack.c.bf16 %v7147, %v7146
    %v7158 = vpack.c.bf16 %v7149, %v7148
    %v7159 = vpack.c.bf16 %v7151, %v7150
    %7168 = vrot.lane.b32.xlu0 %v7152, 32
    %v7169 = vpop.permute.xlu0 %7168
    %7170 = vrot.lane.b32.xlu0 %v7153, 32
    %v7171 = vpop.permute.xlu0 %7170
    %7172 = vrot.lane.b32.xlu0 %v7154, 32
    %v7173 = vpop.permute.xlu0 %7172
    %7174 = vrot.lane.b32.xlu0 %v7155, 32
    %v7175 = vpop.permute.xlu0 %7174
    %7176 = vrot.lane.b32.xlu0 %v7156, 32
    %v7177 = vpop.permute.xlu0 %7176
    %7178 = vrot.lane.b32.xlu0 %v7157, 32
    %v7179 = vpop.permute.xlu0 %7178
    %7180 = vrot.lane.b32.xlu0 %v7158, 32
    %v7181 = vpop.permute.xlu0 %7180
    %7182 = vrot.lane.b32.xlu0 %v7159, 32
    %v7183 = vpop.permute.xlu0 %7182
    %7192 = vst.msk [vmem:[#allocation3] sm:$0xff] %vm254, %v7169
    %7193 = vst.msk [vmem:[#allocation3 + $0x18] sm:$0xff] %vm254, %v7171
    %7194 = vst.msk [vmem:[#allocation3 + $0x30] sm:$0xff] %vm254, %v7173
    %7195 = vst.msk [vmem:[#allocation3 + $0x48] sm:$0xff] %vm254, %v7175
    %7196 = vst.msk [vmem:[#allocation3 + $0x60] sm:$0xff] %vm254, %v7177
    %7197 = vst.msk [vmem:[#allocation3 + $0x78] sm:$0xff] %vm254, %v7179
    %7198 = vst.msk [vmem:[#allocation3 + $0x90] sm:$0xff] %vm254, %v7181
    %7199 = vst.msk [vmem:[#allocation3 + $0xa8] sm:$0xff] %vm254, %v7183
    %v7200 = vld [vmem:[#allocation2 + $0xb] sm:$0xff]
    %v7201 = vld [vmem:[#allocation2 + $0x23] sm:$0xff]
    %v7202 = vld [vmem:[#allocation2 + $0x3b] sm:$0xff]
    %v7203 = vld [vmem:[#allocation2 + $0x53] sm:$0xff]
    %v7204 = vld [vmem:[#allocation2 + $0x6b] sm:$0xff]
    %v7205 = vld [vmem:[#allocation2 + $0x83] sm:$0xff]
    %v7206 = vld [vmem:[#allocation2 + $0x9b] sm:$0xff]
    %v7207 = vld [vmem:[#allocation2 + $0xb3] sm:$0xff]
    %v7208 = vld [vmem:[#allocation2 + $0x15b] sm:$0xff]
    %v7209 = vld [vmem:[#allocation2 + $0x173] sm:$0xff]
    %v7210 = vld [vmem:[#allocation2 + $0x18b] sm:$0xff]
    %v7211 = vld [vmem:[#allocation2 + $0x1a3] sm:$0xff]
    %v7212 = vld [vmem:[#allocation2 + $0x1bb] sm:$0xff]
    %v7213 = vld [vmem:[#allocation2 + $0x1d3] sm:$0xff]
    %v7214 = vld [vmem:[#allocation2 + $0x1eb] sm:$0xff]
    %v7215 = vld [vmem:[#allocation2 + $0x203] sm:$0xff]
    %v7216 = vpack.c.bf16 %v7201, %v7200
    %v7217 = vpack.c.bf16 %v7203, %v7202
    %v7218 = vpack.c.bf16 %v7205, %v7204
    %v7219 = vpack.c.bf16 %v7207, %v7206
    %v7220 = vpack.c.bf16 %v7209, %v7208
    %v7221 = vpack.c.bf16 %v7211, %v7210
    %v7222 = vpack.c.bf16 %v7213, %v7212
    %v7223 = vpack.c.bf16 %v7215, %v7214
    %7232 = vrot.lane.b32.xlu0 %v7216, 64
    %v7233 = vpop.permute.xlu0 %7232
    %7234 = vrot.lane.b32.xlu0 %v7217, 64
    %v7235 = vpop.permute.xlu0 %7234
    %7236 = vrot.lane.b32.xlu0 %v7218, 64
    %v7237 = vpop.permute.xlu0 %7236
    %7238 = vrot.lane.b32.xlu0 %v7219, 64
    %v7239 = vpop.permute.xlu0 %7238
    %7240 = vrot.lane.b32.xlu0 %v7220, 64
    %v7241 = vpop.permute.xlu0 %7240
    %7242 = vrot.lane.b32.xlu0 %v7221, 64
    %v7243 = vpop.permute.xlu0 %7242
    %7244 = vrot.lane.b32.xlu0 %v7222, 64
    %v7245 = vpop.permute.xlu0 %7244
    %7246 = vrot.lane.b32.xlu0 %v7223, 64
    %v7247 = vpop.permute.xlu0 %7246
    %7256 = vst.msk [vmem:[#allocation3] sm:$0xff] %vm319, %v7233
    %7257 = vst.msk [vmem:[#allocation3 + $0x18] sm:$0xff] %vm319, %v7235
    %7258 = vst.msk [vmem:[#allocation3 + $0x30] sm:$0xff] %vm319, %v7237
    %7259 = vst.msk [vmem:[#allocation3 + $0x48] sm:$0xff] %vm319, %v7239
    %7260 = vst.msk [vmem:[#allocation3 + $0x60] sm:$0xff] %vm319, %v7241
    %7261 = vst.msk [vmem:[#allocation3 + $0x78] sm:$0xff] %vm319, %v7243
    %7262 = vst.msk [vmem:[#allocation3 + $0x90] sm:$0xff] %vm319, %v7245
    %7263 = vst.msk [vmem:[#allocation3 + $0xa8] sm:$0xff] %vm319, %v7247
    %v7264 = vld [vmem:[%s148 + $0x5] sm:$0xff]
    %v7265 = vld [vmem:[%s148 + $0x1d] sm:$0xff]
    %v7266 = vld [vmem:[%s148 + $0x35] sm:$0xff]
    %v7267 = vld [vmem:[%s148 + $0x4d] sm:$0xff]
    %v7268 = vld [vmem:[%s148 + $0x65] sm:$0xff]
    %v7269 = vld [vmem:[%s148 + $0x7d] sm:$0xff]
    %v7270 = vld [vmem:[%s148 + $0x95] sm:$0xff]
    %v7271 = vld [vmem:[%s148 + $0xad] sm:$0xff]
    %v7272 = vld [vmem:[%s148 + $0x155] sm:$0xff]
    %v7273 = vld [vmem:[%s148 + $0x16d] sm:$0xff]
    %v7274 = vld [vmem:[%s148 + $0x185] sm:$0xff]
    %v7275 = vld [vmem:[%s148 + $0x19d] sm:$0xff]
    %v7276 = vld [vmem:[%s148 + $0x1b5] sm:$0xff]
    %v7277 = vld [vmem:[%s148 + $0x1cd] sm:$0xff]
    %v7278 = vld [vmem:[%s148 + $0x1e5] sm:$0xff]
    %v7279 = vld [vmem:[%s148 + $0x1fd] sm:$0xff]
    %v7280 = vpack.c.bf16 %v7265, %v7264
    %v7281 = vpack.c.bf16 %v7267, %v7266
    %v7282 = vpack.c.bf16 %v7269, %v7268
    %v7283 = vpack.c.bf16 %v7271, %v7270
    %v7284 = vpack.c.bf16 %v7273, %v7272
    %v7285 = vpack.c.bf16 %v7275, %v7274
    %v7286 = vpack.c.bf16 %v7277, %v7276
    %v7287 = vpack.c.bf16 %v7279, %v7278
    %7296 = vrot.lane.b32.xlu0 %v7280, 96
    %v7297 = vpop.permute.xlu0 %7296
    %7298 = vrot.lane.b32.xlu0 %v7281, 96
    %v7299 = vpop.permute.xlu0 %7298
    %7300 = vrot.lane.b32.xlu0 %v7282, 96
    %v7301 = vpop.permute.xlu0 %7300
    %7302 = vrot.lane.b32.xlu0 %v7283, 96
    %v7303 = vpop.permute.xlu0 %7302
    %7304 = vrot.lane.b32.xlu0 %v7284, 96
    %v7305 = vpop.permute.xlu0 %7304
    %7306 = vrot.lane.b32.xlu0 %v7285, 96
    %v7307 = vpop.permute.xlu0 %7306
    %7308 = vrot.lane.b32.xlu0 %v7286, 96
    %v7309 = vpop.permute.xlu0 %7308
    %7310 = vrot.lane.b32.xlu0 %v7287, 96
    %v7311 = vpop.permute.xlu0 %7310
    %7320 = vst.msk [vmem:[#allocation3] sm:$0xff] %vm384, %v7297
    %7321 = vst.msk [vmem:[#allocation3 + $0x18] sm:$0xff] %vm384, %v7299
    %7322 = vst.msk [vmem:[#allocation3 + $0x30] sm:$0xff] %vm384, %v7301
    %7323 = vst.msk [vmem:[#allocation3 + $0x48] sm:$0xff] %vm384, %v7303
    %7324 = vst.msk [vmem:[#allocation3 + $0x60] sm:$0xff] %vm384, %v7305
    %7325 = vst.msk [vmem:[#allocation3 + $0x78] sm:$0xff] %vm384, %v7307
    %7326 = vst.msk [vmem:[#allocation3 + $0x90] sm:$0xff] %vm384, %v7309
    %7327 = vst.msk [vmem:[#allocation3 + $0xa8] sm:$0xff] %vm384, %v7311
    %v7328 = vld [vmem:[%s148 + $0x8] sm:$0xff]
    %v7329 = vld [vmem:[%s148 + $0x20] sm:$0xff]
    %v7330 = vld [vmem:[%s148 + $0x38] sm:$0xff]
    %v7331 = vld [vmem:[%s148 + $0x50] sm:$0xff]
    %v7332 = vld [vmem:[%s148 + $0x68] sm:$0xff]
    %v7333 = vld [vmem:[%s148 + $0x80] sm:$0xff]
    %v7334 = vld [vmem:[%s148 + $0x98] sm:$0xff]
    %v7335 = vld [vmem:[%s148 + $0xb0] sm:$0xff]
    %v7336 = vld [vmem:[%s148 + $0x158] sm:$0xff]
    %v7337 = vld [vmem:[%s148 + $0x170] sm:$0xff]
    %v7338 = vld [vmem:[%s148 + $0x188] sm:$0xff]
    %v7339 = vld [vmem:[%s148 + $0x1a0] sm:$0xff]
    %v7340 = vld [vmem:[%s148 + $0x1b8] sm:$0xff]
    %v7341 = vld [vmem:[%s148 + $0x1d0] sm:$0xff]
    %v7342 = vld [vmem:[%s148 + $0x1e8] sm:$0xff]
    %v7343 = vld [vmem:[%s148 + $0x200] sm:$0xff]
    %v7344 = vpack.c.bf16 %v7329, %v7328
    %v7345 = vpack.c.bf16 %v7331, %v7330
    %v7346 = vpack.c.bf16 %v7333, %v7332
    %v7347 = vpack.c.bf16 %v7335, %v7334
    %v7348 = vpack.c.bf16 %v7337, %v7336
    %v7349 = vpack.c.bf16 %v7339, %v7338
    %v7350 = vpack.c.bf16 %v7341, %v7340
    %v7351 = vpack.c.bf16 %v7343, %v7342
    %7352 = vst.msk [vmem:[#allocation3 + $0x8] sm:$0xff] %vm46, %v7344
    %7353 = vst.msk [vmem:[#allocation3 + $0x20] sm:$0xff] %vm46, %v7345
    %7354 = vst.msk [vmem:[#allocation3 + $0x38] sm:$0xff] %vm46, %v7346
    %7355 = vst.msk [vmem:[#allocation3 + $0x50] sm:$0xff] %vm46, %v7347
    %7356 = vst.msk [vmem:[#allocation3 + $0x68] sm:$0xff] %vm46, %v7348
    %7357 = vst.msk [vmem:[#allocation3 + $0x80] sm:$0xff] %vm46, %v7349
    %7358 = vst.msk [vmem:[#allocation3 + $0x98] sm:$0xff] %vm46, %v7350
    %7359 = vst.msk [vmem:[#allocation3 + $0xb0] sm:$0xff] %vm46, %v7351
    %v7360 = vld [vmem:[%s148 + $0xb] sm:$0xff]
    %v7361 = vld [vmem:[%s148 + $0x23] sm:$0xff]
    %v7362 = vld [vmem:[%s148 + $0x3b] sm:$0xff]
    %v7363 = vld [vmem:[%s148 + $0x53] sm:$0xff]
    %v7364 = vld [vmem:[%s148 + $0x6b] sm:$0xff]
    %v7365 = vld [vmem:[%s148 + $0x83] sm:$0xff]
    %v7366 = vld [vmem:[%s148 + $0x9b] sm:$0xff]
    %v7367 = vld [vmem:[%s148 + $0xb3] sm:$0xff]
    %v7368 = vld [vmem:[%s148 + $0x15b] sm:$0xff]
    %v7369 = vld [vmem:[%s148 + $0x173] sm:$0xff]
    %v7370 = vld [vmem:[%s148 + $0x18b] sm:$0xff]
    %v7371 = vld [vmem:[%s148 + $0x1a3] sm:$0xff]
    %v7372 = vld [vmem:[%s148 + $0x1bb] sm:$0xff]
    %v7373 = vld [vmem:[%s148 + $0x1d3] sm:$0xff]
    %v7374 = vld [vmem:[%s148 + $0x1eb] sm:$0xff]
    %v7375 = vld [vmem:[%s148 + $0x203] sm:$0xff]
    %v7376 = vpack.c.bf16 %v7361, %v7360
    %v7377 = vpack.c.bf16 %v7363, %v7362
    %v7378 = vpack.c.bf16 %v7365, %v7364
    %v7379 = vpack.c.bf16 %v7367, %v7366
    %v7380 = vpack.c.bf16 %v7369, %v7368
    %v7381 = vpack.c.bf16 %v7371, %v7370
    %v7382 = vpack.c.bf16 %v7373, %v7372
    %v7383 = vpack.c.bf16 %v7375, %v7374
    %7392 = vrot.lane.b32.xlu0 %v7376, 32
    %v7393 = vpop.permute.xlu0 %7392
    %7394 = vrot.lane.b32.xlu0 %v7377, 32
    %v7395 = vpop.permute.xlu0 %7394
    %7396 = vrot.lane.b32.xlu0 %v7378, 32
    %v7397 = vpop.permute.xlu0 %7396
    %7398 = vrot.lane.b32.xlu0 %v7379, 32
    %v7399 = vpop.permute.xlu0 %7398
    %7400 = vrot.lane.b32.xlu0 %v7380, 32
    %v7401 = vpop.permute.xlu0 %7400
    %7402 = vrot.lane.b32.xlu0 %v7381, 32
    %v7403 = vpop.permute.xlu0 %7402
    %7404 = vrot.lane.b32.xlu0 %v7382, 32
    %v7405 = vpop.permute.xlu0 %7404
    %7406 = vrot.lane.b32.xlu0 %v7383, 32
    %v7407 = vpop.permute.xlu0 %7406
    %7416 = vst.msk [vmem:[#allocation3 + $0x8] sm:$0xff] %vm254, %v7393
    %7417 = vst.msk [vmem:[#allocation3 + $0x20] sm:$0xff] %vm254, %v7395
    %7418 = vst.msk [vmem:[#allocation3 + $0x38] sm:$0xff] %vm254, %v7397
    %7419 = vst.msk [vmem:[#allocation3 + $0x50] sm:$0xff] %vm254, %v7399
    %7420 = vst.msk [vmem:[#allocation3 + $0x68] sm:$0xff] %vm254, %v7401
    %7421 = vst.msk [vmem:[#allocation3 + $0x80] sm:$0xff] %vm254, %v7403
    %7422 = vst.msk [vmem:[#allocation3 + $0x98] sm:$0xff] %vm254, %v7405
    %7423 = vst.msk [vmem:[#allocation3 + $0xb0] sm:$0xff] %vm254, %v7407
    %s7424 = scalar_lea.vmem [#allocation2], 144
    %v7425 = vld [vmem:[%s7424 + $0x5] sm:$0xff]
    %v7426 = vld [vmem:[%s7424 + $0x1d] sm:$0xff]
    %v7427 = vld [vmem:[%s7424 + $0x35] sm:$0xff]
    %v7428 = vld [vmem:[%s7424 + $0x4d] sm:$0xff]
    %v7429 = vld [vmem:[%s7424 + $0x65] sm:$0xff]
    %v7430 = vld [vmem:[%s7424 + $0x7d] sm:$0xff]
    %v7431 = vld [vmem:[%s7424 + $0x95] sm:$0xff]
    %v7432 = vld [vmem:[%s7424 + $0xad] sm:$0xff]
    %v7433 = vld [vmem:[%s7424 + $0x155] sm:$0xff]
    %v7434 = vld [vmem:[%s7424 + $0x16d] sm:$0xff]
    %v7435 = vld [vmem:[%s7424 + $0x185] sm:$0xff]
    %v7436 = vld [vmem:[%s7424 + $0x19d] sm:$0xff]
    %v7437 = vld [vmem:[%s7424 + $0x1b5] sm:$0xff]
    %v7438 = vld [vmem:[%s7424 + $0x1cd] sm:$0xff]
    %v7439 = vld [vmem:[%s7424 + $0x1e5] sm:$0xff]
    %v7440 = vld [vmem:[%s7424 + $0x1fd] sm:$0xff]
    %v7441 = vpack.c.bf16 %v7426, %v7425
    %v7442 = vpack.c.bf16 %v7428, %v7427
    %v7443 = vpack.c.bf16 %v7430, %v7429
    %v7444 = vpack.c.bf16 %v7432, %v7431
    %v7445 = vpack.c.bf16 %v7434, %v7433
    %v7446 = vpack.c.bf16 %v7436, %v7435
    %v7447 = vpack.c.bf16 %v7438, %v7437
    %v7448 = vpack.c.bf16 %v7440, %v7439
    %7457 = vrot.lane.b32.xlu0 %v7441, 64
    %v7458 = vpop.permute.xlu0 %7457
    %7459 = vrot.lane.b32.xlu0 %v7442, 64
    %v7460 = vpop.permute.xlu0 %7459
    %7461 = vrot.lane.b32.xlu0 %v7443, 64
    %v7462 = vpop.permute.xlu0 %7461
    %7463 = vrot.lane.b32.xlu0 %v7444, 64
    %v7464 = vpop.permute.xlu0 %7463
    %7465 = vrot.lane.b32.xlu0 %v7445, 64
    %v7466 = vpop.permute.xlu0 %7465
    %7467 = vrot.lane.b32.xlu0 %v7446, 64
    %v7468 = vpop.permute.xlu0 %7467
    %7469 = vrot.lane.b32.xlu0 %v7447, 64
    %v7470 = vpop.permute.xlu0 %7469
    %7471 = vrot.lane.b32.xlu0 %v7448, 64
    %v7472 = vpop.permute.xlu0 %7471
    %7481 = vst.msk [vmem:[#allocation3 + $0x8] sm:$0xff] %vm319, %v7458
    %7482 = vst.msk [vmem:[#allocation3 + $0x20] sm:$0xff] %vm319, %v7460
    %7483 = vst.msk [vmem:[#allocation3 + $0x38] sm:$0xff] %vm319, %v7462
    %7484 = vst.msk [vmem:[#allocation3 + $0x50] sm:$0xff] %vm319, %v7464
    %7485 = vst.msk [vmem:[#allocation3 + $0x68] sm:$0xff] %vm319, %v7466
    %7486 = vst.msk [vmem:[#allocation3 + $0x80] sm:$0xff] %vm319, %v7468
    %7487 = vst.msk [vmem:[#allocation3 + $0x98] sm:$0xff] %vm319, %v7470
    %7488 = vst.msk [vmem:[#allocation3 + $0xb0] sm:$0xff] %vm319, %v7472
    %v7489 = vld [vmem:[%s7424 + $0x8] sm:$0xff]
    %v7490 = vld [vmem:[%s7424 + $0x20] sm:$0xff]
    %v7491 = vld [vmem:[%s7424 + $0x38] sm:$0xff]
    %v7492 = vld [vmem:[%s7424 + $0x50] sm:$0xff]
    %v7493 = vld [vmem:[%s7424 + $0x68] sm:$0xff]
    %v7494 = vld [vmem:[%s7424 + $0x80] sm:$0xff]
    %v7495 = vld [vmem:[%s7424 + $0x98] sm:$0xff]
    %v7496 = vld [vmem:[%s7424 + $0xb0] sm:$0xff]
    %v7497 = vld [vmem:[%s7424 + $0x158] sm:$0xff]
    %v7498 = vld [vmem:[%s7424 + $0x170] sm:$0xff]
    %v7499 = vld [vmem:[%s7424 + $0x188] sm:$0xff]
    %v7500 = vld [vmem:[%s7424 + $0x1a0] sm:$0xff]
    %v7501 = vld [vmem:[%s7424 + $0x1b8] sm:$0xff]
    %v7502 = vld [vmem:[%s7424 + $0x1d0] sm:$0xff]
    %v7503 = vld [vmem:[%s7424 + $0x1e8] sm:$0xff]
    %v7504 = vld [vmem:[%s7424 + $0x200] sm:$0xff]
    %v7505 = vpack.c.bf16 %v7490, %v7489
    %v7506 = vpack.c.bf16 %v7492, %v7491
    %v7507 = vpack.c.bf16 %v7494, %v7493
    %v7508 = vpack.c.bf16 %v7496, %v7495
    %v7509 = vpack.c.bf16 %v7498, %v7497
    %v7510 = vpack.c.bf16 %v7500, %v7499
    %v7511 = vpack.c.bf16 %v7502, %v7501
    %v7512 = vpack.c.bf16 %v7504, %v7503
    %7521 = vrot.lane.b32.xlu0 %v7505, 96
    %v7522 = vpop.permute.xlu0 %7521
    %7523 = vrot.lane.b32.xlu0 %v7506, 96
    %v7524 = vpop.permute.xlu0 %7523
    %7525 = vrot.lane.b32.xlu0 %v7507, 96
    %v7526 = vpop.permute.xlu0 %7525
    %7527 = vrot.lane.b32.xlu0 %v7508, 96
    %v7528 = vpop.permute.xlu0 %7527
    %7529 = vrot.lane.b32.xlu0 %v7509, 96
    %v7530 = vpop.permute.xlu0 %7529
    %7531 = vrot.lane.b32.xlu0 %v7510, 96
    %v7532 = vpop.permute.xlu0 %7531
    %7533 = vrot.lane.b32.xlu0 %v7511, 96
    %v7534 = vpop.permute.xlu0 %7533
    %7535 = vrot.lane.b32.xlu0 %v7512, 96
    %v7536 = vpop.permute.xlu0 %7535
    %7545 = vst.msk [vmem:[#allocation3 + $0x8] sm:$0xff] %vm384, %v7522
    %7546 = vst.msk [vmem:[#allocation3 + $0x20] sm:$0xff] %vm384, %v7524
    %7547 = vst.msk [vmem:[#allocation3 + $0x38] sm:$0xff] %vm384, %v7526
    %7548 = vst.msk [vmem:[#allocation3 + $0x50] sm:$0xff] %vm384, %v7528
    %7549 = vst.msk [vmem:[#allocation3 + $0x68] sm:$0xff] %vm384, %v7530
    %7550 = vst.msk [vmem:[#allocation3 + $0x80] sm:$0xff] %vm384, %v7532
    %7551 = vst.msk [vmem:[#allocation3 + $0x98] sm:$0xff] %vm384, %v7534
    %7552 = vst.msk [vmem:[#allocation3 + $0xb0] sm:$0xff] %vm384, %v7536
    %v7553 = vld [vmem:[%s7424 + $0xb] sm:$0xff]
    %v7554 = vld [vmem:[%s7424 + $0x23] sm:$0xff]
    %v7555 = vld [vmem:[%s7424 + $0x3b] sm:$0xff]
    %v7556 = vld [vmem:[%s7424 + $0x53] sm:$0xff]
    %v7557 = vld [vmem:[%s7424 + $0x6b] sm:$0xff]
    %v7558 = vld [vmem:[%s7424 + $0x83] sm:$0xff]
    %v7559 = vld [vmem:[%s7424 + $0x9b] sm:$0xff]
    %v7560 = vld [vmem:[%s7424 + $0xb3] sm:$0xff]
    %v7561 = vld [vmem:[%s7424 + $0x15b] sm:$0xff]
    %v7562 = vld [vmem:[%s7424 + $0x173] sm:$0xff]
    %v7563 = vld [vmem:[%s7424 + $0x18b] sm:$0xff]
    %v7564 = vld [vmem:[%s7424 + $0x1a3] sm:$0xff]
    %v7565 = vld [vmem:[%s7424 + $0x1bb] sm:$0xff]
    %v7566 = vld [vmem:[%s7424 + $0x1d3] sm:$0xff]
    %v7567 = vld [vmem:[%s7424 + $0x1eb] sm:$0xff]
    %v7568 = vld [vmem:[%s7424 + $0x203] sm:$0xff]
    %v7569 = vpack.c.bf16 %v7554, %v7553
    %v7570 = vpack.c.bf16 %v7556, %v7555
    %v7571 = vpack.c.bf16 %v7558, %v7557
    %v7572 = vpack.c.bf16 %v7560, %v7559
    %v7573 = vpack.c.bf16 %v7562, %v7561
    %v7574 = vpack.c.bf16 %v7564, %v7563
    %v7575 = vpack.c.bf16 %v7566, %v7565
    %v7576 = vpack.c.bf16 %v7568, %v7567
    %7577 = vst.msk [vmem:[#allocation3 + $0x10] sm:$0xff] %vm46, %v7569
    %7578 = vst.msk [vmem:[#allocation3 + $0x28] sm:$0xff] %vm46, %v7570
    %7579 = vst.msk [vmem:[#allocation3 + $0x40] sm:$0xff] %vm46, %v7571
    %7580 = vst.msk [vmem:[#allocation3 + $0x58] sm:$0xff] %vm46, %v7572
    %7581 = vst.msk [vmem:[#allocation3 + $0x70] sm:$0xff] %vm46, %v7573
    %7582 = vst.msk [vmem:[#allocation3 + $0x88] sm:$0xff] %vm46, %v7574
    %7583 = vst.msk [vmem:[#allocation3 + $0xa0] sm:$0xff] %vm46, %v7575
    %7584 = vst.msk [vmem:[#allocation3 + $0xb8] sm:$0xff] %vm46, %v7576
    %v7585 = vld [vmem:[#allocation5] sm:$0xff]
    %v7586 = vld [vmem:[#allocation5 + $0x8] sm:$0xff]
    %v7587 = vld [vmem:[#allocation5 + $0x10] sm:$0xff]
    %v7588 = vld [vmem:[#allocation5 + $0x18] sm:$0xff]
    %v7589 = vld [vmem:[#allocation5 + $0x20] sm:$0xff]
    %v7590 = vld [vmem:[#allocation5 + $0x28] sm:$0xff]
    %v7591 = vld [vmem:[#allocation5 + $0x30] sm:$0xff]
    %v7592 = vld [vmem:[#allocation5 + $0x38] sm:$0xff]
    %v7593 = vld [vmem:[#allocation5 + $0x40] sm:$0xff]
    %v7594 = vld [vmem:[#allocation5 + $0x48] sm:$0xff]
    %v7595 = vld [vmem:[#allocation5 + $0x50] sm:$0xff]
    %v7596 = vld [vmem:[#allocation5 + $0x58] sm:$0xff]
    %v7597 = vld [vmem:[#allocation5 + $0x60] sm:$0xff]
    %v7598 = vld [vmem:[#allocation5 + $0x68] sm:$0xff]
    %v7599 = vld [vmem:[#allocation5 + $0x70] sm:$0xff]
    %v7600 = vld [vmem:[#allocation5 + $0x78] sm:$0xff]
    %s7601 = scalar_lea.vmem %s9, 432
    %v7602 = vld [vmem:[%s7601] sm:$0xf]
    %v7603 = vld [vmem:[%s7601 + $0x4] sm:$0xf]
    %v7604 = vld [vmem:[%s7601 + $0x8] sm:$0xf]
    %v7605 = vld [vmem:[%s7601 + $0xc] sm:$0xf]
    %v7606 = vld [vmem:[%s7601 + $0x10] sm:$0xf]
    %v7607 = vld [vmem:[%s7601 + $0x14] sm:$0xf]
    %v7608 = vld [vmem:[%s7601 + $0x18] sm:$0xf]
    %v7609 = vld [vmem:[%s7601 + $0x1c] sm:$0xf]
    %v7610 = vld [vmem:[%s7601 + $0x20] sm:$0xf]
    %v7611 = vld [vmem:[%s7601 + $0x24] sm:$0xf]
    %v7612 = vld [vmem:[%s7601 + $0x28] sm:$0xf]
    %v7613 = vld [vmem:[%s7601 + $0x2c] sm:$0xf]
    %v7614 = vld [vmem:[%s7601 + $0x30] sm:$0xf]
    %v7615 = vld [vmem:[%s7601 + $0x34] sm:$0xf]
    %v7616 = vld [vmem:[%s7601 + $0x38] sm:$0xf]
    %v7617 = vld [vmem:[%s7601 + $0x3c] sm:$0xf]
    %v7618 = vld [vmem:[%s7601 + $0x40] sm:$0xf]
    %v7619 = vld [vmem:[%s7601 + $0x44] sm:$0xf]
    %v7620 = vld [vmem:[%s7601 + $0x48] sm:$0xf]
    %v7621 = vld [vmem:[%s7601 + $0x4c] sm:$0xf]
    %v7622 = vld [vmem:[%s7601 + $0x50] sm:$0xf]
    %v7623 = vld [vmem:[%s7601 + $0x54] sm:$0xf]
    %v7624 = vld [vmem:[%s7601 + $0x58] sm:$0xf]
    %v7625 = vld [vmem:[%s7601 + $0x5c] sm:$0xf]
    %v7626 = vld [vmem:[%s7601 + $0x60] sm:$0xf]
    %v7627 = vld [vmem:[%s7601 + $0x64] sm:$0xf]
    %v7628 = vld [vmem:[%s7601 + $0x68] sm:$0xf]
    %v7629 = vld [vmem:[%s7601 + $0x6c] sm:$0xf]
    %v7630 = vld [vmem:[%s7601 + $0x70] sm:$0xf]
    %v7631 = vld [vmem:[%s7601 + $0x74] sm:$0xf]
    %v7632 = vld [vmem:[%s7601 + $0x78] sm:$0xf]
    %v7633 = vld [vmem:[%s7601 + $0x7c] sm:$0xf]
    %v7634 = vld [vmem:[%s7601 + $0x80] sm:$0xf]
    %v7635 = vld [vmem:[%s7601 + $0x84] sm:$0xf]
    %v7636 = vld [vmem:[%s7601 + $0x88] sm:$0xf]
    %v7637 = vld [vmem:[%s7601 + $0x8c] sm:$0xf]
    %s7638 = scalar_lea.vmem %s10, 3
    %v7639 = vld [vmem:[%s7638] sm:$0x1]
    %v7640 = vld [vmem:[#allocation3] sm:$0xff]
    %v7641 = vld [vmem:[#allocation3 + $0x8] sm:$0xff]
    %v7642 = vld [vmem:[#allocation3 + $0x10] sm:$0xff]
    %v7643 = vld [vmem:[#allocation3 + $0x18] sm:$0xff]
    %v7644 = vld [vmem:[#allocation3 + $0x20] sm:$0xff]
    %v7645 = vld [vmem:[#allocation3 + $0x28] sm:$0xff]
    %v7646 = vld [vmem:[#allocation3 + $0x30] sm:$0xff]
    %v7647 = vld [vmem:[#allocation3 + $0x38] sm:$0xff]
    %v7648 = vld [vmem:[#allocation3 + $0x40] sm:$0xff]
    %v7649 = vld [vmem:[#allocation3 + $0x48] sm:$0xff]
    %v7650 = vld [vmem:[#allocation3 + $0x50] sm:$0xff]
    %v7651 = vld [vmem:[#allocation3 + $0x58] sm:$0xff]
    %v7652 = vld [vmem:[#allocation3 + $0x60] sm:$0xff]
    %v7653 = vld [vmem:[#allocation3 + $0x68] sm:$0xff]
    %v7654 = vld [vmem:[#allocation3 + $0x70] sm:$0xff]
    %v7655 = vld [vmem:[#allocation3 + $0x78] sm:$0xff]
    %v7656 = vld [vmem:[#allocation3 + $0x80] sm:$0xff]
    %v7657 = vld [vmem:[#allocation3 + $0x88] sm:$0xff]
    %v7658 = vld [vmem:[#allocation3 + $0x90] sm:$0xff]
    %v7659 = vld [vmem:[#allocation3 + $0x98] sm:$0xff]
    %v7660 = vld [vmem:[#allocation3 + $0xa0] sm:$0xff]
    %v7661 = vld [vmem:[#allocation3 + $0xa8] sm:$0xff]
    %v7662 = vld [vmem:[#allocation3 + $0xb0] sm:$0xff]
    %v7663 = vld [vmem:[#allocation3 + $0xb8] sm:$0xff]
    %v7665 = vlaneseq
    %v7666 = vshrl.u32 %v7665, 7
    %v7667 = vsub.s32 0, %v7666
    %v7668 = vrot.slane %v7639, %v7667
    %v7706 = vunpack.c.l.b16 %v7602
    %v7707 = vunpack.c.l.b16 %v7603
    %v7708 = vunpack.c.l.b16 %v7604
    %v7709 = vunpack.c.l.b16 %v7605
    %v7710 = vunpack.c.l.b16 %v7606
    %v7711 = vunpack.c.l.b16 %v7607
    %v7712 = vunpack.c.l.b16 %v7608
    %v7713 = vunpack.c.l.b16 %v7609
    %v7714 = vunpack.c.l.b16 %v7610
    %v7715 = vunpack.c.l.b16 %v7611
    %v7716 = vunpack.c.l.b16 %v7612
    %v7717 = vunpack.c.l.b16 %v7613
    %v7718 = vunpack.c.l.b16 %v7614
    %v7719 = vunpack.c.l.b16 %v7615
    %v7720 = vunpack.c.l.b16 %v7616
    %v7721 = vunpack.c.l.b16 %v7617
    %v7722 = vunpack.c.l.b16 %v7618
    %v7723 = vunpack.c.l.b16 %v7619
    %v7724 = vunpack.c.l.b16 %v7620
    %v7725 = vunpack.c.l.b16 %v7621
    %v7726 = vunpack.c.l.b16 %v7622
    %v7727 = vunpack.c.l.b16 %v7623
    %v7728 = vunpack.c.l.b16 %v7624
    %v7729 = vunpack.c.l.b16 %v7625
    %v7730 = vunpack.c.l.b16 %v7626
    %v7731 = vunpack.c.l.b16 %v7627
    %v7732 = vunpack.c.l.b16 %v7628
    %v7733 = vunpack.c.l.b16 %v7629
    %v7734 = vunpack.c.l.b16 %v7630
    %v7735 = vunpack.c.l.b16 %v7631
    %v7736 = vunpack.c.l.b16 %v7632
    %v7737 = vunpack.c.l.b16 %v7633
    %v7738 = vunpack.c.l.b16 %v7634
    %v7739 = vunpack.c.l.b16 %v7635
    %v7740 = vunpack.c.l.b16 %v7636
    %v7741 = vunpack.c.l.b16 %v7637
    %v7742 = vpack.c.b16 %v7707, %v7706
    %v7743 = vpack.c.b16 %v7709, %v7708
    %v7744 = vpack.c.b16 %v7711, %v7710
    %v7745 = vpack.c.b16 %v7713, %v7712
    %v7746 = vpack.c.b16 %v7715, %v7714
    %v7747 = vpack.c.b16 %v7717, %v7716
    %v7748 = vpack.c.b16 %v7719, %v7718
    %v7749 = vpack.c.b16 %v7721, %v7720
    %v7750 = vpack.c.b16 %v7723, %v7722
    %v7751 = vpack.c.b16 %v7725, %v7724
    %v7752 = vpack.c.b16 %v7727, %v7726
    %v7753 = vpack.c.b16 %v7729, %v7728
    %v7754 = vpack.c.b16 %v7731, %v7730
    %v7755 = vpack.c.b16 %v7733, %v7732
    %v7756 = vpack.c.b16 %v7735, %v7734
    %v7757 = vpack.c.b16 %v7737, %v7736
    %v7758 = vpack.c.b16 %v7739, %v7738
    %v7759 = vpack.c.b16 %v7741, %v7740
    %v7779 = vsel %vm46, %v7642, 0
    %v7782 = vsel %vm46, %v7645, 0
    %v7785 = vsel %vm46, %v7648, 0
    %v7788 = vsel %vm46, %v7651, 0
    %v7791 = vsel %vm46, %v7654, 0
    %v7794 = vsel %vm46, %v7657, 0
    %v7797 = vsel %vm46, %v7660, 0
    %v7800 = vsel %vm46, %v7663, 0
    %7802 = vmatprep.subr.bf16.mxu0 0
    %7803 = vmatpush1.bf16.msra.mxu0 %v7742
    %7804 = vmatprep.subr.bf16.mxu0 0
    %7805 = vmatpush1.bf16.msra.mxu0 %v7743
    %7806 = vmatprep.subr.bf16.mxu0 0
    %7807 = vmatpush1.bf16.msra.mxu0 %v7744
    %7808 = vmatprep.subr.bf16.mxu0 0
    %7809 = vmatpush1.bf16.msra.mxu0 %v7745
    %7810 = vmatprep.subr.bf16.mxu0 0
    %7811 = vmatpush1.bf16.msra.mxu0 %v7746
    %7812 = vmatprep.subr.bf16.mxu0 0
    %7813 = vmatpush1.bf16.msra.mxu0 %v7747
    %7814 = vmatprep.subr.bf16.mxu0 0
    %7815 = vmatpush1.bf16.msra.mxu0 %v7748
    %7816 = vmatprep.subr.bf16.mxu0 0
    %7817 = vmatpush1.bf16.msra.mxu0 %v7749
    %7818 = vmatprep.subr.bf16.mxu0 0
    %7819 = vmatpush1.bf16.msra.mxu0 %v7750
    %7820 = vmatprep.subr.bf16.mxu0 0
    %7821 = vmatpush1.bf16.msra.mxu0 %v7751
    %7822 = vmatprep.subr.bf16.mxu0 0
    %7823 = vmatpush1.bf16.msra.mxu0 %v7752
    %7824 = vmatprep.subr.bf16.mxu0 0
    %7825 = vmatpush1.bf16.msra.mxu0 %v7753
    %7826 = vmatprep.subr.bf16.mxu0 0
    %7827 = vmatpush1.bf16.msra.mxu0 %v7754
    %7828 = vmatprep.subr.bf16.mxu0 0
    %7829 = vmatpush1.bf16.msra.mxu0 %v7755
    %7830 = vmatprep.subr.bf16.mxu0 0
    %7831 = vmatpush1.bf16.msra.mxu0 %v7756
    %7832 = vmatprep.subr.bf16.mxu0 0
    %7833 = vmatpush1.bf16.msra.mxu0 %v7757
    %7834 = vmatprep.mubr.bf16.mxu0 %v7641
    %7835 = vmatmul.mubr.bf16.gmra.mrb[0].mxu0 %v7640
    %v7836 = vpop.f32.mrb[0].mxu0
    %v7837 = vadd.f32 %v7668, %v7836
    %v7838 = vpop.f32.mrb[0].mxu0
    %v7839 = vpop.f32.mrb[0].mxu0
    %v7840 = vadd.f32 %v7668, %v7839
    %v7841 = vpop.f32.mrb[0].mxu0
    %7842 = vmatprep.mubr.bf16.mxu0 %v7644
    %7843 = vmatmul.mubr.bf16.gmra.mrb[0].mxu0 %v7643
    %v7844 = vpop.f32.mrb[0].mxu0
    %v7845 = vadd.f32 %v7668, %v7844
    %v7846 = vpop.f32.mrb[0].mxu0
    %v7847 = vpop.f32.mrb[0].mxu0
    %v7848 = vadd.f32 %v7668, %v7847
    %v7849 = vpop.f32.mrb[0].mxu0
    %7850 = vmatprep.mubr.bf16.mxu0 %v7647
    %7851 = vmatmul.mubr.bf16.gmra.mrb[0].mxu0 %v7646
    %v7852 = vpop.f32.mrb[0].mxu0
    %v7853 = vadd.f32 %v7668, %v7852
    %v7854 = vpop.f32.mrb[0].mxu0
    %v7855 = vpop.f32.mrb[0].mxu0
    %v7856 = vadd.f32 %v7668, %v7855
    %v7857 = vpop.f32.mrb[0].mxu0
    %7858 = vmatprep.mubr.bf16.mxu0 %v7650
    %7859 = vmatmul.mubr.bf16.gmra.mrb[0].mxu0 %v7649
    %v7860 = vpop.f32.mrb[0].mxu0
    %v7861 = vadd.f32 %v7668, %v7860
    %v7862 = vpop.f32.mrb[0].mxu0
    %v7863 = vpop.f32.mrb[0].mxu0
    %v7864 = vadd.f32 %v7668, %v7863
    %v7865 = vpop.f32.mrb[0].mxu0
    %7866 = vmatprep.mubr.bf16.mxu0 %v7653
    %7867 = vmatmul.mubr.bf16.gmra.mrb[0].mxu0 %v7652
    %v7868 = vpop.f32.mrb[0].mxu0
    %v7869 = vadd.f32 %v7668, %v7868
    %v7870 = vpop.f32.mrb[0].mxu0
    %v7871 = vpop.f32.mrb[0].mxu0
    %v7872 = vadd.f32 %v7668, %v7871
    %v7873 = vpop.f32.mrb[0].mxu0
    %7874 = vmatprep.mubr.bf16.mxu0 %v7656
    %7875 = vmatmul.mubr.bf16.gmra.mrb[0].mxu0 %v7655
    %v7876 = vpop.f32.mrb[0].mxu0
    %v7877 = vadd.f32 %v7668, %v7876
    %v7878 = vpop.f32.mrb[0].mxu0
    %v7879 = vpop.f32.mrb[0].mxu0
    %v7880 = vadd.f32 %v7668, %v7879
    %v7881 = vpop.f32.mrb[0].mxu0
    %7882 = vmatprep.mubr.bf16.mxu0 %v7659
    %7883 = vmatmul.mubr.bf16.gmra.mrb[0].mxu0 %v7658
    %v7884 = vpop.f32.mrb[0].mxu0
    %v7885 = vadd.f32 %v7668, %v7884
    %v7886 = vpop.f32.mrb[0].mxu0
    %v7887 = vpop.f32.mrb[0].mxu0
    %v7888 = vadd.f32 %v7668, %v7887
    %v7889 = vpop.f32.mrb[0].mxu0
    %7890 = vmatprep.mubr.bf16.mxu0 %v7662
    %7891 = vmatmul.mubr.bf16.gmra.mrb[0].mxu0 %v7661
    %v7892 = vpop.f32.mrb[0].mxu0
    %v7893 = vadd.f32 %v7668, %v7892
    %v7894 = vpop.f32.mrb[0].mxu0
    %v7895 = vpop.f32.mrb[0].mxu0
    %v7896 = vadd.f32 %v7668, %v7895
    %v7897 = vpop.f32.mrb[0].mxu0
    %7898 = vdwg.mxu0
    %7899 = vmatprep.subr.bf16.mxu0 0
    %7900 = vmatpush1.bf16.msra.mxu0 %v7758
    %7901 = vmatprep.subr.bf16.mxu0 0
    %7902 = vmatpush1.bf16.msra.mxu0 %v7759
    %7903 = vmatprep.subr.bf16.mxu0 0
    %7904 = vmatpush1.bf16.msra.mxu0 0
    %7905 = vmatprep.subr.bf16.mxu0 0
    %7906 = vmatpush1.bf16.msra.mxu0 0
    %7907 = vmatprep.subr.bf16.mxu0 0
    %7908 = vmatpush1.bf16.msra.mxu0 0
    %7909 = vmatprep.subr.bf16.mxu0 0
    %7910 = vmatpush1.bf16.msra.mxu0 0
    %7911 = vmatprep.subr.bf16.mxu0 0
    %7912 = vmatpush1.bf16.msra.mxu0 0
    %7913 = vmatprep.subr.bf16.mxu0 0
    %7914 = vmatpush1.bf16.msra.mxu0 0
    %7915 = vmatprep.subr.bf16.mxu0 0
    %7916 = vmatpush1.bf16.msra.mxu0 0
    %7917 = vmatprep.subr.bf16.mxu0 0
    %7918 = vmatpush1.bf16.msra.mxu0 0
    %7919 = vmatprep.subr.bf16.mxu0 0
    %7920 = vmatpush1.bf16.msra.mxu0 0
    %7921 = vmatprep.subr.bf16.mxu0 0
    %7922 = vmatpush1.bf16.msra.mxu0 0
    %7923 = vmatprep.subr.bf16.mxu0 0
    %7924 = vmatpush1.bf16.msra.mxu0 0
    %7925 = vmatprep.subr.bf16.mxu0 0
    %7926 = vmatpush1.bf16.msra.mxu0 0
    %7927 = vmatprep.subr.bf16.mxu0 0
    %7928 = vmatpush1.bf16.msra.mxu0 0
    %7929 = vmatprep.subr.bf16.mxu0 0
    %7930 = vmatpush1.bf16.msra.mxu0 0
    %7931 = vmatprep.mubr.bf16.mxu0 0
    %7932 = vmatmul.mubr.bf16.gmra.mrb[0].mxu0 %v7779
    %v7933 = vpop.f32.mrb[0].mxu0
    %v7934 = vadd.f32 %v7837, %v7933
    %v7935 = vpop.f32.mrb[0].mxu0
    %v7936 = vpop.f32.mrb[0].mxu0
    %v7937 = vadd.f32 %v7840, %v7936
    %v7938 = vpop.f32.mrb[0].mxu0
    %7939 = vmatprep.mubr.bf16.mxu0 0
    %7940 = vmatmul.mubr.bf16.gmra.mrb[0].mxu0 %v7782
    %v7941 = vpop.f32.mrb[0].mxu0
    %v7942 = vadd.f32 %v7845, %v7941
    %v7943 = vpop.f32.mrb[0].mxu0
    %v7944 = vpop.f32.mrb[0].mxu0
    %v7945 = vadd.f32 %v7848, %v7944
    %v7946 = vpop.f32.mrb[0].mxu0
    %7947 = vmatprep.mubr.bf16.mxu0 0
    %7948 = vmatmul.mubr.bf16.gmra.mrb[0].mxu0 %v7785
    %v7949 = vpop.f32.mrb[0].mxu0
    %v7950 = vadd.f32 %v7853, %v7949
    %v7951 = vpop.f32.mrb[0].mxu0
    %v7952 = vpop.f32.mrb[0].mxu0
    %v7953 = vadd.f32 %v7856, %v7952
    %v7954 = vpop.f32.mrb[0].mxu0
    %7955 = vmatprep.mubr.bf16.mxu0 0
    %7956 = vmatmul.mubr.bf16.gmra.mrb[0].mxu0 %v7788
    %v7957 = vpop.f32.mrb[0].mxu0
    %v7958 = vadd.f32 %v7861, %v7957
    %v7959 = vpop.f32.mrb[0].mxu0
    %v7960 = vpop.f32.mrb[0].mxu0
    %v7961 = vadd.f32 %v7864, %v7960
    %v7962 = vpop.f32.mrb[0].mxu0
    %7963 = vmatprep.mubr.bf16.mxu0 0
    %7964 = vmatmul.mubr.bf16.gmra.mrb[0].mxu0 %v7791
    %v7965 = vpop.f32.mrb[0].mxu0
    %v7966 = vadd.f32 %v7869, %v7965
    %v7967 = vpop.f32.mrb[0].mxu0
    %v7968 = vpop.f32.mrb[0].mxu0
    %v7969 = vadd.f32 %v7872, %v7968
    %v7970 = vpop.f32.mrb[0].mxu0
    %7971 = vmatprep.mubr.bf16.mxu0 0
    %7972 = vmatmul.mubr.bf16.gmra.mrb[0].mxu0 %v7794
    %v7973 = vpop.f32.mrb[0].mxu0
    %v7974 = vadd.f32 %v7877, %v7973
    %v7975 = vpop.f32.mrb[0].mxu0
    %v7976 = vpop.f32.mrb[0].mxu0
    %v7977 = vadd.f32 %v7880, %v7976
    %v7978 = vpop.f32.mrb[0].mxu0
    %7979 = vmatprep.mubr.bf16.mxu0 0
    %7980 = vmatmul.mubr.bf16.gmra.mrb[0].mxu0 %v7797
    %v7981 = vpop.f32.mrb[0].mxu0
    %v7982 = vadd.f32 %v7885, %v7981
    %v7983 = vpop.f32.mrb[0].mxu0
    %v7984 = vpop.f32.mrb[0].mxu0
    %v7985 = vadd.f32 %v7888, %v7984
    %v7986 = vpop.f32.mrb[0].mxu0
    %7987 = vmatprep.mubr.bf16.mxu0 0
    %7988 = vmatmul.mubr.bf16.gmra.mrb[0].mxu0 %v7800
    %v7989 = vpop.f32.mrb[0].mxu0
    %v7990 = vadd.f32 %v7893, %v7989
    %v7991 = vpop.f32.mrb[0].mxu0
    %v7992 = vpop.f32.mrb[0].mxu0
    %v7993 = vadd.f32 %v7896, %v7992
    %v7994 = vpop.f32.mrb[0].mxu0
    %7995 = vdwg.mxu0
    %v7996 = vmul.f32 %v7934, 0.5
    %v7997 = vmul.f32 %v7937, 0.5
    %v7998 = vmul.f32 %v7942, 0.5
    %v7999 = vmul.f32 %v7945, 0.5
    %v8000 = vmul.f32 %v7950, 0.5
    %v8001 = vmul.f32 %v7953, 0.5
    %v8002 = vmul.f32 %v7958, 0.5
    %v8003 = vmul.f32 %v7961, 0.5
    %v8004 = vmul.f32 %v7966, 0.5
    %v8005 = vmul.f32 %v7969, 0.5
    %v8006 = vmul.f32 %v7974, 0.5
    %v8007 = vmul.f32 %v7977, 0.5
    %v8008 = vmul.f32 %v7982, 0.5
    %v8009 = vmul.f32 %v7985, 0.5
    %v8010 = vmul.f32 %v7990, 0.5
    %v8011 = vmul.f32 %v7993, 0.5
    %v8012 = vmul.f32 %v7934, 0.044715
    %v8013 = vmul.f32 %v7937, 0.044715
    %v8014 = vmul.f32 %v7942, 0.044715
    %v8015 = vmul.f32 %v7945, 0.044715
    %v8016 = vmul.f32 %v7950, 0.044715
    %v8017 = vmul.f32 %v7953, 0.044715
    %v8018 = vmul.f32 %v7958, 0.044715
    %v8019 = vmul.f32 %v7961, 0.044715
    %v8020 = vmul.f32 %v7966, 0.044715
    %v8021 = vmul.f32 %v7969, 0.044715
    %v8022 = vmul.f32 %v7974, 0.044715
    %v8023 = vmul.f32 %v7977, 0.044715
    %v8024 = vmul.f32 %v7982, 0.044715
    %v8025 = vmul.f32 %v7985, 0.044715
    %v8026 = vmul.f32 %v7990, 0.044715
    %v8027 = vmul.f32 %v7993, 0.044715
    %v8028 = vmul.f32 %v8012, %v7934
    %v8029 = vmul.f32 %v8013, %v7937
    %v8030 = vmul.f32 %v8014, %v7942
    %v8031 = vmul.f32 %v8015, %v7945
    %v8032 = vmul.f32 %v8016, %v7950
    %v8033 = vmul.f32 %v8017, %v7953
    %v8034 = vmul.f32 %v8018, %v7958
    %v8035 = vmul.f32 %v8019, %v7961
    %v8036 = vmul.f32 %v8020, %v7966
    %v8037 = vmul.f32 %v8021, %v7969
    %v8038 = vmul.f32 %v8022, %v7974
    %v8039 = vmul.f32 %v8023, %v7977
    %v8040 = vmul.f32 %v8024, %v7982
    %v8041 = vmul.f32 %v8025, %v7985
    %v8042 = vmul.f32 %v8026, %v7990
    %v8043 = vmul.f32 %v8027, %v7993
    %v8044 = vmul.f32 %v8028, %v7934
    %v8045 = vmul.f32 %v8029, %v7937
    %v8046 = vmul.f32 %v8030, %v7942
    %v8047 = vmul.f32 %v8031, %v7945
    %v8048 = vmul.f32 %v8032, %v7950
    %v8049 = vmul.f32 %v8033, %v7953
    %v8050 = vmul.f32 %v8034, %v7958
    %v8051 = vmul.f32 %v8035, %v7961
    %v8052 = vmul.f32 %v8036, %v7966
    %v8053 = vmul.f32 %v8037, %v7969
    %v8054 = vmul.f32 %v8038, %v7974
    %v8055 = vmul.f32 %v8039, %v7977
    %v8056 = vmul.f32 %v8040, %v7982
    %v8057 = vmul.f32 %v8041, %v7985
    %v8058 = vmul.f32 %v8042, %v7990
    %v8059 = vmul.f32 %v8043, %v7993
    %v8060 = vadd.f32 %v7934, %v8044
    %v8061 = vadd.f32 %v7937, %v8045
    %v8062 = vadd.f32 %v7942, %v8046
    %v8063 = vadd.f32 %v7945, %v8047
    %v8064 = vadd.f32 %v7950, %v8048
    %v8065 = vadd.f32 %v7953, %v8049
    %v8066 = vadd.f32 %v7958, %v8050
    %v8067 = vadd.f32 %v7961, %v8051
    %v8068 = vadd.f32 %v7966, %v8052
    %v8069 = vadd.f32 %v7969, %v8053
    %v8070 = vadd.f32 %v7974, %v8054
    %v8071 = vadd.f32 %v7977, %v8055
    %v8072 = vadd.f32 %v7982, %v8056
    %v8073 = vadd.f32 %v7985, %v8057
    %v8074 = vadd.f32 %v7990, %v8058
    %v8075 = vadd.f32 %v7993, %v8059
    %v8076 = vmul.f32 %v8060, 0.7978846
    %v8077 = vmul.f32 %v8061, 0.7978846
    %v8078 = vmul.f32 %v8062, 0.7978846
    %v8079 = vmul.f32 %v8063, 0.7978846
    %v8080 = vmul.f32 %v8064, 0.7978846
    %v8081 = vmul.f32 %v8065, 0.7978846
    %v8082 = vmul.f32 %v8066, 0.7978846
    %v8083 = vmul.f32 %v8067, 0.7978846
    %v8084 = vmul.f32 %v8068, 0.7978846
    %v8085 = vmul.f32 %v8069, 0.7978846
    %v8086 = vmul.f32 %v8070, 0.7978846
    %v8087 = vmul.f32 %v8071, 0.7978846
    %v8088 = vmul.f32 %v8072, 0.7978846
    %v8089 = vmul.f32 %v8073, 0.7978846
    %v8090 = vmul.f32 %v8074, 0.7978846
    %v8091 = vmul.f32 %v8075, 0.7978846
    %v8092 = vtanh.pop %v8076
    %v8093 = vtanh.pop %v8077
    %v8094 = vtanh.pop %v8078
    %v8095 = vtanh.pop %v8079
    %v8096 = vtanh.pop %v8080
    %v8097 = vtanh.pop %v8081
    %v8098 = vtanh.pop %v8082
    %v8099 = vtanh.pop %v8083
    %v8100 = vtanh.pop %v8084
    %v8101 = vtanh.pop %v8085
    %v8102 = vtanh.pop %v8086
    %v8103 = vtanh.pop %v8087
    %v8104 = vtanh.pop %v8088
    %v8105 = vtanh.pop %v8089
    %v8106 = vtanh.pop %v8090
    %v8107 = vtanh.pop %v8091
    %v8108 = vadd.f32 %v8092, 1.0
    %v8109 = vadd.f32 %v8093, 1.0
    %v8110 = vadd.f32 %v8094, 1.0
    %v8111 = vadd.f32 %v8095, 1.0
    %v8112 = vadd.f32 %v8096, 1.0
    %v8113 = vadd.f32 %v8097, 1.0
    %v8114 = vadd.f32 %v8098, 1.0
    %v8115 = vadd.f32 %v8099, 1.0
    %v8116 = vadd.f32 %v8100, 1.0
    %v8117 = vadd.f32 %v8101, 1.0
    %v8118 = vadd.f32 %v8102, 1.0
    %v8119 = vadd.f32 %v8103, 1.0
    %v8120 = vadd.f32 %v8104, 1.0
    %v8121 = vadd.f32 %v8105, 1.0
    %v8122 = vadd.f32 %v8106, 1.0
    %v8123 = vadd.f32 %v8107, 1.0
    %v8124 = vmul.f32 %v7996, %v8108
    %v8125 = vmul.f32 %v7997, %v8109
    %v8126 = vmul.f32 %v7998, %v8110
    %v8127 = vmul.f32 %v7999, %v8111
    %v8128 = vmul.f32 %v8000, %v8112
    %v8129 = vmul.f32 %v8001, %v8113
    %v8130 = vmul.f32 %v8002, %v8114
    %v8131 = vmul.f32 %v8003, %v8115
    %v8132 = vmul.f32 %v8004, %v8116
    %v8133 = vmul.f32 %v8005, %v8117
    %v8134 = vmul.f32 %v8006, %v8118
    %v8135 = vmul.f32 %v8007, %v8119
    %v8136 = vmul.f32 %v8008, %v8120
    %v8137 = vmul.f32 %v8009, %v8121
    %v8138 = vmul.f32 %v8010, %v8122
    %v8139 = vmul.f32 %v8011, %v8123
    %v8140 = vadd.f32 %v7585, %v8124
    %v8141 = vadd.f32 %v7586, %v8125
    %v8142 = vadd.f32 %v7587, %v8126
    %v8143 = vadd.f32 %v7588, %v8127
    %v8144 = vadd.f32 %v7589, %v8128
    %v8145 = vadd.f32 %v7590, %v8129
    %v8146 = vadd.f32 %v7591, %v8130
    %v8147 = vadd.f32 %v7592, %v8131
    %v8148 = vadd.f32 %v7593, %v8132
    %v8149 = vadd.f32 %v7594, %v8133
    %v8150 = vadd.f32 %v7595, %v8134
    %v8151 = vadd.f32 %v7596, %v8135
    %v8152 = vadd.f32 %v7597, %v8136
    %v8153 = vadd.f32 %v7598, %v8137
    %v8154 = vadd.f32 %v7599, %v8138
    %v8155 = vadd.f32 %v7600, %v8139
    %8156 = vst.msk [vmem:[#allocation5] sm:$0xff] %vm46, %v8140
    %8157 = vst.msk [vmem:[#allocation5 + $0x8] sm:$0xff] %vm46, %v8141
    %8158 = vst.msk [vmem:[#allocation5 + $0x10] sm:$0xff] %vm46, %v8142
    %8159 = vst.msk [vmem:[#allocation5 + $0x18] sm:$0xff] %vm46, %v8143
    %8160 = vst.msk [vmem:[#allocation5 + $0x20] sm:$0xff] %vm46, %v8144
    %8161 = vst.msk [vmem:[#allocation5 + $0x28] sm:$0xff] %vm46, %v8145
    %8162 = vst.msk [vmem:[#allocation5 + $0x30] sm:$0xff] %vm46, %v8146
    %8163 = vst.msk [vmem:[#allocation5 + $0x38] sm:$0xff] %vm46, %v8147
    %8164 = vst.msk [vmem:[#allocation5 + $0x40] sm:$0xff] %vm46, %v8148
    %8165 = vst.msk [vmem:[#allocation5 + $0x48] sm:$0xff] %vm46, %v8149
    %8166 = vst.msk [vmem:[#allocation5 + $0x50] sm:$0xff] %vm46, %v8150
    %8167 = vst.msk [vmem:[#allocation5 + $0x58] sm:$0xff] %vm46, %v8151
    %8168 = vst.msk [vmem:[#allocation5 + $0x60] sm:$0xff] %vm46, %v8152
    %8169 = vst.msk [vmem:[#allocation5 + $0x68] sm:$0xff] %vm46, %v8153
    %8170 = vst.msk [vmem:[#allocation5 + $0x70] sm:$0xff] %vm46, %v8154
    %8171 = vst.msk [vmem:[#allocation5 + $0x78] sm:$0xff] %vm46, %v8155
    %v8172 = vld [vmem:[#allocation5] sm:$0xff]
    %v8173 = vld [vmem:[#allocation5 + $0x8] sm:$0xff]
    %v8174 = vld [vmem:[#allocation5 + $0x10] sm:$0xff]
    %v8175 = vld [vmem:[#allocation5 + $0x18] sm:$0xff]
    %v8176 = vld [vmem:[#allocation5 + $0x20] sm:$0xff]
    %v8177 = vld [vmem:[#allocation5 + $0x28] sm:$0xff]
    %v8178 = vld [vmem:[#allocation5 + $0x30] sm:$0xff]
    %v8179 = vld [vmem:[#allocation5 + $0x38] sm:$0xff]
    %v8180 = vld [vmem:[#allocation5 + $0x40] sm:$0xff]
    %v8181 = vld [vmem:[#allocation5 + $0x48] sm:$0xff]
    %v8182 = vld [vmem:[#allocation5 + $0x50] sm:$0xff]
    %v8183 = vld [vmem:[#allocation5 + $0x58] sm:$0xff]
    %v8184 = vld [vmem:[#allocation5 + $0x60] sm:$0xff]
    %v8185 = vld [vmem:[#allocation5 + $0x68] sm:$0xff]
    %v8186 = vld [vmem:[#allocation5 + $0x70] sm:$0xff]
    %v8187 = vld [vmem:[#allocation5 + $0x78] sm:$0xff]
    %8188 = vst.msk [vmem:[%s148 + $0x8] sm:$0xff] %vm46, %v8172
    %8189 = vst.msk [vmem:[%s148 + $0x20] sm:$0xff] %vm46, %v8173
    %8190 = vst.msk [vmem:[%s148 + $0x38] sm:$0xff] %vm46, %v8174
    %8191 = vst.msk [vmem:[%s148 + $0x50] sm:$0xff] %vm46, %v8175
    %8192 = vst.msk [vmem:[%s148 + $0x68] sm:$0xff] %vm46, %v8176
    %8193 = vst.msk [vmem:[%s148 + $0x80] sm:$0xff] %vm46, %v8177
    %8194 = vst.msk [vmem:[%s148 + $0x98] sm:$0xff] %vm46, %v8178
    %8195 = vst.msk [vmem:[%s148 + $0xb0] sm:$0xff] %vm46, %v8179
    %8196 = vst.msk [vmem:[%s148 + $0x158] sm:$0xff] %vm46, %v8180
    %8197 = vst.msk [vmem:[%s148 + $0x170] sm:$0xff] %vm46, %v8181
    %8198 = vst.msk [vmem:[%s148 + $0x188] sm:$0xff] %vm46, %v8182
    %8199 = vst.msk [vmem:[%s148 + $0x1a0] sm:$0xff] %vm46, %v8183
    %8200 = vst.msk [vmem:[%s148 + $0x1b8] sm:$0xff] %vm46, %v8184
    %8201 = vst.msk [vmem:[%s148 + $0x1d0] sm:$0xff] %vm46, %v8185
    %8202 = vst.msk [vmem:[%s148 + $0x1e8] sm:$0xff] %vm46, %v8186
    %8203 = vst.msk [vmem:[%s148 + $0x200] sm:$0xff] %vm46, %v8187
    %v8204 = vld [vmem:[%s165 + $0x7] sm:$0xff]
    %v8205 = vld [vmem:[%s165 + $0x1f] sm:$0xff]
    %v8206 = vld [vmem:[%s165 + $0x37] sm:$0xff]
    %v8207 = vld [vmem:[%s165 + $0x4f] sm:$0xff]
    %v8208 = vld [vmem:[%s165 + $0x67] sm:$0xff]
    %v8209 = vld [vmem:[%s165 + $0x7f] sm:$0xff]
    %v8210 = vld [vmem:[%s165 + $0x97] sm:$0xff]
    %v8211 = vld [vmem:[%s165 + $0xaf] sm:$0xff]
    %v8212 = vld [vmem:[%s165 + $0x157] sm:$0xff]
    %v8213 = vld [vmem:[%s165 + $0x16f] sm:$0xff]
    %v8214 = vld [vmem:[%s165 + $0x187] sm:$0xff]
    %v8215 = vld [vmem:[%s165 + $0x19f] sm:$0xff]
    %v8216 = vld [vmem:[%s165 + $0x1b7] sm:$0xff]
    %v8217 = vld [vmem:[%s165 + $0x1cf] sm:$0xff]
    %v8218 = vld [vmem:[%s165 + $0x1e7] sm:$0xff]
    %v8219 = vld [vmem:[%s165 + $0x1ff] sm:$0xff]
    %v8220 = vpack.c.bf16 %v8205, %v8204
    %v8221 = vpack.c.bf16 %v8207, %v8206
    %v8222 = vpack.c.bf16 %v8209, %v8208
    %v8223 = vpack.c.bf16 %v8211, %v8210
    %v8224 = vpack.c.bf16 %v8213, %v8212
    %v8225 = vpack.c.bf16 %v8215, %v8214
    %v8226 = vpack.c.bf16 %v8217, %v8216
    %v8227 = vpack.c.bf16 %v8219, %v8218
    %8228 = vst.msk [vmem:[#allocation3] sm:$0xff] %vm46, %v8220
    %8229 = vst.msk [vmem:[#allocation3 + $0x18] sm:$0xff] %vm46, %v8221
    %8230 = vst.msk [vmem:[#allocation3 + $0x30] sm:$0xff] %vm46, %v8222
    %8231 = vst.msk [vmem:[#allocation3 + $0x48] sm:$0xff] %vm46, %v8223
    %8232 = vst.msk [vmem:[#allocation3 + $0x60] sm:$0xff] %vm46, %v8224
    %8233 = vst.msk [vmem:[#allocation3 + $0x78] sm:$0xff] %vm46, %v8225
    %8234 = vst.msk [vmem:[#allocation3 + $0x90] sm:$0xff] %vm46, %v8226
    %8235 = vst.msk [vmem:[#allocation3 + $0xa8] sm:$0xff] %vm46, %v8227
    %v8236 = vld [vmem:[%s165 + $0x8] sm:$0xff]
    %v8237 = vld [vmem:[%s165 + $0x20] sm:$0xff]
    %v8238 = vld [vmem:[%s165 + $0x38] sm:$0xff]
    %v8239 = vld [vmem:[%s165 + $0x50] sm:$0xff]
    %v8240 = vld [vmem:[%s165 + $0x68] sm:$0xff]
    %v8241 = vld [vmem:[%s165 + $0x80] sm:$0xff]
    %v8242 = vld [vmem:[%s165 + $0x98] sm:$0xff]
    %v8243 = vld [vmem:[%s165 + $0xb0] sm:$0xff]
    %v8244 = vld [vmem:[%s165 + $0x158] sm:$0xff]
    %v8245 = vld [vmem:[%s165 + $0x170] sm:$0xff]
    %v8246 = vld [vmem:[%s165 + $0x188] sm:$0xff]
    %v8247 = vld [vmem:[%s165 + $0x1a0] sm:$0xff]
    %v8248 = vld [vmem:[%s165 + $0x1b8] sm:$0xff]
    %v8249 = vld [vmem:[%s165 + $0x1d0] sm:$0xff]
    %v8250 = vld [vmem:[%s165 + $0x1e8] sm:$0xff]
    %v8251 = vld [vmem:[%s165 + $0x200] sm:$0xff]
    %v8252 = vpack.c.bf16 %v8237, %v8236
    %v8253 = vpack.c.bf16 %v8239, %v8238
    %v8254 = vpack.c.bf16 %v8241, %v8240
    %v8255 = vpack.c.bf16 %v8243, %v8242
    %v8256 = vpack.c.bf16 %v8245, %v8244
    %v8257 = vpack.c.bf16 %v8247, %v8246
    %v8258 = vpack.c.bf16 %v8249, %v8248
    %v8259 = vpack.c.bf16 %v8251, %v8250
    %8268 = vrot.lane.b32.xlu0 %v8252, 32
    %v8269 = vpop.permute.xlu0 %8268
    %8270 = vrot.lane.b32.xlu0 %v8253, 32
    %v8271 = vpop.permute.xlu0 %8270
    %8272 = vrot.lane.b32.xlu0 %v8254, 32
    %v8273 = vpop.permute.xlu0 %8272
    %8274 = vrot.lane.b32.xlu0 %v8255, 32
    %v8275 = vpop.permute.xlu0 %8274
    %8276 = vrot.lane.b32.xlu0 %v8256, 32
    %v8277 = vpop.permute.xlu0 %8276
    %8278 = vrot.lane.b32.xlu0 %v8257, 32
    %v8279 = vpop.permute.xlu0 %8278
    %8280 = vrot.lane.b32.xlu0 %v8258, 32
    %v8281 = vpop.permute.xlu0 %8280
    %8282 = vrot.lane.b32.xlu0 %v8259, 32
    %v8283 = vpop.permute.xlu0 %8282
    %8292 = vst.msk [vmem:[#allocation3] sm:$0xff] %vm254, %v8269
    %8293 = vst.msk [vmem:[#allocation3 + $0x18] sm:$0xff] %vm254, %v8271
    %8294 = vst.msk [vmem:[#allocation3 + $0x30] sm:$0xff] %vm254, %v8273
    %8295 = vst.msk [vmem:[#allocation3 + $0x48] sm:$0xff] %vm254, %v8275
    %8296 = vst.msk [vmem:[#allocation3 + $0x60] sm:$0xff] %vm254, %v8277
    %8297 = vst.msk [vmem:[#allocation3 + $0x78] sm:$0xff] %vm254, %v8279
    %8298 = vst.msk [vmem:[#allocation3 + $0x90] sm:$0xff] %vm254, %v8281
    %8299 = vst.msk [vmem:[#allocation3 + $0xa8] sm:$0xff] %vm254, %v8283
    %v8300 = vld [vmem:[%s165 + $0x9] sm:$0xff]
    %v8301 = vld [vmem:[%s165 + $0x21] sm:$0xff]
    %v8302 = vld [vmem:[%s165 + $0x39] sm:$0xff]
    %v8303 = vld [vmem:[%s165 + $0x51] sm:$0xff]
    %v8304 = vld [vmem:[%s165 + $0x69] sm:$0xff]
    %v8305 = vld [vmem:[%s165 + $0x81] sm:$0xff]
    %v8306 = vld [vmem:[%s165 + $0x99] sm:$0xff]
    %v8307 = vld [vmem:[%s165 + $0xb1] sm:$0xff]
    %v8308 = vld [vmem:[%s165 + $0x159] sm:$0xff]
    %v8309 = vld [vmem:[%s165 + $0x171] sm:$0xff]
    %v8310 = vld [vmem:[%s165 + $0x189] sm:$0xff]
    %v8311 = vld [vmem:[%s165 + $0x1a1] sm:$0xff]
    %v8312 = vld [vmem:[%s165 + $0x1b9] sm:$0xff]
    %v8313 = vld [vmem:[%s165 + $0x1d1] sm:$0xff]
    %v8314 = vld [vmem:[%s165 + $0x1e9] sm:$0xff]
    %v8315 = vld [vmem:[%s165 + $0x201] sm:$0xff]
    %v8316 = vpack.c.bf16 %v8301, %v8300
    %v8317 = vpack.c.bf16 %v8303, %v8302
    %v8318 = vpack.c.bf16 %v8305, %v8304
    %v8319 = vpack.c.bf16 %v8307, %v8306
    %v8320 = vpack.c.bf16 %v8309, %v8308
    %v8321 = vpack.c.bf16 %v8311, %v8310
    %v8322 = vpack.c.bf16 %v8313, %v8312
    %v8323 = vpack.c.bf16 %v8315, %v8314
    %8332 = vrot.lane.b32.xlu0 %v8316, 64
    %v8333 = vpop.permute.xlu0 %8332
    %8334 = vrot.lane.b32.xlu0 %v8317, 64
    %v8335 = vpop.permute.xlu0 %8334
    %8336 = vrot.lane.b32.xlu0 %v8318, 64
    %v8337 = vpop.permute.xlu0 %8336
    %8338 = vrot.lane.b32.xlu0 %v8319, 64
    %v8339 = vpop.permute.xlu0 %8338
    %8340 = vrot.lane.b32.xlu0 %v8320, 64
    %v8341 = vpop.permute.xlu0 %8340
    %8342 = vrot.lane.b32.xlu0 %v8321, 64
    %v8343 = vpop.permute.xlu0 %8342
    %8344 = vrot.lane.b32.xlu0 %v8322, 64
    %v8345 = vpop.permute.xlu0 %8344
    %8346 = vrot.lane.b32.xlu0 %v8323, 64
    %v8347 = vpop.permute.xlu0 %8346
    %8356 = vst.msk [vmem:[#allocation3] sm:$0xff] %vm319, %v8333
    %8357 = vst.msk [vmem:[#allocation3 + $0x18] sm:$0xff] %vm319, %v8335
    %8358 = vst.msk [vmem:[#allocation3 + $0x30] sm:$0xff] %vm319, %v8337
    %8359 = vst.msk [vmem:[#allocation3 + $0x48] sm:$0xff] %vm319, %v8339
    %8360 = vst.msk [vmem:[#allocation3 + $0x60] sm:$0xff] %vm319, %v8341
    %8361 = vst.msk [vmem:[#allocation3 + $0x78] sm:$0xff] %vm319, %v8343
    %8362 = vst.msk [vmem:[#allocation3 + $0x90] sm:$0xff] %vm319, %v8345
    %8363 = vst.msk [vmem:[#allocation3 + $0xa8] sm:$0xff] %vm319, %v8347
    %v8364 = vld [vmem:[%s148 + $0x7] sm:$0xff]
    %v8365 = vld [vmem:[%s148 + $0x1f] sm:$0xff]
    %v8366 = vld [vmem:[%s148 + $0x37] sm:$0xff]
    %v8367 = vld [vmem:[%s148 + $0x4f] sm:$0xff]
    %v8368 = vld [vmem:[%s148 + $0x67] sm:$0xff]
    %v8369 = vld [vmem:[%s148 + $0x7f] sm:$0xff]
    %v8370 = vld [vmem:[%s148 + $0x97] sm:$0xff]
    %v8371 = vld [vmem:[%s148 + $0xaf] sm:$0xff]
    %v8372 = vld [vmem:[%s148 + $0x157] sm:$0xff]
    %v8373 = vld [vmem:[%s148 + $0x16f] sm:$0xff]
    %v8374 = vld [vmem:[%s148 + $0x187] sm:$0xff]
    %v8375 = vld [vmem:[%s148 + $0x19f] sm:$0xff]
    %v8376 = vld [vmem:[%s148 + $0x1b7] sm:$0xff]
    %v8377 = vld [vmem:[%s148 + $0x1cf] sm:$0xff]
    %v8378 = vld [vmem:[%s148 + $0x1e7] sm:$0xff]
    %v8379 = vld [vmem:[%s148 + $0x1ff] sm:$0xff]
    %v8380 = vpack.c.bf16 %v8365, %v8364
    %v8381 = vpack.c.bf16 %v8367, %v8366
    %v8382 = vpack.c.bf16 %v8369, %v8368
    %v8383 = vpack.c.bf16 %v8371, %v8370
    %v8384 = vpack.c.bf16 %v8373, %v8372
    %v8385 = vpack.c.bf16 %v8375, %v8374
    %v8386 = vpack.c.bf16 %v8377, %v8376
    %v8387 = vpack.c.bf16 %v8379, %v8378
    %8396 = vrot.lane.b32.xlu0 %v8380, 96
    %v8397 = vpop.permute.xlu0 %8396
    %8398 = vrot.lane.b32.xlu0 %v8381, 96
    %v8399 = vpop.permute.xlu0 %8398
    %8400 = vrot.lane.b32.xlu0 %v8382, 96
    %v8401 = vpop.permute.xlu0 %8400
    %8402 = vrot.lane.b32.xlu0 %v8383, 96
    %v8403 = vpop.permute.xlu0 %8402
    %8404 = vrot.lane.b32.xlu0 %v8384, 96
    %v8405 = vpop.permute.xlu0 %8404
    %8406 = vrot.lane.b32.xlu0 %v8385, 96
    %v8407 = vpop.permute.xlu0 %8406
    %8408 = vrot.lane.b32.xlu0 %v8386, 96
    %v8409 = vpop.permute.xlu0 %8408
    %8410 = vrot.lane.b32.xlu0 %v8387, 96
    %v8411 = vpop.permute.xlu0 %8410
    %8420 = vst.msk [vmem:[#allocation3] sm:$0xff] %vm384, %v8397
    %8421 = vst.msk [vmem:[#allocation3 + $0x18] sm:$0xff] %vm384, %v8399
    %8422 = vst.msk [vmem:[#allocation3 + $0x30] sm:$0xff] %vm384, %v8401
    %8423 = vst.msk [vmem:[#allocation3 + $0x48] sm:$0xff] %vm384, %v8403
    %8424 = vst.msk [vmem:[#allocation3 + $0x60] sm:$0xff] %vm384, %v8405
    %8425 = vst.msk [vmem:[#allocation3 + $0x78] sm:$0xff] %vm384, %v8407
    %8426 = vst.msk [vmem:[#allocation3 + $0x90] sm:$0xff] %vm384, %v8409
    %8427 = vst.msk [vmem:[#allocation3 + $0xa8] sm:$0xff] %vm384, %v8411
    %v8428 = vld [vmem:[%s148 + $0x8] sm:$0xff]
    %v8429 = vld [vmem:[%s148 + $0x20] sm:$0xff]
    %v8430 = vld [vmem:[%s148 + $0x38] sm:$0xff]
    %v8431 = vld [vmem:[%s148 + $0x50] sm:$0xff]
    %v8432 = vld [vmem:[%s148 + $0x68] sm:$0xff]
    %v8433 = vld [vmem:[%s148 + $0x80] sm:$0xff]
    %v8434 = vld [vmem:[%s148 + $0x98] sm:$0xff]
    %v8435 = vld [vmem:[%s148 + $0xb0] sm:$0xff]
    %v8436 = vld [vmem:[%s148 + $0x158] sm:$0xff]
    %v8437 = vld [vmem:[%s148 + $0x170] sm:$0xff]
    %v8438 = vld [vmem:[%s148 + $0x188] sm:$0xff]
    %v8439 = vld [vmem:[%s148 + $0x1a0] sm:$0xff]
    %v8440 = vld [vmem:[%s148 + $0x1b8] sm:$0xff]
    %v8441 = vld [vmem:[%s148 + $0x1d0] sm:$0xff]
    %v8442 = vld [vmem:[%s148 + $0x1e8] sm:$0xff]
    %v8443 = vld [vmem:[%s148 + $0x200] sm:$0xff]
    %v8444 = vpack.c.bf16 %v8429, %v8428
    %v8445 = vpack.c.bf16 %v8431, %v8430
    %v8446 = vpack.c.bf16 %v8433, %v8432
    %v8447 = vpack.c.bf16 %v8435, %v8434
    %v8448 = vpack.c.bf16 %v8437, %v8436
    %v8449 = vpack.c.bf16 %v8439, %v8438
    %v8450 = vpack.c.bf16 %v8441, %v8440
    %v8451 = vpack.c.bf16 %v8443, %v8442
    %8452 = vst.msk [vmem:[#allocation3 + $0x8] sm:$0xff] %vm46, %v8444
    %8453 = vst.msk [vmem:[#allocation3 + $0x20] sm:$0xff] %vm46, %v8445
    %8454 = vst.msk [vmem:[#allocation3 + $0x38] sm:$0xff] %vm46, %v8446
    %8455 = vst.msk [vmem:[#allocation3 + $0x50] sm:$0xff] %vm46, %v8447
    %8456 = vst.msk [vmem:[#allocation3 + $0x68] sm:$0xff] %vm46, %v8448
    %8457 = vst.msk [vmem:[#allocation3 + $0x80] sm:$0xff] %vm46, %v8449
    %8458 = vst.msk [vmem:[#allocation3 + $0x98] sm:$0xff] %vm46, %v8450
    %8459 = vst.msk [vmem:[#allocation3 + $0xb0] sm:$0xff] %vm46, %v8451
    %v8460 = vld [vmem:[%s148 + $0x9] sm:$0xff]
    %v8461 = vld [vmem:[%s148 + $0x21] sm:$0xff]
    %v8462 = vld [vmem:[%s148 + $0x39] sm:$0xff]
    %v8463 = vld [vmem:[%s148 + $0x51] sm:$0xff]
    %v8464 = vld [vmem:[%s148 + $0x69] sm:$0xff]
    %v8465 = vld [vmem:[%s148 + $0x81] sm:$0xff]
    %v8466 = vld [vmem:[%s148 + $0x99] sm:$0xff]
    %v8467 = vld [vmem:[%s148 + $0xb1] sm:$0xff]
    %v8468 = vld [vmem:[%s148 + $0x159] sm:$0xff]
    %v8469 = vld [vmem:[%s148 + $0x171] sm:$0xff]
    %v8470 = vld [vmem:[%s148 + $0x189] sm:$0xff]
    %v8471 = vld [vmem:[%s148 + $0x1a1] sm:$0xff]
    %v8472 = vld [vmem:[%s148 + $0x1b9] sm:$0xff]
    %v8473 = vld [vmem:[%s148 + $0x1d1] sm:$0xff]
    %v8474 = vld [vmem:[%s148 + $0x1e9] sm:$0xff]
    %v8475 = vld [vmem:[%s148 + $0x201] sm:$0xff]
    %v8476 = vpack.c.bf16 %v8461, %v8460
    %v8477 = vpack.c.bf16 %v8463, %v8462
    %v8478 = vpack.c.bf16 %v8465, %v8464
    %v8479 = vpack.c.bf16 %v8467, %v8466
    %v8480 = vpack.c.bf16 %v8469, %v8468
    %v8481 = vpack.c.bf16 %v8471, %v8470
    %v8482 = vpack.c.bf16 %v8473, %v8472
    %v8483 = vpack.c.bf16 %v8475, %v8474
    %8492 = vrot.lane.b32.xlu0 %v8476, 32
    %v8493 = vpop.permute.xlu0 %8492
    %8494 = vrot.lane.b32.xlu0 %v8477, 32
    %v8495 = vpop.permute.xlu0 %8494
    %8496 = vrot.lane.b32.xlu0 %v8478, 32
    %v8497 = vpop.permute.xlu0 %8496
    %8498 = vrot.lane.b32.xlu0 %v8479, 32
    %v8499 = vpop.permute.xlu0 %8498
    %8500 = vrot.lane.b32.xlu0 %v8480, 32
    %v8501 = vpop.permute.xlu0 %8500
    %8502 = vrot.lane.b32.xlu0 %v8481, 32
    %v8503 = vpop.permute.xlu0 %8502
    %8504 = vrot.lane.b32.xlu0 %v8482, 32
    %v8505 = vpop.permute.xlu0 %8504
    %8506 = vrot.lane.b32.xlu0 %v8483, 32
    %v8507 = vpop.permute.xlu0 %8506
    %8516 = vst.msk [vmem:[#allocation3 + $0x8] sm:$0xff] %vm254, %v8493
    %8517 = vst.msk [vmem:[#allocation3 + $0x20] sm:$0xff] %vm254, %v8495
    %8518 = vst.msk [vmem:[#allocation3 + $0x38] sm:$0xff] %vm254, %v8497
    %8519 = vst.msk [vmem:[#allocation3 + $0x50] sm:$0xff] %vm254, %v8499
    %8520 = vst.msk [vmem:[#allocation3 + $0x68] sm:$0xff] %vm254, %v8501
    %8521 = vst.msk [vmem:[#allocation3 + $0x80] sm:$0xff] %vm254, %v8503
    %8522 = vst.msk [vmem:[#allocation3 + $0x98] sm:$0xff] %vm254, %v8505
    %8523 = vst.msk [vmem:[#allocation3 + $0xb0] sm:$0xff] %vm254, %v8507
    %v8524 = vld [vmem:[%s489 + $0x7] sm:$0xff]
    %v8525 = vld [vmem:[%s489 + $0x1f] sm:$0xff]
    %v8526 = vld [vmem:[%s489 + $0x37] sm:$0xff]
    %v8527 = vld [vmem:[%s489 + $0x4f] sm:$0xff]
    %v8528 = vld [vmem:[%s489 + $0x67] sm:$0xff]
    %v8529 = vld [vmem:[%s489 + $0x7f] sm:$0xff]
    %v8530 = vld [vmem:[%s489 + $0x97] sm:$0xff]
    %v8531 = vld [vmem:[%s489 + $0xaf] sm:$0xff]
    %v8532 = vld [vmem:[%s489 + $0x157] sm:$0xff]
    %v8533 = vld [vmem:[%s489 + $0x16f] sm:$0xff]
    %v8534 = vld [vmem:[%s489 + $0x187] sm:$0xff]
    %v8535 = vld [vmem:[%s489 + $0x19f] sm:$0xff]
    %v8536 = vld [vmem:[%s489 + $0x1b7] sm:$0xff]
    %v8537 = vld [vmem:[%s489 + $0x1cf] sm:$0xff]
    %v8538 = vld [vmem:[%s489 + $0x1e7] sm:$0xff]
    %v8539 = vld [vmem:[%s489 + $0x1ff] sm:$0xff]
    %v8540 = vpack.c.bf16 %v8525, %v8524
    %v8541 = vpack.c.bf16 %v8527, %v8526
    %v8542 = vpack.c.bf16 %v8529, %v8528
    %v8543 = vpack.c.bf16 %v8531, %v8530
    %v8544 = vpack.c.bf16 %v8533, %v8532
    %v8545 = vpack.c.bf16 %v8535, %v8534
    %v8546 = vpack.c.bf16 %v8537, %v8536
    %v8547 = vpack.c.bf16 %v8539, %v8538
    %8556 = vrot.lane.b32.xlu0 %v8540, 64
    %v8557 = vpop.permute.xlu0 %8556
    %8558 = vrot.lane.b32.xlu0 %v8541, 64
    %v8559 = vpop.permute.xlu0 %8558
    %8560 = vrot.lane.b32.xlu0 %v8542, 64
    %v8561 = vpop.permute.xlu0 %8560
    %8562 = vrot.lane.b32.xlu0 %v8543, 64
    %v8563 = vpop.permute.xlu0 %8562
    %8564 = vrot.lane.b32.xlu0 %v8544, 64
    %v8565 = vpop.permute.xlu0 %8564
    %8566 = vrot.lane.b32.xlu0 %v8545, 64
    %v8567 = vpop.permute.xlu0 %8566
    %8568 = vrot.lane.b32.xlu0 %v8546, 64
    %v8569 = vpop.permute.xlu0 %8568
    %8570 = vrot.lane.b32.xlu0 %v8547, 64
    %v8571 = vpop.permute.xlu0 %8570
    %8580 = vst.msk [vmem:[#allocation3 + $0x8] sm:$0xff] %vm319, %v8557
    %8581 = vst.msk [vmem:[#allocation3 + $0x20] sm:$0xff] %vm319, %v8559
    %8582 = vst.msk [vmem:[#allocation3 + $0x38] sm:$0xff] %vm319, %v8561
    %8583 = vst.msk [vmem:[#allocation3 + $0x50] sm:$0xff] %vm319, %v8563
    %8584 = vst.msk [vmem:[#allocation3 + $0x68] sm:$0xff] %vm319, %v8565
    %8585 = vst.msk [vmem:[#allocation3 + $0x80] sm:$0xff] %vm319, %v8567
    %8586 = vst.msk [vmem:[#allocation3 + $0x98] sm:$0xff] %vm319, %v8569
    %8587 = vst.msk [vmem:[#allocation3 + $0xb0] sm:$0xff] %vm319, %v8571
    %v8588 = vld [vmem:[%s489 + $0x8] sm:$0xff]
    %v8589 = vld [vmem:[%s489 + $0x20] sm:$0xff]
    %v8590 = vld [vmem:[%s489 + $0x38] sm:$0xff]
    %v8591 = vld [vmem:[%s489 + $0x50] sm:$0xff]
    %v8592 = vld [vmem:[%s489 + $0x68] sm:$0xff]
    %v8593 = vld [vmem:[%s489 + $0x80] sm:$0xff]
    %v8594 = vld [vmem:[%s489 + $0x98] sm:$0xff]
    %v8595 = vld [vmem:[%s489 + $0xb0] sm:$0xff]
    %v8596 = vld [vmem:[%s489 + $0x158] sm:$0xff]
    %v8597 = vld [vmem:[%s489 + $0x170] sm:$0xff]
    %v8598 = vld [vmem:[%s489 + $0x188] sm:$0xff]
    %v8599 = vld [vmem:[%s489 + $0x1a0] sm:$0xff]
    %v8600 = vld [vmem:[%s489 + $0x1b8] sm:$0xff]
    %v8601 = vld [vmem:[%s489 + $0x1d0] sm:$0xff]
    %v8602 = vld [vmem:[%s489 + $0x1e8] sm:$0xff]
    %v8603 = vld [vmem:[%s489 + $0x200] sm:$0xff]
    %v8604 = vpack.c.bf16 %v8589, %v8588
    %v8605 = vpack.c.bf16 %v8591, %v8590
    %v8606 = vpack.c.bf16 %v8593, %v8592
    %v8607 = vpack.c.bf16 %v8595, %v8594
    %v8608 = vpack.c.bf16 %v8597, %v8596
    %v8609 = vpack.c.bf16 %v8599, %v8598
    %v8610 = vpack.c.bf16 %v8601, %v8600
    %v8611 = vpack.c.bf16 %v8603, %v8602
    %8620 = vrot.lane.b32.xlu0 %v8604, 96
    %v8621 = vpop.permute.xlu0 %8620
    %8622 = vrot.lane.b32.xlu0 %v8605, 96
    %v8623 = vpop.permute.xlu0 %8622
    %8624 = vrot.lane.b32.xlu0 %v8606, 96
    %v8625 = vpop.permute.xlu0 %8624
    %8626 = vrot.lane.b32.xlu0 %v8607, 96
    %v8627 = vpop.permute.xlu0 %8626
    %8628 = vrot.lane.b32.xlu0 %v8608, 96
    %v8629 = vpop.permute.xlu0 %8628
    %8630 = vrot.lane.b32.xlu0 %v8609, 96
    %v8631 = vpop.permute.xlu0 %8630
    %8632 = vrot.lane.b32.xlu0 %v8610, 96
    %v8633 = vpop.permute.xlu0 %8632
    %8634 = vrot.lane.b32.xlu0 %v8611, 96
    %v8635 = vpop.permute.xlu0 %8634
    %8644 = vst.msk [vmem:[#allocation3 + $0x8] sm:$0xff] %vm384, %v8621
    %8645 = vst.msk [vmem:[#allocation3 + $0x20] sm:$0xff] %vm384, %v8623
    %8646 = vst.msk [vmem:[#allocation3 + $0x38] sm:$0xff] %vm384, %v8625
    %8647 = vst.msk [vmem:[#allocation3 + $0x50] sm:$0xff] %vm384, %v8627
    %8648 = vst.msk [vmem:[#allocation3 + $0x68] sm:$0xff] %vm384, %v8629
    %8649 = vst.msk [vmem:[#allocation3 + $0x80] sm:$0xff] %vm384, %v8631
    %8650 = vst.msk [vmem:[#allocation3 + $0x98] sm:$0xff] %vm384, %v8633
    %8651 = vst.msk [vmem:[#allocation3 + $0xb0] sm:$0xff] %vm384, %v8635
    %v8652 = vld [vmem:[%s489 + $0x9] sm:$0xff]
    %v8653 = vld [vmem:[%s489 + $0x21] sm:$0xff]
    %v8654 = vld [vmem:[%s489 + $0x39] sm:$0xff]
    %v8655 = vld [vmem:[%s489 + $0x51] sm:$0xff]
    %v8656 = vld [vmem:[%s489 + $0x69] sm:$0xff]
    %v8657 = vld [vmem:[%s489 + $0x81] sm:$0xff]
    %v8658 = vld [vmem:[%s489 + $0x99] sm:$0xff]
    %v8659 = vld [vmem:[%s489 + $0xb1] sm:$0xff]
    %v8660 = vld [vmem:[%s489 + $0x159] sm:$0xff]
    %v8661 = vld [vmem:[%s489 + $0x171] sm:$0xff]
    %v8662 = vld [vmem:[%s489 + $0x189] sm:$0xff]
    %v8663 = vld [vmem:[%s489 + $0x1a1] sm:$0xff]
    %v8664 = vld [vmem:[%s489 + $0x1b9] sm:$0xff]
    %v8665 = vld [vmem:[%s489 + $0x1d1] sm:$0xff]
    %v8666 = vld [vmem:[%s489 + $0x1e9] sm:$0xff]
    %v8667 = vld [vmem:[%s489 + $0x201] sm:$0xff]
    %v8668 = vpack.c.bf16 %v8653, %v8652
    %v8669 = vpack.c.bf16 %v8655, %v8654
    %v8670 = vpack.c.bf16 %v8657, %v8656
    %v8671 = vpack.c.bf16 %v8659, %v8658
    %v8672 = vpack.c.bf16 %v8661, %v8660
    %v8673 = vpack.c.bf16 %v8663, %v8662
    %v8674 = vpack.c.bf16 %v8665, %v8664
    %v8675 = vpack.c.bf16 %v8667, %v8666
    %8676 = vst.msk [vmem:[#allocation3 + $0x10] sm:$0xff] %vm46, %v8668
    %8677 = vst.msk [vmem:[#allocation3 + $0x28] sm:$0xff] %vm46, %v8669
    %8678 = vst.msk [vmem:[#allocation3 + $0x40] sm:$0xff] %vm46, %v8670
    %8679 = vst.msk [vmem:[#allocation3 + $0x58] sm:$0xff] %vm46, %v8671
    %8680 = vst.msk [vmem:[#allocation3 + $0x70] sm:$0xff] %vm46, %v8672
    %8681 = vst.msk [vmem:[#allocation3 + $0x88] sm:$0xff] %vm46, %v8673
    %8682 = vst.msk [vmem:[#allocation3 + $0xa0] sm:$0xff] %vm46, %v8674
    %8683 = vst.msk [vmem:[#allocation3 + $0xb8] sm:$0xff] %vm46, %v8675
    %s8684 = scalar_lea.vmem %s9, 576
    %v8685 = vld [vmem:[%s8684] sm:$0xf]
    %v8686 = vld [vmem:[%s8684 + $0x4] sm:$0xf]
    %v8687 = vld [vmem:[%s8684 + $0x8] sm:$0xf]
    %v8688 = vld [vmem:[%s8684 + $0xc] sm:$0xf]
    %v8689 = vld [vmem:[%s8684 + $0x10] sm:$0xf]
    %v8690 = vld [vmem:[%s8684 + $0x14] sm:$0xf]
    %v8691 = vld [vmem:[%s8684 + $0x18] sm:$0xf]
    %v8692 = vld [vmem:[%s8684 + $0x1c] sm:$0xf]
    %v8693 = vld [vmem:[%s8684 + $0x20] sm:$0xf]
    %v8694 = vld [vmem:[%s8684 + $0x24] sm:$0xf]
    %v8695 = vld [vmem:[%s8684 + $0x28] sm:$0xf]
    %v8696 = vld [vmem:[%s8684 + $0x2c] sm:$0xf]
    %v8697 = vld [vmem:[%s8684 + $0x30] sm:$0xf]
    %v8698 = vld [vmem:[%s8684 + $0x34] sm:$0xf]
    %v8699 = vld [vmem:[%s8684 + $0x38] sm:$0xf]
    %v8700 = vld [vmem:[%s8684 + $0x3c] sm:$0xf]
    %v8701 = vld [vmem:[%s8684 + $0x40] sm:$0xf]
    %v8702 = vld [vmem:[%s8684 + $0x44] sm:$0xf]
    %v8703 = vld [vmem:[%s8684 + $0x48] sm:$0xf]
    %v8704 = vld [vmem:[%s8684 + $0x4c] sm:$0xf]
    %v8705 = vld [vmem:[%s8684 + $0x50] sm:$0xf]
    %v8706 = vld [vmem:[%s8684 + $0x54] sm:$0xf]
    %v8707 = vld [vmem:[%s8684 + $0x58] sm:$0xf]
    %v8708 = vld [vmem:[%s8684 + $0x5c] sm:$0xf]
    %v8709 = vld [vmem:[%s8684 + $0x60] sm:$0xf]
    %v8710 = vld [vmem:[%s8684 + $0x64] sm:$0xf]
    %v8711 = vld [vmem:[%s8684 + $0x68] sm:$0xf]
    %v8712 = vld [vmem:[%s8684 + $0x6c] sm:$0xf]
    %v8713 = vld [vmem:[%s8684 + $0x70] sm:$0xf]
    %v8714 = vld [vmem:[%s8684 + $0x74] sm:$0xf]
    %v8715 = vld [vmem:[%s8684 + $0x78] sm:$0xf]
    %v8716 = vld [vmem:[%s8684 + $0x7c] sm:$0xf]
    %v8717 = vld [vmem:[%s8684 + $0x80] sm:$0xf]
    %v8718 = vld [vmem:[%s8684 + $0x84] sm:$0xf]
    %v8719 = vld [vmem:[%s8684 + $0x88] sm:$0xf]
    %v8720 = vld [vmem:[%s8684 + $0x8c] sm:$0xf]
    %s8721 = scalar_lea.vmem %s10, 4
    %v8722 = vld [vmem:[%s8721] sm:$0x1]
    %v8723 = vld [vmem:[#allocation3] sm:$0xff]
    %v8724 = vld [vmem:[#allocation3 + $0x8] sm:$0xff]
    %v8725 = vld [vmem:[#allocation3 + $0x10] sm:$0xff]
    %v8726 = vld [vmem:[#allocation3 + $0x18] sm:$0xff]
    %v8727 = vld [vmem:[#allocation3 + $0x20] sm:$0xff]
    %v8728 = vld [vmem:[#allocation3 + $0x28] sm:$0xff]
    %v8729 = vld [vmem:[#allocation3 + $0x30] sm:$0xff]
    %v8730 = vld [vmem:[#allocation3 + $0x38] sm:$0xff]
    %v8731 = vld [vmem:[#allocation3 + $0x40] sm:$0xff]
    %v8732 = vld [vmem:[#allocation3 + $0x48] sm:$0xff]
    %v8733 = vld [vmem:[#allocation3 + $0x50] sm:$0xff]
    %v8734 = vld [vmem:[#allocation3 + $0x58] sm:$0xff]
    %v8735 = vld [vmem:[#allocation3 + $0x60] sm:$0xff]
    %v8736 = vld [vmem:[#allocation3 + $0x68] sm:$0xff]
    %v8737 = vld [vmem:[#allocation3 + $0x70] sm:$0xff]
    %v8738 = vld [vmem:[#allocation3 + $0x78] sm:$0xff]
    %v8739 = vld [vmem:[#allocation3 + $0x80] sm:$0xff]
    %v8740 = vld [vmem:[#allocation3 + $0x88] sm:$0xff]
    %v8741 = vld [vmem:[#allocation3 + $0x90] sm:$0xff]
    %v8742 = vld [vmem:[#allocation3 + $0x98] sm:$0xff]
    %v8743 = vld [vmem:[#allocation3 + $0xa0] sm:$0xff]
    %v8744 = vld [vmem:[#allocation3 + $0xa8] sm:$0xff]
    %v8745 = vld [vmem:[#allocation3 + $0xb0] sm:$0xff]
    %v8746 = vld [vmem:[#allocation3 + $0xb8] sm:$0xff]
    %v8748 = vlaneseq
    %v8749 = vshrl.u32 %v8748, 7
    %v8750 = vsub.s32 0, %v8749
    %v8751 = vrot.slane %v8722, %v8750
    %v8789 = vunpack.c.l.b16 %v8685
    %v8790 = vunpack.c.l.b16 %v8686
    %v8791 = vunpack.c.l.b16 %v8687
    %v8792 = vunpack.c.l.b16 %v8688
    %v8793 = vunpack.c.l.b16 %v8689
    %v8794 = vunpack.c.l.b16 %v8690
    %v8795 = vunpack.c.l.b16 %v8691
    %v8796 = vunpack.c.l.b16 %v8692
    %v8797 = vunpack.c.l.b16 %v8693
    %v8798 = vunpack.c.l.b16 %v8694
    %v8799 = vunpack.c.l.b16 %v8695
    %v8800 = vunpack.c.l.b16 %v8696
    %v8801 = vunpack.c.l.b16 %v8697
    %v8802 = vunpack.c.l.b16 %v8698
    %v8803 = vunpack.c.l.b16 %v8699
    %v8804 = vunpack.c.l.b16 %v8700
    %v8805 = vunpack.c.l.b16 %v8701
    %v8806 = vunpack.c.l.b16 %v8702
    %v8807 = vunpack.c.l.b16 %v8703
    %v8808 = vunpack.c.l.b16 %v8704
    %v8809 = vunpack.c.l.b16 %v8705
    %v8810 = vunpack.c.l.b16 %v8706
    %v8811 = vunpack.c.l.b16 %v8707
    %v8812 = vunpack.c.l.b16 %v8708
    %v8813 = vunpack.c.l.b16 %v8709
    %v8814 = vunpack.c.l.b16 %v8710
    %v8815 = vunpack.c.l.b16 %v8711
    %v8816 = vunpack.c.l.b16 %v8712
    %v8817 = vunpack.c.l.b16 %v8713
    %v8818 = vunpack.c.l.b16 %v8714
    %v8819 = vunpack.c.l.b16 %v8715
    %v8820 = vunpack.c.l.b16 %v8716
    %v8821 = vunpack.c.l.b16 %v8717
    %v8822 = vunpack.c.l.b16 %v8718
    %v8823 = vunpack.c.l.b16 %v8719
    %v8824 = vunpack.c.l.b16 %v8720
    %v8825 = vpack.c.b16 %v8790, %v8789
    %v8826 = vpack.c.b16 %v8792, %v8791
    %v8827 = vpack.c.b16 %v8794, %v8793
    %v8828 = vpack.c.b16 %v8796, %v8795
    %v8829 = vpack.c.b16 %v8798, %v8797
    %v8830 = vpack.c.b16 %v8800, %v8799
    %v8831 = vpack.c.b16 %v8802, %v8801
    %v8832 = vpack.c.b16 %v8804, %v8803
    %v8833 = vpack.c.b16 %v8806, %v8805
    %v8834 = vpack.c.b16 %v8808, %v8807
    %v8835 = vpack.c.b16 %v8810, %v8809
    %v8836 = vpack.c.b16 %v8812, %v8811
    %v8837 = vpack.c.b16 %v8814, %v8813
    %v8838 = vpack.c.b16 %v8816, %v8815
    %v8839 = vpack.c.b16 %v8818, %v8817
    %v8840 = vpack.c.b16 %v8820, %v8819
    %v8841 = vpack.c.b16 %v8822, %v8821
    %v8842 = vpack.c.b16 %v8824, %v8823
    %v8862 = vsel %vm46, %v8725, 0
    %v8865 = vsel %vm46, %v8728, 0
    %v8868 = vsel %vm46, %v8731, 0
    %v8871 = vsel %vm46, %v8734, 0
    %v8874 = vsel %vm46, %v8737, 0
    %v8877 = vsel %vm46, %v8740, 0
    %v8880 = vsel %vm46, %v8743, 0
    %v8883 = vsel %vm46, %v8746, 0
    %8885 = vmatprep.subr.bf16.mxu0 0
    %8886 = vmatpush1.bf16.msra.mxu0 %v8825
    %8887 = vmatprep.subr.bf16.mxu0 0
    %8888 = vmatpush1.bf16.msra.mxu0 %v8826
    %8889 = vmatprep.subr.bf16.mxu0 0
    %8890 = vmatpush1.bf16.msra.mxu0 %v8827
    %8891 = vmatprep.subr.bf16.mxu0 0
    %8892 = vmatpush1.bf16.msra.mxu0 %v8828
    %8893 = vmatprep.subr.bf16.mxu0 0
    %8894 = vmatpush1.bf16.msra.mxu0 %v8829
    %8895 = vmatprep.subr.bf16.mxu0 0
    %8896 = vmatpush1.bf16.msra.mxu0 %v8830
    %8897 = vmatprep.subr.bf16.mxu0 0
    %8898 = vmatpush1.bf16.msra.mxu0 %v8831
    %8899 = vmatprep.subr.bf16.mxu0 0
    %8900 = vmatpush1.bf16.msra.mxu0 %v8832
    %8901 = vmatprep.subr.bf16.mxu0 0
    %8902 = vmatpush1.bf16.msra.mxu0 %v8833
    %8903 = vmatprep.subr.bf16.mxu0 0
    %8904 = vmatpush1.bf16.msra.mxu0 %v8834
    %8905 = vmatprep.subr.bf16.mxu0 0
    %8906 = vmatpush1.bf16.msra.mxu0 %v8835
    %8907 = vmatprep.subr.bf16.mxu0 0
    %8908 = vmatpush1.bf16.msra.mxu0 %v8836
    %8909 = vmatprep.subr.bf16.mxu0 0
    %8910 = vmatpush1.bf16.msra.mxu0 %v8837
    %8911 = vmatprep.subr.bf16.mxu0 0
    %8912 = vmatpush1.bf16.msra.mxu0 %v8838
    %8913 = vmatprep.subr.bf16.mxu0 0
    %8914 = vmatpush1.bf16.msra.mxu0 %v8839
    %8915 = vmatprep.subr.bf16.mxu0 0
    %8916 = vmatpush1.bf16.msra.mxu0 %v8840
    %8917 = vmatprep.mubr.bf16.mxu0 %v8724
    %8918 = vmatmul.mubr.bf16.gmra.mrb[0].mxu0 %v8723
    %v8919 = vpop.f32.mrb[0].mxu0
    %v8920 = vadd.f32 %v8751, %v8919
    %v8921 = vpop.f32.mrb[0].mxu0
    %v8922 = vpop.f32.mrb[0].mxu0
    %v8923 = vadd.f32 %v8751, %v8922
    %v8924 = vpop.f32.mrb[0].mxu0
    %8925 = vmatprep.mubr.bf16.mxu0 %v8727
    %8926 = vmatmul.mubr.bf16.gmra.mrb[0].mxu0 %v8726
    %v8927 = vpop.f32.mrb[0].mxu0
    %v8928 = vadd.f32 %v8751, %v8927
    %v8929 = vpop.f32.mrb[0].mxu0
    %v8930 = vpop.f32.mrb[0].mxu0
    %v8931 = vadd.f32 %v8751, %v8930
    %v8932 = vpop.f32.mrb[0].mxu0
    %8933 = vmatprep.mubr.bf16.mxu0 %v8730
    %8934 = vmatmul.mubr.bf16.gmra.mrb[0].mxu0 %v8729
    %v8935 = vpop.f32.mrb[0].mxu0
    %v8936 = vadd.f32 %v8751, %v8935
    %v8937 = vpop.f32.mrb[0].mxu0
    %v8938 = vpop.f32.mrb[0].mxu0
    %v8939 = vadd.f32 %v8751, %v8938
    %v8940 = vpop.f32.mrb[0].mxu0
    %8941 = vmatprep.mubr.bf16.mxu0 %v8733
    %8942 = vmatmul.mubr.bf16.gmra.mrb[0].mxu0 %v8732
    %v8943 = vpop.f32.mrb[0].mxu0
    %v8944 = vadd.f32 %v8751, %v8943
    %v8945 = vpop.f32.mrb[0].mxu0
    %v8946 = vpop.f32.mrb[0].mxu0
    %v8947 = vadd.f32 %v8751, %v8946
    %v8948 = vpop.f32.mrb[0].mxu0
    %8949 = vmatprep.mubr.bf16.mxu0 %v8736
    %8950 = vmatmul.mubr.bf16.gmra.mrb[0].mxu0 %v8735
    %v8951 = vpop.f32.mrb[0].mxu0
    %v8952 = vadd.f32 %v8751, %v8951
    %v8953 = vpop.f32.mrb[0].mxu0
    %v8954 = vpop.f32.mrb[0].mxu0
    %v8955 = vadd.f32 %v8751, %v8954
    %v8956 = vpop.f32.mrb[0].mxu0
    %8957 = vmatprep.mubr.bf16.mxu0 %v8739
    %8958 = vmatmul.mubr.bf16.gmra.mrb[0].mxu0 %v8738
    %v8959 = vpop.f32.mrb[0].mxu0
    %v8960 = vadd.f32 %v8751, %v8959
    %v8961 = vpop.f32.mrb[0].mxu0
    %v8962 = vpop.f32.mrb[0].mxu0
    %v8963 = vadd.f32 %v8751, %v8962
    %v8964 = vpop.f32.mrb[0].mxu0
    %8965 = vmatprep.mubr.bf16.mxu0 %v8742
    %8966 = vmatmul.mubr.bf16.gmra.mrb[0].mxu0 %v8741
    %v8967 = vpop.f32.mrb[0].mxu0
    %v8968 = vadd.f32 %v8751, %v8967
    %v8969 = vpop.f32.mrb[0].mxu0
    %v8970 = vpop.f32.mrb[0].mxu0
    %v8971 = vadd.f32 %v8751, %v8970
    %v8972 = vpop.f32.mrb[0].mxu0
    %8973 = vmatprep.mubr.bf16.mxu0 %v8745
    %8974 = vmatmul.mubr.bf16.gmra.mrb[0].mxu0 %v8744
    %v8975 = vpop.f32.mrb[0].mxu0
    %v8976 = vadd.f32 %v8751, %v8975
    %v8977 = vpop.f32.mrb[0].mxu0
    %v8978 = vpop.f32.mrb[0].mxu0
    %v8979 = vadd.f32 %v8751, %v8978
    %v8980 = vpop.f32.mrb[0].mxu0
    %8981 = vdwg.mxu0
    %8982 = vmatprep.subr.bf16.mxu0 0
    %8983 = vmatpush1.bf16.msra.mxu0 %v8841
    %8984 = vmatprep.subr.bf16.mxu0 0
    %8985 = vmatpush1.bf16.msra.mxu0 %v8842
    %8986 = vmatprep.subr.bf16.mxu0 0
    %8987 = vmatpush1.bf16.msra.mxu0 0
    %8988 = vmatprep.subr.bf16.mxu0 0
    %8989 = vmatpush1.bf16.msra.mxu0 0
    %8990 = vmatprep.subr.bf16.mxu0 0
    %8991 = vmatpush1.bf16.msra.mxu0 0
    %8992 = vmatprep.subr.bf16.mxu0 0
    %8993 = vmatpush1.bf16.msra.mxu0 0
    %8994 = vmatprep.subr.bf16.mxu0 0
    %8995 = vmatpush1.bf16.msra.mxu0 0
    %8996 = vmatprep.subr.bf16.mxu0 0
    %8997 = vmatpush1.bf16.msra.mxu0 0
    %8998 = vmatprep.subr.bf16.mxu0 0
    %8999 = vmatpush1.bf16.msra.mxu0 0
    %9000 = vmatprep.subr.bf16.mxu0 0
    %9001 = vmatpush1.bf16.msra.mxu0 0
    %9002 = vmatprep.subr.bf16.mxu0 0
    %9003 = vmatpush1.bf16.msra.mxu0 0
    %9004 = vmatprep.subr.bf16.mxu0 0
    %9005 = vmatpush1.bf16.msra.mxu0 0
    %9006 = vmatprep.subr.bf16.mxu0 0
    %9007 = vmatpush1.bf16.msra.mxu0 0
    %9008 = vmatprep.subr.bf16.mxu0 0
    %9009 = vmatpush1.bf16.msra.mxu0 0
    %9010 = vmatprep.subr.bf16.mxu0 0
    %9011 = vmatpush1.bf16.msra.mxu0 0
    %9012 = vmatprep.subr.bf16.mxu0 0
    %9013 = vmatpush1.bf16.msra.mxu0 0
    %9014 = vmatprep.mubr.bf16.mxu0 0
    %9015 = vmatmul.mubr.bf16.gmra.mrb[0].mxu0 %v8862
    %v9016 = vpop.f32.mrb[0].mxu0
    %v9017 = vadd.f32 %v8920, %v9016
    %v9018 = vpop.f32.mrb[0].mxu0
    %v9019 = vpop.f32.mrb[0].mxu0
    %v9020 = vadd.f32 %v8923, %v9019
    %v9021 = vpop.f32.mrb[0].mxu0
    %9022 = vmatprep.mubr.bf16.mxu0 0
    %9023 = vmatmul.mubr.bf16.gmra.mrb[0].mxu0 %v8865
    %v9024 = vpop.f32.mrb[0].mxu0
    %v9025 = vadd.f32 %v8928, %v9024
    %v9026 = vpop.f32.mrb[0].mxu0
    %v9027 = vpop.f32.mrb[0].mxu0
    %v9028 = vadd.f32 %v8931, %v9027
    %v9029 = vpop.f32.mrb[0].mxu0
    %9030 = vmatprep.mubr.bf16.mxu0 0
    %9031 = vmatmul.mubr.bf16.gmra.mrb[0].mxu0 %v8868
    %v9032 = vpop.f32.mrb[0].mxu0
    %v9033 = vadd.f32 %v8936, %v9032
    %v9034 = vpop.f32.mrb[0].mxu0
    %v9035 = vpop.f32.mrb[0].mxu0
    %v9036 = vadd.f32 %v8939, %v9035
    %v9037 = vpop.f32.mrb[0].mxu0
    %9038 = vmatprep.mubr.bf16.mxu0 0
    %9039 = vmatmul.mubr.bf16.gmra.mrb[0].mxu0 %v8871
    %v9040 = vpop.f32.mrb[0].mxu0
    %v9041 = vadd.f32 %v8944, %v9040
    %v9042 = vpop.f32.mrb[0].mxu0
    %v9043 = vpop.f32.mrb[0].mxu0
    %v9044 = vadd.f32 %v8947, %v9043
    %v9045 = vpop.f32.mrb[0].mxu0
    %9046 = vmatprep.mubr.bf16.mxu0 0
    %9047 = vmatmul.mubr.bf16.gmra.mrb[0].mxu0 %v8874
    %v9048 = vpop.f32.mrb[0].mxu0
    %v9049 = vadd.f32 %v8952, %v9048
    %v9050 = vpop.f32.mrb[0].mxu0
    %v9051 = vpop.f32.mrb[0].mxu0
    %v9052 = vadd.f32 %v8955, %v9051
    %v9053 = vpop.f32.mrb[0].mxu0
    %9054 = vmatprep.mubr.bf16.mxu0 0
    %9055 = vmatmul.mubr.bf16.gmra.mrb[0].mxu0 %v8877
    %v9056 = vpop.f32.mrb[0].mxu0
    %v9057 = vadd.f32 %v8960, %v9056
    %v9058 = vpop.f32.mrb[0].mxu0
    %v9059 = vpop.f32.mrb[0].mxu0
    %v9060 = vadd.f32 %v8963, %v9059
    %v9061 = vpop.f32.mrb[0].mxu0
    %9062 = vmatprep.mubr.bf16.mxu0 0
    %9063 = vmatmul.mubr.bf16.gmra.mrb[0].mxu0 %v8880
    %v9064 = vpop.f32.mrb[0].mxu0
    %v9065 = vadd.f32 %v8968, %v9064
    %v9066 = vpop.f32.mrb[0].mxu0
    %v9067 = vpop.f32.mrb[0].mxu0
    %v9068 = vadd.f32 %v8971, %v9067
    %v9069 = vpop.f32.mrb[0].mxu0
    %9070 = vmatprep.mubr.bf16.mxu0 0
    %9071 = vmatmul.mubr.bf16.gmra.mrb[0].mxu0 %v8883
    %v9072 = vpop.f32.mrb[0].mxu0
    %v9073 = vadd.f32 %v8976, %v9072
    %v9074 = vpop.f32.mrb[0].mxu0
    %v9075 = vpop.f32.mrb[0].mxu0
    %v9076 = vadd.f32 %v8979, %v9075
    %v9077 = vpop.f32.mrb[0].mxu0
    %9078 = vdwg.mxu0
    %v9079 = vmul.f32 %v9017, 0.5
    %v9080 = vmul.f32 %v9020, 0.5
    %v9081 = vmul.f32 %v9025, 0.5
    %v9082 = vmul.f32 %v9028, 0.5
    %v9083 = vmul.f32 %v9033, 0.5
    %v9084 = vmul.f32 %v9036, 0.5
    %v9085 = vmul.f32 %v9041, 0.5
    %v9086 = vmul.f32 %v9044, 0.5
    %v9087 = vmul.f32 %v9049, 0.5
    %v9088 = vmul.f32 %v9052, 0.5
    %v9089 = vmul.f32 %v9057, 0.5
    %v9090 = vmul.f32 %v9060, 0.5
    %v9091 = vmul.f32 %v9065, 0.5
    %v9092 = vmul.f32 %v9068, 0.5
    %v9093 = vmul.f32 %v9073, 0.5
    %v9094 = vmul.f32 %v9076, 0.5
    %v9095 = vmul.f32 %v9017, 0.044715
    %v9096 = vmul.f32 %v9020, 0.044715
    %v9097 = vmul.f32 %v9025, 0.044715
    %v9098 = vmul.f32 %v9028, 0.044715
    %v9099 = vmul.f32 %v9033, 0.044715
    %v9100 = vmul.f32 %v9036, 0.044715
    %v9101 = vmul.f32 %v9041, 0.044715
    %v9102 = vmul.f32 %v9044, 0.044715
    %v9103 = vmul.f32 %v9049, 0.044715
    %v9104 = vmul.f32 %v9052, 0.044715
    %v9105 = vmul.f32 %v9057, 0.044715
    %v9106 = vmul.f32 %v9060, 0.044715
    %v9107 = vmul.f32 %v9065, 0.044715
    %v9108 = vmul.f32 %v9068, 0.044715
    %v9109 = vmul.f32 %v9073, 0.044715
    %v9110 = vmul.f32 %v9076, 0.044715
    %v9111 = vmul.f32 %v9095, %v9017
    %v9112 = vmul.f32 %v9096, %v9020
    %v9113 = vmul.f32 %v9097, %v9025
    %v9114 = vmul.f32 %v9098, %v9028
    %v9115 = vmul.f32 %v9099, %v9033
    %v9116 = vmul.f32 %v9100, %v9036
    %v9117 = vmul.f32 %v9101, %v9041
    %v9118 = vmul.f32 %v9102, %v9044
    %v9119 = vmul.f32 %v9103, %v9049
    %v9120 = vmul.f32 %v9104, %v9052
    %v9121 = vmul.f32 %v9105, %v9057
    %v9122 = vmul.f32 %v9106, %v9060
    %v9123 = vmul.f32 %v9107, %v9065
    %v9124 = vmul.f32 %v9108, %v9068
    %v9125 = vmul.f32 %v9109, %v9073
    %v9126 = vmul.f32 %v9110, %v9076
    %v9127 = vmul.f32 %v9111, %v9017
    %v9128 = vmul.f32 %v9112, %v9020
    %v9129 = vmul.f32 %v9113, %v9025
    %v9130 = vmul.f32 %v9114, %v9028
    %v9131 = vmul.f32 %v9115, %v9033
    %v9132 = vmul.f32 %v9116, %v9036
    %v9133 = vmul.f32 %v9117, %v9041
    %v9134 = vmul.f32 %v9118, %v9044
    %v9135 = vmul.f32 %v9119, %v9049
    %v9136 = vmul.f32 %v9120, %v9052
    %v9137 = vmul.f32 %v9121, %v9057
    %v9138 = vmul.f32 %v9122, %v9060
    %v9139 = vmul.f32 %v9123, %v9065
    %v9140 = vmul.f32 %v9124, %v9068
    %v9141 = vmul.f32 %v9125, %v9073
    %v9142 = vmul.f32 %v9126, %v9076
    %v9143 = vadd.f32 %v9017, %v9127
    %v9144 = vadd.f32 %v9020, %v9128
    %v9145 = vadd.f32 %v9025, %v9129
    %v9146 = vadd.f32 %v9028, %v9130
    %v9147 = vadd.f32 %v9033, %v9131
    %v9148 = vadd.f32 %v9036, %v9132
    %v9149 = vadd.f32 %v9041, %v9133
    %v9150 = vadd.f32 %v9044, %v9134
    %v9151 = vadd.f32 %v9049, %v9135
    %v9152 = vadd.f32 %v9052, %v9136
    %v9153 = vadd.f32 %v9057, %v9137
    %v9154 = vadd.f32 %v9060, %v9138
    %v9155 = vadd.f32 %v9065, %v9139
    %v9156 = vadd.f32 %v9068, %v9140
    %v9157 = vadd.f32 %v9073, %v9141
    %v9158 = vadd.f32 %v9076, %v9142
    %v9159 = vmul.f32 %v9143, 0.7978846
    %v9160 = vmul.f32 %v9144, 0.7978846
    %v9161 = vmul.f32 %v9145, 0.7978846
    %v9162 = vmul.f32 %v9146, 0.7978846
    %v9163 = vmul.f32 %v9147, 0.7978846
    %v9164 = vmul.f32 %v9148, 0.7978846
    %v9165 = vmul.f32 %v9149, 0.7978846
    %v9166 = vmul.f32 %v9150, 0.7978846
    %v9167 = vmul.f32 %v9151, 0.7978846
    %v9168 = vmul.f32 %v9152, 0.7978846
    %v9169 = vmul.f32 %v9153, 0.7978846
    %v9170 = vmul.f32 %v9154, 0.7978846
    %v9171 = vmul.f32 %v9155, 0.7978846
    %v9172 = vmul.f32 %v9156, 0.7978846
    %v9173 = vmul.f32 %v9157, 0.7978846
    %v9174 = vmul.f32 %v9158, 0.7978846
    %v9175 = vtanh.pop %v9159
    %v9176 = vtanh.pop %v9160
    %v9177 = vtanh.pop %v9161
    %v9178 = vtanh.pop %v9162
    %v9179 = vtanh.pop %v9163
    %v9180 = vtanh.pop %v9164
    %v9181 = vtanh.pop %v9165
    %v9182 = vtanh.pop %v9166
    %v9183 = vtanh.pop %v9167
    %v9184 = vtanh.pop %v9168
    %v9185 = vtanh.pop %v9169
    %v9186 = vtanh.pop %v9170
    %v9187 = vtanh.pop %v9171
    %v9188 = vtanh.pop %v9172
    %v9189 = vtanh.pop %v9173
    %v9190 = vtanh.pop %v9174
    %v9191 = vadd.f32 %v9175, 1.0
    %v9192 = vadd.f32 %v9176, 1.0
    %v9193 = vadd.f32 %v9177, 1.0
    %v9194 = vadd.f32 %v9178, 1.0
    %v9195 = vadd.f32 %v9179, 1.0
    %v9196 = vadd.f32 %v9180, 1.0
    %v9197 = vadd.f32 %v9181, 1.0
    %v9198 = vadd.f32 %v9182, 1.0
    %v9199 = vadd.f32 %v9183, 1.0
    %v9200 = vadd.f32 %v9184, 1.0
    %v9201 = vadd.f32 %v9185, 1.0
    %v9202 = vadd.f32 %v9186, 1.0
    %v9203 = vadd.f32 %v9187, 1.0
    %v9204 = vadd.f32 %v9188, 1.0
    %v9205 = vadd.f32 %v9189, 1.0
    %v9206 = vadd.f32 %v9190, 1.0
    %v9207 = vmul.f32 %v9079, %v9191
    %v9208 = vmul.f32 %v9080, %v9192
    %v9209 = vmul.f32 %v9081, %v9193
    %v9210 = vmul.f32 %v9082, %v9194
    %v9211 = vmul.f32 %v9083, %v9195
    %v9212 = vmul.f32 %v9084, %v9196
    %v9213 = vmul.f32 %v9085, %v9197
    %v9214 = vmul.f32 %v9086, %v9198
    %v9215 = vmul.f32 %v9087, %v9199
    %v9216 = vmul.f32 %v9088, %v9200
    %v9217 = vmul.f32 %v9089, %v9201
    %v9218 = vmul.f32 %v9090, %v9202
    %v9219 = vmul.f32 %v9091, %v9203
    %v9220 = vmul.f32 %v9092, %v9204
    %v9221 = vmul.f32 %v9093, %v9205
    %v9222 = vmul.f32 %v9094, %v9206
    %v9223 = vld [vmem:[#allocation4] sm:$0xff]
    %v9224 = vld [vmem:[#allocation4 + $0x8] sm:$0xff]
    %v9225 = vld [vmem:[#allocation4 + $0x10] sm:$0xff]
    %v9226 = vld [vmem:[#allocation4 + $0x18] sm:$0xff]
    %v9227 = vld [vmem:[#allocation4 + $0x20] sm:$0xff]
    %v9228 = vld [vmem:[#allocation4 + $0x28] sm:$0xff]
    %v9229 = vld [vmem:[#allocation4 + $0x30] sm:$0xff]
    %v9230 = vld [vmem:[#allocation4 + $0x38] sm:$0xff]
    %v9231 = vld [vmem:[#allocation4 + $0x40] sm:$0xff]
    %v9232 = vld [vmem:[#allocation4 + $0x48] sm:$0xff]
    %v9233 = vld [vmem:[#allocation4 + $0x50] sm:$0xff]
    %v9234 = vld [vmem:[#allocation4 + $0x58] sm:$0xff]
    %v9235 = vld [vmem:[#allocation4 + $0x60] sm:$0xff]
    %v9236 = vld [vmem:[#allocation4 + $0x68] sm:$0xff]
    %v9237 = vld [vmem:[#allocation4 + $0x70] sm:$0xff]
    %v9238 = vld [vmem:[#allocation4 + $0x78] sm:$0xff]
    %v9239 = vadd.f32 %v9223, %v9207
    %v9240 = vadd.f32 %v9224, %v9208
    %v9241 = vadd.f32 %v9225, %v9209
    %v9242 = vadd.f32 %v9226, %v9210
    %v9243 = vadd.f32 %v9227, %v9211
    %v9244 = vadd.f32 %v9228, %v9212
    %v9245 = vadd.f32 %v9229, %v9213
    %v9246 = vadd.f32 %v9230, %v9214
    %v9247 = vadd.f32 %v9231, %v9215
    %v9248 = vadd.f32 %v9232, %v9216
    %v9249 = vadd.f32 %v9233, %v9217
    %v9250 = vadd.f32 %v9234, %v9218
    %v9251 = vadd.f32 %v9235, %v9219
    %v9252 = vadd.f32 %v9236, %v9220
    %v9253 = vadd.f32 %v9237, %v9221
    %v9254 = vadd.f32 %v9238, %v9222
    %9255 = vst.msk [vmem:[#allocation6] sm:$0xff] %vm46, %v9239
    %9256 = vst.msk [vmem:[#allocation6 + $0x8] sm:$0xff] %vm46, %v9240
    %9257 = vst.msk [vmem:[#allocation6 + $0x10] sm:$0xff] %vm46, %v9241
    %9258 = vst.msk [vmem:[#allocation6 + $0x18] sm:$0xff] %vm46, %v9242
    %9259 = vst.msk [vmem:[#allocation6 + $0x20] sm:$0xff] %vm46, %v9243
    %9260 = vst.msk [vmem:[#allocation6 + $0x28] sm:$0xff] %vm46, %v9244
    %9261 = vst.msk [vmem:[#allocation6 + $0x30] sm:$0xff] %vm46, %v9245
    %9262 = vst.msk [vmem:[#allocation6 + $0x38] sm:$0xff] %vm46, %v9246
    %9263 = vst.msk [vmem:[#allocation6 + $0x40] sm:$0xff] %vm46, %v9247
    %9264 = vst.msk [vmem:[#allocation6 + $0x48] sm:$0xff] %vm46, %v9248
    %9265 = vst.msk [vmem:[#allocation6 + $0x50] sm:$0xff] %vm46, %v9249
    %9266 = vst.msk [vmem:[#allocation6 + $0x58] sm:$0xff] %vm46, %v9250
    %9267 = vst.msk [vmem:[#allocation6 + $0x60] sm:$0xff] %vm46, %v9251
    %9268 = vst.msk [vmem:[#allocation6 + $0x68] sm:$0xff] %vm46, %v9252
    %9269 = vst.msk [vmem:[#allocation6 + $0x70] sm:$0xff] %vm46, %v9253
    %9270 = vst.msk [vmem:[#allocation6 + $0x78] sm:$0xff] %vm46, %v9254
    // Predicated region
    $region54: #{transformer_forward.1} parent=1 // pred_check
      _
    $region55: #{transformer_forward.1} parent=1 // pred_check_branch
      %9272 = sbr.rel (0) target = $region57
    $region56: #{transformer_forward.1} parent=1 // pred_region
      %s9274 = ssub.s32 2048, 2048
      %9275 = vsyncadd [#allocation7], %s9274
      %s9276 = sshll.u32 [#allocation6], 4
      %s9277 = int_to_ptr.vmem [resolvable:$true] %s9276
      %9282 = dma.vmem_to_hbm [thread:$0]  %s9277, 2048, %s13, [#allocation7], 128, 128, 8
    $region57: #{transformer_forward.1} parent=1 // pred_fallthru
      _
    // Predicated region
    $region58: #{transformer_forward.1} parent=1 // pred_check
      _
    $region59: #{transformer_forward.1} parent=1 // pred_check_branch
      %9284 = sbr.rel (0) target = $region61
    $region60: #{transformer_forward.1} parent=1 // pred_region
      %9285 = dma.done [#allocation7], 2048
    $region61: #{transformer_forward.1} parent=1 // pred_fallthru
      _
    %9286 = vsyncpa [#allocation7], 1

</llo_original>
